<compile_context>
chip_gen: v5e
topology: v5e:2x2
jax: 0.10.0
libtpu: 0.0.40
codegen_flags: <defaults>
</compile_context>

<pallas_src>
import numpy as np

import jax
import jax.numpy as jnp
from jax import lax
from jax.experimental import pallas as pl
from jax.experimental.pallas import tpu as pltpu


# ---------------------------------------------------------------------------
# One-time parameter preprocessing (host side, hoisted out of the forward).
# ---------------------------------------------------------------------------
def _pack_tconv_layer(w_t, b, H, W, rp):
    """Pack ConvTranspose2d(k=3, s=2, p=1, op=1) into a single matmul.

    Packed input activation:  A[hp, (r*W + w)*Cin + ci] = y_in[hp*rp + r, w, ci]
    Kernel builds             XB = [A | first-true-row-of-next-block]
    Packed output activation: Q[hp, (r'*2W + w')*Cout + co] = y_out[hp*2rp + r', w', co]
    so that Q = XB @ WB + bias, and Q is directly the next layer's packed input
    (row packing doubles: rp_out = 2*rp).
    """
    w = np.asarray(w_t, np.float32)            # (Cin, Cout, 3, 3) torch layout
    bias = np.asarray(b, np.float32)           # (Cout,)
    cin, cout = w.shape[0], w.shape[1]

    p_in = rp * W * cin                        # packed input lanes
    K = p_in + W * cin                         # + one extra true row (next block)
    N = (2 * rp) * (2 * W) * cout
    wb = np.zeros((K, N), np.float32)

    def src(rloc, wcol):                       # rloc == rp -> next block, row 0
        if rloc < rp:
            return (rloc * W + wcol) * cin
        return p_in + wcol * cin

    def dst(rout, wout):
        return (rout * 2 * W + wout) * cout

    # y_out[2h+a, 2w+b] = sum over taps:
    #   a=0: (ih=h, kh=1)        a=1: (ih=h, kh=2) + (ih=h+1, kh=0)
    #   b=0: (iw=w, kw=1)        b=1: (iw=w, kw=2) + (iw=w+1, kw=0)   (if w+1 < W)
    for r in range(rp):
        for wcol in range(W):
            for a in (0, 1):
                row_srcs = [(r, 1 if a == 0 else 2)]
                if a == 1:
                    row_srcs.append((r + 1, 0))
                for bph in (0, 1):
                    col_srcs = [(wcol, 1 if bph == 0 else 2)]
                    if bph == 1 and wcol + 1 < W:
                        col_srcs.append((wcol + 1, 0))
                    d = dst(2 * r + a, 2 * wcol + bph)
                    for (rloc, kh) in row_srcs:
                        for (wloc, kw) in col_srcs:
                            s = src(rloc, wloc)
                            wb[s:s + cin, d:d + cout] += w[:, :, kh, kw]

    bb = np.tile(bias, (2 * rp) * (2 * W)).reshape(1, N)
    return wb, bb


def prepare_decoder_params(params):
    """params: [(w(Cin,Cout,3,3), b(Cout,)) x 3] -> packed bf16 weights + f32 biases."""
    configs = ((4, 4, 1), (8, 8, 2), (16, 16, 4))   # (H, W, row-packing) per layer
    packed = []
    for (w_t, b), (H, W, rp) in zip(params, configs):
        wb, bb = _pack_tconv_layer(w_t, b, H, W, rp)
        packed.append((jnp.asarray(wb, dtype=jnp.bfloat16),
                       jnp.asarray(bb, dtype=jnp.float32)))
    return packed


# ---------------------------------------------------------------------------
# Fused decoder kernel: the whole 3-layer decoder for one batch element.
# ---------------------------------------------------------------------------
def _decoder_kernel(x_ref, w1_ref, b1_ref, w2_ref, b2_ref, w3_ref, b3_ref, o_ref):
    # 4x4 super-diagonal shift matrix (packed-row count is 4 for every layer):
    # (shift @ A)[i] = A[i+1], zero for the last row.  Implemented as a matmul
    # so no roll/concat relayout is needed for the cross-row neighbor.
    r_i = lax.broadcasted_iota(jnp.int32, (4, 4), 0)
    c_i = lax.broadcasted_iota(jnp.int32, (4, 4), 1)
    shift = (c_i == r_i + 1).astype(jnp.float32)

    def layer(a, w_ref, b_ref, act):
        # a: (4, P) packed activation; first 256 lanes of each packed block are
        # its first true spatial row (W*Cin == 256 for every layer).
        top = a[:, :256]
        nxt = jnp.dot(shift, top, preferred_element_type=jnp.float32)
        xb = jnp.concatenate([a, nxt], axis=-1)            # (4, P + 256), lane-aligned
        q = jnp.dot(xb.astype(jnp.bfloat16), w_ref[...],
                    preferred_element_type=jnp.float32)
        q = q + b_ref[...]
        if act == "relu":
            return jnp.maximum(q, 0.0)
        return jax.nn.sigmoid(q)

    a = x_ref[0]                                  # (4, 256)   = (4, 4, 64) packed
    a = layer(a, w1_ref, b1_ref, "relu")          # (4, 512)   = (8, 8, 32) packed
    a = layer(a, w2_ref, b2_ref, "relu")          # (4, 1024)  = (16, 16, 16) packed
    a = layer(a, w3_ref, b3_ref, "sigmoid")       # (4, 768)   = (32, 32, 3) packed
    o_ref[...] = a.reshape(1, 4, 768)


def decoder_forward(x_nchw, packed_params):
    """x_nchw: (N, 64, 4, 4) f32 -> (N, 3, 32, 32) f32 (matches the PyTorch module)."""
    n = x_nchw.shape[0]
    # NCHW -> NHWC -> packed (N, 4, 4*64); tiny (8 KB) layout op on the input side.
    x = jnp.transpose(x_nchw, (0, 2, 3, 1)).reshape(n, 4, 256)
    (w1, b1), (w2, b2), (w3, b3) = packed_params

    out_packed = pl.pallas_call(
        _decoder_kernel,
        out_shape=jax.ShapeDtypeStruct((n, 4, 768), jnp.float32),
        grid=(n,),
        in_specs=[
            pl.BlockSpec((1, 4, 256), lambda i: (i, 0, 0)),
            pl.BlockSpec((512, 512), lambda i: (0, 0)),
            pl.BlockSpec((1, 512), lambda i: (0, 0)),
            pl.BlockSpec((768, 1024), lambda i: (0, 0)),
            pl.BlockSpec((1, 1024), lambda i: (0, 0)),
            pl.BlockSpec((1280, 768), lambda i: (0, 0)),
            pl.BlockSpec((1, 768), lambda i: (0, 0)),
        ],
        out_specs=pl.BlockSpec((1, 4, 768), lambda i: (i, 0, 0)),
        compiler_params=pltpu.CompilerParams(
            dimension_semantics=("parallel",)),
    )(x, w1, b1, w2, b2, w3, b3)

    # Unpacking the kernel output is a pure row-major view: (N,4,768)->(N,32,32,3).
    out = out_packed.reshape(n, 32, 32, 3)
    return jnp.transpose(out, (0, 3, 1, 2))       # NHWC -> NCHW


# ---------------------------------------------------------------------------
# Pure-JAX reference (zero-dilate + pad + flipped-weight conv) for validation.
# ---------------------------------------------------------------------------
def _reference_decoder(x_nchw, params):
    x = jnp.transpose(x_nchw, (0, 2, 3, 1)).astype(jnp.float32)
    acts = ("relu", "relu", "sigmoid")
    for (w_t, b), act in zip(params, acts):
        n, hh, ww, c = x.shape
        xd = jnp.zeros((n, 2 * hh - 1, 2 * ww - 1, c), x.dtype)
        xd = xd.at[:, ::2, ::2, :].set(x)
        xp = jnp.pad(xd, ((0, 0), (1, 2), (1, 2), (0, 0)))
        w_conv = jnp.transpose(w_t[:, :, ::-1, ::-1], (2, 3, 0, 1))   # HWIO, flipped
        y = lax.conv_general_dilated(
            xp, w_conv, (1, 1), "VALID",
            dimension_numbers=("NHWC", "HWIO", "NHWC"))
        y = y + b
        x = jnp.maximum(y, 0.0) if act == "relu" else jax.nn.sigmoid(y)
    return jnp.transpose(x, (0, 3, 1, 2))


def init_params(key):
    # Deterministic synthetic init (mirrors PyTorch uniform fan-in scaling).
    shapes = [(64, 32), (32, 16), (16, 3)]
    params = []
    for i, (cin, cout) in enumerate(shapes):
        kw, kb = jax.random.split(jax.random.fold_in(key, i))
        bound = 1.0 / float(np.sqrt(cin * 9.0))
        w = jax.random.uniform(kw, (cin, cout, 3, 3), jnp.float32, -bound, bound)
        b = jax.random.uniform(kb, (cout,), jnp.float32, -bound, bound)
        params.append((w, b))
    return params


if __name__ == "__main__":
    key = jax.random.PRNGKey(0)
    params = init_params(key)
    packed = prepare_decoder_params(params)     # hoisted, one-time weight packing

    # latent input, NCHW like the PyTorch module: (batch=2, C=64, 4, 4)
    x = jax.random.normal(jax.random.fold_in(key, 100), (2, 64, 4, 4), jnp.float32)

    fwd = jax.jit(decoder_forward)
    y = jax.block_until_ready(fwd(x, packed))
    assert y.shape == (2, 3, 32, 32), y.shape
    assert bool(jnp.all((y >= 0.0) & (y <= 1.0)))           # sigmoid output range

    y_ref = jax.block_until_ready(_reference_decoder(x, params))
    max_err = float(jnp.max(jnp.abs(y - y_ref)))
    assert max_err < 3e-2, f"mismatch vs reference: {max_err}"

    print("KERNEL_OK")
</pallas_src>

<mosaic_0001>
module attributes {stable_mosaic.version = 11 : i64} {
  func.func @_decoder_kernel(%arg0: i32, %arg1: memref<1x4x256xf32, #tpu.memory_space<vmem>>, %arg2: memref<512x512xbf16, #tpu.memory_space<vmem>>, %arg3: memref<1x512xf32, #tpu.memory_space<vmem>>, %arg4: memref<768x1024xbf16, #tpu.memory_space<vmem>>, %arg5: memref<1x1024xf32, #tpu.memory_space<vmem>>, %arg6: memref<1280x768xbf16, #tpu.memory_space<vmem>>, %arg7: memref<1x768xf32, #tpu.memory_space<vmem>>, %arg8: memref<1x4x768xf32, #tpu.memory_space<vmem>>) attributes {dimension_semantics = [#tpu.dimension_semantics<parallel>], iteration_bounds = array<i64: 2>, scalar_prefetch = 0 : i64, scratch_operands = 0 : i64, tpu.core_type = #tpu.core_type<tc>, window_params = [{transform_indices = @transform_0, window_bounds = array<i64: 1, 4, 256>}, {pipeline_mode = #tpu.pipeline_mode<synchronous>, transform_indices = @transform_1, window_bounds = array<i64: 512, 512>}, {pipeline_mode = #tpu.pipeline_mode<synchronous>, transform_indices = @transform_2, window_bounds = array<i64: 1, 512>}, {pipeline_mode = #tpu.pipeline_mode<synchronous>, transform_indices = @transform_3, window_bounds = array<i64: 768, 1024>}, {pipeline_mode = #tpu.pipeline_mode<synchronous>, transform_indices = @transform_4, window_bounds = array<i64: 1, 1024>}, {pipeline_mode = #tpu.pipeline_mode<synchronous>, transform_indices = @transform_5, window_bounds = array<i64: 1280, 768>}, {pipeline_mode = #tpu.pipeline_mode<synchronous>, transform_indices = @transform_6, window_bounds = array<i64: 1, 768>}, {transform_indices = @transform_7, window_bounds = array<i64: 1, 4, 768>}]} {
    %0 = tpu.iota {dimensions = array<i32: 0>} : vector<4x4xi32>
    %1 = tpu.iota {dimensions = array<i32: 1>} : vector<4x4xi32>
    %c1_i32 = arith.constant 1 : i32
    %2 = vector.broadcast %c1_i32 : i32 to vector<4x4xi32>
    %3 = arith.addi %0, %2 : vector<4x4xi32>
    %4 = arith.cmpi eq, %1, %3 : vector<4x4xi32>
    %5 = arith.extui %4 : vector<4x4xi1> to vector<4x4xi32>
    %6 = arith.sitofp %5 : vector<4x4xi32> to vector<4x4xf32>
    %c0 = arith.constant 0 : index
    %c0_0 = arith.constant 0 : index
    %c0_1 = arith.constant 0 : index
    %7 = vector.load %arg1[%c0, %c0_0, %c0_1] : memref<1x4x256xf32, #tpu.memory_space<vmem>>, vector<1x4x256xf32>
    %8 = vector.shape_cast %7 : vector<1x4x256xf32> to vector<4x256xf32>
    %cst = arith.constant dense<0.000000e+00> : vector<4x256xf32>
    %9 = tpu.matmul %6, %8, %cst {dimension_numbers = #tpu.dot_dimension_numbers<[1], [0], [0], [1], [0, 0, 1, 1], [], []>} : vector<4x4xf32>, vector<4x256xf32>, vector<4x256xf32> -> vector<4x256xf32>
    %10 = tpu.concatenate %8, %9 in 1 : vector<4x256xf32>, vector<4x256xf32> -> vector<4x512xf32>
    %11 = arith.truncf %10 : vector<4x512xf32> to vector<4x512xbf16>
    %c0_2 = arith.constant 0 : index
    %c0_3 = arith.constant 0 : index
    %12 = vector.load %arg2[%c0_2, %c0_3] : memref<512x512xbf16, #tpu.memory_space<vmem>>, vector<512x512xbf16>
    %cst_4 = arith.constant dense<0.000000e+00> : vector<4x512xf32>
    %13 = tpu.matmul %11, %12, %cst_4 {dimension_numbers = #tpu.dot_dimension_numbers<[1], [0], [0], [1], [0, 0, 1, 1], [], []>} : vector<4x512xbf16>, vector<512x512xbf16>, vector<4x512xf32> -> vector<4x512xf32>
    %c0_5 = arith.constant 0 : index
    %c0_6 = arith.constant 0 : index
    %14 = vector.load %arg3[%c0_5, %c0_6] : memref<1x512xf32, #tpu.memory_space<vmem>>, vector<1x512xf32>
    %15 = vector.broadcast %14 : vector<1x512xf32> to vector<4x512xf32>
    %16 = arith.addf %13, %15 : vector<4x512xf32>
    %cst_7 = arith.constant 0.000000e+00 : f32
    %17 = vector.broadcast %cst_7 : f32 to vector<4x512xf32>
    %18 = arith.maximumf %16, %17 : vector<4x512xf32>
    %19 = vector.extract_strided_slice %18 {offsets = [0, 0], sizes = [4, 256], strides = [1, 1]} : vector<4x512xf32> to vector<4x256xf32>
    %cst_8 = arith.constant dense<0.000000e+00> : vector<4x256xf32>
    %20 = tpu.matmul %6, %19, %cst_8 {dimension_numbers = #tpu.dot_dimension_numbers<[1], [0], [0], [1], [0, 0, 1, 1], [], []>} : vector<4x4xf32>, vector<4x256xf32>, vector<4x256xf32> -> vector<4x256xf32>
    %21 = tpu.concatenate %18, %20 in 1 : vector<4x512xf32>, vector<4x256xf32> -> vector<4x768xf32>
    %22 = arith.truncf %21 : vector<4x768xf32> to vector<4x768xbf16>
    %c0_9 = arith.constant 0 : index
    %c0_10 = arith.constant 0 : index
    %23 = vector.load %arg4[%c0_9, %c0_10] : memref<768x1024xbf16, #tpu.memory_space<vmem>>, vector<768x1024xbf16>
    %cst_11 = arith.constant dense<0.000000e+00> : vector<4x1024xf32>
    %24 = tpu.matmul %22, %23, %cst_11 {dimension_numbers = #tpu.dot_dimension_numbers<[1], [0], [0], [1], [0, 0, 1, 1], [], []>} : vector<4x768xbf16>, vector<768x1024xbf16>, vector<4x1024xf32> -> vector<4x1024xf32>
    %c0_12 = arith.constant 0 : index
    %c0_13 = arith.constant 0 : index
    %25 = vector.load %arg5[%c0_12, %c0_13] : memref<1x1024xf32, #tpu.memory_space<vmem>>, vector<1x1024xf32>
    %26 = vector.broadcast %25 : vector<1x1024xf32> to vector<4x1024xf32>
    %27 = arith.addf %24, %26 : vector<4x1024xf32>
    %cst_14 = arith.constant 0.000000e+00 : f32
    %28 = vector.broadcast %cst_14 : f32 to vector<4x1024xf32>
    %29 = arith.maximumf %27, %28 : vector<4x1024xf32>
    %30 = vector.extract_strided_slice %29 {offsets = [0, 0], sizes = [4, 256], strides = [1, 1]} : vector<4x1024xf32> to vector<4x256xf32>
    %cst_15 = arith.constant dense<0.000000e+00> : vector<4x256xf32>
    %31 = tpu.matmul %6, %30, %cst_15 {dimension_numbers = #tpu.dot_dimension_numbers<[1], [0], [0], [1], [0, 0, 1, 1], [], []>} : vector<4x4xf32>, vector<4x256xf32>, vector<4x256xf32> -> vector<4x256xf32>
    %32 = tpu.concatenate %29, %31 in 1 : vector<4x1024xf32>, vector<4x256xf32> -> vector<4x1280xf32>
    %33 = arith.truncf %32 : vector<4x1280xf32> to vector<4x1280xbf16>
    %c0_16 = arith.constant 0 : index
    %c0_17 = arith.constant 0 : index
    %34 = vector.load %arg6[%c0_16, %c0_17] : memref<1280x768xbf16, #tpu.memory_space<vmem>>, vector<1280x768xbf16>
    %cst_18 = arith.constant dense<0.000000e+00> : vector<4x768xf32>
    %35 = tpu.matmul %33, %34, %cst_18 {dimension_numbers = #tpu.dot_dimension_numbers<[1], [0], [0], [1], [0, 0, 1, 1], [], []>} : vector<4x1280xbf16>, vector<1280x768xbf16>, vector<4x768xf32> -> vector<4x768xf32>
    %c0_19 = arith.constant 0 : index
    %c0_20 = arith.constant 0 : index
    %36 = vector.load %arg7[%c0_19, %c0_20] : memref<1x768xf32, #tpu.memory_space<vmem>>, vector<1x768xf32>
    %37 = vector.broadcast %36 : vector<1x768xf32> to vector<4x768xf32>
    %38 = arith.addf %35, %37 : vector<4x768xf32>
    %39 = arith.negf %38 : vector<4x768xf32>
    %40 = math.exp %39 : vector<4x768xf32>
    %cst_21 = arith.constant 1.000000e+00 : f32
    %41 = vector.broadcast %cst_21 : f32 to vector<4x768xf32>
    %42 = arith.addf %41, %40 : vector<4x768xf32>
    %43 = arith.divf %41, %42 : vector<4x768xf32>
    %44 = vector.shape_cast %43 : vector<4x768xf32> to vector<1x4x768xf32>
    %c0_22 = arith.constant 0 : index
    %c0_23 = arith.constant 0 : index
    %c0_24 = arith.constant 0 : index
    %45 = vector.load %arg8[%c0_22, %c0_23, %c0_24] : memref<1x4x768xf32, #tpu.memory_space<vmem>>, vector<1x4x768xf32>
    tpu.vector_store %arg8[%c0_22, %c0_23, %c0_24], %44 {strides = array<i32>} : memref<1x4x768xf32, #tpu.memory_space<vmem>>, vector<1x4x768xf32>,
    return
  }
  func.func @transform_0(%arg0: i32) -> (i32, i32, i32) {
    %c0_i32 = arith.constant 0 : i32
    %c0_i32_0 = arith.constant 0 : i32
    %c0_i32_1 = arith.constant 0 : i32
    return %arg0, %c0_i32, %c0_i32_0 : i32, i32, i32
  }
  func.func @transform_1(%arg0: i32) -> (i32, i32) {
    %c0_i32 = arith.constant 0 : i32
    %c0_i32_0 = arith.constant 0 : i32
    %c0_i32_1 = arith.constant 0 : i32
    return %c0_i32, %c0_i32_0 : i32, i32
  }
  func.func @transform_2(%arg0: i32) -> (i32, i32) {
    %c0_i32 = arith.constant 0 : i32
    %c0_i32_0 = arith.constant 0 : i32
    %c0_i32_1 = arith.constant 0 : i32
    return %c0_i32, %c0_i32_0 : i32, i32
  }
  func.func @transform_3(%arg0: i32) -> (i32, i32) {
    %c0_i32 = arith.constant 0 : i32
    %c0_i32_0 = arith.constant 0 : i32
    %c0_i32_1 = arith.constant 0 : i32
    return %c0_i32, %c0_i32_0 : i32, i32
  }
  func.func @transform_4(%arg0: i32) -> (i32, i32) {
    %c0_i32 = arith.constant 0 : i32
    %c0_i32_0 = arith.constant 0 : i32
    %c0_i32_1 = arith.constant 0 : i32
    return %c0_i32, %c0_i32_0 : i32, i32
  }
  func.func @transform_5(%arg0: i32) -> (i32, i32) {
    %c0_i32 = arith.constant 0 : i32
    %c0_i32_0 = arith.constant 0 : i32
    %c0_i32_1 = arith.constant 0 : i32
    return %c0_i32, %c0_i32_0 : i32, i32
  }
  func.func @transform_6(%arg0: i32) -> (i32, i32) {
    %c0_i32 = arith.constant 0 : i32
    %c0_i32_0 = arith.constant 0 : i32
    %c0_i32_1 = arith.constant 0 : i32
    return %c0_i32, %c0_i32_0 : i32, i32
  }
  func.func @transform_7(%arg0: i32) -> (i32, i32, i32) {
    %c0_i32 = arith.constant 0 : i32
    %c0_i32_0 = arith.constant 0 : i32
    %c0_i32_1 = arith.constant 0 : i32
    return %arg0, %c0_i32, %c0_i32_0 : i32, i32, i32
  }
}

</mosaic_0001>

<llo_original>
// kernel: decoder_forward.1
$region0: #{decoder_forward.1}
  #allocation0 [shape = 'u32[]', space=smem, size = 0x4, offset = 0x4, fixed_abs, tag = 'smem constant byte address 0x4 - core index']
  #allocation1 [shape = 'u32[72,128]{1,0:T(1,128)}', space=vmem, size = 0x9000, scoped, tag = 'internal scratch']
  %s0 = inlined_call_operand.vmem [shape: f32[2,4,256], index: 0, kind: input, shape index: {}]
  %s1 = inlined_call_operand.hbm [shape: bf16[512,512], index: 1, kind: input, shape index: {}]
  %s2 = inlined_call_operand.hbm [shape: f32[1,512], index: 2, kind: input, shape index: {}]
  %s3 = inlined_call_operand.hbm [shape: bf16[768,1024], index: 3, kind: input, shape index: {}]
  %s4 = inlined_call_operand.hbm [shape: f32[1,1024], index: 4, kind: input, shape index: {}]
  %s5 = inlined_call_operand.hbm [shape: bf16[1280,768], index: 5, kind: input, shape index: {}]
  %s6 = inlined_call_operand.hbm [shape: f32[1,768], index: 6, kind: input, shape index: {}]
  %s7 = inlined_call_operand.vmem [shape: f32[2,4,768], index: 7, kind: output, shape index: {}]
  %s8 = sld [smem:[#allocation0]]
  $region85: #{decoder_forward.1} parent=0
    _
  %s10 = ssub.s32 1, %s8
  %s11 = scalar_select 0, %s10, %s8
  $region1: #{decoder_forward.1} parent=0
    #allocation2 [shape = 'u8[524288]{0}', space=vmem, size = 0x80000, scoped, tag = 'input window, operand 1, single buffered']
    #allocation3 [shape = 's32[2]{0}', space=sflag, size = 0x8, scoped, tag = 'scoped memory for decoder_forward.1']
    #allocation4 [shape = 'u8[2048]{0}', space=vmem, size = 0x800, scoped, tag = 'input window, operand 2, single buffered']
    #allocation5 [shape = 's32[1]{0}', space=sflag, size = 0x4, scoped, tag = 'scoped memory for decoder_forward.1']
    #allocation6 [shape = 'u8[1572864]{0}', space=vmem, size = 0x180000, scoped, tag = 'input window, operand 3, single buffered']
    #allocation7 [shape = 'u8[4096]{0}', space=vmem, size = 0x1000, scoped, tag = 'input window, operand 4, single buffered']
    #allocation8 [shape = 's32[1]{0}', space=sflag, size = 0x4, scoped, tag = 'scoped memory for decoder_forward.1']
    #allocation9 [shape = 'u8[1966080]{0}', space=vmem, size = 0x1e0000, scoped, tag = 'input window, operand 5, single buffered']
    #allocation10 [shape = 'u8[3072]{0}', space=vmem, size = 0xc00, scoped, tag = 'input window, operand 6, single buffered']
    #allocation11 [shape = 's32[1]{0}', space=sflag, size = 0x4, scoped, tag = 'scoped memory for decoder_forward.1']
    %12 = vsyncpa [#allocation3], 0
    %13 = vsyncpa [#allocation5], 0
    %14 = vsyncpa [#allocation8], 0
    %15 = vsyncpa [#allocation11], 0
    loop: start=0, step=1, limit=4
    $region2: #{decoder_forward.1} parent=1 // loop_pre_header
      _
    $region3: #{decoder_forward.1} parent=1 // loop_header
      %s17 = sphi 0, %s21
      %p18 = scmp.ge.s32.totalorder %s17, 4
      %s27 = sphi 0, %s29
      %s30 = sphi 0, %s27
      %s31 = sphi 0, %s30
      %s47 = sphi 0, %s31
      %s51 = sphi 0, %s51
      %s53 = sphi 0, %s51
      %s54 = sphi 0, %s53
      %s68 = sphi 0, %s54
      %s72 = sphi 0, %s72
      %s74 = sphi 0, %s72
      %s75 = sphi 0, %s74
      %s89 = sphi 0, %s75
      %s93 = sphi 0, %s93
      %s95 = sphi 0, %s93
      %s96 = sphi 0, %s95
      %s110 = sphi 0, %s96
      %s114 = sphi 0, %s114
      %s116 = sphi 0, %s114
      %s117 = sphi 0, %s116
      %s131 = sphi 0, %s117
      %s135 = sphi 0, %s135
      %s137 = sphi 0, %s135
      %s138 = sphi 0, %s137
      %s152 = sphi 0, %s138
      %s156 = sphi 0, %s156
      %s158 = sphi 0, %s156
      %s159 = sphi 0, %s158
      %s173 = sphi 0, %s159
      %s179 = sphi 0, %s181
      %s182 = sphi 0, %s179
      %s183 = sphi 0, %s182
      %s199 = sphi 0, %s183
    $region4: #{decoder_forward.1} parent=1 // loop_header_branch
      %20 = sbr.rel (%p18) target = $region8
    $region5: #{decoder_forward.1} parent=1 // loop_body
      %s22 = ssub.s32 %s17, 1
      %s23 = ssub.s32 %s17, 2
      %s24 = sadd.s32 %s17, 1
      %s25 = ssub.s32 %s17, %s24
      %p26 = scmp.eq.s32.totalorder %s25, 0
      %s28 = sadd.s32 %s27, 1
      %s29 = scalar_select %p26, %s27, %s28
      %p32 = pneg %p26
      %p33 = scmp.eq.s32.totalorder %s17, 1
      %p34 = por %p32, %p33
      %p35 = scmp.ne.s32.totalorder %s27, %s30
      %p36 = scmp.eq.s32.totalorder %s17, 0
      %p37 = por %p35, %p36
      %p38 = scmp.ne.s32.totalorder %s27, %s30
      %p39 = scmp.eq.s32.totalorder %s22, 1
      %p40 = por %p38, %p39
      %p41 = scmp.ne.s32.totalorder %s30, %s31
      %p42 = scmp.eq.s32.totalorder %s22, 0
      %p43 = por %p41, %p42
      %p44 = scmp.ne.s32.totalorder %s30, %s31
      %p45 = scmp.eq.s32.totalorder %s23, 1
      %p46 = por %p44, %p45
      %p48 = scmp.ne.s32.totalorder %s31, %s47
      %p49 = scmp.eq.s32.totalorder %s23, 0
      %p50 = por %p48, %p49
      %s52 = sadd.s32 %s51, 1
      %p55 = scmp.eq.s32.totalorder %s17, 1
      %p56 = scmp.ne.s32.totalorder %s51, %s53
      %p57 = scmp.eq.s32.totalorder %s17, 0
      %p58 = por %p56, %p57
      %p59 = scmp.ne.s32.totalorder %s51, %s53
      %p60 = scmp.eq.s32.totalorder %s22, 1
      %p61 = por %p59, %p60
      %p62 = scmp.ne.s32.totalorder %s53, %s54
      %p63 = scmp.eq.s32.totalorder %s22, 0
      %p64 = por %p62, %p63
      %p65 = scmp.ne.s32.totalorder %s53, %s54
      %p66 = scmp.eq.s32.totalorder %s23, 1
      %p67 = por %p65, %p66
      %p69 = scmp.ne.s32.totalorder %s54, %s68
      %p70 = scmp.eq.s32.totalorder %s23, 0
      %p71 = por %p69, %p70
      %s73 = sadd.s32 %s72, 1
      %p76 = scmp.eq.s32.totalorder %s17, 1
      %p77 = scmp.ne.s32.totalorder %s72, %s74
      %p78 = scmp.eq.s32.totalorder %s17, 0
      %p79 = por %p77, %p78
      %p80 = scmp.ne.s32.totalorder %s72, %s74
      %p81 = scmp.eq.s32.totalorder %s22, 1
      %p82 = por %p80, %p81
      %p83 = scmp.ne.s32.totalorder %s74, %s75
      %p84 = scmp.eq.s32.totalorder %s22, 0
      %p85 = por %p83, %p84
      %p86 = scmp.ne.s32.totalorder %s74, %s75
      %p87 = scmp.eq.s32.totalorder %s23, 1
      %p88 = por %p86, %p87
      %p90 = scmp.ne.s32.totalorder %s75, %s89
      %p91 = scmp.eq.s32.totalorder %s23, 0
      %p92 = por %p90, %p91
      %s94 = sadd.s32 %s93, 1
      %p97 = scmp.eq.s32.totalorder %s17, 1
      %p98 = scmp.ne.s32.totalorder %s93, %s95
      %p99 = scmp.eq.s32.totalorder %s17, 0
      %p100 = por %p98, %p99
      %p101 = scmp.ne.s32.totalorder %s93, %s95
      %p102 = scmp.eq.s32.totalorder %s22, 1
      %p103 = por %p101, %p102
      %p104 = scmp.ne.s32.totalorder %s95, %s96
      %p105 = scmp.eq.s32.totalorder %s22, 0
      %p106 = por %p104, %p105
      %p107 = scmp.ne.s32.totalorder %s95, %s96
      %p108 = scmp.eq.s32.totalorder %s23, 1
      %p109 = por %p107, %p108
      %p111 = scmp.ne.s32.totalorder %s96, %s110
      %p112 = scmp.eq.s32.totalorder %s23, 0
      %p113 = por %p111, %p112
      %s115 = sadd.s32 %s114, 1
      %p118 = scmp.eq.s32.totalorder %s17, 1
      %p119 = scmp.ne.s32.totalorder %s114, %s116
      %p120 = scmp.eq.s32.totalorder %s17, 0
      %p121 = por %p119, %p120
      %p122 = scmp.ne.s32.totalorder %s114, %s116
      %p123 = scmp.eq.s32.totalorder %s22, 1
      %p124 = por %p122, %p123
      %p125 = scmp.ne.s32.totalorder %s116, %s117
      %p126 = scmp.eq.s32.totalorder %s22, 0
      %p127 = por %p125, %p126
      %p128 = scmp.ne.s32.totalorder %s116, %s117
      %p129 = scmp.eq.s32.totalorder %s23, 1
      %p130 = por %p128, %p129
      %p132 = scmp.ne.s32.totalorder %s117, %s131
      %p133 = scmp.eq.s32.totalorder %s23, 0
      %p134 = por %p132, %p133
      %s136 = sadd.s32 %s135, 1
      %p139 = scmp.eq.s32.totalorder %s17, 1
      %p140 = scmp.ne.s32.totalorder %s135, %s137
      %p141 = scmp.eq.s32.totalorder %s17, 0
      %p142 = por %p140, %p141
      %p143 = scmp.ne.s32.totalorder %s135, %s137
      %p144 = scmp.eq.s32.totalorder %s22, 1
      %p145 = por %p143, %p144
      %p146 = scmp.ne.s32.totalorder %s137, %s138
      %p147 = scmp.eq.s32.totalorder %s22, 0
      %p148 = por %p146, %p147
      %p149 = scmp.ne.s32.totalorder %s137, %s138
      %p150 = scmp.eq.s32.totalorder %s23, 1
      %p151 = por %p149, %p150
      %p153 = scmp.ne.s32.totalorder %s138, %s152
      %p154 = scmp.eq.s32.totalorder %s23, 0
      %p155 = por %p153, %p154
      %s157 = sadd.s32 %s156, 1
      %p160 = scmp.eq.s32.totalorder %s17, 1
      %p161 = scmp.ne.s32.totalorder %s156, %s158
      %p162 = scmp.eq.s32.totalorder %s17, 0
      %p163 = por %p161, %p162
      %p164 = scmp.ne.s32.totalorder %s156, %s158
      %p165 = scmp.eq.s32.totalorder %s22, 1
      %p166 = por %p164, %p165
      %p167 = scmp.ne.s32.totalorder %s158, %s159
      %p168 = scmp.eq.s32.totalorder %s22, 0
      %p169 = por %p167, %p168
      %p170 = scmp.ne.s32.totalorder %s158, %s159
      %p171 = scmp.eq.s32.totalorder %s23, 1
      %p172 = por %p170, %p171
      %p174 = scmp.ne.s32.totalorder %s159, %s173
      %p175 = scmp.eq.s32.totalorder %s23, 0
      %p176 = por %p174, %p175
      %s177 = ssub.s32 %s17, %s24
      %p178 = scmp.eq.s32.totalorder %s177, 0
      %s180 = sadd.s32 %s179, 1
      %s181 = scalar_select %p178, %s179, %s180
      %p184 = pneg %p178
      %p185 = scmp.eq.s32.totalorder %s17, 1
      %p186 = por %p184, %p185
      %p187 = scmp.ne.s32.totalorder %s179, %s182
      %p188 = scmp.eq.s32.totalorder %s17, 0
      %p189 = por %p187, %p188
      %p190 = scmp.ne.s32.totalorder %s179, %s182
      %p191 = scmp.eq.s32.totalorder %s22, 1
      %p192 = por %p190, %p191
      %p193 = scmp.ne.s32.totalorder %s182, %s183
      %p194 = scmp.eq.s32.totalorder %s22, 0
      %p195 = por %p193, %p194
      %p196 = scmp.ne.s32.totalorder %s182, %s183
      %p197 = scmp.eq.s32.totalorder %s23, 1
      %p198 = por %p196, %p197
      %p200 = scmp.ne.s32.totalorder %s183, %s199
      %p201 = scmp.eq.s32.totalorder %s23, 0
      %p202 = por %p200, %p201
      %p203 = scmp.le.s32.totalorder 1, %s17
      %p204 = scmp.lt.s32.totalorder %s17, 3
      %p205 = pnand %p203, %p204
      %p206 = pneg %p205
      // Predicated region
      $region9: #{decoder_forward.1} parent=5 // pred_check
        _
      $region10: #{decoder_forward.1} parent=5 // pred_check_branch
        %208 = sbr.rel (%p205) target = $region12
      $region11: #{decoder_forward.1} parent=5 // pred_region
        %s209 = ssub.s32 %s17, 1
        // Predicated region
        $region13: #{decoder_forward.1} parent=11 // pred_check
          %p210 = pneg %p64
        $region14: #{decoder_forward.1} parent=11 // pred_check_branch
          %212 = sbr.rel (%p210) target = $region16
        $region15: #{decoder_forward.1} parent=11 // pred_region
          %214 = vsyncadd [#allocation3], 0
          %s215 = sshll.u32 %s1, 4
          %s216 = int_to_ptr.hbm [resolvable:$true] %s215
          %s217 = sshll.u32 [#allocation2], 4
          %s218 = int_to_ptr.vmem [resolvable:$true] %s217
          %223 = dma.hbm_to_vmem [thread:$0]  %s216, 16384, %s218, [#allocation3], 256, 256, 16
        $region16: #{decoder_forward.1} parent=11 // pred_fallthru
          _
        // Predicated region
        $region17: #{decoder_forward.1} parent=11 // pred_check
          %p224 = pneg %p85
        $region18: #{decoder_forward.1} parent=11 // pred_check_branch
          %226 = sbr.rel (%p224) target = $region20
        $region19: #{decoder_forward.1} parent=11 // pred_region
          %228 = vsyncadd [#allocation5], 0
          %s230 = sshll.u32 %s2, 4
          %s231 = int_to_ptr.hbm [resolvable:$true] %s230
          %s232 = sshll.u32 [#allocation4], 4
          %s233 = int_to_ptr.vmem [resolvable:$true] %s232
          %235 = dma.hbm_to_vmem [thread:$0]  %s231, 64, %s233, [#allocation5]
        $region20: #{decoder_forward.1} parent=11 // pred_fallthru
          _
        // Predicated region
        $region21: #{decoder_forward.1} parent=11 // pred_check
          %p236 = pneg %p106
        $region22: #{decoder_forward.1} parent=11 // pred_check_branch
          %238 = sbr.rel (%p236) target = $region24
        $region23: #{decoder_forward.1} parent=11 // pred_region
          %240 = vsyncadd [#allocation5], 0
          %s241 = sshll.u32 %s3, 4
          %s242 = int_to_ptr.hbm [resolvable:$true] %s241
          %s243 = sshll.u32 [#allocation6], 4
          %s244 = int_to_ptr.vmem [resolvable:$true] %s243
          %249 = dma.hbm_to_vmem [thread:$0]  %s242, 49152, %s244, [#allocation5], 512, 512, 32
        $region24: #{decoder_forward.1} parent=11 // pred_fallthru
          _
        // Predicated region
        $region25: #{decoder_forward.1} parent=11 // pred_check
          %p250 = pneg %p127
        $region26: #{decoder_forward.1} parent=11 // pred_check_branch
          %252 = sbr.rel (%p250) target = $region28
        $region27: #{decoder_forward.1} parent=11 // pred_region
          %254 = vsyncadd [#allocation8], 0
          %s256 = sshll.u32 %s4, 4
          %s257 = int_to_ptr.hbm [resolvable:$true] %s256
          %s258 = sshll.u32 [#allocation7], 4
          %s259 = int_to_ptr.vmem [resolvable:$true] %s258
          %261 = dma.hbm_to_vmem [thread:$0]  %s257, 128, %s259, [#allocation8]
        $region28: #{decoder_forward.1} parent=11 // pred_fallthru
          _
        // Predicated region
        $region29: #{decoder_forward.1} parent=11 // pred_check
          %p262 = pneg %p148
        $region30: #{decoder_forward.1} parent=11 // pred_check_branch
          %264 = sbr.rel (%p262) target = $region32
        $region31: #{decoder_forward.1} parent=11 // pred_region
          %266 = vsyncadd [#allocation8], 0
          %s267 = sshll.u32 %s5, 4
          %s268 = int_to_ptr.hbm [resolvable:$true] %s267
          %s269 = sshll.u32 [#allocation9], 4
          %s270 = int_to_ptr.vmem [resolvable:$true] %s269
          %275 = dma.hbm_to_vmem [thread:$0]  %s268, 61440, %s270, [#allocation8], 384, 384, 24
        $region32: #{decoder_forward.1} parent=11 // pred_fallthru
          _
        // Predicated region
        $region33: #{decoder_forward.1} parent=11 // pred_check
          %p276 = pneg %p169
        $region34: #{decoder_forward.1} parent=11 // pred_check_branch
          %278 = sbr.rel (%p276) target = $region36
        $region35: #{decoder_forward.1} parent=11 // pred_region
          %280 = vsyncadd [#allocation11], 0
          %s282 = sshll.u32 %s6, 4
          %s283 = int_to_ptr.hbm [resolvable:$true] %s282
          %s284 = sshll.u32 [#allocation10], 4
          %s285 = int_to_ptr.vmem [resolvable:$true] %s284
          %287 = dma.hbm_to_vmem [thread:$0]  %s283, 96, %s285, [#allocation11]
        $region36: #{decoder_forward.1} parent=11 // pred_fallthru
          _
      $region12: #{decoder_forward.1} parent=5 // pred_fallthru
        _
      %p288 = scmp.lt.s32.totalorder %s17, 2
      // Predicated region
      $region37: #{decoder_forward.1} parent=5 // pred_check
        %p289 = pneg %p288
      $region38: #{decoder_forward.1} parent=5 // pred_check_branch
        %291 = sbr.rel (%p289) target = $region40
      $region39: #{decoder_forward.1} parent=5 // pred_region
        // Predicated region
        $region41: #{decoder_forward.1} parent=39 // pred_check
          %p292 = pneg %p37
        $region42: #{decoder_forward.1} parent=39 // pred_check_branch
          %294 = sbr.rel (%p292) target = $region44
        $region43: #{decoder_forward.1} parent=39 // pred_region
          %p295 = scmp.lt.s32.totalorder %s17, 1
          %s296 = scalar_select %p295, %s17, 1
          %s297 = smul.addr %s296, 2
          %s298 = smul.addr %s297, 4
          %s299 = scalar_lea.vmem %s0, %s298
        $region44: #{decoder_forward.1} parent=39 // pred_fallthru
          _
      $region40: #{decoder_forward.1} parent=5 // pred_fallthru
        _
      %p300 = scmp.le.s32.totalorder 1, %s17
      %p301 = scmp.lt.s32.totalorder %s17, 3
      %p302 = pnand %p300, %p301
      %p303 = pneg %p302
      // Predicated region
      $region45: #{decoder_forward.1} parent=5 // pred_check
        _
      $region46: #{decoder_forward.1} parent=5 // pred_check_branch
        %305 = sbr.rel (%p302) target = $region48
      $region47: #{decoder_forward.1} parent=5 // pred_region
        %s306 = ssub.s32 %s17, 1
        // Predicated region
        $region49: #{decoder_forward.1} parent=47 // pred_check
          %p307 = pneg %p64
        $region50: #{decoder_forward.1} parent=47 // pred_check_branch
          %309 = sbr.rel (%p307) target = $region52
        $region51: #{decoder_forward.1} parent=47 // pred_region
          %311 = dma.done [#allocation3], 16384
        $region52: #{decoder_forward.1} parent=47 // pred_fallthru
          _
        // Predicated region
        $region53: #{decoder_forward.1} parent=47 // pred_check
          %p312 = pneg %p85
        $region54: #{decoder_forward.1} parent=47 // pred_check_branch
          %314 = sbr.rel (%p312) target = $region56
        $region55: #{decoder_forward.1} parent=47 // pred_region
          %316 = dma.done [#allocation5], 64
        $region56: #{decoder_forward.1} parent=47 // pred_fallthru
          _
        // Predicated region
        $region57: #{decoder_forward.1} parent=47 // pred_check
          %p317 = pneg %p106
        $region58: #{decoder_forward.1} parent=47 // pred_check_branch
          %319 = sbr.rel (%p317) target = $region60
        $region59: #{decoder_forward.1} parent=47 // pred_region
          %321 = dma.done [#allocation5], 49152
        $region60: #{decoder_forward.1} parent=47 // pred_fallthru
          _
        // Predicated region
        $region61: #{decoder_forward.1} parent=47 // pred_check
          %p322 = pneg %p127
        $region62: #{decoder_forward.1} parent=47 // pred_check_branch
          %324 = sbr.rel (%p322) target = $region64
        $region63: #{decoder_forward.1} parent=47 // pred_region
          %326 = dma.done [#allocation8], 128
        $region64: #{decoder_forward.1} parent=47 // pred_fallthru
          _
        // Predicated region
        $region65: #{decoder_forward.1} parent=47 // pred_check
          %p327 = pneg %p148
        $region66: #{decoder_forward.1} parent=47 // pred_check_branch
          %329 = sbr.rel (%p327) target = $region68
        $region67: #{decoder_forward.1} parent=47 // pred_region
          %331 = dma.done [#allocation8], 61440
        $region68: #{decoder_forward.1} parent=47 // pred_fallthru
          _
        // Predicated region
        $region69: #{decoder_forward.1} parent=47 // pred_check
          %p332 = pneg %p169
        $region70: #{decoder_forward.1} parent=47 // pred_check_branch
          %334 = sbr.rel (%p332) target = $region72
        $region71: #{decoder_forward.1} parent=47 // pred_region
          %336 = dma.done [#allocation11], 96
        $region72: #{decoder_forward.1} parent=47 // pred_fallthru
          _
        %p337 = scmp.lt.s32.totalorder %s22, 1
        %s338 = scalar_select %p337, %s22, 1
        %s339 = smul.addr %s338, 2
        %s340 = smul.addr %s339, 4
        %s341 = scalar_lea.vmem %s0, %s340
        %p342 = pneg %p43
        %p343 = pneg %p40
        %p344 = pneg %p64
        %p345 = pneg %p61
        %p346 = pneg %p85
        %p347 = pneg %p82
        %p348 = pneg %p106
        %p349 = pneg %p103
        %p350 = pneg %p127
        %p351 = pneg %p124
        %p352 = pneg %p148
        %p353 = pneg %p145
        %p354 = pneg %p169
        %p355 = pneg %p166
        %p356 = pneg %p195
        %p357 = pneg %p192
        %p358 = scmp.lt.s32.totalorder %s22, 1
        %s359 = scalar_select %p358, %s22, 1
        %s360 = smul.addr %s359, 6
        %s361 = smul.addr %s360, 4
        %s362 = scalar_lea.vmem %s7, %s361
        %p363 = scmp.lt.s32.totalorder %s22, 1
        %s364 = scalar_select %p363, %s22, 1
        %s365 = smul.addr %s364, 2
        %s366 = smul.addr %s365, 4
        %s367 = scalar_lea.vmem %s0, %s366
        %p368 = scmp.lt.s32.totalorder %s22, 1
        %s369 = scalar_select %p368, %s22, 1
        %s370 = smul.addr %s369, 6
        %s371 = smul.addr %s370, 4
        %s372 = scalar_lea.vmem %s7, %s371
        %v373 = vlaneseq
        %v374 = vshrl.u32 %v373, 7
        %v375 = vlaneseq
        %v376 = vand.u32 %v375, 127
        %v377 = vadd.s32 %v374, 1
        %vm378 = vcmp.eq.s32.totalorder %v376, %v377
        %v379 = vsel %vm378, 1, 0
        %v380 = vcvt.s32.f32 %v379
        %v381 = vld [vmem:[%s367] sm:$0xff]
        %383 = vst [vmem:[#allocation1] ss:$2 sm:$0xff] %v381
        %v384 = vld.sshfl [vmem:[#allocation1] sm:$0xff pattern:$0x75316420]
        %v385 = vld.sshfl [vmem:[#allocation1 + $0x8] sm:$0xff pattern:$0x75316420]
        %vm386 = vcmask 31744
        %v388 = vsel %vm386, %v380, 0
        %vm390 = vcmask 1043456
        %v391 = vsel %vm390, %v384, 0
        %v393 = vsel %vm390, %v385, 0
        %395 = vmatpush.msra.mxu0 0.0
        %396 = vmatpush.msra.mxu0 0.0
        %397 = vmatpush.msra.mxu0 0.0
        %398 = vmatpush.msra.mxu0 0.0
        %399 = vmatpush.msra.mxu0 0.0
        %400 = vmatpush.msra.mxu0 0.0
        %401 = vmatpush.msra.mxu0 0.0
        %402 = vmatpush.msra.mxu0 0.0
        %403 = vmatpush.msra.mxu0 0.0
        %404 = vmatpush.msra.mxu0 0.0
        %405 = vmatpush.msra.mxu0 0.0
        %406 = vmatpush.msra.mxu0 0.0
        %407 = vmatpush.msra.mxu0 0.0
        %408 = vmatpush.msra.mxu0 0.0
        %409 = vmatpush.msra.mxu0 0.0
        %410 = vmatpush.msra.mxu0 %v391
        %411 = vmatmul.f32.gmra.mxu0 %v388
        %v412 = vpop.f32.mrf.mxu0
        %v413 = vadd.f32 0.0, %v412
        %414 = vdwg.mxu0
        %415 = vmatpush.msra.mxu0 0.0
        %416 = vmatpush.msra.mxu0 0.0
        %417 = vmatpush.msra.mxu0 0.0
        %418 = vmatpush.msra.mxu0 0.0
        %419 = vmatpush.msra.mxu0 0.0
        %420 = vmatpush.msra.mxu0 0.0
        %421 = vmatpush.msra.mxu0 0.0
        %422 = vmatpush.msra.mxu0 0.0
        %423 = vmatpush.msra.mxu0 0.0
        %424 = vmatpush.msra.mxu0 0.0
        %425 = vmatpush.msra.mxu0 0.0
        %426 = vmatpush.msra.mxu0 0.0
        %427 = vmatpush.msra.mxu0 0.0
        %428 = vmatpush.msra.mxu0 0.0
        %429 = vmatpush.msra.mxu0 0.0
        %430 = vmatpush.msra.mxu0 %v393
        %431 = vmatmul.f32.gmra.mxu0 %v388
        %v432 = vpop.f32.mrf.mxu0
        %v433 = vadd.f32 0.0, %v432
        %434 = vdwg.mxu0
        %435 = vst [vmem:[#allocation1] ss:$2 sm:$0xff] %v381
        %v436 = vld.sshfl [vmem:[#allocation1] sm:$0xff pattern:$0x75316420]
        %v437 = vld.sshfl [vmem:[#allocation1 + $0x8] sm:$0xff pattern:$0x75316420]
        %v440 = vpack.c.bf16 %v436, %v436
        %v441 = vpack.c.bf16 %v437, %v437
        %v442 = vpack.c.bf16 %v413, %v413
        %v443 = vpack.c.bf16 %v433, %v433
        %v444 = vld [vmem:[#allocation2] sm:$0xff]
        %v445 = vld [vmem:[#allocation2 + $0x8] sm:$0xff]
        %v446 = vld [vmem:[#allocation2 + $0x10] sm:$0xff]
        %v447 = vld [vmem:[#allocation2 + $0x18] sm:$0xff]
        %v448 = vld [vmem:[#allocation2 + $0x20] sm:$0xff]
        %v449 = vld [vmem:[#allocation2 + $0x28] sm:$0xff]
        %v450 = vld [vmem:[#allocation2 + $0x30] sm:$0xff]
        %v451 = vld [vmem:[#allocation2 + $0x38] sm:$0xff]
        %v452 = vld [vmem:[#allocation2 + $0x40] sm:$0xff]
        %v453 = vld [vmem:[#allocation2 + $0x48] sm:$0xff]
        %v454 = vld [vmem:[#allocation2 + $0x50] sm:$0xff]
        %v455 = vld [vmem:[#allocation2 + $0x58] sm:$0xff]
        %v456 = vld [vmem:[#allocation2 + $0x60] sm:$0xff]
        %v457 = vld [vmem:[#allocation2 + $0x68] sm:$0xff]
        %v458 = vld [vmem:[#allocation2 + $0x70] sm:$0xff]
        %v459 = vld [vmem:[#allocation2 + $0x78] sm:$0xff]
        %v460 = vld [vmem:[#allocation2 + $0x80] sm:$0xff]
        %v461 = vld [vmem:[#allocation2 + $0x88] sm:$0xff]
        %v462 = vld [vmem:[#allocation2 + $0x90] sm:$0xff]
        %v463 = vld [vmem:[#allocation2 + $0x98] sm:$0xff]
        %v464 = vld [vmem:[#allocation2 + $0xa0] sm:$0xff]
        %v465 = vld [vmem:[#allocation2 + $0xa8] sm:$0xff]
        %v466 = vld [vmem:[#allocation2 + $0xb0] sm:$0xff]
        %v467 = vld [vmem:[#allocation2 + $0xb8] sm:$0xff]
        %v468 = vld [vmem:[#allocation2 + $0xc0] sm:$0xff]
        %v469 = vld [vmem:[#allocation2 + $0xc8] sm:$0xff]
        %v470 = vld [vmem:[#allocation2 + $0xd0] sm:$0xff]
        %v471 = vld [vmem:[#allocation2 + $0xd8] sm:$0xff]
        %v472 = vld [vmem:[#allocation2 + $0xe0] sm:$0xff]
        %v473 = vld [vmem:[#allocation2 + $0xe8] sm:$0xff]
        %v474 = vld [vmem:[#allocation2 + $0xf0] sm:$0xff]
        %v475 = vld [vmem:[#allocation2 + $0xf8] sm:$0xff]
        %v476 = vld [vmem:[#allocation2 + $0x100] sm:$0xff]
        %v477 = vld [vmem:[#allocation2 + $0x108] sm:$0xff]
        %v478 = vld [vmem:[#allocation2 + $0x110] sm:$0xff]
        %v479 = vld [vmem:[#allocation2 + $0x118] sm:$0xff]
        %v480 = vld [vmem:[#allocation2 + $0x120] sm:$0xff]
        %v481 = vld [vmem:[#allocation2 + $0x128] sm:$0xff]
        %v482 = vld [vmem:[#allocation2 + $0x130] sm:$0xff]
        %v483 = vld [vmem:[#allocation2 + $0x138] sm:$0xff]
        %v484 = vld [vmem:[#allocation2 + $0x140] sm:$0xff]
        %v485 = vld [vmem:[#allocation2 + $0x148] sm:$0xff]
        %v486 = vld [vmem:[#allocation2 + $0x150] sm:$0xff]
        %v487 = vld [vmem:[#allocation2 + $0x158] sm:$0xff]
        %v488 = vld [vmem:[#allocation2 + $0x160] sm:$0xff]
        %v489 = vld [vmem:[#allocation2 + $0x168] sm:$0xff]
        %v490 = vld [vmem:[#allocation2 + $0x170] sm:$0xff]
        %v491 = vld [vmem:[#allocation2 + $0x178] sm:$0xff]
        %v492 = vld [vmem:[#allocation2 + $0x180] sm:$0xff]
        %v493 = vld [vmem:[#allocation2 + $0x188] sm:$0xff]
        %v494 = vld [vmem:[#allocation2 + $0x190] sm:$0xff]
        %v495 = vld [vmem:[#allocation2 + $0x198] sm:$0xff]
        %v496 = vld [vmem:[#allocation2 + $0x1a0] sm:$0xff]
        %v497 = vld [vmem:[#allocation2 + $0x1a8] sm:$0xff]
        %v498 = vld [vmem:[#allocation2 + $0x1b0] sm:$0xff]
        %v499 = vld [vmem:[#allocation2 + $0x1b8] sm:$0xff]
        %v500 = vld [vmem:[#allocation2 + $0x1c0] sm:$0xff]
        %v501 = vld [vmem:[#allocation2 + $0x1c8] sm:$0xff]
        %v502 = vld [vmem:[#allocation2 + $0x1d0] sm:$0xff]
        %v503 = vld [vmem:[#allocation2 + $0x1d8] sm:$0xff]
        %v504 = vld [vmem:[#allocation2 + $0x1e0] sm:$0xff]
        %v505 = vld [vmem:[#allocation2 + $0x1e8] sm:$0xff]
        %v506 = vld [vmem:[#allocation2 + $0x1f0] sm:$0xff]
        %v507 = vld [vmem:[#allocation2 + $0x1f8] sm:$0xff]
        %v508 = vld [vmem:[#allocation2 + $0x200] sm:$0xff]
        %v509 = vld [vmem:[#allocation2 + $0x208] sm:$0xff]
        %v510 = vld [vmem:[#allocation2 + $0x210] sm:$0xff]
        %v511 = vld [vmem:[#allocation2 + $0x218] sm:$0xff]
        %v512 = vld [vmem:[#allocation2 + $0x220] sm:$0xff]
        %v513 = vld [vmem:[#allocation2 + $0x228] sm:$0xff]
        %v514 = vld [vmem:[#allocation2 + $0x230] sm:$0xff]
        %v515 = vld [vmem:[#allocation2 + $0x238] sm:$0xff]
        %v516 = vld [vmem:[#allocation2 + $0x240] sm:$0xff]
        %v517 = vld [vmem:[#allocation2 + $0x248] sm:$0xff]
        %v518 = vld [vmem:[#allocation2 + $0x250] sm:$0xff]
        %v519 = vld [vmem:[#allocation2 + $0x258] sm:$0xff]
        %v520 = vld [vmem:[#allocation2 + $0x260] sm:$0xff]
        %v521 = vld [vmem:[#allocation2 + $0x268] sm:$0xff]
        %v522 = vld [vmem:[#allocation2 + $0x270] sm:$0xff]
        %v523 = vld [vmem:[#allocation2 + $0x278] sm:$0xff]
        %v524 = vld [vmem:[#allocation2 + $0x280] sm:$0xff]
        %v525 = vld [vmem:[#allocation2 + $0x288] sm:$0xff]
        %v526 = vld [vmem:[#allocation2 + $0x290] sm:$0xff]
        %v527 = vld [vmem:[#allocation2 + $0x298] sm:$0xff]
        %v528 = vld [vmem:[#allocation2 + $0x2a0] sm:$0xff]
        %v529 = vld [vmem:[#allocation2 + $0x2a8] sm:$0xff]
        %v530 = vld [vmem:[#allocation2 + $0x2b0] sm:$0xff]
        %v531 = vld [vmem:[#allocation2 + $0x2b8] sm:$0xff]
        %v532 = vld [vmem:[#allocation2 + $0x2c0] sm:$0xff]
        %v533 = vld [vmem:[#allocation2 + $0x2c8] sm:$0xff]
        %v534 = vld [vmem:[#allocation2 + $0x2d0] sm:$0xff]
        %v535 = vld [vmem:[#allocation2 + $0x2d8] sm:$0xff]
        %v536 = vld [vmem:[#allocation2 + $0x2e0] sm:$0xff]
        %v537 = vld [vmem:[#allocation2 + $0x2e8] sm:$0xff]
        %v538 = vld [vmem:[#allocation2 + $0x2f0] sm:$0xff]
        %v539 = vld [vmem:[#allocation2 + $0x2f8] sm:$0xff]
        %v540 = vld [vmem:[#allocation2 + $0x300] sm:$0xff]
        %v541 = vld [vmem:[#allocation2 + $0x308] sm:$0xff]
        %v542 = vld [vmem:[#allocation2 + $0x310] sm:$0xff]
        %v543 = vld [vmem:[#allocation2 + $0x318] sm:$0xff]
        %v544 = vld [vmem:[#allocation2 + $0x320] sm:$0xff]
        %v545 = vld [vmem:[#allocation2 + $0x328] sm:$0xff]
        %v546 = vld [vmem:[#allocation2 + $0x330] sm:$0xff]
        %v547 = vld [vmem:[#allocation2 + $0x338] sm:$0xff]
        %v548 = vld [vmem:[#allocation2 + $0x340] sm:$0xff]
        %v549 = vld [vmem:[#allocation2 + $0x348] sm:$0xff]
        %v550 = vld [vmem:[#allocation2 + $0x350] sm:$0xff]
        %v551 = vld [vmem:[#allocation2 + $0x358] sm:$0xff]
        %v552 = vld [vmem:[#allocation2 + $0x360] sm:$0xff]
        %v553 = vld [vmem:[#allocation2 + $0x368] sm:$0xff]
        %v554 = vld [vmem:[#allocation2 + $0x370] sm:$0xff]
        %v555 = vld [vmem:[#allocation2 + $0x378] sm:$0xff]
        %v556 = vld [vmem:[#allocation2 + $0x380] sm:$0xff]
        %v557 = vld [vmem:[#allocation2 + $0x388] sm:$0xff]
        %v558 = vld [vmem:[#allocation2 + $0x390] sm:$0xff]
        %v559 = vld [vmem:[#allocation2 + $0x398] sm:$0xff]
        %v560 = vld [vmem:[#allocation2 + $0x3a0] sm:$0xff]
        %v561 = vld [vmem:[#allocation2 + $0x3a8] sm:$0xff]
        %v562 = vld [vmem:[#allocation2 + $0x3b0] sm:$0xff]
        %v563 = vld [vmem:[#allocation2 + $0x3b8] sm:$0xff]
        %v564 = vld [vmem:[#allocation2 + $0x3c0] sm:$0xff]
        %v565 = vld [vmem:[#allocation2 + $0x3c8] sm:$0xff]
        %v566 = vld [vmem:[#allocation2 + $0x3d0] sm:$0xff]
        %v567 = vld [vmem:[#allocation2 + $0x3d8] sm:$0xff]
        %v568 = vld [vmem:[#allocation2 + $0x3e0] sm:$0xff]
        %v569 = vld [vmem:[#allocation2 + $0x3e8] sm:$0xff]
        %v570 = vld [vmem:[#allocation2 + $0x3f0] sm:$0xff]
        %v571 = vld [vmem:[#allocation2 + $0x3f8] sm:$0xff]
        %v572 = vld [vmem:[#allocation4] sm:$0xf]
        %v574 = vperm.slane %v572, 0
        %v575 = vperm.slane %v572, 1
        %v576 = vperm.slane %v572, 2
        %v577 = vperm.slane %v572, 3
        %v710 = vunpack.c.l.b16 %v444
        %v711 = vunpack.c.h.b16 %v444
        %v712 = vunpack.c.l.b16 %v445
        %v713 = vunpack.c.h.b16 %v445
        %v714 = vunpack.c.l.b16 %v446
        %v715 = vunpack.c.h.b16 %v446
        %v716 = vunpack.c.l.b16 %v447
        %v717 = vunpack.c.h.b16 %v447
        %v718 = vunpack.c.l.b16 %v448
        %v719 = vunpack.c.h.b16 %v448
        %v720 = vunpack.c.l.b16 %v449
        %v721 = vunpack.c.h.b16 %v449
        %v722 = vunpack.c.l.b16 %v450
        %v723 = vunpack.c.h.b16 %v450
        %v724 = vunpack.c.l.b16 %v451
        %v725 = vunpack.c.h.b16 %v451
        %v726 = vunpack.c.l.b16 %v452
        %v727 = vunpack.c.h.b16 %v452
        %v728 = vunpack.c.l.b16 %v453
        %v729 = vunpack.c.h.b16 %v453
        %v730 = vunpack.c.l.b16 %v454
        %v731 = vunpack.c.h.b16 %v454
        %v732 = vunpack.c.l.b16 %v455
        %v733 = vunpack.c.h.b16 %v455
        %v734 = vunpack.c.l.b16 %v456
        %v735 = vunpack.c.h.b16 %v456
        %v736 = vunpack.c.l.b16 %v457
        %v737 = vunpack.c.h.b16 %v457
        %v738 = vunpack.c.l.b16 %v458
        %v739 = vunpack.c.h.b16 %v458
        %v740 = vunpack.c.l.b16 %v459
        %v741 = vunpack.c.h.b16 %v459
        %v742 = vunpack.c.l.b16 %v460
        %v743 = vunpack.c.h.b16 %v460
        %v744 = vunpack.c.l.b16 %v461
        %v745 = vunpack.c.h.b16 %v461
        %v746 = vunpack.c.l.b16 %v462
        %v747 = vunpack.c.h.b16 %v462
        %v748 = vunpack.c.l.b16 %v463
        %v749 = vunpack.c.h.b16 %v463
        %v750 = vunpack.c.l.b16 %v464
        %v751 = vunpack.c.h.b16 %v464
        %v752 = vunpack.c.l.b16 %v465
        %v753 = vunpack.c.h.b16 %v465
        %v754 = vunpack.c.l.b16 %v466
        %v755 = vunpack.c.h.b16 %v466
        %v756 = vunpack.c.l.b16 %v467
        %v757 = vunpack.c.h.b16 %v467
        %v758 = vunpack.c.l.b16 %v468
        %v759 = vunpack.c.h.b16 %v468
        %v760 = vunpack.c.l.b16 %v469
        %v761 = vunpack.c.h.b16 %v469
        %v762 = vunpack.c.l.b16 %v470
        %v763 = vunpack.c.h.b16 %v470
        %v764 = vunpack.c.l.b16 %v471
        %v765 = vunpack.c.h.b16 %v471
        %v766 = vunpack.c.l.b16 %v472
        %v767 = vunpack.c.h.b16 %v472
        %v768 = vunpack.c.l.b16 %v473
        %v769 = vunpack.c.h.b16 %v473
        %v770 = vunpack.c.l.b16 %v474
        %v771 = vunpack.c.h.b16 %v474
        %v772 = vunpack.c.l.b16 %v475
        %v773 = vunpack.c.h.b16 %v475
        %v774 = vunpack.c.l.b16 %v476
        %v775 = vunpack.c.h.b16 %v476
        %v776 = vunpack.c.l.b16 %v477
        %v777 = vunpack.c.h.b16 %v477
        %v778 = vunpack.c.l.b16 %v478
        %v779 = vunpack.c.h.b16 %v478
        %v780 = vunpack.c.l.b16 %v479
        %v781 = vunpack.c.h.b16 %v479
        %v782 = vunpack.c.l.b16 %v480
        %v783 = vunpack.c.h.b16 %v480
        %v784 = vunpack.c.l.b16 %v481
        %v785 = vunpack.c.h.b16 %v481
        %v786 = vunpack.c.l.b16 %v482
        %v787 = vunpack.c.h.b16 %v482
        %v788 = vunpack.c.l.b16 %v483
        %v789 = vunpack.c.h.b16 %v483
        %v790 = vunpack.c.l.b16 %v484
        %v791 = vunpack.c.h.b16 %v484
        %v792 = vunpack.c.l.b16 %v485
        %v793 = vunpack.c.h.b16 %v485
        %v794 = vunpack.c.l.b16 %v486
        %v795 = vunpack.c.h.b16 %v486
        %v796 = vunpack.c.l.b16 %v487
        %v797 = vunpack.c.h.b16 %v487
        %v798 = vunpack.c.l.b16 %v488
        %v799 = vunpack.c.h.b16 %v488
        %v800 = vunpack.c.l.b16 %v489
        %v801 = vunpack.c.h.b16 %v489
        %v802 = vunpack.c.l.b16 %v490
        %v803 = vunpack.c.h.b16 %v490
        %v804 = vunpack.c.l.b16 %v491
        %v805 = vunpack.c.h.b16 %v491
        %v806 = vunpack.c.l.b16 %v492
        %v807 = vunpack.c.h.b16 %v492
        %v808 = vunpack.c.l.b16 %v493
        %v809 = vunpack.c.h.b16 %v493
        %v810 = vunpack.c.l.b16 %v494
        %v811 = vunpack.c.h.b16 %v494
        %v812 = vunpack.c.l.b16 %v495
        %v813 = vunpack.c.h.b16 %v495
        %v814 = vunpack.c.l.b16 %v496
        %v815 = vunpack.c.h.b16 %v496
        %v816 = vunpack.c.l.b16 %v497
        %v817 = vunpack.c.h.b16 %v497
        %v818 = vunpack.c.l.b16 %v498
        %v819 = vunpack.c.h.b16 %v498
        %v820 = vunpack.c.l.b16 %v499
        %v821 = vunpack.c.h.b16 %v499
        %v822 = vunpack.c.l.b16 %v500
        %v823 = vunpack.c.h.b16 %v500
        %v824 = vunpack.c.l.b16 %v501
        %v825 = vunpack.c.h.b16 %v501
        %v826 = vunpack.c.l.b16 %v502
        %v827 = vunpack.c.h.b16 %v502
        %v828 = vunpack.c.l.b16 %v503
        %v829 = vunpack.c.h.b16 %v503
        %v830 = vunpack.c.l.b16 %v504
        %v831 = vunpack.c.h.b16 %v504
        %v832 = vunpack.c.l.b16 %v505
        %v833 = vunpack.c.h.b16 %v505
        %v834 = vunpack.c.l.b16 %v506
        %v835 = vunpack.c.h.b16 %v506
        %v836 = vunpack.c.l.b16 %v507
        %v837 = vunpack.c.h.b16 %v507
        %v838 = vunpack.c.l.b16 %v508
        %v839 = vunpack.c.h.b16 %v508
        %v840 = vunpack.c.l.b16 %v509
        %v841 = vunpack.c.h.b16 %v509
        %v842 = vunpack.c.l.b16 %v510
        %v843 = vunpack.c.h.b16 %v510
        %v844 = vunpack.c.l.b16 %v511
        %v845 = vunpack.c.h.b16 %v511
        %v846 = vunpack.c.l.b16 %v512
        %v847 = vunpack.c.h.b16 %v512
        %v848 = vunpack.c.l.b16 %v513
        %v849 = vunpack.c.h.b16 %v513
        %v850 = vunpack.c.l.b16 %v514
        %v851 = vunpack.c.h.b16 %v514
        %v852 = vunpack.c.l.b16 %v515
        %v853 = vunpack.c.h.b16 %v515
        %v854 = vunpack.c.l.b16 %v516
        %v855 = vunpack.c.h.b16 %v516
        %v856 = vunpack.c.l.b16 %v517
        %v857 = vunpack.c.h.b16 %v517
        %v858 = vunpack.c.l.b16 %v518
        %v859 = vunpack.c.h.b16 %v518
        %v860 = vunpack.c.l.b16 %v519
        %v861 = vunpack.c.h.b16 %v519
        %v862 = vunpack.c.l.b16 %v520
        %v863 = vunpack.c.h.b16 %v520
        %v864 = vunpack.c.l.b16 %v521
        %v865 = vunpack.c.h.b16 %v521
        %v866 = vunpack.c.l.b16 %v522
        %v867 = vunpack.c.h.b16 %v522
        %v868 = vunpack.c.l.b16 %v523
        %v869 = vunpack.c.h.b16 %v523
        %v870 = vunpack.c.l.b16 %v524
        %v871 = vunpack.c.h.b16 %v524
        %v872 = vunpack.c.l.b16 %v525
        %v873 = vunpack.c.h.b16 %v525
        %v874 = vunpack.c.l.b16 %v526
        %v875 = vunpack.c.h.b16 %v526
        %v876 = vunpack.c.l.b16 %v527
        %v877 = vunpack.c.h.b16 %v527
        %v878 = vunpack.c.l.b16 %v528
        %v879 = vunpack.c.h.b16 %v528
        %v880 = vunpack.c.l.b16 %v529
        %v881 = vunpack.c.h.b16 %v529
        %v882 = vunpack.c.l.b16 %v530
        %v883 = vunpack.c.h.b16 %v530
        %v884 = vunpack.c.l.b16 %v531
        %v885 = vunpack.c.h.b16 %v531
        %v886 = vunpack.c.l.b16 %v532
        %v887 = vunpack.c.h.b16 %v532
        %v888 = vunpack.c.l.b16 %v533
        %v889 = vunpack.c.h.b16 %v533
        %v890 = vunpack.c.l.b16 %v534
        %v891 = vunpack.c.h.b16 %v534
        %v892 = vunpack.c.l.b16 %v535
        %v893 = vunpack.c.h.b16 %v535
        %v894 = vunpack.c.l.b16 %v536
        %v895 = vunpack.c.h.b16 %v536
        %v896 = vunpack.c.l.b16 %v537
        %v897 = vunpack.c.h.b16 %v537
        %v898 = vunpack.c.l.b16 %v538
        %v899 = vunpack.c.h.b16 %v538
        %v900 = vunpack.c.l.b16 %v539
        %v901 = vunpack.c.h.b16 %v539
        %v902 = vunpack.c.l.b16 %v540
        %v903 = vunpack.c.h.b16 %v540
        %v904 = vunpack.c.l.b16 %v541
        %v905 = vunpack.c.h.b16 %v541
        %v906 = vunpack.c.l.b16 %v542
        %v907 = vunpack.c.h.b16 %v542
        %v908 = vunpack.c.l.b16 %v543
        %v909 = vunpack.c.h.b16 %v543
        %v910 = vunpack.c.l.b16 %v544
        %v911 = vunpack.c.h.b16 %v544
        %v912 = vunpack.c.l.b16 %v545
        %v913 = vunpack.c.h.b16 %v545
        %v914 = vunpack.c.l.b16 %v546
        %v915 = vunpack.c.h.b16 %v546
        %v916 = vunpack.c.l.b16 %v547
        %v917 = vunpack.c.h.b16 %v547
        %v918 = vunpack.c.l.b16 %v548
        %v919 = vunpack.c.h.b16 %v548
        %v920 = vunpack.c.l.b16 %v549
        %v921 = vunpack.c.h.b16 %v549
        %v922 = vunpack.c.l.b16 %v550
        %v923 = vunpack.c.h.b16 %v550
        %v924 = vunpack.c.l.b16 %v551
        %v925 = vunpack.c.h.b16 %v551
        %v926 = vunpack.c.l.b16 %v552
        %v927 = vunpack.c.h.b16 %v552
        %v928 = vunpack.c.l.b16 %v553
        %v929 = vunpack.c.h.b16 %v553
        %v930 = vunpack.c.l.b16 %v554
        %v931 = vunpack.c.h.b16 %v554
        %v932 = vunpack.c.l.b16 %v555
        %v933 = vunpack.c.h.b16 %v555
        %v934 = vunpack.c.l.b16 %v556
        %v935 = vunpack.c.h.b16 %v556
        %v936 = vunpack.c.l.b16 %v557
        %v937 = vunpack.c.h.b16 %v557
        %v938 = vunpack.c.l.b16 %v558
        %v939 = vunpack.c.h.b16 %v558
        %v940 = vunpack.c.l.b16 %v559
        %v941 = vunpack.c.h.b16 %v559
        %v942 = vunpack.c.l.b16 %v560
        %v943 = vunpack.c.h.b16 %v560
        %v944 = vunpack.c.l.b16 %v561
        %v945 = vunpack.c.h.b16 %v561
        %v946 = vunpack.c.l.b16 %v562
        %v947 = vunpack.c.h.b16 %v562
        %v948 = vunpack.c.l.b16 %v563
        %v949 = vunpack.c.h.b16 %v563
        %v950 = vunpack.c.l.b16 %v564
        %v951 = vunpack.c.h.b16 %v564
        %v952 = vunpack.c.l.b16 %v565
        %v953 = vunpack.c.h.b16 %v565
        %v954 = vunpack.c.l.b16 %v566
        %v955 = vunpack.c.h.b16 %v566
        %v956 = vunpack.c.l.b16 %v567
        %v957 = vunpack.c.h.b16 %v567
        %v958 = vunpack.c.l.b16 %v568
        %v959 = vunpack.c.h.b16 %v568
        %v960 = vunpack.c.l.b16 %v569
        %v961 = vunpack.c.h.b16 %v569
        %v962 = vunpack.c.l.b16 %v570
        %v963 = vunpack.c.h.b16 %v570
        %v964 = vunpack.c.l.b16 %v571
        %v965 = vunpack.c.h.b16 %v571
        %v966 = vpack.c.b16 %v714, %v710
        %v967 = vpack.c.b16 %v715, %v711
        %v968 = vpack.c.b16 %v716, %v712
        %v969 = vpack.c.b16 %v717, %v713
        %v970 = vpack.c.b16 %v722, %v718
        %v971 = vpack.c.b16 %v723, %v719
        %v972 = vpack.c.b16 %v724, %v720
        %v973 = vpack.c.b16 %v725, %v721
        %v974 = vpack.c.b16 %v730, %v726
        %v975 = vpack.c.b16 %v731, %v727
        %v976 = vpack.c.b16 %v732, %v728
        %v977 = vpack.c.b16 %v733, %v729
        %v978 = vpack.c.b16 %v738, %v734
        %v979 = vpack.c.b16 %v739, %v735
        %v980 = vpack.c.b16 %v740, %v736
        %v981 = vpack.c.b16 %v741, %v737
        %v982 = vpack.c.b16 %v746, %v742
        %v983 = vpack.c.b16 %v747, %v743
        %v984 = vpack.c.b16 %v748, %v744
        %v985 = vpack.c.b16 %v749, %v745
        %v986 = vpack.c.b16 %v754, %v750
        %v987 = vpack.c.b16 %v755, %v751
        %v988 = vpack.c.b16 %v756, %v752
        %v989 = vpack.c.b16 %v757, %v753
        %v990 = vpack.c.b16 %v762, %v758
        %v991 = vpack.c.b16 %v763, %v759
        %v992 = vpack.c.b16 %v764, %v760
        %v993 = vpack.c.b16 %v765, %v761
        %v994 = vpack.c.b16 %v770, %v766
        %v995 = vpack.c.b16 %v771, %v767
        %v996 = vpack.c.b16 %v772, %v768
        %v997 = vpack.c.b16 %v773, %v769
        %v998 = vpack.c.b16 %v778, %v774
        %v999 = vpack.c.b16 %v779, %v775
        %v1000 = vpack.c.b16 %v780, %v776
        %v1001 = vpack.c.b16 %v781, %v777
        %v1002 = vpack.c.b16 %v786, %v782
        %v1003 = vpack.c.b16 %v787, %v783
        %v1004 = vpack.c.b16 %v788, %v784
        %v1005 = vpack.c.b16 %v789, %v785
        %v1006 = vpack.c.b16 %v794, %v790
        %v1007 = vpack.c.b16 %v795, %v791
        %v1008 = vpack.c.b16 %v796, %v792
        %v1009 = vpack.c.b16 %v797, %v793
        %v1010 = vpack.c.b16 %v802, %v798
        %v1011 = vpack.c.b16 %v803, %v799
        %v1012 = vpack.c.b16 %v804, %v800
        %v1013 = vpack.c.b16 %v805, %v801
        %v1014 = vpack.c.b16 %v810, %v806
        %v1015 = vpack.c.b16 %v811, %v807
        %v1016 = vpack.c.b16 %v812, %v808
        %v1017 = vpack.c.b16 %v813, %v809
        %v1018 = vpack.c.b16 %v818, %v814
        %v1019 = vpack.c.b16 %v819, %v815
        %v1020 = vpack.c.b16 %v820, %v816
        %v1021 = vpack.c.b16 %v821, %v817
        %v1022 = vpack.c.b16 %v826, %v822
        %v1023 = vpack.c.b16 %v827, %v823
        %v1024 = vpack.c.b16 %v828, %v824
        %v1025 = vpack.c.b16 %v829, %v825
        %v1026 = vpack.c.b16 %v834, %v830
        %v1027 = vpack.c.b16 %v835, %v831
        %v1028 = vpack.c.b16 %v836, %v832
        %v1029 = vpack.c.b16 %v837, %v833
        %v1030 = vpack.c.b16 %v842, %v838
        %v1031 = vpack.c.b16 %v843, %v839
        %v1032 = vpack.c.b16 %v844, %v840
        %v1033 = vpack.c.b16 %v845, %v841
        %v1034 = vpack.c.b16 %v850, %v846
        %v1035 = vpack.c.b16 %v851, %v847
        %v1036 = vpack.c.b16 %v852, %v848
        %v1037 = vpack.c.b16 %v853, %v849
        %v1038 = vpack.c.b16 %v858, %v854
        %v1039 = vpack.c.b16 %v859, %v855
        %v1040 = vpack.c.b16 %v860, %v856
        %v1041 = vpack.c.b16 %v861, %v857
        %v1042 = vpack.c.b16 %v866, %v862
        %v1043 = vpack.c.b16 %v867, %v863
        %v1044 = vpack.c.b16 %v868, %v864
        %v1045 = vpack.c.b16 %v869, %v865
        %v1046 = vpack.c.b16 %v874, %v870
        %v1047 = vpack.c.b16 %v875, %v871
        %v1048 = vpack.c.b16 %v876, %v872
        %v1049 = vpack.c.b16 %v877, %v873
        %v1050 = vpack.c.b16 %v882, %v878
        %v1051 = vpack.c.b16 %v883, %v879
        %v1052 = vpack.c.b16 %v884, %v880
        %v1053 = vpack.c.b16 %v885, %v881
        %v1054 = vpack.c.b16 %v890, %v886
        %v1055 = vpack.c.b16 %v891, %v887
        %v1056 = vpack.c.b16 %v892, %v888
        %v1057 = vpack.c.b16 %v893, %v889
        %v1058 = vpack.c.b16 %v898, %v894
        %v1059 = vpack.c.b16 %v899, %v895
        %v1060 = vpack.c.b16 %v900, %v896
        %v1061 = vpack.c.b16 %v901, %v897
        %v1062 = vpack.c.b16 %v906, %v902
        %v1063 = vpack.c.b16 %v907, %v903
        %v1064 = vpack.c.b16 %v908, %v904
        %v1065 = vpack.c.b16 %v909, %v905
        %v1066 = vpack.c.b16 %v914, %v910
        %v1067 = vpack.c.b16 %v915, %v911
        %v1068 = vpack.c.b16 %v916, %v912
        %v1069 = vpack.c.b16 %v917, %v913
        %v1070 = vpack.c.b16 %v922, %v918
        %v1071 = vpack.c.b16 %v923, %v919
        %v1072 = vpack.c.b16 %v924, %v920
        %v1073 = vpack.c.b16 %v925, %v921
        %v1074 = vpack.c.b16 %v930, %v926
        %v1075 = vpack.c.b16 %v931, %v927
        %v1076 = vpack.c.b16 %v932, %v928
        %v1077 = vpack.c.b16 %v933, %v929
        %v1078 = vpack.c.b16 %v938, %v934
        %v1079 = vpack.c.b16 %v939, %v935
        %v1080 = vpack.c.b16 %v940, %v936
        %v1081 = vpack.c.b16 %v941, %v937
        %v1082 = vpack.c.b16 %v946, %v942
        %v1083 = vpack.c.b16 %v947, %v943
        %v1084 = vpack.c.b16 %v948, %v944
        %v1085 = vpack.c.b16 %v949, %v945
        %v1086 = vpack.c.b16 %v954, %v950
        %v1087 = vpack.c.b16 %v955, %v951
        %v1088 = vpack.c.b16 %v956, %v952
        %v1089 = vpack.c.b16 %v957, %v953
        %v1090 = vpack.c.b16 %v962, %v958
        %v1091 = vpack.c.b16 %v963, %v959
        %v1092 = vpack.c.b16 %v964, %v960
        %v1093 = vpack.c.b16 %v965, %v961
        %1222 = vmatpush.bf16.msra.mxu0 %v994
        %1223 = vmatpush.bf16.msra.mxu0 %v990
        %1224 = vmatpush.bf16.msra.mxu0 %v986
        %1225 = vmatpush.bf16.msra.mxu0 %v982
        %1226 = vmatpush.bf16.msra.mxu0 %v978
        %1227 = vmatpush.bf16.msra.mxu0 %v974
        %1228 = vmatpush.bf16.msra.mxu0 %v970
        %1229 = vmatpush.bf16.msra.mxu0 %v966
        %1230 = vmatmul.bf16.gmra.mxu0 %v440
        %v1231 = vpop.f32.mrf.mxu0
        %v1232 = vadd.f32 %v574, %v1231
        %v1233 = vpop.f32.mrf.mxu0
        %1234 = vdwg.mxu0
        %1235 = vmatpush.bf16.msra.mxu0 %v1026
        %1236 = vmatpush.bf16.msra.mxu0 %v1022
        %1237 = vmatpush.bf16.msra.mxu0 %v1018
        %1238 = vmatpush.bf16.msra.mxu0 %v1014
        %1239 = vmatpush.bf16.msra.mxu0 %v1010
        %1240 = vmatpush.bf16.msra.mxu0 %v1006
        %1241 = vmatpush.bf16.msra.mxu0 %v1002
        %1242 = vmatpush.bf16.msra.mxu0 %v998
        %1243 = vmatmul.bf16.gmra.mxu0 %v441
        %v1244 = vpop.f32.mrf.mxu0
        %v1245 = vadd.f32 %v1232, %v1244
        %v1246 = vpop.f32.mrf.mxu0
        %1247 = vdwg.mxu0
        %1248 = vmatpush.bf16.msra.mxu0 %v1058
        %1249 = vmatpush.bf16.msra.mxu0 %v1054
        %1250 = vmatpush.bf16.msra.mxu0 %v1050
        %1251 = vmatpush.bf16.msra.mxu0 %v1046
        %1252 = vmatpush.bf16.msra.mxu0 %v1042
        %1253 = vmatpush.bf16.msra.mxu0 %v1038
        %1254 = vmatpush.bf16.msra.mxu0 %v1034
        %1255 = vmatpush.bf16.msra.mxu0 %v1030
        %1256 = vmatmul.bf16.gmra.mxu0 %v442
        %v1257 = vpop.f32.mrf.mxu0
        %v1258 = vadd.f32 %v1245, %v1257
        %v1259 = vpop.f32.mrf.mxu0
        %1260 = vdwg.mxu0
        %1261 = vmatpush.bf16.msra.mxu0 %v1090
        %1262 = vmatpush.bf16.msra.mxu0 %v1086
        %1263 = vmatpush.bf16.msra.mxu0 %v1082
        %1264 = vmatpush.bf16.msra.mxu0 %v1078
        %1265 = vmatpush.bf16.msra.mxu0 %v1074
        %1266 = vmatpush.bf16.msra.mxu0 %v1070
        %1267 = vmatpush.bf16.msra.mxu0 %v1066
        %1268 = vmatpush.bf16.msra.mxu0 %v1062
        %1269 = vmatmul.bf16.gmra.mxu0 %v443
        %v1270 = vpop.f32.mrf.mxu0
        %v1271 = vadd.f32 %v1258, %v1270
        %v1272 = vpop.f32.mrf.mxu0
        %1273 = vdwg.mxu0
        %1274 = vmatpush.bf16.msra.mxu0 %v995
        %1275 = vmatpush.bf16.msra.mxu0 %v991
        %1276 = vmatpush.bf16.msra.mxu0 %v987
        %1277 = vmatpush.bf16.msra.mxu0 %v983
        %1278 = vmatpush.bf16.msra.mxu0 %v979
        %1279 = vmatpush.bf16.msra.mxu0 %v975
        %1280 = vmatpush.bf16.msra.mxu0 %v971
        %1281 = vmatpush.bf16.msra.mxu0 %v967
        %1282 = vmatmul.bf16.gmra.mxu0 %v440
        %v1283 = vpop.f32.mrf.mxu0
        %v1284 = vadd.f32 %v575, %v1283
        %v1285 = vpop.f32.mrf.mxu0
        %1286 = vdwg.mxu0
        %1287 = vmatpush.bf16.msra.mxu0 %v1027
        %1288 = vmatpush.bf16.msra.mxu0 %v1023
        %1289 = vmatpush.bf16.msra.mxu0 %v1019
        %1290 = vmatpush.bf16.msra.mxu0 %v1015
        %1291 = vmatpush.bf16.msra.mxu0 %v1011
        %1292 = vmatpush.bf16.msra.mxu0 %v1007
        %1293 = vmatpush.bf16.msra.mxu0 %v1003
        %1294 = vmatpush.bf16.msra.mxu0 %v999
        %1295 = vmatmul.bf16.gmra.mxu0 %v441
        %v1296 = vpop.f32.mrf.mxu0
        %v1297 = vadd.f32 %v1284, %v1296
        %v1298 = vpop.f32.mrf.mxu0
        %1299 = vdwg.mxu0
        %1300 = vmatpush.bf16.msra.mxu0 %v1059
        %1301 = vmatpush.bf16.msra.mxu0 %v1055
        %1302 = vmatpush.bf16.msra.mxu0 %v1051
        %1303 = vmatpush.bf16.msra.mxu0 %v1047
        %1304 = vmatpush.bf16.msra.mxu0 %v1043
        %1305 = vmatpush.bf16.msra.mxu0 %v1039
        %1306 = vmatpush.bf16.msra.mxu0 %v1035
        %1307 = vmatpush.bf16.msra.mxu0 %v1031
        %1308 = vmatmul.bf16.gmra.mxu0 %v442
        %v1309 = vpop.f32.mrf.mxu0
        %v1310 = vadd.f32 %v1297, %v1309
        %v1311 = vpop.f32.mrf.mxu0
        %1312 = vdwg.mxu0
        %1313 = vmatpush.bf16.msra.mxu0 %v1091
        %1314 = vmatpush.bf16.msra.mxu0 %v1087
        %1315 = vmatpush.bf16.msra.mxu0 %v1083
        %1316 = vmatpush.bf16.msra.mxu0 %v1079
        %1317 = vmatpush.bf16.msra.mxu0 %v1075
        %1318 = vmatpush.bf16.msra.mxu0 %v1071
        %1319 = vmatpush.bf16.msra.mxu0 %v1067
        %1320 = vmatpush.bf16.msra.mxu0 %v1063
        %1321 = vmatmul.bf16.gmra.mxu0 %v443
        %v1322 = vpop.f32.mrf.mxu0
        %v1323 = vadd.f32 %v1310, %v1322
        %v1324 = vpop.f32.mrf.mxu0
        %1325 = vdwg.mxu0
        %1326 = vmatpush.bf16.msra.mxu0 %v996
        %1327 = vmatpush.bf16.msra.mxu0 %v992
        %1328 = vmatpush.bf16.msra.mxu0 %v988
        %1329 = vmatpush.bf16.msra.mxu0 %v984
        %1330 = vmatpush.bf16.msra.mxu0 %v980
        %1331 = vmatpush.bf16.msra.mxu0 %v976
        %1332 = vmatpush.bf16.msra.mxu0 %v972
        %1333 = vmatpush.bf16.msra.mxu0 %v968
        %1334 = vmatmul.bf16.gmra.mxu0 %v440
        %v1335 = vpop.f32.mrf.mxu0
        %v1336 = vadd.f32 %v576, %v1335
        %v1337 = vpop.f32.mrf.mxu0
        %1338 = vdwg.mxu0
        %1339 = vmatpush.bf16.msra.mxu0 %v1028
        %1340 = vmatpush.bf16.msra.mxu0 %v1024
        %1341 = vmatpush.bf16.msra.mxu0 %v1020
        %1342 = vmatpush.bf16.msra.mxu0 %v1016
        %1343 = vmatpush.bf16.msra.mxu0 %v1012
        %1344 = vmatpush.bf16.msra.mxu0 %v1008
        %1345 = vmatpush.bf16.msra.mxu0 %v1004
        %1346 = vmatpush.bf16.msra.mxu0 %v1000
        %1347 = vmatmul.bf16.gmra.mxu0 %v441
        %v1348 = vpop.f32.mrf.mxu0
        %v1349 = vadd.f32 %v1336, %v1348
        %v1350 = vpop.f32.mrf.mxu0
        %1351 = vdwg.mxu0
        %1352 = vmatpush.bf16.msra.mxu0 %v1060
        %1353 = vmatpush.bf16.msra.mxu0 %v1056
        %1354 = vmatpush.bf16.msra.mxu0 %v1052
        %1355 = vmatpush.bf16.msra.mxu0 %v1048
        %1356 = vmatpush.bf16.msra.mxu0 %v1044
        %1357 = vmatpush.bf16.msra.mxu0 %v1040
        %1358 = vmatpush.bf16.msra.mxu0 %v1036
        %1359 = vmatpush.bf16.msra.mxu0 %v1032
        %1360 = vmatmul.bf16.gmra.mxu0 %v442
        %v1361 = vpop.f32.mrf.mxu0
        %v1362 = vadd.f32 %v1349, %v1361
        %v1363 = vpop.f32.mrf.mxu0
        %1364 = vdwg.mxu0
        %1365 = vmatpush.bf16.msra.mxu0 %v1092
        %1366 = vmatpush.bf16.msra.mxu0 %v1088
        %1367 = vmatpush.bf16.msra.mxu0 %v1084
        %1368 = vmatpush.bf16.msra.mxu0 %v1080
        %1369 = vmatpush.bf16.msra.mxu0 %v1076
        %1370 = vmatpush.bf16.msra.mxu0 %v1072
        %1371 = vmatpush.bf16.msra.mxu0 %v1068
        %1372 = vmatpush.bf16.msra.mxu0 %v1064
        %1373 = vmatmul.bf16.gmra.mxu0 %v443
        %v1374 = vpop.f32.mrf.mxu0
        %v1375 = vadd.f32 %v1362, %v1374
        %v1376 = vpop.f32.mrf.mxu0
        %1377 = vdwg.mxu0
        %1378 = vmatpush.bf16.msra.mxu0 %v997
        %1379 = vmatpush.bf16.msra.mxu0 %v993
        %1380 = vmatpush.bf16.msra.mxu0 %v989
        %1381 = vmatpush.bf16.msra.mxu0 %v985
        %1382 = vmatpush.bf16.msra.mxu0 %v981
        %1383 = vmatpush.bf16.msra.mxu0 %v977
        %1384 = vmatpush.bf16.msra.mxu0 %v973
        %1385 = vmatpush.bf16.msra.mxu0 %v969
        %1386 = vmatmul.bf16.gmra.mxu0 %v440
        %v1387 = vpop.f32.mrf.mxu0
        %v1388 = vadd.f32 %v577, %v1387
        %v1389 = vpop.f32.mrf.mxu0
        %1390 = vdwg.mxu0
        %1391 = vmatpush.bf16.msra.mxu0 %v1029
        %1392 = vmatpush.bf16.msra.mxu0 %v1025
        %1393 = vmatpush.bf16.msra.mxu0 %v1021
        %1394 = vmatpush.bf16.msra.mxu0 %v1017
        %1395 = vmatpush.bf16.msra.mxu0 %v1013
        %1396 = vmatpush.bf16.msra.mxu0 %v1009
        %1397 = vmatpush.bf16.msra.mxu0 %v1005
        %1398 = vmatpush.bf16.msra.mxu0 %v1001
        %1399 = vmatmul.bf16.gmra.mxu0 %v441
        %v1400 = vpop.f32.mrf.mxu0
        %v1401 = vadd.f32 %v1388, %v1400
        %v1402 = vpop.f32.mrf.mxu0
        %1403 = vdwg.mxu0
        %1404 = vmatpush.bf16.msra.mxu0 %v1061
        %1405 = vmatpush.bf16.msra.mxu0 %v1057
        %1406 = vmatpush.bf16.msra.mxu0 %v1053
        %1407 = vmatpush.bf16.msra.mxu0 %v1049
        %1408 = vmatpush.bf16.msra.mxu0 %v1045
        %1409 = vmatpush.bf16.msra.mxu0 %v1041
        %1410 = vmatpush.bf16.msra.mxu0 %v1037
        %1411 = vmatpush.bf16.msra.mxu0 %v1033
        %1412 = vmatmul.bf16.gmra.mxu0 %v442
        %v1413 = vpop.f32.mrf.mxu0
        %v1414 = vadd.f32 %v1401, %v1413
        %v1415 = vpop.f32.mrf.mxu0
        %1416 = vdwg.mxu0
        %1417 = vmatpush.bf16.msra.mxu0 %v1093
        %1418 = vmatpush.bf16.msra.mxu0 %v1089
        %1419 = vmatpush.bf16.msra.mxu0 %v1085
        %1420 = vmatpush.bf16.msra.mxu0 %v1081
        %1421 = vmatpush.bf16.msra.mxu0 %v1077
        %1422 = vmatpush.bf16.msra.mxu0 %v1073
        %1423 = vmatpush.bf16.msra.mxu0 %v1069
        %1424 = vmatpush.bf16.msra.mxu0 %v1065
        %1425 = vmatmul.bf16.gmra.mxu0 %v443
        %v1426 = vpop.f32.mrf.mxu0
        %v1427 = vadd.f32 %v1414, %v1426
        %v1428 = vpop.f32.mrf.mxu0
        %1429 = vdwg.mxu0
        %v1430 = vmax.f32 %v1271, 0.0
        %v1431 = vmax.f32 %v1323, 0.0
        %v1432 = vmax.f32 %v1375, 0.0
        %v1433 = vmax.f32 %v1427, 0.0
        %v1435 = vsel %vm390, %v1430, 0
        %v1438 = vsel %vm390, %v1431, 0
        %1440 = vmatpush.msra.mxu0 0.0
        %1441 = vmatpush.msra.mxu0 0.0
        %1442 = vmatpush.msra.mxu0 0.0
        %1443 = vmatpush.msra.mxu0 0.0
        %1444 = vmatpush.msra.mxu0 0.0
        %1445 = vmatpush.msra.mxu0 0.0
        %1446 = vmatpush.msra.mxu0 0.0
        %1447 = vmatpush.msra.mxu0 0.0
        %1448 = vmatpush.msra.mxu0 0.0
        %1449 = vmatpush.msra.mxu0 0.0
        %1450 = vmatpush.msra.mxu0 0.0
        %1451 = vmatpush.msra.mxu0 0.0
        %1452 = vmatpush.msra.mxu0 0.0
        %1453 = vmatpush.msra.mxu0 0.0
        %1454 = vmatpush.msra.mxu0 0.0
        %1455 = vmatpush.msra.mxu0 %v1435
        %1456 = vmatmul.f32.gmra.mxu0 %v388
        %v1457 = vpop.f32.mrf.mxu0
        %v1458 = vadd.f32 0.0, %v1457
        %1459 = vdwg.mxu0
        %1460 = vmatpush.msra.mxu0 0.0
        %1461 = vmatpush.msra.mxu0 0.0
        %1462 = vmatpush.msra.mxu0 0.0
        %1463 = vmatpush.msra.mxu0 0.0
        %1464 = vmatpush.msra.mxu0 0.0
        %1465 = vmatpush.msra.mxu0 0.0
        %1466 = vmatpush.msra.mxu0 0.0
        %1467 = vmatpush.msra.mxu0 0.0
        %1468 = vmatpush.msra.mxu0 0.0
        %1469 = vmatpush.msra.mxu0 0.0
        %1470 = vmatpush.msra.mxu0 0.0
        %1471 = vmatpush.msra.mxu0 0.0
        %1472 = vmatpush.msra.mxu0 0.0
        %1473 = vmatpush.msra.mxu0 0.0
        %1474 = vmatpush.msra.mxu0 0.0
        %1475 = vmatpush.msra.mxu0 %v1438
        %1476 = vmatmul.f32.gmra.mxu0 %v388
        %v1477 = vpop.f32.mrf.mxu0
        %v1478 = vadd.f32 0.0, %v1477
        %1479 = vdwg.mxu0
        %v1480 = vpack.c.bf16 %v1430, %v1430
        %v1481 = vpack.c.bf16 %v1431, %v1431
        %v1482 = vpack.c.bf16 %v1432, %v1432
        %v1483 = vpack.c.bf16 %v1433, %v1433
        %v1484 = vpack.c.bf16 %v1458, %v1458
        %v1485 = vpack.c.bf16 %v1478, %v1478
        %v1486 = vld [vmem:[#allocation6] sm:$0xff]
        %v1487 = vld [vmem:[#allocation6 + $0x8] sm:$0xff]
        %v1488 = vld [vmem:[#allocation6 + $0x10] sm:$0xff]
        %v1489 = vld [vmem:[#allocation6 + $0x18] sm:$0xff]
        %v1490 = vld [vmem:[#allocation6 + $0x20] sm:$0xff]
        %v1491 = vld [vmem:[#allocation6 + $0x28] sm:$0xff]
        %v1492 = vld [vmem:[#allocation6 + $0x30] sm:$0xff]
        %v1493 = vld [vmem:[#allocation6 + $0x38] sm:$0xff]
        %v1494 = vld [vmem:[#allocation6 + $0x40] sm:$0xff]
        %v1495 = vld [vmem:[#allocation6 + $0x48] sm:$0xff]
        %v1496 = vld [vmem:[#allocation6 + $0x50] sm:$0xff]
        %v1497 = vld [vmem:[#allocation6 + $0x58] sm:$0xff]
        %v1498 = vld [vmem:[#allocation6 + $0x60] sm:$0xff]
        %v1499 = vld [vmem:[#allocation6 + $0x68] sm:$0xff]
        %v1500 = vld [vmem:[#allocation6 + $0x70] sm:$0xff]
        %v1501 = vld [vmem:[#allocation6 + $0x78] sm:$0xff]
        %v1502 = vld [vmem:[#allocation6 + $0x80] sm:$0xff]
        %v1503 = vld [vmem:[#allocation6 + $0x88] sm:$0xff]
        %v1504 = vld [vmem:[#allocation6 + $0x90] sm:$0xff]
        %v1505 = vld [vmem:[#allocation6 + $0x98] sm:$0xff]
        %v1506 = vld [vmem:[#allocation6 + $0xa0] sm:$0xff]
        %v1507 = vld [vmem:[#allocation6 + $0xa8] sm:$0xff]
        %v1508 = vld [vmem:[#allocation6 + $0xb0] sm:$0xff]
        %v1509 = vld [vmem:[#allocation6 + $0xb8] sm:$0xff]
        %v1510 = vld [vmem:[#allocation6 + $0xc0] sm:$0xff]
        %v1511 = vld [vmem:[#allocation6 + $0xc8] sm:$0xff]
        %v1512 = vld [vmem:[#allocation6 + $0xd0] sm:$0xff]
        %v1513 = vld [vmem:[#allocation6 + $0xd8] sm:$0xff]
        %v1514 = vld [vmem:[#allocation6 + $0xe0] sm:$0xff]
        %v1515 = vld [vmem:[#allocation6 + $0xe8] sm:$0xff]
        %v1516 = vld [vmem:[#allocation6 + $0xf0] sm:$0xff]
        %v1517 = vld [vmem:[#allocation6 + $0xf8] sm:$0xff]
        %v1518 = vld [vmem:[#allocation6 + $0x100] sm:$0xff]
        %v1519 = vld [vmem:[#allocation6 + $0x108] sm:$0xff]
        %v1520 = vld [vmem:[#allocation6 + $0x110] sm:$0xff]
        %v1521 = vld [vmem:[#allocation6 + $0x118] sm:$0xff]
        %v1522 = vld [vmem:[#allocation6 + $0x120] sm:$0xff]
        %v1523 = vld [vmem:[#allocation6 + $0x128] sm:$0xff]
        %v1524 = vld [vmem:[#allocation6 + $0x130] sm:$0xff]
        %v1525 = vld [vmem:[#allocation6 + $0x138] sm:$0xff]
        %v1526 = vld [vmem:[#allocation6 + $0x140] sm:$0xff]
        %v1527 = vld [vmem:[#allocation6 + $0x148] sm:$0xff]
        %v1528 = vld [vmem:[#allocation6 + $0x150] sm:$0xff]
        %v1529 = vld [vmem:[#allocation6 + $0x158] sm:$0xff]
        %v1530 = vld [vmem:[#allocation6 + $0x160] sm:$0xff]
        %v1531 = vld [vmem:[#allocation6 + $0x168] sm:$0xff]
        %v1532 = vld [vmem:[#allocation6 + $0x170] sm:$0xff]
        %v1533 = vld [vmem:[#allocation6 + $0x178] sm:$0xff]
        %v1534 = vld [vmem:[#allocation6 + $0x180] sm:$0xff]
        %v1535 = vld [vmem:[#allocation6 + $0x188] sm:$0xff]
        %v1536 = vld [vmem:[#allocation6 + $0x190] sm:$0xff]
        %v1537 = vld [vmem:[#allocation6 + $0x198] sm:$0xff]
        %v1538 = vld [vmem:[#allocation6 + $0x1a0] sm:$0xff]
        %v1539 = vld [vmem:[#allocation6 + $0x1a8] sm:$0xff]
        %v1540 = vld [vmem:[#allocation6 + $0x1b0] sm:$0xff]
        %v1541 = vld [vmem:[#allocation6 + $0x1b8] sm:$0xff]
        %v1542 = vld [vmem:[#allocation6 + $0x1c0] sm:$0xff]
        %v1543 = vld [vmem:[#allocation6 + $0x1c8] sm:$0xff]
        %v1544 = vld [vmem:[#allocation6 + $0x1d0] sm:$0xff]
        %v1545 = vld [vmem:[#allocation6 + $0x1d8] sm:$0xff]
        %v1546 = vld [vmem:[#allocation6 + $0x1e0] sm:$0xff]
        %v1547 = vld [vmem:[#allocation6 + $0x1e8] sm:$0xff]
        %v1548 = vld [vmem:[#allocation6 + $0x1f0] sm:$0xff]
        %v1549 = vld [vmem:[#allocation6 + $0x1f8] sm:$0xff]
        %v1550 = vld [vmem:[#allocation6 + $0x200] sm:$0xff]
        %v1551 = vld [vmem:[#allocation6 + $0x208] sm:$0xff]
        %v1552 = vld [vmem:[#allocation6 + $0x210] sm:$0xff]
        %v1553 = vld [vmem:[#allocation6 + $0x218] sm:$0xff]
        %v1554 = vld [vmem:[#allocation6 + $0x220] sm:$0xff]
        %v1555 = vld [vmem:[#allocation6 + $0x228] sm:$0xff]
        %v1556 = vld [vmem:[#allocation6 + $0x230] sm:$0xff]
        %v1557 = vld [vmem:[#allocation6 + $0x238] sm:$0xff]
        %v1558 = vld [vmem:[#allocation6 + $0x240] sm:$0xff]
        %v1559 = vld [vmem:[#allocation6 + $0x248] sm:$0xff]
        %v1560 = vld [vmem:[#allocation6 + $0x250] sm:$0xff]
        %v1561 = vld [vmem:[#allocation6 + $0x258] sm:$0xff]
        %v1562 = vld [vmem:[#allocation6 + $0x260] sm:$0xff]
        %v1563 = vld [vmem:[#allocation6 + $0x268] sm:$0xff]
        %v1564 = vld [vmem:[#allocation6 + $0x270] sm:$0xff]
        %v1565 = vld [vmem:[#allocation6 + $0x278] sm:$0xff]
        %v1566 = vld [vmem:[#allocation6 + $0x280] sm:$0xff]
        %v1567 = vld [vmem:[#allocation6 + $0x288] sm:$0xff]
        %v1568 = vld [vmem:[#allocation6 + $0x290] sm:$0xff]
        %v1569 = vld [vmem:[#allocation6 + $0x298] sm:$0xff]
        %v1570 = vld [vmem:[#allocation6 + $0x2a0] sm:$0xff]
        %v1571 = vld [vmem:[#allocation6 + $0x2a8] sm:$0xff]
        %v1572 = vld [vmem:[#allocation6 + $0x2b0] sm:$0xff]
        %v1573 = vld [vmem:[#allocation6 + $0x2b8] sm:$0xff]
        %v1574 = vld [vmem:[#allocation6 + $0x2c0] sm:$0xff]
        %v1575 = vld [vmem:[#allocation6 + $0x2c8] sm:$0xff]
        %v1576 = vld [vmem:[#allocation6 + $0x2d0] sm:$0xff]
        %v1577 = vld [vmem:[#allocation6 + $0x2d8] sm:$0xff]
        %v1578 = vld [vmem:[#allocation6 + $0x2e0] sm:$0xff]
        %v1579 = vld [vmem:[#allocation6 + $0x2e8] sm:$0xff]
        %v1580 = vld [vmem:[#allocation6 + $0x2f0] sm:$0xff]
        %v1581 = vld [vmem:[#allocation6 + $0x2f8] sm:$0xff]
        %v1582 = vld [vmem:[#allocation6 + $0x300] sm:$0xff]
        %v1583 = vld [vmem:[#allocation6 + $0x308] sm:$0xff]
        %v1584 = vld [vmem:[#allocation6 + $0x310] sm:$0xff]
        %v1585 = vld [vmem:[#allocation6 + $0x318] sm:$0xff]
        %v1586 = vld [vmem:[#allocation6 + $0x320] sm:$0xff]
        %v1587 = vld [vmem:[#allocation6 + $0x328] sm:$0xff]
        %v1588 = vld [vmem:[#allocation6 + $0x330] sm:$0xff]
        %v1589 = vld [vmem:[#allocation6 + $0x338] sm:$0xff]
        %v1590 = vld [vmem:[#allocation6 + $0x340] sm:$0xff]
        %v1591 = vld [vmem:[#allocation6 + $0x348] sm:$0xff]
        %v1592 = vld [vmem:[#allocation6 + $0x350] sm:$0xff]
        %v1593 = vld [vmem:[#allocation6 + $0x358] sm:$0xff]
        %v1594 = vld [vmem:[#allocation6 + $0x360] sm:$0xff]
        %v1595 = vld [vmem:[#allocation6 + $0x368] sm:$0xff]
        %v1596 = vld [vmem:[#allocation6 + $0x370] sm:$0xff]
        %v1597 = vld [vmem:[#allocation6 + $0x378] sm:$0xff]
        %v1598 = vld [vmem:[#allocation6 + $0x380] sm:$0xff]
        %v1599 = vld [vmem:[#allocation6 + $0x388] sm:$0xff]
        %v1600 = vld [vmem:[#allocation6 + $0x390] sm:$0xff]
        %v1601 = vld [vmem:[#allocation6 + $0x398] sm:$0xff]
        %v1602 = vld [vmem:[#allocation6 + $0x3a0] sm:$0xff]
        %v1603 = vld [vmem:[#allocation6 + $0x3a8] sm:$0xff]
        %v1604 = vld [vmem:[#allocation6 + $0x3b0] sm:$0xff]
        %v1605 = vld [vmem:[#allocation6 + $0x3b8] sm:$0xff]
        %v1606 = vld [vmem:[#allocation6 + $0x3c0] sm:$0xff]
        %v1607 = vld [vmem:[#allocation6 + $0x3c8] sm:$0xff]
        %v1608 = vld [vmem:[#allocation6 + $0x3d0] sm:$0xff]
        %v1609 = vld [vmem:[#allocation6 + $0x3d8] sm:$0xff]
        %v1610 = vld [vmem:[#allocation6 + $0x3e0] sm:$0xff]
        %v1611 = vld [vmem:[#allocation6 + $0x3e8] sm:$0xff]
        %v1612 = vld [vmem:[#allocation6 + $0x3f0] sm:$0xff]
        %v1613 = vld [vmem:[#allocation6 + $0x3f8] sm:$0xff]
        %v1614 = vld [vmem:[#allocation6 + $0x400] sm:$0xff]
        %v1615 = vld [vmem:[#allocation6 + $0x408] sm:$0xff]
        %v1616 = vld [vmem:[#allocation6 + $0x410] sm:$0xff]
        %v1617 = vld [vmem:[#allocation6 + $0x418] sm:$0xff]
        %v1618 = vld [vmem:[#allocation6 + $0x420] sm:$0xff]
        %v1619 = vld [vmem:[#allocation6 + $0x428] sm:$0xff]
        %v1620 = vld [vmem:[#allocation6 + $0x430] sm:$0xff]
        %v1621 = vld [vmem:[#allocation6 + $0x438] sm:$0xff]
        %v1622 = vld [vmem:[#allocation6 + $0x440] sm:$0xff]
        %v1623 = vld [vmem:[#allocation6 + $0x448] sm:$0xff]
        %v1624 = vld [vmem:[#allocation6 + $0x450] sm:$0xff]
        %v1625 = vld [vmem:[#allocation6 + $0x458] sm:$0xff]
        %v1626 = vld [vmem:[#allocation6 + $0x460] sm:$0xff]
        %v1627 = vld [vmem:[#allocation6 + $0x468] sm:$0xff]
        %v1628 = vld [vmem:[#allocation6 + $0x470] sm:$0xff]
        %v1629 = vld [vmem:[#allocation6 + $0x478] sm:$0xff]
        %v1630 = vld [vmem:[#allocation6 + $0x480] sm:$0xff]
        %v1631 = vld [vmem:[#allocation6 + $0x488] sm:$0xff]
        %v1632 = vld [vmem:[#allocation6 + $0x490] sm:$0xff]
        %v1633 = vld [vmem:[#allocation6 + $0x498] sm:$0xff]
        %v1634 = vld [vmem:[#allocation6 + $0x4a0] sm:$0xff]
        %v1635 = vld [vmem:[#allocation6 + $0x4a8] sm:$0xff]
        %v1636 = vld [vmem:[#allocation6 + $0x4b0] sm:$0xff]
        %v1637 = vld [vmem:[#allocation6 + $0x4b8] sm:$0xff]
        %v1638 = vld [vmem:[#allocation6 + $0x4c0] sm:$0xff]
        %v1639 = vld [vmem:[#allocation6 + $0x4c8] sm:$0xff]
        %v1640 = vld [vmem:[#allocation6 + $0x4d0] sm:$0xff]
        %v1641 = vld [vmem:[#allocation6 + $0x4d8] sm:$0xff]
        %v1642 = vld [vmem:[#allocation6 + $0x4e0] sm:$0xff]
        %v1643 = vld [vmem:[#allocation6 + $0x4e8] sm:$0xff]
        %v1644 = vld [vmem:[#allocation6 + $0x4f0] sm:$0xff]
        %v1645 = vld [vmem:[#allocation6 + $0x4f8] sm:$0xff]
        %v1646 = vld [vmem:[#allocation6 + $0x500] sm:$0xff]
        %v1647 = vld [vmem:[#allocation6 + $0x508] sm:$0xff]
        %v1648 = vld [vmem:[#allocation6 + $0x510] sm:$0xff]
        %v1649 = vld [vmem:[#allocation6 + $0x518] sm:$0xff]
        %v1650 = vld [vmem:[#allocation6 + $0x520] sm:$0xff]
        %v1651 = vld [vmem:[#allocation6 + $0x528] sm:$0xff]
        %v1652 = vld [vmem:[#allocation6 + $0x530] sm:$0xff]
        %v1653 = vld [vmem:[#allocation6 + $0x538] sm:$0xff]
        %v1654 = vld [vmem:[#allocation6 + $0x540] sm:$0xff]
        %v1655 = vld [vmem:[#allocation6 + $0x548] sm:$0xff]
        %v1656 = vld [vmem:[#allocation6 + $0x550] sm:$0xff]
        %v1657 = vld [vmem:[#allocation6 + $0x558] sm:$0xff]
        %v1658 = vld [vmem:[#allocation6 + $0x560] sm:$0xff]
        %v1659 = vld [vmem:[#allocation6 + $0x568] sm:$0xff]
        %v1660 = vld [vmem:[#allocation6 + $0x570] sm:$0xff]
        %v1661 = vld [vmem:[#allocation6 + $0x578] sm:$0xff]
        %v1662 = vld [vmem:[#allocation6 + $0x580] sm:$0xff]
        %v1663 = vld [vmem:[#allocation6 + $0x588] sm:$0xff]
        %v1664 = vld [vmem:[#allocation6 + $0x590] sm:$0xff]
        %v1665 = vld [vmem:[#allocation6 + $0x598] sm:$0xff]
        %v1666 = vld [vmem:[#allocation6 + $0x5a0] sm:$0xff]
        %v1667 = vld [vmem:[#allocation6 + $0x5a8] sm:$0xff]
        %v1668 = vld [vmem:[#allocation6 + $0x5b0] sm:$0xff]
        %v1669 = vld [vmem:[#allocation6 + $0x5b8] sm:$0xff]
        %v1670 = vld [vmem:[#allocation6 + $0x5c0] sm:$0xff]
        %v1671 = vld [vmem:[#allocation6 + $0x5c8] sm:$0xff]
        %v1672 = vld [vmem:[#allocation6 + $0x5d0] sm:$0xff]
        %v1673 = vld [vmem:[#allocation6 + $0x5d8] sm:$0xff]
        %v1674 = vld [vmem:[#allocation6 + $0x5e0] sm:$0xff]
        %v1675 = vld [vmem:[#allocation6 + $0x5e8] sm:$0xff]
        %v1676 = vld [vmem:[#allocation6 + $0x5f0] sm:$0xff]
        %v1677 = vld [vmem:[#allocation6 + $0x5f8] sm:$0xff]
        %v1678 = vld [vmem:[#allocation6 + $0x600] sm:$0xff]
        %v1679 = vld [vmem:[#allocation6 + $0x608] sm:$0xff]
        %v1680 = vld [vmem:[#allocation6 + $0x610] sm:$0xff]
        %v1681 = vld [vmem:[#allocation6 + $0x618] sm:$0xff]
        %v1682 = vld [vmem:[#allocation6 + $0x620] sm:$0xff]
        %v1683 = vld [vmem:[#allocation6 + $0x628] sm:$0xff]
        %v1684 = vld [vmem:[#allocation6 + $0x630] sm:$0xff]
        %v1685 = vld [vmem:[#allocation6 + $0x638] sm:$0xff]
        %v1686 = vld [vmem:[#allocation6 + $0x640] sm:$0xff]
        %v1687 = vld [vmem:[#allocation6 + $0x648] sm:$0xff]
        %v1688 = vld [vmem:[#allocation6 + $0x650] sm:$0xff]
        %v1689 = vld [vmem:[#allocation6 + $0x658] sm:$0xff]
        %v1690 = vld [vmem:[#allocation6 + $0x660] sm:$0xff]
        %v1691 = vld [vmem:[#allocation6 + $0x668] sm:$0xff]
        %v1692 = vld [vmem:[#allocation6 + $0x670] sm:$0xff]
        %v1693 = vld [vmem:[#allocation6 + $0x678] sm:$0xff]
        %v1694 = vld [vmem:[#allocation6 + $0x680] sm:$0xff]
        %v1695 = vld [vmem:[#allocation6 + $0x688] sm:$0xff]
        %v1696 = vld [vmem:[#allocation6 + $0x690] sm:$0xff]
        %v1697 = vld [vmem:[#allocation6 + $0x698] sm:$0xff]
        %v1698 = vld [vmem:[#allocation6 + $0x6a0] sm:$0xff]
        %v1699 = vld [vmem:[#allocation6 + $0x6a8] sm:$0xff]
        %v1700 = vld [vmem:[#allocation6 + $0x6b0] sm:$0xff]
        %v1701 = vld [vmem:[#allocation6 + $0x6b8] sm:$0xff]
        %v1702 = vld [vmem:[#allocation6 + $0x6c0] sm:$0xff]
        %v1703 = vld [vmem:[#allocation6 + $0x6c8] sm:$0xff]
        %v1704 = vld [vmem:[#allocation6 + $0x6d0] sm:$0xff]
        %v1705 = vld [vmem:[#allocation6 + $0x6d8] sm:$0xff]
        %v1706 = vld [vmem:[#allocation6 + $0x6e0] sm:$0xff]
        %v1707 = vld [vmem:[#allocation6 + $0x6e8] sm:$0xff]
        %v1708 = vld [vmem:[#allocation6 + $0x6f0] sm:$0xff]
        %v1709 = vld [vmem:[#allocation6 + $0x6f8] sm:$0xff]
        %v1710 = vld [vmem:[#allocation6 + $0x700] sm:$0xff]
        %v1711 = vld [vmem:[#allocation6 + $0x708] sm:$0xff]
        %v1712 = vld [vmem:[#allocation6 + $0x710] sm:$0xff]
        %v1713 = vld [vmem:[#allocation6 + $0x718] sm:$0xff]
        %v1714 = vld [vmem:[#allocation6 + $0x720] sm:$0xff]
        %v1715 = vld [vmem:[#allocation6 + $0x728] sm:$0xff]
        %v1716 = vld [vmem:[#allocation6 + $0x730] sm:$0xff]
        %v1717 = vld [vmem:[#allocation6 + $0x738] sm:$0xff]
        %v1718 = vld [vmem:[#allocation6 + $0x740] sm:$0xff]
        %v1719 = vld [vmem:[#allocation6 + $0x748] sm:$0xff]
        %v1720 = vld [vmem:[#allocation6 + $0x750] sm:$0xff]
        %v1721 = vld [vmem:[#allocation6 + $0x758] sm:$0xff]
        %v1722 = vld [vmem:[#allocation6 + $0x760] sm:$0xff]
        %v1723 = vld [vmem:[#allocation6 + $0x768] sm:$0xff]
        %v1724 = vld [vmem:[#allocation6 + $0x770] sm:$0xff]
        %v1725 = vld [vmem:[#allocation6 + $0x778] sm:$0xff]
        %v1726 = vld [vmem:[#allocation6 + $0x780] sm:$0xff]
        %v1727 = vld [vmem:[#allocation6 + $0x788] sm:$0xff]
        %v1728 = vld [vmem:[#allocation6 + $0x790] sm:$0xff]
        %v1729 = vld [vmem:[#allocation6 + $0x798] sm:$0xff]
        %v1730 = vld [vmem:[#allocation6 + $0x7a0] sm:$0xff]
        %v1731 = vld [vmem:[#allocation6 + $0x7a8] sm:$0xff]
        %v1732 = vld [vmem:[#allocation6 + $0x7b0] sm:$0xff]
        %v1733 = vld [vmem:[#allocation6 + $0x7b8] sm:$0xff]
        %v1734 = vld [vmem:[#allocation6 + $0x7c0] sm:$0xff]
        %v1735 = vld [vmem:[#allocation6 + $0x7c8] sm:$0xff]
        %v1736 = vld [vmem:[#allocation6 + $0x7d0] sm:$0xff]
        %v1737 = vld [vmem:[#allocation6 + $0x7d8] sm:$0xff]
        %v1738 = vld [vmem:[#allocation6 + $0x7e0] sm:$0xff]
        %v1739 = vld [vmem:[#allocation6 + $0x7e8] sm:$0xff]
        %v1740 = vld [vmem:[#allocation6 + $0x7f0] sm:$0xff]
        %v1741 = vld [vmem:[#allocation6 + $0x7f8] sm:$0xff]
        %v1742 = vld [vmem:[#allocation6 + $0x800] sm:$0xff]
        %v1743 = vld [vmem:[#allocation6 + $0x808] sm:$0xff]
        %v1744 = vld [vmem:[#allocation6 + $0x810] sm:$0xff]
        %v1745 = vld [vmem:[#allocation6 + $0x818] sm:$0xff]
        %v1746 = vld [vmem:[#allocation6 + $0x820] sm:$0xff]
        %v1747 = vld [vmem:[#allocation6 + $0x828] sm:$0xff]
        %v1748 = vld [vmem:[#allocation6 + $0x830] sm:$0xff]
        %v1749 = vld [vmem:[#allocation6 + $0x838] sm:$0xff]
        %v1750 = vld [vmem:[#allocation6 + $0x840] sm:$0xff]
        %v1751 = vld [vmem:[#allocation6 + $0x848] sm:$0xff]
        %v1752 = vld [vmem:[#allocation6 + $0x850] sm:$0xff]
        %v1753 = vld [vmem:[#allocation6 + $0x858] sm:$0xff]
        %v1754 = vld [vmem:[#allocation6 + $0x860] sm:$0xff]
        %v1755 = vld [vmem:[#allocation6 + $0x868] sm:$0xff]
        %v1756 = vld [vmem:[#allocation6 + $0x870] sm:$0xff]
        %v1757 = vld [vmem:[#allocation6 + $0x878] sm:$0xff]
        %v1758 = vld [vmem:[#allocation6 + $0x880] sm:$0xff]
        %v1759 = vld [vmem:[#allocation6 + $0x888] sm:$0xff]
        %v1760 = vld [vmem:[#allocation6 + $0x890] sm:$0xff]
        %v1761 = vld [vmem:[#allocation6 + $0x898] sm:$0xff]
        %v1762 = vld [vmem:[#allocation6 + $0x8a0] sm:$0xff]
        %v1763 = vld [vmem:[#allocation6 + $0x8a8] sm:$0xff]
        %v1764 = vld [vmem:[#allocation6 + $0x8b0] sm:$0xff]
        %v1765 = vld [vmem:[#allocation6 + $0x8b8] sm:$0xff]
        %v1766 = vld [vmem:[#allocation6 + $0x8c0] sm:$0xff]
        %v1767 = vld [vmem:[#allocation6 + $0x8c8] sm:$0xff]
        %v1768 = vld [vmem:[#allocation6 + $0x8d0] sm:$0xff]
        %v1769 = vld [vmem:[#allocation6 + $0x8d8] sm:$0xff]
        %v1770 = vld [vmem:[#allocation6 + $0x8e0] sm:$0xff]
        %v1771 = vld [vmem:[#allocation6 + $0x8e8] sm:$0xff]
        %v1772 = vld [vmem:[#allocation6 + $0x8f0] sm:$0xff]
        %v1773 = vld [vmem:[#allocation6 + $0x8f8] sm:$0xff]
        %v1774 = vld [vmem:[#allocation6 + $0x900] sm:$0xff]
        %v1775 = vld [vmem:[#allocation6 + $0x908] sm:$0xff]
        %v1776 = vld [vmem:[#allocation6 + $0x910] sm:$0xff]
        %v1777 = vld [vmem:[#allocation6 + $0x918] sm:$0xff]
        %v1778 = vld [vmem:[#allocation6 + $0x920] sm:$0xff]
        %v1779 = vld [vmem:[#allocation6 + $0x928] sm:$0xff]
        %v1780 = vld [vmem:[#allocation6 + $0x930] sm:$0xff]
        %v1781 = vld [vmem:[#allocation6 + $0x938] sm:$0xff]
        %v1782 = vld [vmem:[#allocation6 + $0x940] sm:$0xff]
        %v1783 = vld [vmem:[#allocation6 + $0x948] sm:$0xff]
        %v1784 = vld [vmem:[#allocation6 + $0x950] sm:$0xff]
        %v1785 = vld [vmem:[#allocation6 + $0x958] sm:$0xff]
        %v1786 = vld [vmem:[#allocation6 + $0x960] sm:$0xff]
        %v1787 = vld [vmem:[#allocation6 + $0x968] sm:$0xff]
        %v1788 = vld [vmem:[#allocation6 + $0x970] sm:$0xff]
        %v1789 = vld [vmem:[#allocation6 + $0x978] sm:$0xff]
        %v1790 = vld [vmem:[#allocation6 + $0x980] sm:$0xff]
        %v1791 = vld [vmem:[#allocation6 + $0x988] sm:$0xff]
        %v1792 = vld [vmem:[#allocation6 + $0x990] sm:$0xff]
        %v1793 = vld [vmem:[#allocation6 + $0x998] sm:$0xff]
        %v1794 = vld [vmem:[#allocation6 + $0x9a0] sm:$0xff]
        %v1795 = vld [vmem:[#allocation6 + $0x9a8] sm:$0xff]
        %v1796 = vld [vmem:[#allocation6 + $0x9b0] sm:$0xff]
        %v1797 = vld [vmem:[#allocation6 + $0x9b8] sm:$0xff]
        %v1798 = vld [vmem:[#allocation6 + $0x9c0] sm:$0xff]
        %v1799 = vld [vmem:[#allocation6 + $0x9c8] sm:$0xff]
        %v1800 = vld [vmem:[#allocation6 + $0x9d0] sm:$0xff]
        %v1801 = vld [vmem:[#allocation6 + $0x9d8] sm:$0xff]
        %v1802 = vld [vmem:[#allocation6 + $0x9e0] sm:$0xff]
        %v1803 = vld [vmem:[#allocation6 + $0x9e8] sm:$0xff]
        %v1804 = vld [vmem:[#allocation6 + $0x9f0] sm:$0xff]
        %v1805 = vld [vmem:[#allocation6 + $0x9f8] sm:$0xff]
        %v1806 = vld [vmem:[#allocation6 + $0xa00] sm:$0xff]
        %v1807 = vld [vmem:[#allocation6 + $0xa08] sm:$0xff]
        %v1808 = vld [vmem:[#allocation6 + $0xa10] sm:$0xff]
        %v1809 = vld [vmem:[#allocation6 + $0xa18] sm:$0xff]
        %v1810 = vld [vmem:[#allocation6 + $0xa20] sm:$0xff]
        %v1811 = vld [vmem:[#allocation6 + $0xa28] sm:$0xff]
        %v1812 = vld [vmem:[#allocation6 + $0xa30] sm:$0xff]
        %v1813 = vld [vmem:[#allocation6 + $0xa38] sm:$0xff]
        %v1814 = vld [vmem:[#allocation6 + $0xa40] sm:$0xff]
        %v1815 = vld [vmem:[#allocation6 + $0xa48] sm:$0xff]
        %v1816 = vld [vmem:[#allocation6 + $0xa50] sm:$0xff]
        %v1817 = vld [vmem:[#allocation6 + $0xa58] sm:$0xff]
        %v1818 = vld [vmem:[#allocation6 + $0xa60] sm:$0xff]
        %v1819 = vld [vmem:[#allocation6 + $0xa68] sm:$0xff]
        %v1820 = vld [vmem:[#allocation6 + $0xa70] sm:$0xff]
        %v1821 = vld [vmem:[#allocation6 + $0xa78] sm:$0xff]
        %v1822 = vld [vmem:[#allocation6 + $0xa80] sm:$0xff]
        %v1823 = vld [vmem:[#allocation6 + $0xa88] sm:$0xff]
        %v1824 = vld [vmem:[#allocation6 + $0xa90] sm:$0xff]
        %v1825 = vld [vmem:[#allocation6 + $0xa98] sm:$0xff]
        %v1826 = vld [vmem:[#allocation6 + $0xaa0] sm:$0xff]
        %v1827 = vld [vmem:[#allocation6 + $0xaa8] sm:$0xff]
        %v1828 = vld [vmem:[#allocation6 + $0xab0] sm:$0xff]
        %v1829 = vld [vmem:[#allocation6 + $0xab8] sm:$0xff]
        %v1830 = vld [vmem:[#allocation6 + $0xac0] sm:$0xff]
        %v1831 = vld [vmem:[#allocation6 + $0xac8] sm:$0xff]
        %v1832 = vld [vmem:[#allocation6 + $0xad0] sm:$0xff]
        %v1833 = vld [vmem:[#allocation6 + $0xad8] sm:$0xff]
        %v1834 = vld [vmem:[#allocation6 + $0xae0] sm:$0xff]
        %v1835 = vld [vmem:[#allocation6 + $0xae8] sm:$0xff]
        %v1836 = vld [vmem:[#allocation6 + $0xaf0] sm:$0xff]
        %v1837 = vld [vmem:[#allocation6 + $0xaf8] sm:$0xff]
        %v1838 = vld [vmem:[#allocation6 + $0xb00] sm:$0xff]
        %v1839 = vld [vmem:[#allocation6 + $0xb08] sm:$0xff]
        %v1840 = vld [vmem:[#allocation6 + $0xb10] sm:$0xff]
        %v1841 = vld [vmem:[#allocation6 + $0xb18] sm:$0xff]
        %v1842 = vld [vmem:[#allocation6 + $0xb20] sm:$0xff]
        %v1843 = vld [vmem:[#allocation6 + $0xb28] sm:$0xff]
        %v1844 = vld [vmem:[#allocation6 + $0xb30] sm:$0xff]
        %v1845 = vld [vmem:[#allocation6 + $0xb38] sm:$0xff]
        %v1846 = vld [vmem:[#allocation6 + $0xb40] sm:$0xff]
        %v1847 = vld [vmem:[#allocation6 + $0xb48] sm:$0xff]
        %v1848 = vld [vmem:[#allocation6 + $0xb50] sm:$0xff]
        %v1849 = vld [vmem:[#allocation6 + $0xb58] sm:$0xff]
        %v1850 = vld [vmem:[#allocation6 + $0xb60] sm:$0xff]
        %v1851 = vld [vmem:[#allocation6 + $0xb68] sm:$0xff]
        %v1852 = vld [vmem:[#allocation6 + $0xb70] sm:$0xff]
        %v1853 = vld [vmem:[#allocation6 + $0xb78] sm:$0xff]
        %v1854 = vld [vmem:[#allocation6 + $0xb80] sm:$0xff]
        %v1855 = vld [vmem:[#allocation6 + $0xb88] sm:$0xff]
        %v1856 = vld [vmem:[#allocation6 + $0xb90] sm:$0xff]
        %v1857 = vld [vmem:[#allocation6 + $0xb98] sm:$0xff]
        %v1858 = vld [vmem:[#allocation6 + $0xba0] sm:$0xff]
        %v1859 = vld [vmem:[#allocation6 + $0xba8] sm:$0xff]
        %v1860 = vld [vmem:[#allocation6 + $0xbb0] sm:$0xff]
        %v1861 = vld [vmem:[#allocation6 + $0xbb8] sm:$0xff]
        %v1862 = vld [vmem:[#allocation6 + $0xbc0] sm:$0xff]
        %v1863 = vld [vmem:[#allocation6 + $0xbc8] sm:$0xff]
        %v1864 = vld [vmem:[#allocation6 + $0xbd0] sm:$0xff]
        %v1865 = vld [vmem:[#allocation6 + $0xbd8] sm:$0xff]
        %v1866 = vld [vmem:[#allocation6 + $0xbe0] sm:$0xff]
        %v1867 = vld [vmem:[#allocation6 + $0xbe8] sm:$0xff]
        %v1868 = vld [vmem:[#allocation6 + $0xbf0] sm:$0xff]
        %v1869 = vld [vmem:[#allocation6 + $0xbf8] sm:$0xff]
        %v1870 = vld [vmem:[#allocation7] sm:$0xff]
        %v1872 = vperm.slane %v1870, 0
        %v1873 = vperm.slane %v1870, 1
        %v1874 = vperm.slane %v1870, 2
        %v1875 = vperm.slane %v1870, 3
        %v1876 = vperm.slane %v1870, 4
        %v1877 = vperm.slane %v1870, 5
        %v1878 = vperm.slane %v1870, 6
        %v1879 = vperm.slane %v1870, 7
        %v2272 = vunpack.c.l.b16 %v1486
        %v2273 = vunpack.c.h.b16 %v1486
        %v2274 = vunpack.c.l.b16 %v1487
        %v2275 = vunpack.c.h.b16 %v1487
        %v2276 = vunpack.c.l.b16 %v1488
        %v2277 = vunpack.c.h.b16 %v1488
        %v2278 = vunpack.c.l.b16 %v1489
        %v2279 = vunpack.c.h.b16 %v1489
        %v2280 = vunpack.c.l.b16 %v1490
        %v2281 = vunpack.c.h.b16 %v1490
        %v2282 = vunpack.c.l.b16 %v1491
        %v2283 = vunpack.c.h.b16 %v1491
        %v2284 = vunpack.c.l.b16 %v1492
        %v2285 = vunpack.c.h.b16 %v1492
        %v2286 = vunpack.c.l.b16 %v1493
        %v2287 = vunpack.c.h.b16 %v1493
        %v2288 = vunpack.c.l.b16 %v1494
        %v2289 = vunpack.c.h.b16 %v1494
        %v2290 = vunpack.c.l.b16 %v1495
        %v2291 = vunpack.c.h.b16 %v1495
        %v2292 = vunpack.c.l.b16 %v1496
        %v2293 = vunpack.c.h.b16 %v1496
        %v2294 = vunpack.c.l.b16 %v1497
        %v2295 = vunpack.c.h.b16 %v1497
        %v2296 = vunpack.c.l.b16 %v1498
        %v2297 = vunpack.c.h.b16 %v1498
        %v2298 = vunpack.c.l.b16 %v1499
        %v2299 = vunpack.c.h.b16 %v1499
        %v2300 = vunpack.c.l.b16 %v1500
        %v2301 = vunpack.c.h.b16 %v1500
        %v2302 = vunpack.c.l.b16 %v1501
        %v2303 = vunpack.c.h.b16 %v1501
        %v2304 = vunpack.c.l.b16 %v1502
        %v2305 = vunpack.c.h.b16 %v1502
        %v2306 = vunpack.c.l.b16 %v1503
        %v2307 = vunpack.c.h.b16 %v1503
        %v2308 = vunpack.c.l.b16 %v1504
        %v2309 = vunpack.c.h.b16 %v1504
        %v2310 = vunpack.c.l.b16 %v1505
        %v2311 = vunpack.c.h.b16 %v1505
        %v2312 = vunpack.c.l.b16 %v1506
        %v2313 = vunpack.c.h.b16 %v1506
        %v2314 = vunpack.c.l.b16 %v1507
        %v2315 = vunpack.c.h.b16 %v1507
        %v2316 = vunpack.c.l.b16 %v1508
        %v2317 = vunpack.c.h.b16 %v1508
        %v2318 = vunpack.c.l.b16 %v1509
        %v2319 = vunpack.c.h.b16 %v1509
        %v2320 = vunpack.c.l.b16 %v1510
        %v2321 = vunpack.c.h.b16 %v1510
        %v2322 = vunpack.c.l.b16 %v1511
        %v2323 = vunpack.c.h.b16 %v1511
        %v2324 = vunpack.c.l.b16 %v1512
        %v2325 = vunpack.c.h.b16 %v1512
        %v2326 = vunpack.c.l.b16 %v1513
        %v2327 = vunpack.c.h.b16 %v1513
        %v2328 = vunpack.c.l.b16 %v1514
        %v2329 = vunpack.c.h.b16 %v1514
        %v2330 = vunpack.c.l.b16 %v1515
        %v2331 = vunpack.c.h.b16 %v1515
        %v2332 = vunpack.c.l.b16 %v1516
        %v2333 = vunpack.c.h.b16 %v1516
        %v2334 = vunpack.c.l.b16 %v1517
        %v2335 = vunpack.c.h.b16 %v1517
        %v2336 = vunpack.c.l.b16 %v1518
        %v2337 = vunpack.c.h.b16 %v1518
        %v2338 = vunpack.c.l.b16 %v1519
        %v2339 = vunpack.c.h.b16 %v1519
        %v2340 = vunpack.c.l.b16 %v1520
        %v2341 = vunpack.c.h.b16 %v1520
        %v2342 = vunpack.c.l.b16 %v1521
        %v2343 = vunpack.c.h.b16 %v1521
        %v2344 = vunpack.c.l.b16 %v1522
        %v2345 = vunpack.c.h.b16 %v1522
        %v2346 = vunpack.c.l.b16 %v1523
        %v2347 = vunpack.c.h.b16 %v1523
        %v2348 = vunpack.c.l.b16 %v1524
        %v2349 = vunpack.c.h.b16 %v1524
        %v2350 = vunpack.c.l.b16 %v1525
        %v2351 = vunpack.c.h.b16 %v1525
        %v2352 = vunpack.c.l.b16 %v1526
        %v2353 = vunpack.c.h.b16 %v1526
        %v2354 = vunpack.c.l.b16 %v1527
        %v2355 = vunpack.c.h.b16 %v1527
        %v2356 = vunpack.c.l.b16 %v1528
        %v2357 = vunpack.c.h.b16 %v1528
        %v2358 = vunpack.c.l.b16 %v1529
        %v2359 = vunpack.c.h.b16 %v1529
        %v2360 = vunpack.c.l.b16 %v1530
        %v2361 = vunpack.c.h.b16 %v1530
        %v2362 = vunpack.c.l.b16 %v1531
        %v2363 = vunpack.c.h.b16 %v1531
        %v2364 = vunpack.c.l.b16 %v1532
        %v2365 = vunpack.c.h.b16 %v1532
        %v2366 = vunpack.c.l.b16 %v1533
        %v2367 = vunpack.c.h.b16 %v1533
        %v2368 = vunpack.c.l.b16 %v1534
        %v2369 = vunpack.c.h.b16 %v1534
        %v2370 = vunpack.c.l.b16 %v1535
        %v2371 = vunpack.c.h.b16 %v1535
        %v2372 = vunpack.c.l.b16 %v1536
        %v2373 = vunpack.c.h.b16 %v1536
        %v2374 = vunpack.c.l.b16 %v1537
        %v2375 = vunpack.c.h.b16 %v1537
        %v2376 = vunpack.c.l.b16 %v1538
        %v2377 = vunpack.c.h.b16 %v1538
        %v2378 = vunpack.c.l.b16 %v1539
        %v2379 = vunpack.c.h.b16 %v1539
        %v2380 = vunpack.c.l.b16 %v1540
        %v2381 = vunpack.c.h.b16 %v1540
        %v2382 = vunpack.c.l.b16 %v1541
        %v2383 = vunpack.c.h.b16 %v1541
        %v2384 = vunpack.c.l.b16 %v1542
        %v2385 = vunpack.c.h.b16 %v1542
        %v2386 = vunpack.c.l.b16 %v1543
        %v2387 = vunpack.c.h.b16 %v1543
        %v2388 = vunpack.c.l.b16 %v1544
        %v2389 = vunpack.c.h.b16 %v1544
        %v2390 = vunpack.c.l.b16 %v1545
        %v2391 = vunpack.c.h.b16 %v1545
        %v2392 = vunpack.c.l.b16 %v1546
        %v2393 = vunpack.c.h.b16 %v1546
        %v2394 = vunpack.c.l.b16 %v1547
        %v2395 = vunpack.c.h.b16 %v1547
        %v2396 = vunpack.c.l.b16 %v1548
        %v2397 = vunpack.c.h.b16 %v1548
        %v2398 = vunpack.c.l.b16 %v1549
        %v2399 = vunpack.c.h.b16 %v1549
        %v2400 = vunpack.c.l.b16 %v1550
        %v2401 = vunpack.c.h.b16 %v1550
        %v2402 = vunpack.c.l.b16 %v1551
        %v2403 = vunpack.c.h.b16 %v1551
        %v2404 = vunpack.c.l.b16 %v1552
        %v2405 = vunpack.c.h.b16 %v1552
        %v2406 = vunpack.c.l.b16 %v1553
        %v2407 = vunpack.c.h.b16 %v1553
        %v2408 = vunpack.c.l.b16 %v1554
        %v2409 = vunpack.c.h.b16 %v1554
        %v2410 = vunpack.c.l.b16 %v1555
        %v2411 = vunpack.c.h.b16 %v1555
        %v2412 = vunpack.c.l.b16 %v1556
        %v2413 = vunpack.c.h.b16 %v1556
        %v2414 = vunpack.c.l.b16 %v1557
        %v2415 = vunpack.c.h.b16 %v1557
        %v2416 = vunpack.c.l.b16 %v1558
        %v2417 = vunpack.c.h.b16 %v1558
        %v2418 = vunpack.c.l.b16 %v1559
        %v2419 = vunpack.c.h.b16 %v1559
        %v2420 = vunpack.c.l.b16 %v1560
        %v2421 = vunpack.c.h.b16 %v1560
        %v2422 = vunpack.c.l.b16 %v1561
        %v2423 = vunpack.c.h.b16 %v1561
        %v2424 = vunpack.c.l.b16 %v1562
        %v2425 = vunpack.c.h.b16 %v1562
        %v2426 = vunpack.c.l.b16 %v1563
        %v2427 = vunpack.c.h.b16 %v1563
        %v2428 = vunpack.c.l.b16 %v1564
        %v2429 = vunpack.c.h.b16 %v1564
        %v2430 = vunpack.c.l.b16 %v1565
        %v2431 = vunpack.c.h.b16 %v1565
        %v2432 = vunpack.c.l.b16 %v1566
        %v2433 = vunpack.c.h.b16 %v1566
        %v2434 = vunpack.c.l.b16 %v1567
        %v2435 = vunpack.c.h.b16 %v1567
        %v2436 = vunpack.c.l.b16 %v1568
        %v2437 = vunpack.c.h.b16 %v1568
        %v2438 = vunpack.c.l.b16 %v1569
        %v2439 = vunpack.c.h.b16 %v1569
        %v2440 = vunpack.c.l.b16 %v1570
        %v2441 = vunpack.c.h.b16 %v1570
        %v2442 = vunpack.c.l.b16 %v1571
        %v2443 = vunpack.c.h.b16 %v1571
        %v2444 = vunpack.c.l.b16 %v1572
        %v2445 = vunpack.c.h.b16 %v1572
        %v2446 = vunpack.c.l.b16 %v1573
        %v2447 = vunpack.c.h.b16 %v1573
        %v2448 = vunpack.c.l.b16 %v1574
        %v2449 = vunpack.c.h.b16 %v1574
        %v2450 = vunpack.c.l.b16 %v1575
        %v2451 = vunpack.c.h.b16 %v1575
        %v2452 = vunpack.c.l.b16 %v1576
        %v2453 = vunpack.c.h.b16 %v1576
        %v2454 = vunpack.c.l.b16 %v1577
        %v2455 = vunpack.c.h.b16 %v1577
        %v2456 = vunpack.c.l.b16 %v1578
        %v2457 = vunpack.c.h.b16 %v1578
        %v2458 = vunpack.c.l.b16 %v1579
        %v2459 = vunpack.c.h.b16 %v1579
        %v2460 = vunpack.c.l.b16 %v1580
        %v2461 = vunpack.c.h.b16 %v1580
        %v2462 = vunpack.c.l.b16 %v1581
        %v2463 = vunpack.c.h.b16 %v1581
        %v2464 = vunpack.c.l.b16 %v1582
        %v2465 = vunpack.c.h.b16 %v1582
        %v2466 = vunpack.c.l.b16 %v1583
        %v2467 = vunpack.c.h.b16 %v1583
        %v2468 = vunpack.c.l.b16 %v1584
        %v2469 = vunpack.c.h.b16 %v1584
        %v2470 = vunpack.c.l.b16 %v1585
        %v2471 = vunpack.c.h.b16 %v1585
        %v2472 = vunpack.c.l.b16 %v1586
        %v2473 = vunpack.c.h.b16 %v1586
        %v2474 = vunpack.c.l.b16 %v1587
        %v2475 = vunpack.c.h.b16 %v1587
        %v2476 = vunpack.c.l.b16 %v1588
        %v2477 = vunpack.c.h.b16 %v1588
        %v2478 = vunpack.c.l.b16 %v1589
        %v2479 = vunpack.c.h.b16 %v1589
        %v2480 = vunpack.c.l.b16 %v1590
        %v2481 = vunpack.c.h.b16 %v1590
        %v2482 = vunpack.c.l.b16 %v1591
        %v2483 = vunpack.c.h.b16 %v1591
        %v2484 = vunpack.c.l.b16 %v1592
        %v2485 = vunpack.c.h.b16 %v1592
        %v2486 = vunpack.c.l.b16 %v1593
        %v2487 = vunpack.c.h.b16 %v1593
        %v2488 = vunpack.c.l.b16 %v1594
        %v2489 = vunpack.c.h.b16 %v1594
        %v2490 = vunpack.c.l.b16 %v1595
        %v2491 = vunpack.c.h.b16 %v1595
        %v2492 = vunpack.c.l.b16 %v1596
        %v2493 = vunpack.c.h.b16 %v1596
        %v2494 = vunpack.c.l.b16 %v1597
        %v2495 = vunpack.c.h.b16 %v1597
        %v2496 = vunpack.c.l.b16 %v1598
        %v2497 = vunpack.c.h.b16 %v1598
        %v2498 = vunpack.c.l.b16 %v1599
        %v2499 = vunpack.c.h.b16 %v1599
        %v2500 = vunpack.c.l.b16 %v1600
        %v2501 = vunpack.c.h.b16 %v1600
        %v2502 = vunpack.c.l.b16 %v1601
        %v2503 = vunpack.c.h.b16 %v1601
        %v2504 = vunpack.c.l.b16 %v1602
        %v2505 = vunpack.c.h.b16 %v1602
        %v2506 = vunpack.c.l.b16 %v1603
        %v2507 = vunpack.c.h.b16 %v1603
        %v2508 = vunpack.c.l.b16 %v1604
        %v2509 = vunpack.c.h.b16 %v1604
        %v2510 = vunpack.c.l.b16 %v1605
        %v2511 = vunpack.c.h.b16 %v1605
        %v2512 = vunpack.c.l.b16 %v1606
        %v2513 = vunpack.c.h.b16 %v1606
        %v2514 = vunpack.c.l.b16 %v1607
        %v2515 = vunpack.c.h.b16 %v1607
        %v2516 = vunpack.c.l.b16 %v1608
        %v2517 = vunpack.c.h.b16 %v1608
        %v2518 = vunpack.c.l.b16 %v1609
        %v2519 = vunpack.c.h.b16 %v1609
        %v2520 = vunpack.c.l.b16 %v1610
        %v2521 = vunpack.c.h.b16 %v1610
        %v2522 = vunpack.c.l.b16 %v1611
        %v2523 = vunpack.c.h.b16 %v1611
        %v2524 = vunpack.c.l.b16 %v1612
        %v2525 = vunpack.c.h.b16 %v1612
        %v2526 = vunpack.c.l.b16 %v1613
        %v2527 = vunpack.c.h.b16 %v1613
        %v2528 = vunpack.c.l.b16 %v1614
        %v2529 = vunpack.c.h.b16 %v1614
        %v2530 = vunpack.c.l.b16 %v1615
        %v2531 = vunpack.c.h.b16 %v1615
        %v2532 = vunpack.c.l.b16 %v1616
        %v2533 = vunpack.c.h.b16 %v1616
        %v2534 = vunpack.c.l.b16 %v1617
        %v2535 = vunpack.c.h.b16 %v1617
        %v2536 = vunpack.c.l.b16 %v1618
        %v2537 = vunpack.c.h.b16 %v1618
        %v2538 = vunpack.c.l.b16 %v1619
        %v2539 = vunpack.c.h.b16 %v1619
        %v2540 = vunpack.c.l.b16 %v1620
        %v2541 = vunpack.c.h.b16 %v1620
        %v2542 = vunpack.c.l.b16 %v1621
        %v2543 = vunpack.c.h.b16 %v1621
        %v2544 = vunpack.c.l.b16 %v1622
        %v2545 = vunpack.c.h.b16 %v1622
        %v2546 = vunpack.c.l.b16 %v1623
        %v2547 = vunpack.c.h.b16 %v1623
        %v2548 = vunpack.c.l.b16 %v1624
        %v2549 = vunpack.c.h.b16 %v1624
        %v2550 = vunpack.c.l.b16 %v1625
        %v2551 = vunpack.c.h.b16 %v1625
        %v2552 = vunpack.c.l.b16 %v1626
        %v2553 = vunpack.c.h.b16 %v1626
        %v2554 = vunpack.c.l.b16 %v1627
        %v2555 = vunpack.c.h.b16 %v1627
        %v2556 = vunpack.c.l.b16 %v1628
        %v2557 = vunpack.c.h.b16 %v1628
        %v2558 = vunpack.c.l.b16 %v1629
        %v2559 = vunpack.c.h.b16 %v1629
        %v2560 = vunpack.c.l.b16 %v1630
        %v2561 = vunpack.c.h.b16 %v1630
        %v2562 = vunpack.c.l.b16 %v1631
        %v2563 = vunpack.c.h.b16 %v1631
        %v2564 = vunpack.c.l.b16 %v1632
        %v2565 = vunpack.c.h.b16 %v1632
        %v2566 = vunpack.c.l.b16 %v1633
        %v2567 = vunpack.c.h.b16 %v1633
        %v2568 = vunpack.c.l.b16 %v1634
        %v2569 = vunpack.c.h.b16 %v1634
        %v2570 = vunpack.c.l.b16 %v1635
        %v2571 = vunpack.c.h.b16 %v1635
        %v2572 = vunpack.c.l.b16 %v1636
        %v2573 = vunpack.c.h.b16 %v1636
        %v2574 = vunpack.c.l.b16 %v1637
        %v2575 = vunpack.c.h.b16 %v1637
        %v2576 = vunpack.c.l.b16 %v1638
        %v2577 = vunpack.c.h.b16 %v1638
        %v2578 = vunpack.c.l.b16 %v1639
        %v2579 = vunpack.c.h.b16 %v1639
        %v2580 = vunpack.c.l.b16 %v1640
        %v2581 = vunpack.c.h.b16 %v1640
        %v2582 = vunpack.c.l.b16 %v1641
        %v2583 = vunpack.c.h.b16 %v1641
        %v2584 = vunpack.c.l.b16 %v1642
        %v2585 = vunpack.c.h.b16 %v1642
        %v2586 = vunpack.c.l.b16 %v1643
        %v2587 = vunpack.c.h.b16 %v1643
        %v2588 = vunpack.c.l.b16 %v1644
        %v2589 = vunpack.c.h.b16 %v1644
        %v2590 = vunpack.c.l.b16 %v1645
        %v2591 = vunpack.c.h.b16 %v1645
        %v2592 = vunpack.c.l.b16 %v1646
        %v2593 = vunpack.c.h.b16 %v1646
        %v2594 = vunpack.c.l.b16 %v1647
        %v2595 = vunpack.c.h.b16 %v1647
        %v2596 = vunpack.c.l.b16 %v1648
        %v2597 = vunpack.c.h.b16 %v1648
        %v2598 = vunpack.c.l.b16 %v1649
        %v2599 = vunpack.c.h.b16 %v1649
        %v2600 = vunpack.c.l.b16 %v1650
        %v2601 = vunpack.c.h.b16 %v1650
        %v2602 = vunpack.c.l.b16 %v1651
        %v2603 = vunpack.c.h.b16 %v1651
        %v2604 = vunpack.c.l.b16 %v1652
        %v2605 = vunpack.c.h.b16 %v1652
        %v2606 = vunpack.c.l.b16 %v1653
        %v2607 = vunpack.c.h.b16 %v1653
        %v2608 = vunpack.c.l.b16 %v1654
        %v2609 = vunpack.c.h.b16 %v1654
        %v2610 = vunpack.c.l.b16 %v1655
        %v2611 = vunpack.c.h.b16 %v1655
        %v2612 = vunpack.c.l.b16 %v1656
        %v2613 = vunpack.c.h.b16 %v1656
        %v2614 = vunpack.c.l.b16 %v1657
        %v2615 = vunpack.c.h.b16 %v1657
        %v2616 = vunpack.c.l.b16 %v1658
        %v2617 = vunpack.c.h.b16 %v1658
        %v2618 = vunpack.c.l.b16 %v1659
        %v2619 = vunpack.c.h.b16 %v1659
        %v2620 = vunpack.c.l.b16 %v1660
        %v2621 = vunpack.c.h.b16 %v1660
        %v2622 = vunpack.c.l.b16 %v1661
        %v2623 = vunpack.c.h.b16 %v1661
        %v2624 = vunpack.c.l.b16 %v1662
        %v2625 = vunpack.c.h.b16 %v1662
        %v2626 = vunpack.c.l.b16 %v1663
        %v2627 = vunpack.c.h.b16 %v1663
        %v2628 = vunpack.c.l.b16 %v1664
        %v2629 = vunpack.c.h.b16 %v1664
        %v2630 = vunpack.c.l.b16 %v1665
        %v2631 = vunpack.c.h.b16 %v1665
        %v2632 = vunpack.c.l.b16 %v1666
        %v2633 = vunpack.c.h.b16 %v1666
        %v2634 = vunpack.c.l.b16 %v1667
        %v2635 = vunpack.c.h.b16 %v1667
        %v2636 = vunpack.c.l.b16 %v1668
        %v2637 = vunpack.c.h.b16 %v1668
        %v2638 = vunpack.c.l.b16 %v1669
        %v2639 = vunpack.c.h.b16 %v1669
        %v2640 = vunpack.c.l.b16 %v1670
        %v2641 = vunpack.c.h.b16 %v1670
        %v2642 = vunpack.c.l.b16 %v1671
        %v2643 = vunpack.c.h.b16 %v1671
        %v2644 = vunpack.c.l.b16 %v1672
        %v2645 = vunpack.c.h.b16 %v1672
        %v2646 = vunpack.c.l.b16 %v1673
        %v2647 = vunpack.c.h.b16 %v1673
        %v2648 = vunpack.c.l.b16 %v1674
        %v2649 = vunpack.c.h.b16 %v1674
        %v2650 = vunpack.c.l.b16 %v1675
        %v2651 = vunpack.c.h.b16 %v1675
        %v2652 = vunpack.c.l.b16 %v1676
        %v2653 = vunpack.c.h.b16 %v1676
        %v2654 = vunpack.c.l.b16 %v1677
        %v2655 = vunpack.c.h.b16 %v1677
        %v2656 = vunpack.c.l.b16 %v1678
        %v2657 = vunpack.c.h.b16 %v1678
        %v2658 = vunpack.c.l.b16 %v1679
        %v2659 = vunpack.c.h.b16 %v1679
        %v2660 = vunpack.c.l.b16 %v1680
        %v2661 = vunpack.c.h.b16 %v1680
        %v2662 = vunpack.c.l.b16 %v1681
        %v2663 = vunpack.c.h.b16 %v1681
        %v2664 = vunpack.c.l.b16 %v1682
        %v2665 = vunpack.c.h.b16 %v1682
        %v2666 = vunpack.c.l.b16 %v1683
        %v2667 = vunpack.c.h.b16 %v1683
        %v2668 = vunpack.c.l.b16 %v1684
        %v2669 = vunpack.c.h.b16 %v1684
        %v2670 = vunpack.c.l.b16 %v1685
        %v2671 = vunpack.c.h.b16 %v1685
        %v2672 = vunpack.c.l.b16 %v1686
        %v2673 = vunpack.c.h.b16 %v1686
        %v2674 = vunpack.c.l.b16 %v1687
        %v2675 = vunpack.c.h.b16 %v1687
        %v2676 = vunpack.c.l.b16 %v1688
        %v2677 = vunpack.c.h.b16 %v1688
        %v2678 = vunpack.c.l.b16 %v1689
        %v2679 = vunpack.c.h.b16 %v1689
        %v2680 = vunpack.c.l.b16 %v1690
        %v2681 = vunpack.c.h.b16 %v1690
        %v2682 = vunpack.c.l.b16 %v1691
        %v2683 = vunpack.c.h.b16 %v1691
        %v2684 = vunpack.c.l.b16 %v1692
        %v2685 = vunpack.c.h.b16 %v1692
        %v2686 = vunpack.c.l.b16 %v1693
        %v2687 = vunpack.c.h.b16 %v1693
        %v2688 = vunpack.c.l.b16 %v1694
        %v2689 = vunpack.c.h.b16 %v1694
        %v2690 = vunpack.c.l.b16 %v1695
        %v2691 = vunpack.c.h.b16 %v1695
        %v2692 = vunpack.c.l.b16 %v1696
        %v2693 = vunpack.c.h.b16 %v1696
        %v2694 = vunpack.c.l.b16 %v1697
        %v2695 = vunpack.c.h.b16 %v1697
        %v2696 = vunpack.c.l.b16 %v1698
        %v2697 = vunpack.c.h.b16 %v1698
        %v2698 = vunpack.c.l.b16 %v1699
        %v2699 = vunpack.c.h.b16 %v1699
        %v2700 = vunpack.c.l.b16 %v1700
        %v2701 = vunpack.c.h.b16 %v1700
        %v2702 = vunpack.c.l.b16 %v1701
        %v2703 = vunpack.c.h.b16 %v1701
        %v2704 = vunpack.c.l.b16 %v1702
        %v2705 = vunpack.c.h.b16 %v1702
        %v2706 = vunpack.c.l.b16 %v1703
        %v2707 = vunpack.c.h.b16 %v1703
        %v2708 = vunpack.c.l.b16 %v1704
        %v2709 = vunpack.c.h.b16 %v1704
        %v2710 = vunpack.c.l.b16 %v1705
        %v2711 = vunpack.c.h.b16 %v1705
        %v2712 = vunpack.c.l.b16 %v1706
        %v2713 = vunpack.c.h.b16 %v1706
        %v2714 = vunpack.c.l.b16 %v1707
        %v2715 = vunpack.c.h.b16 %v1707
        %v2716 = vunpack.c.l.b16 %v1708
        %v2717 = vunpack.c.h.b16 %v1708
        %v2718 = vunpack.c.l.b16 %v1709
        %v2719 = vunpack.c.h.b16 %v1709
        %v2720 = vunpack.c.l.b16 %v1710
        %v2721 = vunpack.c.h.b16 %v1710
        %v2722 = vunpack.c.l.b16 %v1711
        %v2723 = vunpack.c.h.b16 %v1711
        %v2724 = vunpack.c.l.b16 %v1712
        %v2725 = vunpack.c.h.b16 %v1712
        %v2726 = vunpack.c.l.b16 %v1713
        %v2727 = vunpack.c.h.b16 %v1713
        %v2728 = vunpack.c.l.b16 %v1714
        %v2729 = vunpack.c.h.b16 %v1714
        %v2730 = vunpack.c.l.b16 %v1715
        %v2731 = vunpack.c.h.b16 %v1715
        %v2732 = vunpack.c.l.b16 %v1716
        %v2733 = vunpack.c.h.b16 %v1716
        %v2734 = vunpack.c.l.b16 %v1717
        %v2735 = vunpack.c.h.b16 %v1717
        %v2736 = vunpack.c.l.b16 %v1718
        %v2737 = vunpack.c.h.b16 %v1718
        %v2738 = vunpack.c.l.b16 %v1719
        %v2739 = vunpack.c.h.b16 %v1719
        %v2740 = vunpack.c.l.b16 %v1720
        %v2741 = vunpack.c.h.b16 %v1720
        %v2742 = vunpack.c.l.b16 %v1721
        %v2743 = vunpack.c.h.b16 %v1721
        %v2744 = vunpack.c.l.b16 %v1722
        %v2745 = vunpack.c.h.b16 %v1722
        %v2746 = vunpack.c.l.b16 %v1723
        %v2747 = vunpack.c.h.b16 %v1723
        %v2748 = vunpack.c.l.b16 %v1724
        %v2749 = vunpack.c.h.b16 %v1724
        %v2750 = vunpack.c.l.b16 %v1725
        %v2751 = vunpack.c.h.b16 %v1725
        %v2752 = vunpack.c.l.b16 %v1726
        %v2753 = vunpack.c.h.b16 %v1726
        %v2754 = vunpack.c.l.b16 %v1727
        %v2755 = vunpack.c.h.b16 %v1727
        %v2756 = vunpack.c.l.b16 %v1728
        %v2757 = vunpack.c.h.b16 %v1728
        %v2758 = vunpack.c.l.b16 %v1729
        %v2759 = vunpack.c.h.b16 %v1729
        %v2760 = vunpack.c.l.b16 %v1730
        %v2761 = vunpack.c.h.b16 %v1730
        %v2762 = vunpack.c.l.b16 %v1731
        %v2763 = vunpack.c.h.b16 %v1731
        %v2764 = vunpack.c.l.b16 %v1732
        %v2765 = vunpack.c.h.b16 %v1732
        %v2766 = vunpack.c.l.b16 %v1733
        %v2767 = vunpack.c.h.b16 %v1733
        %v2768 = vunpack.c.l.b16 %v1734
        %v2769 = vunpack.c.h.b16 %v1734
        %v2770 = vunpack.c.l.b16 %v1735
        %v2771 = vunpack.c.h.b16 %v1735
        %v2772 = vunpack.c.l.b16 %v1736
        %v2773 = vunpack.c.h.b16 %v1736
        %v2774 = vunpack.c.l.b16 %v1737
        %v2775 = vunpack.c.h.b16 %v1737
        %v2776 = vunpack.c.l.b16 %v1738
        %v2777 = vunpack.c.h.b16 %v1738
        %v2778 = vunpack.c.l.b16 %v1739
        %v2779 = vunpack.c.h.b16 %v1739
        %v2780 = vunpack.c.l.b16 %v1740
        %v2781 = vunpack.c.h.b16 %v1740
        %v2782 = vunpack.c.l.b16 %v1741
        %v2783 = vunpack.c.h.b16 %v1741
        %v2784 = vunpack.c.l.b16 %v1742
        %v2785 = vunpack.c.h.b16 %v1742
        %v2786 = vunpack.c.l.b16 %v1743
        %v2787 = vunpack.c.h.b16 %v1743
        %v2788 = vunpack.c.l.b16 %v1744
        %v2789 = vunpack.c.h.b16 %v1744
        %v2790 = vunpack.c.l.b16 %v1745
        %v2791 = vunpack.c.h.b16 %v1745
        %v2792 = vunpack.c.l.b16 %v1746
        %v2793 = vunpack.c.h.b16 %v1746
        %v2794 = vunpack.c.l.b16 %v1747
        %v2795 = vunpack.c.h.b16 %v1747
        %v2796 = vunpack.c.l.b16 %v1748
        %v2797 = vunpack.c.h.b16 %v1748
        %v2798 = vunpack.c.l.b16 %v1749
        %v2799 = vunpack.c.h.b16 %v1749
        %v2800 = vunpack.c.l.b16 %v1750
        %v2801 = vunpack.c.h.b16 %v1750
        %v2802 = vunpack.c.l.b16 %v1751
        %v2803 = vunpack.c.h.b16 %v1751
        %v2804 = vunpack.c.l.b16 %v1752
        %v2805 = vunpack.c.h.b16 %v1752
        %v2806 = vunpack.c.l.b16 %v1753
        %v2807 = vunpack.c.h.b16 %v1753
        %v2808 = vunpack.c.l.b16 %v1754
        %v2809 = vunpack.c.h.b16 %v1754
        %v2810 = vunpack.c.l.b16 %v1755
        %v2811 = vunpack.c.h.b16 %v1755
        %v2812 = vunpack.c.l.b16 %v1756
        %v2813 = vunpack.c.h.b16 %v1756
        %v2814 = vunpack.c.l.b16 %v1757
        %v2815 = vunpack.c.h.b16 %v1757
        %v2816 = vunpack.c.l.b16 %v1758
        %v2817 = vunpack.c.h.b16 %v1758
        %v2818 = vunpack.c.l.b16 %v1759
        %v2819 = vunpack.c.h.b16 %v1759
        %v2820 = vunpack.c.l.b16 %v1760
        %v2821 = vunpack.c.h.b16 %v1760
        %v2822 = vunpack.c.l.b16 %v1761
        %v2823 = vunpack.c.h.b16 %v1761
        %v2824 = vunpack.c.l.b16 %v1762
        %v2825 = vunpack.c.h.b16 %v1762
        %v2826 = vunpack.c.l.b16 %v1763
        %v2827 = vunpack.c.h.b16 %v1763
        %v2828 = vunpack.c.l.b16 %v1764
        %v2829 = vunpack.c.h.b16 %v1764
        %v2830 = vunpack.c.l.b16 %v1765
        %v2831 = vunpack.c.h.b16 %v1765
        %v2832 = vunpack.c.l.b16 %v1766
        %v2833 = vunpack.c.h.b16 %v1766
        %v2834 = vunpack.c.l.b16 %v1767
        %v2835 = vunpack.c.h.b16 %v1767
        %v2836 = vunpack.c.l.b16 %v1768
        %v2837 = vunpack.c.h.b16 %v1768
        %v2838 = vunpack.c.l.b16 %v1769
        %v2839 = vunpack.c.h.b16 %v1769
        %v2840 = vunpack.c.l.b16 %v1770
        %v2841 = vunpack.c.h.b16 %v1770
        %v2842 = vunpack.c.l.b16 %v1771
        %v2843 = vunpack.c.h.b16 %v1771
        %v2844 = vunpack.c.l.b16 %v1772
        %v2845 = vunpack.c.h.b16 %v1772
        %v2846 = vunpack.c.l.b16 %v1773
        %v2847 = vunpack.c.h.b16 %v1773
        %v2848 = vunpack.c.l.b16 %v1774
        %v2849 = vunpack.c.h.b16 %v1774
        %v2850 = vunpack.c.l.b16 %v1775
        %v2851 = vunpack.c.h.b16 %v1775
        %v2852 = vunpack.c.l.b16 %v1776
        %v2853 = vunpack.c.h.b16 %v1776
        %v2854 = vunpack.c.l.b16 %v1777
        %v2855 = vunpack.c.h.b16 %v1777
        %v2856 = vunpack.c.l.b16 %v1778
        %v2857 = vunpack.c.h.b16 %v1778
        %v2858 = vunpack.c.l.b16 %v1779
        %v2859 = vunpack.c.h.b16 %v1779
        %v2860 = vunpack.c.l.b16 %v1780
        %v2861 = vunpack.c.h.b16 %v1780
        %v2862 = vunpack.c.l.b16 %v1781
        %v2863 = vunpack.c.h.b16 %v1781
        %v2864 = vunpack.c.l.b16 %v1782
        %v2865 = vunpack.c.h.b16 %v1782
        %v2866 = vunpack.c.l.b16 %v1783
        %v2867 = vunpack.c.h.b16 %v1783
        %v2868 = vunpack.c.l.b16 %v1784
        %v2869 = vunpack.c.h.b16 %v1784
        %v2870 = vunpack.c.l.b16 %v1785
        %v2871 = vunpack.c.h.b16 %v1785
        %v2872 = vunpack.c.l.b16 %v1786
        %v2873 = vunpack.c.h.b16 %v1786
        %v2874 = vunpack.c.l.b16 %v1787
        %v2875 = vunpack.c.h.b16 %v1787
        %v2876 = vunpack.c.l.b16 %v1788
        %v2877 = vunpack.c.h.b16 %v1788
        %v2878 = vunpack.c.l.b16 %v1789
        %v2879 = vunpack.c.h.b16 %v1789
        %v2880 = vunpack.c.l.b16 %v1790
        %v2881 = vunpack.c.h.b16 %v1790
        %v2882 = vunpack.c.l.b16 %v1791
        %v2883 = vunpack.c.h.b16 %v1791
        %v2884 = vunpack.c.l.b16 %v1792
        %v2885 = vunpack.c.h.b16 %v1792
        %v2886 = vunpack.c.l.b16 %v1793
        %v2887 = vunpack.c.h.b16 %v1793
        %v2888 = vunpack.c.l.b16 %v1794
        %v2889 = vunpack.c.h.b16 %v1794
        %v2890 = vunpack.c.l.b16 %v1795
        %v2891 = vunpack.c.h.b16 %v1795
        %v2892 = vunpack.c.l.b16 %v1796
        %v2893 = vunpack.c.h.b16 %v1796
        %v2894 = vunpack.c.l.b16 %v1797
        %v2895 = vunpack.c.h.b16 %v1797
        %v2896 = vunpack.c.l.b16 %v1798
        %v2897 = vunpack.c.h.b16 %v1798
        %v2898 = vunpack.c.l.b16 %v1799
        %v2899 = vunpack.c.h.b16 %v1799
        %v2900 = vunpack.c.l.b16 %v1800
        %v2901 = vunpack.c.h.b16 %v1800
        %v2902 = vunpack.c.l.b16 %v1801
        %v2903 = vunpack.c.h.b16 %v1801
        %v2904 = vunpack.c.l.b16 %v1802
        %v2905 = vunpack.c.h.b16 %v1802
        %v2906 = vunpack.c.l.b16 %v1803
        %v2907 = vunpack.c.h.b16 %v1803
        %v2908 = vunpack.c.l.b16 %v1804
        %v2909 = vunpack.c.h.b16 %v1804
        %v2910 = vunpack.c.l.b16 %v1805
        %v2911 = vunpack.c.h.b16 %v1805
        %v2912 = vunpack.c.l.b16 %v1806
        %v2913 = vunpack.c.h.b16 %v1806
        %v2914 = vunpack.c.l.b16 %v1807
        %v2915 = vunpack.c.h.b16 %v1807
        %v2916 = vunpack.c.l.b16 %v1808
        %v2917 = vunpack.c.h.b16 %v1808
        %v2918 = vunpack.c.l.b16 %v1809
        %v2919 = vunpack.c.h.b16 %v1809
        %v2920 = vunpack.c.l.b16 %v1810
        %v2921 = vunpack.c.h.b16 %v1810
        %v2922 = vunpack.c.l.b16 %v1811
        %v2923 = vunpack.c.h.b16 %v1811
        %v2924 = vunpack.c.l.b16 %v1812
        %v2925 = vunpack.c.h.b16 %v1812
        %v2926 = vunpack.c.l.b16 %v1813
        %v2927 = vunpack.c.h.b16 %v1813
        %v2928 = vunpack.c.l.b16 %v1814
        %v2929 = vunpack.c.h.b16 %v1814
        %v2930 = vunpack.c.l.b16 %v1815
        %v2931 = vunpack.c.h.b16 %v1815
        %v2932 = vunpack.c.l.b16 %v1816
        %v2933 = vunpack.c.h.b16 %v1816
        %v2934 = vunpack.c.l.b16 %v1817
        %v2935 = vunpack.c.h.b16 %v1817
        %v2936 = vunpack.c.l.b16 %v1818
        %v2937 = vunpack.c.h.b16 %v1818
        %v2938 = vunpack.c.l.b16 %v1819
        %v2939 = vunpack.c.h.b16 %v1819
        %v2940 = vunpack.c.l.b16 %v1820
        %v2941 = vunpack.c.h.b16 %v1820
        %v2942 = vunpack.c.l.b16 %v1821
        %v2943 = vunpack.c.h.b16 %v1821
        %v2944 = vunpack.c.l.b16 %v1822
        %v2945 = vunpack.c.h.b16 %v1822
        %v2946 = vunpack.c.l.b16 %v1823
        %v2947 = vunpack.c.h.b16 %v1823
        %v2948 = vunpack.c.l.b16 %v1824
        %v2949 = vunpack.c.h.b16 %v1824
        %v2950 = vunpack.c.l.b16 %v1825
        %v2951 = vunpack.c.h.b16 %v1825
        %v2952 = vunpack.c.l.b16 %v1826
        %v2953 = vunpack.c.h.b16 %v1826
        %v2954 = vunpack.c.l.b16 %v1827
        %v2955 = vunpack.c.h.b16 %v1827
        %v2956 = vunpack.c.l.b16 %v1828
        %v2957 = vunpack.c.h.b16 %v1828
        %v2958 = vunpack.c.l.b16 %v1829
        %v2959 = vunpack.c.h.b16 %v1829
        %v2960 = vunpack.c.l.b16 %v1830
        %v2961 = vunpack.c.h.b16 %v1830
        %v2962 = vunpack.c.l.b16 %v1831
        %v2963 = vunpack.c.h.b16 %v1831
        %v2964 = vunpack.c.l.b16 %v1832
        %v2965 = vunpack.c.h.b16 %v1832
        %v2966 = vunpack.c.l.b16 %v1833
        %v2967 = vunpack.c.h.b16 %v1833
        %v2968 = vunpack.c.l.b16 %v1834
        %v2969 = vunpack.c.h.b16 %v1834
        %v2970 = vunpack.c.l.b16 %v1835
        %v2971 = vunpack.c.h.b16 %v1835
        %v2972 = vunpack.c.l.b16 %v1836
        %v2973 = vunpack.c.h.b16 %v1836
        %v2974 = vunpack.c.l.b16 %v1837
        %v2975 = vunpack.c.h.b16 %v1837
        %v2976 = vunpack.c.l.b16 %v1838
        %v2977 = vunpack.c.h.b16 %v1838
        %v2978 = vunpack.c.l.b16 %v1839
        %v2979 = vunpack.c.h.b16 %v1839
        %v2980 = vunpack.c.l.b16 %v1840
        %v2981 = vunpack.c.h.b16 %v1840
        %v2982 = vunpack.c.l.b16 %v1841
        %v2983 = vunpack.c.h.b16 %v1841
        %v2984 = vunpack.c.l.b16 %v1842
        %v2985 = vunpack.c.h.b16 %v1842
        %v2986 = vunpack.c.l.b16 %v1843
        %v2987 = vunpack.c.h.b16 %v1843
        %v2988 = vunpack.c.l.b16 %v1844
        %v2989 = vunpack.c.h.b16 %v1844
        %v2990 = vunpack.c.l.b16 %v1845
        %v2991 = vunpack.c.h.b16 %v1845
        %v2992 = vunpack.c.l.b16 %v1846
        %v2993 = vunpack.c.h.b16 %v1846
        %v2994 = vunpack.c.l.b16 %v1847
        %v2995 = vunpack.c.h.b16 %v1847
        %v2996 = vunpack.c.l.b16 %v1848
        %v2997 = vunpack.c.h.b16 %v1848
        %v2998 = vunpack.c.l.b16 %v1849
        %v2999 = vunpack.c.h.b16 %v1849
        %v3000 = vunpack.c.l.b16 %v1850
        %v3001 = vunpack.c.h.b16 %v1850
        %v3002 = vunpack.c.l.b16 %v1851
        %v3003 = vunpack.c.h.b16 %v1851
        %v3004 = vunpack.c.l.b16 %v1852
        %v3005 = vunpack.c.h.b16 %v1852
        %v3006 = vunpack.c.l.b16 %v1853
        %v3007 = vunpack.c.h.b16 %v1853
        %v3008 = vunpack.c.l.b16 %v1854
        %v3009 = vunpack.c.h.b16 %v1854
        %v3010 = vunpack.c.l.b16 %v1855
        %v3011 = vunpack.c.h.b16 %v1855
        %v3012 = vunpack.c.l.b16 %v1856
        %v3013 = vunpack.c.h.b16 %v1856
        %v3014 = vunpack.c.l.b16 %v1857
        %v3015 = vunpack.c.h.b16 %v1857
        %v3016 = vunpack.c.l.b16 %v1858
        %v3017 = vunpack.c.h.b16 %v1858
        %v3018 = vunpack.c.l.b16 %v1859
        %v3019 = vunpack.c.h.b16 %v1859
        %v3020 = vunpack.c.l.b16 %v1860
        %v3021 = vunpack.c.h.b16 %v1860
        %v3022 = vunpack.c.l.b16 %v1861
        %v3023 = vunpack.c.h.b16 %v1861
        %v3024 = vunpack.c.l.b16 %v1862
        %v3025 = vunpack.c.h.b16 %v1862
        %v3026 = vunpack.c.l.b16 %v1863
        %v3027 = vunpack.c.h.b16 %v1863
        %v3028 = vunpack.c.l.b16 %v1864
        %v3029 = vunpack.c.h.b16 %v1864
        %v3030 = vunpack.c.l.b16 %v1865
        %v3031 = vunpack.c.h.b16 %v1865
        %v3032 = vunpack.c.l.b16 %v1866
        %v3033 = vunpack.c.h.b16 %v1866
        %v3034 = vunpack.c.l.b16 %v1867
        %v3035 = vunpack.c.h.b16 %v1867
        %v3036 = vunpack.c.l.b16 %v1868
        %v3037 = vunpack.c.h.b16 %v1868
        %v3038 = vunpack.c.l.b16 %v1869
        %v3039 = vunpack.c.h.b16 %v1869
        %v3040 = vpack.c.b16 %v2280, %v2272
        %v3041 = vpack.c.b16 %v2281, %v2273
        %v3042 = vpack.c.b16 %v2282, %v2274
        %v3043 = vpack.c.b16 %v2283, %v2275
        %v3044 = vpack.c.b16 %v2284, %v2276
        %v3045 = vpack.c.b16 %v2285, %v2277
        %v3046 = vpack.c.b16 %v2286, %v2278
        %v3047 = vpack.c.b16 %v2287, %v2279
        %v3048 = vpack.c.b16 %v2296, %v2288
        %v3049 = vpack.c.b16 %v2297, %v2289
        %v3050 = vpack.c.b16 %v2298, %v2290
        %v3051 = vpack.c.b16 %v2299, %v2291
        %v3052 = vpack.c.b16 %v2300, %v2292
        %v3053 = vpack.c.b16 %v2301, %v2293
        %v3054 = vpack.c.b16 %v2302, %v2294
        %v3055 = vpack.c.b16 %v2303, %v2295
        %v3056 = vpack.c.b16 %v2312, %v2304
        %v3057 = vpack.c.b16 %v2313, %v2305
        %v3058 = vpack.c.b16 %v2314, %v2306
        %v3059 = vpack.c.b16 %v2315, %v2307
        %v3060 = vpack.c.b16 %v2316, %v2308
        %v3061 = vpack.c.b16 %v2317, %v2309
        %v3062 = vpack.c.b16 %v2318, %v2310
        %v3063 = vpack.c.b16 %v2319, %v2311
        %v3064 = vpack.c.b16 %v2328, %v2320
        %v3065 = vpack.c.b16 %v2329, %v2321
        %v3066 = vpack.c.b16 %v2330, %v2322
        %v3067 = vpack.c.b16 %v2331, %v2323
        %v3068 = vpack.c.b16 %v2332, %v2324
        %v3069 = vpack.c.b16 %v2333, %v2325
        %v3070 = vpack.c.b16 %v2334, %v2326
        %v3071 = vpack.c.b16 %v2335, %v2327
        %v3072 = vpack.c.b16 %v2344, %v2336
        %v3073 = vpack.c.b16 %v2345, %v2337
        %v3074 = vpack.c.b16 %v2346, %v2338
        %v3075 = vpack.c.b16 %v2347, %v2339
        %v3076 = vpack.c.b16 %v2348, %v2340
        %v3077 = vpack.c.b16 %v2349, %v2341
        %v3078 = vpack.c.b16 %v2350, %v2342
        %v3079 = vpack.c.b16 %v2351, %v2343
        %v3080 = vpack.c.b16 %v2360, %v2352
        %v3081 = vpack.c.b16 %v2361, %v2353
        %v3082 = vpack.c.b16 %v2362, %v2354
        %v3083 = vpack.c.b16 %v2363, %v2355
        %v3084 = vpack.c.b16 %v2364, %v2356
        %v3085 = vpack.c.b16 %v2365, %v2357
        %v3086 = vpack.c.b16 %v2366, %v2358
        %v3087 = vpack.c.b16 %v2367, %v2359
        %v3088 = vpack.c.b16 %v2376, %v2368
        %v3089 = vpack.c.b16 %v2377, %v2369
        %v3090 = vpack.c.b16 %v2378, %v2370
        %v3091 = vpack.c.b16 %v2379, %v2371
        %v3092 = vpack.c.b16 %v2380, %v2372
        %v3093 = vpack.c.b16 %v2381, %v2373
        %v3094 = vpack.c.b16 %v2382, %v2374
        %v3095 = vpack.c.b16 %v2383, %v2375
        %v3096 = vpack.c.b16 %v2392, %v2384
        %v3097 = vpack.c.b16 %v2393, %v2385
        %v3098 = vpack.c.b16 %v2394, %v2386
        %v3099 = vpack.c.b16 %v2395, %v2387
        %v3100 = vpack.c.b16 %v2396, %v2388
        %v3101 = vpack.c.b16 %v2397, %v2389
        %v3102 = vpack.c.b16 %v2398, %v2390
        %v3103 = vpack.c.b16 %v2399, %v2391
        %v3104 = vpack.c.b16 %v2408, %v2400
        %v3105 = vpack.c.b16 %v2409, %v2401
        %v3106 = vpack.c.b16 %v2410, %v2402
        %v3107 = vpack.c.b16 %v2411, %v2403
        %v3108 = vpack.c.b16 %v2412, %v2404
        %v3109 = vpack.c.b16 %v2413, %v2405
        %v3110 = vpack.c.b16 %v2414, %v2406
        %v3111 = vpack.c.b16 %v2415, %v2407
        %v3112 = vpack.c.b16 %v2424, %v2416
        %v3113 = vpack.c.b16 %v2425, %v2417
        %v3114 = vpack.c.b16 %v2426, %v2418
        %v3115 = vpack.c.b16 %v2427, %v2419
        %v3116 = vpack.c.b16 %v2428, %v2420
        %v3117 = vpack.c.b16 %v2429, %v2421
        %v3118 = vpack.c.b16 %v2430, %v2422
        %v3119 = vpack.c.b16 %v2431, %v2423
        %v3120 = vpack.c.b16 %v2440, %v2432
        %v3121 = vpack.c.b16 %v2441, %v2433
        %v3122 = vpack.c.b16 %v2442, %v2434
        %v3123 = vpack.c.b16 %v2443, %v2435
        %v3124 = vpack.c.b16 %v2444, %v2436
        %v3125 = vpack.c.b16 %v2445, %v2437
        %v3126 = vpack.c.b16 %v2446, %v2438
        %v3127 = vpack.c.b16 %v2447, %v2439
        %v3128 = vpack.c.b16 %v2456, %v2448
        %v3129 = vpack.c.b16 %v2457, %v2449
        %v3130 = vpack.c.b16 %v2458, %v2450
        %v3131 = vpack.c.b16 %v2459, %v2451
        %v3132 = vpack.c.b16 %v2460, %v2452
        %v3133 = vpack.c.b16 %v2461, %v2453
        %v3134 = vpack.c.b16 %v2462, %v2454
        %v3135 = vpack.c.b16 %v2463, %v2455
        %v3136 = vpack.c.b16 %v2472, %v2464
        %v3137 = vpack.c.b16 %v2473, %v2465
        %v3138 = vpack.c.b16 %v2474, %v2466
        %v3139 = vpack.c.b16 %v2475, %v2467
        %v3140 = vpack.c.b16 %v2476, %v2468
        %v3141 = vpack.c.b16 %v2477, %v2469
        %v3142 = vpack.c.b16 %v2478, %v2470
        %v3143 = vpack.c.b16 %v2479, %v2471
        %v3144 = vpack.c.b16 %v2488, %v2480
        %v3145 = vpack.c.b16 %v2489, %v2481
        %v3146 = vpack.c.b16 %v2490, %v2482
        %v3147 = vpack.c.b16 %v2491, %v2483
        %v3148 = vpack.c.b16 %v2492, %v2484
        %v3149 = vpack.c.b16 %v2493, %v2485
        %v3150 = vpack.c.b16 %v2494, %v2486
        %v3151 = vpack.c.b16 %v2495, %v2487
        %v3152 = vpack.c.b16 %v2504, %v2496
        %v3153 = vpack.c.b16 %v2505, %v2497
        %v3154 = vpack.c.b16 %v2506, %v2498
        %v3155 = vpack.c.b16 %v2507, %v2499
        %v3156 = vpack.c.b16 %v2508, %v2500
        %v3157 = vpack.c.b16 %v2509, %v2501
        %v3158 = vpack.c.b16 %v2510, %v2502
        %v3159 = vpack.c.b16 %v2511, %v2503
        %v3160 = vpack.c.b16 %v2520, %v2512
        %v3161 = vpack.c.b16 %v2521, %v2513
        %v3162 = vpack.c.b16 %v2522, %v2514
        %v3163 = vpack.c.b16 %v2523, %v2515
        %v3164 = vpack.c.b16 %v2524, %v2516
        %v3165 = vpack.c.b16 %v2525, %v2517
        %v3166 = vpack.c.b16 %v2526, %v2518
        %v3167 = vpack.c.b16 %v2527, %v2519
        %v3168 = vpack.c.b16 %v2536, %v2528
        %v3169 = vpack.c.b16 %v2537, %v2529
        %v3170 = vpack.c.b16 %v2538, %v2530
        %v3171 = vpack.c.b16 %v2539, %v2531
        %v3172 = vpack.c.b16 %v2540, %v2532
        %v3173 = vpack.c.b16 %v2541, %v2533
        %v3174 = vpack.c.b16 %v2542, %v2534
        %v3175 = vpack.c.b16 %v2543, %v2535
        %v3176 = vpack.c.b16 %v2552, %v2544
        %v3177 = vpack.c.b16 %v2553, %v2545
        %v3178 = vpack.c.b16 %v2554, %v2546
        %v3179 = vpack.c.b16 %v2555, %v2547
        %v3180 = vpack.c.b16 %v2556, %v2548
        %v3181 = vpack.c.b16 %v2557, %v2549
        %v3182 = vpack.c.b16 %v2558, %v2550
        %v3183 = vpack.c.b16 %v2559, %v2551
        %v3184 = vpack.c.b16 %v2568, %v2560
        %v3185 = vpack.c.b16 %v2569, %v2561
        %v3186 = vpack.c.b16 %v2570, %v2562
        %v3187 = vpack.c.b16 %v2571, %v2563
        %v3188 = vpack.c.b16 %v2572, %v2564
        %v3189 = vpack.c.b16 %v2573, %v2565
        %v3190 = vpack.c.b16 %v2574, %v2566
        %v3191 = vpack.c.b16 %v2575, %v2567
        %v3192 = vpack.c.b16 %v2584, %v2576
        %v3193 = vpack.c.b16 %v2585, %v2577
        %v3194 = vpack.c.b16 %v2586, %v2578
        %v3195 = vpack.c.b16 %v2587, %v2579
        %v3196 = vpack.c.b16 %v2588, %v2580
        %v3197 = vpack.c.b16 %v2589, %v2581
        %v3198 = vpack.c.b16 %v2590, %v2582
        %v3199 = vpack.c.b16 %v2591, %v2583
        %v3200 = vpack.c.b16 %v2600, %v2592
        %v3201 = vpack.c.b16 %v2601, %v2593
        %v3202 = vpack.c.b16 %v2602, %v2594
        %v3203 = vpack.c.b16 %v2603, %v2595
        %v3204 = vpack.c.b16 %v2604, %v2596
        %v3205 = vpack.c.b16 %v2605, %v2597
        %v3206 = vpack.c.b16 %v2606, %v2598
        %v3207 = vpack.c.b16 %v2607, %v2599
        %v3208 = vpack.c.b16 %v2616, %v2608
        %v3209 = vpack.c.b16 %v2617, %v2609
        %v3210 = vpack.c.b16 %v2618, %v2610
        %v3211 = vpack.c.b16 %v2619, %v2611
        %v3212 = vpack.c.b16 %v2620, %v2612
        %v3213 = vpack.c.b16 %v2621, %v2613
        %v3214 = vpack.c.b16 %v2622, %v2614
        %v3215 = vpack.c.b16 %v2623, %v2615
        %v3216 = vpack.c.b16 %v2632, %v2624
        %v3217 = vpack.c.b16 %v2633, %v2625
        %v3218 = vpack.c.b16 %v2634, %v2626
        %v3219 = vpack.c.b16 %v2635, %v2627
        %v3220 = vpack.c.b16 %v2636, %v2628
        %v3221 = vpack.c.b16 %v2637, %v2629
        %v3222 = vpack.c.b16 %v2638, %v2630
        %v3223 = vpack.c.b16 %v2639, %v2631
        %v3224 = vpack.c.b16 %v2648, %v2640
        %v3225 = vpack.c.b16 %v2649, %v2641
        %v3226 = vpack.c.b16 %v2650, %v2642
        %v3227 = vpack.c.b16 %v2651, %v2643
        %v3228 = vpack.c.b16 %v2652, %v2644
        %v3229 = vpack.c.b16 %v2653, %v2645
        %v3230 = vpack.c.b16 %v2654, %v2646
        %v3231 = vpack.c.b16 %v2655, %v2647
        %v3232 = vpack.c.b16 %v2664, %v2656
        %v3233 = vpack.c.b16 %v2665, %v2657
        %v3234 = vpack.c.b16 %v2666, %v2658
        %v3235 = vpack.c.b16 %v2667, %v2659
        %v3236 = vpack.c.b16 %v2668, %v2660
        %v3237 = vpack.c.b16 %v2669, %v2661
        %v3238 = vpack.c.b16 %v2670, %v2662
        %v3239 = vpack.c.b16 %v2671, %v2663
        %v3240 = vpack.c.b16 %v2680, %v2672
        %v3241 = vpack.c.b16 %v2681, %v2673
        %v3242 = vpack.c.b16 %v2682, %v2674
        %v3243 = vpack.c.b16 %v2683, %v2675
        %v3244 = vpack.c.b16 %v2684, %v2676
        %v3245 = vpack.c.b16 %v2685, %v2677
        %v3246 = vpack.c.b16 %v2686, %v2678
        %v3247 = vpack.c.b16 %v2687, %v2679
        %v3248 = vpack.c.b16 %v2696, %v2688
        %v3249 = vpack.c.b16 %v2697, %v2689
        %v3250 = vpack.c.b16 %v2698, %v2690
        %v3251 = vpack.c.b16 %v2699, %v2691
        %v3252 = vpack.c.b16 %v2700, %v2692
        %v3253 = vpack.c.b16 %v2701, %v2693
        %v3254 = vpack.c.b16 %v2702, %v2694
        %v3255 = vpack.c.b16 %v2703, %v2695
        %v3256 = vpack.c.b16 %v2712, %v2704
        %v3257 = vpack.c.b16 %v2713, %v2705
        %v3258 = vpack.c.b16 %v2714, %v2706
        %v3259 = vpack.c.b16 %v2715, %v2707
        %v3260 = vpack.c.b16 %v2716, %v2708
        %v3261 = vpack.c.b16 %v2717, %v2709
        %v3262 = vpack.c.b16 %v2718, %v2710
        %v3263 = vpack.c.b16 %v2719, %v2711
        %v3264 = vpack.c.b16 %v2728, %v2720
        %v3265 = vpack.c.b16 %v2729, %v2721
        %v3266 = vpack.c.b16 %v2730, %v2722
        %v3267 = vpack.c.b16 %v2731, %v2723
        %v3268 = vpack.c.b16 %v2732, %v2724
        %v3269 = vpack.c.b16 %v2733, %v2725
        %v3270 = vpack.c.b16 %v2734, %v2726
        %v3271 = vpack.c.b16 %v2735, %v2727
        %v3272 = vpack.c.b16 %v2744, %v2736
        %v3273 = vpack.c.b16 %v2745, %v2737
        %v3274 = vpack.c.b16 %v2746, %v2738
        %v3275 = vpack.c.b16 %v2747, %v2739
        %v3276 = vpack.c.b16 %v2748, %v2740
        %v3277 = vpack.c.b16 %v2749, %v2741
        %v3278 = vpack.c.b16 %v2750, %v2742
        %v3279 = vpack.c.b16 %v2751, %v2743
        %v3280 = vpack.c.b16 %v2760, %v2752
        %v3281 = vpack.c.b16 %v2761, %v2753
        %v3282 = vpack.c.b16 %v2762, %v2754
        %v3283 = vpack.c.b16 %v2763, %v2755
        %v3284 = vpack.c.b16 %v2764, %v2756
        %v3285 = vpack.c.b16 %v2765, %v2757
        %v3286 = vpack.c.b16 %v2766, %v2758
        %v3287 = vpack.c.b16 %v2767, %v2759
        %v3288 = vpack.c.b16 %v2776, %v2768
        %v3289 = vpack.c.b16 %v2777, %v2769
        %v3290 = vpack.c.b16 %v2778, %v2770
        %v3291 = vpack.c.b16 %v2779, %v2771
        %v3292 = vpack.c.b16 %v2780, %v2772
        %v3293 = vpack.c.b16 %v2781, %v2773
        %v3294 = vpack.c.b16 %v2782, %v2774
        %v3295 = vpack.c.b16 %v2783, %v2775
        %v3296 = vpack.c.b16 %v2792, %v2784
        %v3297 = vpack.c.b16 %v2793, %v2785
        %v3298 = vpack.c.b16 %v2794, %v2786
        %v3299 = vpack.c.b16 %v2795, %v2787
        %v3300 = vpack.c.b16 %v2796, %v2788
        %v3301 = vpack.c.b16 %v2797, %v2789
        %v3302 = vpack.c.b16 %v2798, %v2790
        %v3303 = vpack.c.b16 %v2799, %v2791
        %v3304 = vpack.c.b16 %v2808, %v2800
        %v3305 = vpack.c.b16 %v2809, %v2801
        %v3306 = vpack.c.b16 %v2810, %v2802
        %v3307 = vpack.c.b16 %v2811, %v2803
        %v3308 = vpack.c.b16 %v2812, %v2804
        %v3309 = vpack.c.b16 %v2813, %v2805
        %v3310 = vpack.c.b16 %v2814, %v2806
        %v3311 = vpack.c.b16 %v2815, %v2807
        %v3312 = vpack.c.b16 %v2824, %v2816
        %v3313 = vpack.c.b16 %v2825, %v2817
        %v3314 = vpack.c.b16 %v2826, %v2818
        %v3315 = vpack.c.b16 %v2827, %v2819
        %v3316 = vpack.c.b16 %v2828, %v2820
        %v3317 = vpack.c.b16 %v2829, %v2821
        %v3318 = vpack.c.b16 %v2830, %v2822
        %v3319 = vpack.c.b16 %v2831, %v2823
        %v3320 = vpack.c.b16 %v2840, %v2832
        %v3321 = vpack.c.b16 %v2841, %v2833
        %v3322 = vpack.c.b16 %v2842, %v2834
        %v3323 = vpack.c.b16 %v2843, %v2835
        %v3324 = vpack.c.b16 %v2844, %v2836
        %v3325 = vpack.c.b16 %v2845, %v2837
        %v3326 = vpack.c.b16 %v2846, %v2838
        %v3327 = vpack.c.b16 %v2847, %v2839
        %v3328 = vpack.c.b16 %v2856, %v2848
        %v3329 = vpack.c.b16 %v2857, %v2849
        %v3330 = vpack.c.b16 %v2858, %v2850
        %v3331 = vpack.c.b16 %v2859, %v2851
        %v3332 = vpack.c.b16 %v2860, %v2852
        %v3333 = vpack.c.b16 %v2861, %v2853
        %v3334 = vpack.c.b16 %v2862, %v2854
        %v3335 = vpack.c.b16 %v2863, %v2855
        %v3336 = vpack.c.b16 %v2872, %v2864
        %v3337 = vpack.c.b16 %v2873, %v2865
        %v3338 = vpack.c.b16 %v2874, %v2866
        %v3339 = vpack.c.b16 %v2875, %v2867
        %v3340 = vpack.c.b16 %v2876, %v2868
        %v3341 = vpack.c.b16 %v2877, %v2869
        %v3342 = vpack.c.b16 %v2878, %v2870
        %v3343 = vpack.c.b16 %v2879, %v2871
        %v3344 = vpack.c.b16 %v2888, %v2880
        %v3345 = vpack.c.b16 %v2889, %v2881
        %v3346 = vpack.c.b16 %v2890, %v2882
        %v3347 = vpack.c.b16 %v2891, %v2883
        %v3348 = vpack.c.b16 %v2892, %v2884
        %v3349 = vpack.c.b16 %v2893, %v2885
        %v3350 = vpack.c.b16 %v2894, %v2886
        %v3351 = vpack.c.b16 %v2895, %v2887
        %v3352 = vpack.c.b16 %v2904, %v2896
        %v3353 = vpack.c.b16 %v2905, %v2897
        %v3354 = vpack.c.b16 %v2906, %v2898
        %v3355 = vpack.c.b16 %v2907, %v2899
        %v3356 = vpack.c.b16 %v2908, %v2900
        %v3357 = vpack.c.b16 %v2909, %v2901
        %v3358 = vpack.c.b16 %v2910, %v2902
        %v3359 = vpack.c.b16 %v2911, %v2903
        %v3360 = vpack.c.b16 %v2920, %v2912
        %v3361 = vpack.c.b16 %v2921, %v2913
        %v3362 = vpack.c.b16 %v2922, %v2914
        %v3363 = vpack.c.b16 %v2923, %v2915
        %v3364 = vpack.c.b16 %v2924, %v2916
        %v3365 = vpack.c.b16 %v2925, %v2917
        %v3366 = vpack.c.b16 %v2926, %v2918
        %v3367 = vpack.c.b16 %v2927, %v2919
        %v3368 = vpack.c.b16 %v2936, %v2928
        %v3369 = vpack.c.b16 %v2937, %v2929
        %v3370 = vpack.c.b16 %v2938, %v2930
        %v3371 = vpack.c.b16 %v2939, %v2931
        %v3372 = vpack.c.b16 %v2940, %v2932
        %v3373 = vpack.c.b16 %v2941, %v2933
        %v3374 = vpack.c.b16 %v2942, %v2934
        %v3375 = vpack.c.b16 %v2943, %v2935
        %v3376 = vpack.c.b16 %v2952, %v2944
        %v3377 = vpack.c.b16 %v2953, %v2945
        %v3378 = vpack.c.b16 %v2954, %v2946
        %v3379 = vpack.c.b16 %v2955, %v2947
        %v3380 = vpack.c.b16 %v2956, %v2948
        %v3381 = vpack.c.b16 %v2957, %v2949
        %v3382 = vpack.c.b16 %v2958, %v2950
        %v3383 = vpack.c.b16 %v2959, %v2951
        %v3384 = vpack.c.b16 %v2968, %v2960
        %v3385 = vpack.c.b16 %v2969, %v2961
        %v3386 = vpack.c.b16 %v2970, %v2962
        %v3387 = vpack.c.b16 %v2971, %v2963
        %v3388 = vpack.c.b16 %v2972, %v2964
        %v3389 = vpack.c.b16 %v2973, %v2965
        %v3390 = vpack.c.b16 %v2974, %v2966
        %v3391 = vpack.c.b16 %v2975, %v2967
        %v3392 = vpack.c.b16 %v2984, %v2976
        %v3393 = vpack.c.b16 %v2985, %v2977
        %v3394 = vpack.c.b16 %v2986, %v2978
        %v3395 = vpack.c.b16 %v2987, %v2979
        %v3396 = vpack.c.b16 %v2988, %v2980
        %v3397 = vpack.c.b16 %v2989, %v2981
        %v3398 = vpack.c.b16 %v2990, %v2982
        %v3399 = vpack.c.b16 %v2991, %v2983
        %v3400 = vpack.c.b16 %v3000, %v2992
        %v3401 = vpack.c.b16 %v3001, %v2993
        %v3402 = vpack.c.b16 %v3002, %v2994
        %v3403 = vpack.c.b16 %v3003, %v2995
        %v3404 = vpack.c.b16 %v3004, %v2996
        %v3405 = vpack.c.b16 %v3005, %v2997
        %v3406 = vpack.c.b16 %v3006, %v2998
        %v3407 = vpack.c.b16 %v3007, %v2999
        %v3408 = vpack.c.b16 %v3016, %v3008
        %v3409 = vpack.c.b16 %v3017, %v3009
        %v3410 = vpack.c.b16 %v3018, %v3010
        %v3411 = vpack.c.b16 %v3019, %v3011
        %v3412 = vpack.c.b16 %v3020, %v3012
        %v3413 = vpack.c.b16 %v3021, %v3013
        %v3414 = vpack.c.b16 %v3022, %v3014
        %v3415 = vpack.c.b16 %v3023, %v3015
        %v3416 = vpack.c.b16 %v3032, %v3024
        %v3417 = vpack.c.b16 %v3033, %v3025
        %v3418 = vpack.c.b16 %v3034, %v3026
        %v3419 = vpack.c.b16 %v3035, %v3027
        %v3420 = vpack.c.b16 %v3036, %v3028
        %v3421 = vpack.c.b16 %v3037, %v3029
        %v3422 = vpack.c.b16 %v3038, %v3030
        %v3423 = vpack.c.b16 %v3039, %v3031
        %3808 = vmatpush.bf16.msra.mxu0 %v3096
        %3809 = vmatpush.bf16.msra.mxu0 %v3088
        %3810 = vmatpush.bf16.msra.mxu0 %v3080
        %3811 = vmatpush.bf16.msra.mxu0 %v3072
        %3812 = vmatpush.bf16.msra.mxu0 %v3064
        %3813 = vmatpush.bf16.msra.mxu0 %v3056
        %3814 = vmatpush.bf16.msra.mxu0 %v3048
        %3815 = vmatpush.bf16.msra.mxu0 %v3040
        %3816 = vmatmul.bf16.gmra.mxu0 %v1480
        %v3817 = vpop.f32.mrf.mxu0
        %v3818 = vadd.f32 %v1872, %v3817
        %v3819 = vpop.f32.mrf.mxu0
        %3820 = vdwg.mxu0
        %3821 = vmatpush.bf16.msra.mxu0 %v3160
        %3822 = vmatpush.bf16.msra.mxu0 %v3152
        %3823 = vmatpush.bf16.msra.mxu0 %v3144
        %3824 = vmatpush.bf16.msra.mxu0 %v3136
        %3825 = vmatpush.bf16.msra.mxu0 %v3128
        %3826 = vmatpush.bf16.msra.mxu0 %v3120
        %3827 = vmatpush.bf16.msra.mxu0 %v3112
        %3828 = vmatpush.bf16.msra.mxu0 %v3104
        %3829 = vmatmul.bf16.gmra.mxu0 %v1481
        %v3830 = vpop.f32.mrf.mxu0
        %v3831 = vadd.f32 %v3818, %v3830
        %v3832 = vpop.f32.mrf.mxu0
        %3833 = vdwg.mxu0
        %3834 = vmatpush.bf16.msra.mxu0 %v3224
        %3835 = vmatpush.bf16.msra.mxu0 %v3216
        %3836 = vmatpush.bf16.msra.mxu0 %v3208
        %3837 = vmatpush.bf16.msra.mxu0 %v3200
        %3838 = vmatpush.bf16.msra.mxu0 %v3192
        %3839 = vmatpush.bf16.msra.mxu0 %v3184
        %3840 = vmatpush.bf16.msra.mxu0 %v3176
        %3841 = vmatpush.bf16.msra.mxu0 %v3168
        %3842 = vmatmul.bf16.gmra.mxu0 %v1482
        %v3843 = vpop.f32.mrf.mxu0
        %v3844 = vadd.f32 %v3831, %v3843
        %v3845 = vpop.f32.mrf.mxu0
        %3846 = vdwg.mxu0
        %3847 = vmatpush.bf16.msra.mxu0 %v3288
        %3848 = vmatpush.bf16.msra.mxu0 %v3280
        %3849 = vmatpush.bf16.msra.mxu0 %v3272
        %3850 = vmatpush.bf16.msra.mxu0 %v3264
        %3851 = vmatpush.bf16.msra.mxu0 %v3256
        %3852 = vmatpush.bf16.msra.mxu0 %v3248
        %3853 = vmatpush.bf16.msra.mxu0 %v3240
        %3854 = vmatpush.bf16.msra.mxu0 %v3232
        %3855 = vmatmul.bf16.gmra.mxu0 %v1483
        %v3856 = vpop.f32.mrf.mxu0
        %v3857 = vadd.f32 %v3844, %v3856
        %v3858 = vpop.f32.mrf.mxu0
        %3859 = vdwg.mxu0
        %3860 = vmatpush.bf16.msra.mxu0 %v3352
        %3861 = vmatpush.bf16.msra.mxu0 %v3344
        %3862 = vmatpush.bf16.msra.mxu0 %v3336
        %3863 = vmatpush.bf16.msra.mxu0 %v3328
        %3864 = vmatpush.bf16.msra.mxu0 %v3320
        %3865 = vmatpush.bf16.msra.mxu0 %v3312
        %3866 = vmatpush.bf16.msra.mxu0 %v3304
        %3867 = vmatpush.bf16.msra.mxu0 %v3296
        %3868 = vmatmul.bf16.gmra.mxu0 %v1484
        %v3869 = vpop.f32.mrf.mxu0
        %v3870 = vadd.f32 %v3857, %v3869
        %v3871 = vpop.f32.mrf.mxu0
        %3872 = vdwg.mxu0
        %3873 = vmatpush.bf16.msra.mxu0 %v3416
        %3874 = vmatpush.bf16.msra.mxu0 %v3408
        %3875 = vmatpush.bf16.msra.mxu0 %v3400
        %3876 = vmatpush.bf16.msra.mxu0 %v3392
        %3877 = vmatpush.bf16.msra.mxu0 %v3384
        %3878 = vmatpush.bf16.msra.mxu0 %v3376
        %3879 = vmatpush.bf16.msra.mxu0 %v3368
        %3880 = vmatpush.bf16.msra.mxu0 %v3360
        %3881 = vmatmul.bf16.gmra.mxu0 %v1485
        %v3882 = vpop.f32.mrf.mxu0
        %v3883 = vadd.f32 %v3870, %v3882
        %v3884 = vpop.f32.mrf.mxu0
        %3885 = vdwg.mxu0
        %3886 = vmatpush.bf16.msra.mxu0 %v3097
        %3887 = vmatpush.bf16.msra.mxu0 %v3089
        %3888 = vmatpush.bf16.msra.mxu0 %v3081
        %3889 = vmatpush.bf16.msra.mxu0 %v3073
        %3890 = vmatpush.bf16.msra.mxu0 %v3065
        %3891 = vmatpush.bf16.msra.mxu0 %v3057
        %3892 = vmatpush.bf16.msra.mxu0 %v3049
        %3893 = vmatpush.bf16.msra.mxu0 %v3041
        %3894 = vmatmul.bf16.gmra.mxu0 %v1480
        %v3895 = vpop.f32.mrf.mxu0
        %v3896 = vadd.f32 %v1873, %v3895
        %v3897 = vpop.f32.mrf.mxu0
        %3898 = vdwg.mxu0
        %3899 = vmatpush.bf16.msra.mxu0 %v3161
        %3900 = vmatpush.bf16.msra.mxu0 %v3153
        %3901 = vmatpush.bf16.msra.mxu0 %v3145
        %3902 = vmatpush.bf16.msra.mxu0 %v3137
        %3903 = vmatpush.bf16.msra.mxu0 %v3129
        %3904 = vmatpush.bf16.msra.mxu0 %v3121
        %3905 = vmatpush.bf16.msra.mxu0 %v3113
        %3906 = vmatpush.bf16.msra.mxu0 %v3105
        %3907 = vmatmul.bf16.gmra.mxu0 %v1481
        %v3908 = vpop.f32.mrf.mxu0
        %v3909 = vadd.f32 %v3896, %v3908
        %v3910 = vpop.f32.mrf.mxu0
        %3911 = vdwg.mxu0
        %3912 = vmatpush.bf16.msra.mxu0 %v3225
        %3913 = vmatpush.bf16.msra.mxu0 %v3217
        %3914 = vmatpush.bf16.msra.mxu0 %v3209
        %3915 = vmatpush.bf16.msra.mxu0 %v3201
        %3916 = vmatpush.bf16.msra.mxu0 %v3193
        %3917 = vmatpush.bf16.msra.mxu0 %v3185
        %3918 = vmatpush.bf16.msra.mxu0 %v3177
        %3919 = vmatpush.bf16.msra.mxu0 %v3169
        %3920 = vmatmul.bf16.gmra.mxu0 %v1482
        %v3921 = vpop.f32.mrf.mxu0
        %v3922 = vadd.f32 %v3909, %v3921
        %v3923 = vpop.f32.mrf.mxu0
        %3924 = vdwg.mxu0
        %3925 = vmatpush.bf16.msra.mxu0 %v3289
        %3926 = vmatpush.bf16.msra.mxu0 %v3281
        %3927 = vmatpush.bf16.msra.mxu0 %v3273
        %3928 = vmatpush.bf16.msra.mxu0 %v3265
        %3929 = vmatpush.bf16.msra.mxu0 %v3257
        %3930 = vmatpush.bf16.msra.mxu0 %v3249
        %3931 = vmatpush.bf16.msra.mxu0 %v3241
        %3932 = vmatpush.bf16.msra.mxu0 %v3233
        %3933 = vmatmul.bf16.gmra.mxu0 %v1483
        %v3934 = vpop.f32.mrf.mxu0
        %v3935 = vadd.f32 %v3922, %v3934
        %v3936 = vpop.f32.mrf.mxu0
        %3937 = vdwg.mxu0
        %3938 = vmatpush.bf16.msra.mxu0 %v3353
        %3939 = vmatpush.bf16.msra.mxu0 %v3345
        %3940 = vmatpush.bf16.msra.mxu0 %v3337
        %3941 = vmatpush.bf16.msra.mxu0 %v3329
        %3942 = vmatpush.bf16.msra.mxu0 %v3321
        %3943 = vmatpush.bf16.msra.mxu0 %v3313
        %3944 = vmatpush.bf16.msra.mxu0 %v3305
        %3945 = vmatpush.bf16.msra.mxu0 %v3297
        %3946 = vmatmul.bf16.gmra.mxu0 %v1484
        %v3947 = vpop.f32.mrf.mxu0
        %v3948 = vadd.f32 %v3935, %v3947
        %v3949 = vpop.f32.mrf.mxu0
        %3950 = vdwg.mxu0
        %3951 = vmatpush.bf16.msra.mxu0 %v3417
        %3952 = vmatpush.bf16.msra.mxu0 %v3409
        %3953 = vmatpush.bf16.msra.mxu0 %v3401
        %3954 = vmatpush.bf16.msra.mxu0 %v3393
        %3955 = vmatpush.bf16.msra.mxu0 %v3385
        %3956 = vmatpush.bf16.msra.mxu0 %v3377
        %3957 = vmatpush.bf16.msra.mxu0 %v3369
        %3958 = vmatpush.bf16.msra.mxu0 %v3361
        %3959 = vmatmul.bf16.gmra.mxu0 %v1485
        %v3960 = vpop.f32.mrf.mxu0
        %v3961 = vadd.f32 %v3948, %v3960
        %v3962 = vpop.f32.mrf.mxu0
        %3963 = vdwg.mxu0
        %3964 = vmatpush.bf16.msra.mxu0 %v3098
        %3965 = vmatpush.bf16.msra.mxu0 %v3090
        %3966 = vmatpush.bf16.msra.mxu0 %v3082
        %3967 = vmatpush.bf16.msra.mxu0 %v3074
        %3968 = vmatpush.bf16.msra.mxu0 %v3066
        %3969 = vmatpush.bf16.msra.mxu0 %v3058
        %3970 = vmatpush.bf16.msra.mxu0 %v3050
        %3971 = vmatpush.bf16.msra.mxu0 %v3042
        %3972 = vmatmul.bf16.gmra.mxu0 %v1480
        %v3973 = vpop.f32.mrf.mxu0
        %v3974 = vadd.f32 %v1874, %v3973
        %v3975 = vpop.f32.mrf.mxu0
        %3976 = vdwg.mxu0
        %3977 = vmatpush.bf16.msra.mxu0 %v3162
        %3978 = vmatpush.bf16.msra.mxu0 %v3154
        %3979 = vmatpush.bf16.msra.mxu0 %v3146
        %3980 = vmatpush.bf16.msra.mxu0 %v3138
        %3981 = vmatpush.bf16.msra.mxu0 %v3130
        %3982 = vmatpush.bf16.msra.mxu0 %v3122
        %3983 = vmatpush.bf16.msra.mxu0 %v3114
        %3984 = vmatpush.bf16.msra.mxu0 %v3106
        %3985 = vmatmul.bf16.gmra.mxu0 %v1481
        %v3986 = vpop.f32.mrf.mxu0
        %v3987 = vadd.f32 %v3974, %v3986
        %v3988 = vpop.f32.mrf.mxu0
        %3989 = vdwg.mxu0
        %3990 = vmatpush.bf16.msra.mxu0 %v3226
        %3991 = vmatpush.bf16.msra.mxu0 %v3218
        %3992 = vmatpush.bf16.msra.mxu0 %v3210
        %3993 = vmatpush.bf16.msra.mxu0 %v3202
        %3994 = vmatpush.bf16.msra.mxu0 %v3194
        %3995 = vmatpush.bf16.msra.mxu0 %v3186
        %3996 = vmatpush.bf16.msra.mxu0 %v3178
        %3997 = vmatpush.bf16.msra.mxu0 %v3170
        %3998 = vmatmul.bf16.gmra.mxu0 %v1482
        %v3999 = vpop.f32.mrf.mxu0
        %v4000 = vadd.f32 %v3987, %v3999
        %v4001 = vpop.f32.mrf.mxu0
        %4002 = vdwg.mxu0
        %4003 = vmatpush.bf16.msra.mxu0 %v3290
        %4004 = vmatpush.bf16.msra.mxu0 %v3282
        %4005 = vmatpush.bf16.msra.mxu0 %v3274
        %4006 = vmatpush.bf16.msra.mxu0 %v3266
        %4007 = vmatpush.bf16.msra.mxu0 %v3258
        %4008 = vmatpush.bf16.msra.mxu0 %v3250
        %4009 = vmatpush.bf16.msra.mxu0 %v3242
        %4010 = vmatpush.bf16.msra.mxu0 %v3234
        %4011 = vmatmul.bf16.gmra.mxu0 %v1483
        %v4012 = vpop.f32.mrf.mxu0
        %v4013 = vadd.f32 %v4000, %v4012
        %v4014 = vpop.f32.mrf.mxu0
        %4015 = vdwg.mxu0
        %4016 = vmatpush.bf16.msra.mxu0 %v3354
        %4017 = vmatpush.bf16.msra.mxu0 %v3346
        %4018 = vmatpush.bf16.msra.mxu0 %v3338
        %4019 = vmatpush.bf16.msra.mxu0 %v3330
        %4020 = vmatpush.bf16.msra.mxu0 %v3322
        %4021 = vmatpush.bf16.msra.mxu0 %v3314
        %4022 = vmatpush.bf16.msra.mxu0 %v3306
        %4023 = vmatpush.bf16.msra.mxu0 %v3298
        %4024 = vmatmul.bf16.gmra.mxu0 %v1484
        %v4025 = vpop.f32.mrf.mxu0
        %v4026 = vadd.f32 %v4013, %v4025
        %v4027 = vpop.f32.mrf.mxu0
        %4028 = vdwg.mxu0
        %4029 = vmatpush.bf16.msra.mxu0 %v3418
        %4030 = vmatpush.bf16.msra.mxu0 %v3410
        %4031 = vmatpush.bf16.msra.mxu0 %v3402
        %4032 = vmatpush.bf16.msra.mxu0 %v3394
        %4033 = vmatpush.bf16.msra.mxu0 %v3386
        %4034 = vmatpush.bf16.msra.mxu0 %v3378
        %4035 = vmatpush.bf16.msra.mxu0 %v3370
        %4036 = vmatpush.bf16.msra.mxu0 %v3362
        %4037 = vmatmul.bf16.gmra.mxu0 %v1485
        %v4038 = vpop.f32.mrf.mxu0
        %v4039 = vadd.f32 %v4026, %v4038
        %v4040 = vpop.f32.mrf.mxu0
        %4041 = vdwg.mxu0
        %4042 = vmatpush.bf16.msra.mxu0 %v3099
        %4043 = vmatpush.bf16.msra.mxu0 %v3091
        %4044 = vmatpush.bf16.msra.mxu0 %v3083
        %4045 = vmatpush.bf16.msra.mxu0 %v3075
        %4046 = vmatpush.bf16.msra.mxu0 %v3067
        %4047 = vmatpush.bf16.msra.mxu0 %v3059
        %4048 = vmatpush.bf16.msra.mxu0 %v3051
        %4049 = vmatpush.bf16.msra.mxu0 %v3043
        %4050 = vmatmul.bf16.gmra.mxu0 %v1480
        %v4051 = vpop.f32.mrf.mxu0
        %v4052 = vadd.f32 %v1875, %v4051
        %v4053 = vpop.f32.mrf.mxu0
        %4054 = vdwg.mxu0
        %4055 = vmatpush.bf16.msra.mxu0 %v3163
        %4056 = vmatpush.bf16.msra.mxu0 %v3155
        %4057 = vmatpush.bf16.msra.mxu0 %v3147
        %4058 = vmatpush.bf16.msra.mxu0 %v3139
        %4059 = vmatpush.bf16.msra.mxu0 %v3131
        %4060 = vmatpush.bf16.msra.mxu0 %v3123
        %4061 = vmatpush.bf16.msra.mxu0 %v3115
        %4062 = vmatpush.bf16.msra.mxu0 %v3107
        %4063 = vmatmul.bf16.gmra.mxu0 %v1481
        %v4064 = vpop.f32.mrf.mxu0
        %v4065 = vadd.f32 %v4052, %v4064
        %v4066 = vpop.f32.mrf.mxu0
        %4067 = vdwg.mxu0
        %4068 = vmatpush.bf16.msra.mxu0 %v3227
        %4069 = vmatpush.bf16.msra.mxu0 %v3219
        %4070 = vmatpush.bf16.msra.mxu0 %v3211
        %4071 = vmatpush.bf16.msra.mxu0 %v3203
        %4072 = vmatpush.bf16.msra.mxu0 %v3195
        %4073 = vmatpush.bf16.msra.mxu0 %v3187
        %4074 = vmatpush.bf16.msra.mxu0 %v3179
        %4075 = vmatpush.bf16.msra.mxu0 %v3171
        %4076 = vmatmul.bf16.gmra.mxu0 %v1482
        %v4077 = vpop.f32.mrf.mxu0
        %v4078 = vadd.f32 %v4065, %v4077
        %v4079 = vpop.f32.mrf.mxu0
        %4080 = vdwg.mxu0
        %4081 = vmatpush.bf16.msra.mxu0 %v3291
        %4082 = vmatpush.bf16.msra.mxu0 %v3283
        %4083 = vmatpush.bf16.msra.mxu0 %v3275
        %4084 = vmatpush.bf16.msra.mxu0 %v3267
        %4085 = vmatpush.bf16.msra.mxu0 %v3259
        %4086 = vmatpush.bf16.msra.mxu0 %v3251
        %4087 = vmatpush.bf16.msra.mxu0 %v3243
        %4088 = vmatpush.bf16.msra.mxu0 %v3235
        %4089 = vmatmul.bf16.gmra.mxu0 %v1483
        %v4090 = vpop.f32.mrf.mxu0
        %v4091 = vadd.f32 %v4078, %v4090
        %v4092 = vpop.f32.mrf.mxu0
        %4093 = vdwg.mxu0
        %4094 = vmatpush.bf16.msra.mxu0 %v3355
        %4095 = vmatpush.bf16.msra.mxu0 %v3347
        %4096 = vmatpush.bf16.msra.mxu0 %v3339
        %4097 = vmatpush.bf16.msra.mxu0 %v3331
        %4098 = vmatpush.bf16.msra.mxu0 %v3323
        %4099 = vmatpush.bf16.msra.mxu0 %v3315
        %4100 = vmatpush.bf16.msra.mxu0 %v3307
        %4101 = vmatpush.bf16.msra.mxu0 %v3299
        %4102 = vmatmul.bf16.gmra.mxu0 %v1484
        %v4103 = vpop.f32.mrf.mxu0
        %v4104 = vadd.f32 %v4091, %v4103
        %v4105 = vpop.f32.mrf.mxu0
        %4106 = vdwg.mxu0
        %4107 = vmatpush.bf16.msra.mxu0 %v3419
        %4108 = vmatpush.bf16.msra.mxu0 %v3411
        %4109 = vmatpush.bf16.msra.mxu0 %v3403
        %4110 = vmatpush.bf16.msra.mxu0 %v3395
        %4111 = vmatpush.bf16.msra.mxu0 %v3387
        %4112 = vmatpush.bf16.msra.mxu0 %v3379
        %4113 = vmatpush.bf16.msra.mxu0 %v3371
        %4114 = vmatpush.bf16.msra.mxu0 %v3363
        %4115 = vmatmul.bf16.gmra.mxu0 %v1485
        %v4116 = vpop.f32.mrf.mxu0
        %v4117 = vadd.f32 %v4104, %v4116
        %v4118 = vpop.f32.mrf.mxu0
        %4119 = vdwg.mxu0
        %4120 = vmatpush.bf16.msra.mxu0 %v3100
        %4121 = vmatpush.bf16.msra.mxu0 %v3092
        %4122 = vmatpush.bf16.msra.mxu0 %v3084
        %4123 = vmatpush.bf16.msra.mxu0 %v3076
        %4124 = vmatpush.bf16.msra.mxu0 %v3068
        %4125 = vmatpush.bf16.msra.mxu0 %v3060
        %4126 = vmatpush.bf16.msra.mxu0 %v3052
        %4127 = vmatpush.bf16.msra.mxu0 %v3044
        %4128 = vmatmul.bf16.gmra.mxu0 %v1480
        %v4129 = vpop.f32.mrf.mxu0
        %v4130 = vadd.f32 %v1876, %v4129
        %v4131 = vpop.f32.mrf.mxu0
        %4132 = vdwg.mxu0
        %4133 = vmatpush.bf16.msra.mxu0 %v3164
        %4134 = vmatpush.bf16.msra.mxu0 %v3156
        %4135 = vmatpush.bf16.msra.mxu0 %v3148
        %4136 = vmatpush.bf16.msra.mxu0 %v3140
        %4137 = vmatpush.bf16.msra.mxu0 %v3132
        %4138 = vmatpush.bf16.msra.mxu0 %v3124
        %4139 = vmatpush.bf16.msra.mxu0 %v3116
        %4140 = vmatpush.bf16.msra.mxu0 %v3108
        %4141 = vmatmul.bf16.gmra.mxu0 %v1481
        %v4142 = vpop.f32.mrf.mxu0
        %v4143 = vadd.f32 %v4130, %v4142
        %v4144 = vpop.f32.mrf.mxu0
        %4145 = vdwg.mxu0
        %4146 = vmatpush.bf16.msra.mxu0 %v3228
        %4147 = vmatpush.bf16.msra.mxu0 %v3220
        %4148 = vmatpush.bf16.msra.mxu0 %v3212
        %4149 = vmatpush.bf16.msra.mxu0 %v3204
        %4150 = vmatpush.bf16.msra.mxu0 %v3196
        %4151 = vmatpush.bf16.msra.mxu0 %v3188
        %4152 = vmatpush.bf16.msra.mxu0 %v3180
        %4153 = vmatpush.bf16.msra.mxu0 %v3172
        %4154 = vmatmul.bf16.gmra.mxu0 %v1482
        %v4155 = vpop.f32.mrf.mxu0
        %v4156 = vadd.f32 %v4143, %v4155
        %v4157 = vpop.f32.mrf.mxu0
        %4158 = vdwg.mxu0
        %4159 = vmatpush.bf16.msra.mxu0 %v3292
        %4160 = vmatpush.bf16.msra.mxu0 %v3284
        %4161 = vmatpush.bf16.msra.mxu0 %v3276
        %4162 = vmatpush.bf16.msra.mxu0 %v3268
        %4163 = vmatpush.bf16.msra.mxu0 %v3260
        %4164 = vmatpush.bf16.msra.mxu0 %v3252
        %4165 = vmatpush.bf16.msra.mxu0 %v3244
        %4166 = vmatpush.bf16.msra.mxu0 %v3236
        %4167 = vmatmul.bf16.gmra.mxu0 %v1483
        %v4168 = vpop.f32.mrf.mxu0
        %v4169 = vadd.f32 %v4156, %v4168
        %v4170 = vpop.f32.mrf.mxu0
        %4171 = vdwg.mxu0
        %4172 = vmatpush.bf16.msra.mxu0 %v3356
        %4173 = vmatpush.bf16.msra.mxu0 %v3348
        %4174 = vmatpush.bf16.msra.mxu0 %v3340
        %4175 = vmatpush.bf16.msra.mxu0 %v3332
        %4176 = vmatpush.bf16.msra.mxu0 %v3324
        %4177 = vmatpush.bf16.msra.mxu0 %v3316
        %4178 = vmatpush.bf16.msra.mxu0 %v3308
        %4179 = vmatpush.bf16.msra.mxu0 %v3300
        %4180 = vmatmul.bf16.gmra.mxu0 %v1484
        %v4181 = vpop.f32.mrf.mxu0
        %v4182 = vadd.f32 %v4169, %v4181
        %v4183 = vpop.f32.mrf.mxu0
        %4184 = vdwg.mxu0
        %4185 = vmatpush.bf16.msra.mxu0 %v3420
        %4186 = vmatpush.bf16.msra.mxu0 %v3412
        %4187 = vmatpush.bf16.msra.mxu0 %v3404
        %4188 = vmatpush.bf16.msra.mxu0 %v3396
        %4189 = vmatpush.bf16.msra.mxu0 %v3388
        %4190 = vmatpush.bf16.msra.mxu0 %v3380
        %4191 = vmatpush.bf16.msra.mxu0 %v3372
        %4192 = vmatpush.bf16.msra.mxu0 %v3364
        %4193 = vmatmul.bf16.gmra.mxu0 %v1485
        %v4194 = vpop.f32.mrf.mxu0
        %v4195 = vadd.f32 %v4182, %v4194
        %v4196 = vpop.f32.mrf.mxu0
        %4197 = vdwg.mxu0
        %4198 = vmatpush.bf16.msra.mxu0 %v3101
        %4199 = vmatpush.bf16.msra.mxu0 %v3093
        %4200 = vmatpush.bf16.msra.mxu0 %v3085
        %4201 = vmatpush.bf16.msra.mxu0 %v3077
        %4202 = vmatpush.bf16.msra.mxu0 %v3069
        %4203 = vmatpush.bf16.msra.mxu0 %v3061
        %4204 = vmatpush.bf16.msra.mxu0 %v3053
        %4205 = vmatpush.bf16.msra.mxu0 %v3045
        %4206 = vmatmul.bf16.gmra.mxu0 %v1480
        %v4207 = vpop.f32.mrf.mxu0
        %v4208 = vadd.f32 %v1877, %v4207
        %v4209 = vpop.f32.mrf.mxu0
        %4210 = vdwg.mxu0
        %4211 = vmatpush.bf16.msra.mxu0 %v3165
        %4212 = vmatpush.bf16.msra.mxu0 %v3157
        %4213 = vmatpush.bf16.msra.mxu0 %v3149
        %4214 = vmatpush.bf16.msra.mxu0 %v3141
        %4215 = vmatpush.bf16.msra.mxu0 %v3133
        %4216 = vmatpush.bf16.msra.mxu0 %v3125
        %4217 = vmatpush.bf16.msra.mxu0 %v3117
        %4218 = vmatpush.bf16.msra.mxu0 %v3109
        %4219 = vmatmul.bf16.gmra.mxu0 %v1481
        %v4220 = vpop.f32.mrf.mxu0
        %v4221 = vadd.f32 %v4208, %v4220
        %v4222 = vpop.f32.mrf.mxu0
        %4223 = vdwg.mxu0
        %4224 = vmatpush.bf16.msra.mxu0 %v3229
        %4225 = vmatpush.bf16.msra.mxu0 %v3221
        %4226 = vmatpush.bf16.msra.mxu0 %v3213
        %4227 = vmatpush.bf16.msra.mxu0 %v3205
        %4228 = vmatpush.bf16.msra.mxu0 %v3197
        %4229 = vmatpush.bf16.msra.mxu0 %v3189
        %4230 = vmatpush.bf16.msra.mxu0 %v3181
        %4231 = vmatpush.bf16.msra.mxu0 %v3173
        %4232 = vmatmul.bf16.gmra.mxu0 %v1482
        %v4233 = vpop.f32.mrf.mxu0
        %v4234 = vadd.f32 %v4221, %v4233
        %v4235 = vpop.f32.mrf.mxu0
        %4236 = vdwg.mxu0
        %4237 = vmatpush.bf16.msra.mxu0 %v3293
        %4238 = vmatpush.bf16.msra.mxu0 %v3285
        %4239 = vmatpush.bf16.msra.mxu0 %v3277
        %4240 = vmatpush.bf16.msra.mxu0 %v3269
        %4241 = vmatpush.bf16.msra.mxu0 %v3261
        %4242 = vmatpush.bf16.msra.mxu0 %v3253
        %4243 = vmatpush.bf16.msra.mxu0 %v3245
        %4244 = vmatpush.bf16.msra.mxu0 %v3237
        %4245 = vmatmul.bf16.gmra.mxu0 %v1483
        %v4246 = vpop.f32.mrf.mxu0
        %v4247 = vadd.f32 %v4234, %v4246
        %v4248 = vpop.f32.mrf.mxu0
        %4249 = vdwg.mxu0
        %4250 = vmatpush.bf16.msra.mxu0 %v3357
        %4251 = vmatpush.bf16.msra.mxu0 %v3349
        %4252 = vmatpush.bf16.msra.mxu0 %v3341
        %4253 = vmatpush.bf16.msra.mxu0 %v3333
        %4254 = vmatpush.bf16.msra.mxu0 %v3325
        %4255 = vmatpush.bf16.msra.mxu0 %v3317
        %4256 = vmatpush.bf16.msra.mxu0 %v3309
        %4257 = vmatpush.bf16.msra.mxu0 %v3301
        %4258 = vmatmul.bf16.gmra.mxu0 %v1484
        %v4259 = vpop.f32.mrf.mxu0
        %v4260 = vadd.f32 %v4247, %v4259
        %v4261 = vpop.f32.mrf.mxu0
        %4262 = vdwg.mxu0
        %4263 = vmatpush.bf16.msra.mxu0 %v3421
        %4264 = vmatpush.bf16.msra.mxu0 %v3413
        %4265 = vmatpush.bf16.msra.mxu0 %v3405
        %4266 = vmatpush.bf16.msra.mxu0 %v3397
        %4267 = vmatpush.bf16.msra.mxu0 %v3389
        %4268 = vmatpush.bf16.msra.mxu0 %v3381
        %4269 = vmatpush.bf16.msra.mxu0 %v3373
        %4270 = vmatpush.bf16.msra.mxu0 %v3365
        %4271 = vmatmul.bf16.gmra.mxu0 %v1485
        %v4272 = vpop.f32.mrf.mxu0
        %v4273 = vadd.f32 %v4260, %v4272
        %v4274 = vpop.f32.mrf.mxu0
        %4275 = vdwg.mxu0
        %4276 = vmatpush.bf16.msra.mxu0 %v3102
        %4277 = vmatpush.bf16.msra.mxu0 %v3094
        %4278 = vmatpush.bf16.msra.mxu0 %v3086
        %4279 = vmatpush.bf16.msra.mxu0 %v3078
        %4280 = vmatpush.bf16.msra.mxu0 %v3070
        %4281 = vmatpush.bf16.msra.mxu0 %v3062
        %4282 = vmatpush.bf16.msra.mxu0 %v3054
        %4283 = vmatpush.bf16.msra.mxu0 %v3046
        %4284 = vmatmul.bf16.gmra.mxu0 %v1480
        %v4285 = vpop.f32.mrf.mxu0
        %v4286 = vadd.f32 %v1878, %v4285
        %v4287 = vpop.f32.mrf.mxu0
        %4288 = vdwg.mxu0
        %4289 = vmatpush.bf16.msra.mxu0 %v3166
        %4290 = vmatpush.bf16.msra.mxu0 %v3158
        %4291 = vmatpush.bf16.msra.mxu0 %v3150
        %4292 = vmatpush.bf16.msra.mxu0 %v3142
        %4293 = vmatpush.bf16.msra.mxu0 %v3134
        %4294 = vmatpush.bf16.msra.mxu0 %v3126
        %4295 = vmatpush.bf16.msra.mxu0 %v3118
        %4296 = vmatpush.bf16.msra.mxu0 %v3110
        %4297 = vmatmul.bf16.gmra.mxu0 %v1481
        %v4298 = vpop.f32.mrf.mxu0
        %v4299 = vadd.f32 %v4286, %v4298
        %v4300 = vpop.f32.mrf.mxu0
        %4301 = vdwg.mxu0
        %4302 = vmatpush.bf16.msra.mxu0 %v3230
        %4303 = vmatpush.bf16.msra.mxu0 %v3222
        %4304 = vmatpush.bf16.msra.mxu0 %v3214
        %4305 = vmatpush.bf16.msra.mxu0 %v3206
        %4306 = vmatpush.bf16.msra.mxu0 %v3198
        %4307 = vmatpush.bf16.msra.mxu0 %v3190
        %4308 = vmatpush.bf16.msra.mxu0 %v3182
        %4309 = vmatpush.bf16.msra.mxu0 %v3174
        %4310 = vmatmul.bf16.gmra.mxu0 %v1482
        %v4311 = vpop.f32.mrf.mxu0
        %v4312 = vadd.f32 %v4299, %v4311
        %v4313 = vpop.f32.mrf.mxu0
        %4314 = vdwg.mxu0
        %4315 = vmatpush.bf16.msra.mxu0 %v3294
        %4316 = vmatpush.bf16.msra.mxu0 %v3286
        %4317 = vmatpush.bf16.msra.mxu0 %v3278
        %4318 = vmatpush.bf16.msra.mxu0 %v3270
        %4319 = vmatpush.bf16.msra.mxu0 %v3262
        %4320 = vmatpush.bf16.msra.mxu0 %v3254
        %4321 = vmatpush.bf16.msra.mxu0 %v3246
        %4322 = vmatpush.bf16.msra.mxu0 %v3238
        %4323 = vmatmul.bf16.gmra.mxu0 %v1483
        %v4324 = vpop.f32.mrf.mxu0
        %v4325 = vadd.f32 %v4312, %v4324
        %v4326 = vpop.f32.mrf.mxu0
        %4327 = vdwg.mxu0
        %4328 = vmatpush.bf16.msra.mxu0 %v3358
        %4329 = vmatpush.bf16.msra.mxu0 %v3350
        %4330 = vmatpush.bf16.msra.mxu0 %v3342
        %4331 = vmatpush.bf16.msra.mxu0 %v3334
        %4332 = vmatpush.bf16.msra.mxu0 %v3326
        %4333 = vmatpush.bf16.msra.mxu0 %v3318
        %4334 = vmatpush.bf16.msra.mxu0 %v3310
        %4335 = vmatpush.bf16.msra.mxu0 %v3302
        %4336 = vmatmul.bf16.gmra.mxu0 %v1484
        %v4337 = vpop.f32.mrf.mxu0
        %v4338 = vadd.f32 %v4325, %v4337
        %v4339 = vpop.f32.mrf.mxu0
        %4340 = vdwg.mxu0
        %4341 = vmatpush.bf16.msra.mxu0 %v3422
        %4342 = vmatpush.bf16.msra.mxu0 %v3414
        %4343 = vmatpush.bf16.msra.mxu0 %v3406
        %4344 = vmatpush.bf16.msra.mxu0 %v3398
        %4345 = vmatpush.bf16.msra.mxu0 %v3390
        %4346 = vmatpush.bf16.msra.mxu0 %v3382
        %4347 = vmatpush.bf16.msra.mxu0 %v3374
        %4348 = vmatpush.bf16.msra.mxu0 %v3366
        %4349 = vmatmul.bf16.gmra.mxu0 %v1485
        %v4350 = vpop.f32.mrf.mxu0
        %v4351 = vadd.f32 %v4338, %v4350
        %v4352 = vpop.f32.mrf.mxu0
        %4353 = vdwg.mxu0
        %4354 = vmatpush.bf16.msra.mxu0 %v3103
        %4355 = vmatpush.bf16.msra.mxu0 %v3095
        %4356 = vmatpush.bf16.msra.mxu0 %v3087
        %4357 = vmatpush.bf16.msra.mxu0 %v3079
        %4358 = vmatpush.bf16.msra.mxu0 %v3071
        %4359 = vmatpush.bf16.msra.mxu0 %v3063
        %4360 = vmatpush.bf16.msra.mxu0 %v3055
        %4361 = vmatpush.bf16.msra.mxu0 %v3047
        %4362 = vmatmul.bf16.gmra.mxu0 %v1480
        %v4363 = vpop.f32.mrf.mxu0
        %v4364 = vadd.f32 %v1879, %v4363
        %v4365 = vpop.f32.mrf.mxu0
        %4366 = vdwg.mxu0
        %4367 = vmatpush.bf16.msra.mxu0 %v3167
        %4368 = vmatpush.bf16.msra.mxu0 %v3159
        %4369 = vmatpush.bf16.msra.mxu0 %v3151
        %4370 = vmatpush.bf16.msra.mxu0 %v3143
        %4371 = vmatpush.bf16.msra.mxu0 %v3135
        %4372 = vmatpush.bf16.msra.mxu0 %v3127
        %4373 = vmatpush.bf16.msra.mxu0 %v3119
        %4374 = vmatpush.bf16.msra.mxu0 %v3111
        %4375 = vmatmul.bf16.gmra.mxu0 %v1481
        %v4376 = vpop.f32.mrf.mxu0
        %v4377 = vadd.f32 %v4364, %v4376
        %v4378 = vpop.f32.mrf.mxu0
        %4379 = vdwg.mxu0
        %4380 = vmatpush.bf16.msra.mxu0 %v3231
        %4381 = vmatpush.bf16.msra.mxu0 %v3223
        %4382 = vmatpush.bf16.msra.mxu0 %v3215
        %4383 = vmatpush.bf16.msra.mxu0 %v3207
        %4384 = vmatpush.bf16.msra.mxu0 %v3199
        %4385 = vmatpush.bf16.msra.mxu0 %v3191
        %4386 = vmatpush.bf16.msra.mxu0 %v3183
        %4387 = vmatpush.bf16.msra.mxu0 %v3175
        %4388 = vmatmul.bf16.gmra.mxu0 %v1482
        %v4389 = vpop.f32.mrf.mxu0
        %v4390 = vadd.f32 %v4377, %v4389
        %v4391 = vpop.f32.mrf.mxu0
        %4392 = vdwg.mxu0
        %4393 = vmatpush.bf16.msra.mxu0 %v3295
        %4394 = vmatpush.bf16.msra.mxu0 %v3287
        %4395 = vmatpush.bf16.msra.mxu0 %v3279
        %4396 = vmatpush.bf16.msra.mxu0 %v3271
        %4397 = vmatpush.bf16.msra.mxu0 %v3263
        %4398 = vmatpush.bf16.msra.mxu0 %v3255
        %4399 = vmatpush.bf16.msra.mxu0 %v3247
        %4400 = vmatpush.bf16.msra.mxu0 %v3239
        %4401 = vmatmul.bf16.gmra.mxu0 %v1483
        %v4402 = vpop.f32.mrf.mxu0
        %v4403 = vadd.f32 %v4390, %v4402
        %v4404 = vpop.f32.mrf.mxu0
        %4405 = vdwg.mxu0
        %4406 = vmatpush.bf16.msra.mxu0 %v3359
        %4407 = vmatpush.bf16.msra.mxu0 %v3351
        %4408 = vmatpush.bf16.msra.mxu0 %v3343
        %4409 = vmatpush.bf16.msra.mxu0 %v3335
        %4410 = vmatpush.bf16.msra.mxu0 %v3327
        %4411 = vmatpush.bf16.msra.mxu0 %v3319
        %4412 = vmatpush.bf16.msra.mxu0 %v3311
        %4413 = vmatpush.bf16.msra.mxu0 %v3303
        %4414 = vmatmul.bf16.gmra.mxu0 %v1484
        %v4415 = vpop.f32.mrf.mxu0
        %v4416 = vadd.f32 %v4403, %v4415
        %v4417 = vpop.f32.mrf.mxu0
        %4418 = vdwg.mxu0
        %4419 = vmatpush.bf16.msra.mxu0 %v3423
        %4420 = vmatpush.bf16.msra.mxu0 %v3415
        %4421 = vmatpush.bf16.msra.mxu0 %v3407
        %4422 = vmatpush.bf16.msra.mxu0 %v3399
        %4423 = vmatpush.bf16.msra.mxu0 %v3391
        %4424 = vmatpush.bf16.msra.mxu0 %v3383
        %4425 = vmatpush.bf16.msra.mxu0 %v3375
        %4426 = vmatpush.bf16.msra.mxu0 %v3367
        %4427 = vmatmul.bf16.gmra.mxu0 %v1485
        %v4428 = vpop.f32.mrf.mxu0
        %v4429 = vadd.f32 %v4416, %v4428
        %v4430 = vpop.f32.mrf.mxu0
        %4431 = vdwg.mxu0
        %v4432 = vmax.f32 %v3883, 0.0
        %v4433 = vmax.f32 %v3961, 0.0
        %v4434 = vmax.f32 %v4039, 0.0
        %v4435 = vmax.f32 %v4117, 0.0
        %v4436 = vmax.f32 %v4195, 0.0
        %v4437 = vmax.f32 %v4273, 0.0
        %v4438 = vmax.f32 %v4351, 0.0
        %v4439 = vmax.f32 %v4429, 0.0
        %v4441 = vsel %vm390, %v4432, 0
        %v4444 = vsel %vm390, %v4433, 0
        %4446 = vmatpush.msra.mxu0 0.0
        %4447 = vmatpush.msra.mxu0 0.0
        %4448 = vmatpush.msra.mxu0 0.0
        %4449 = vmatpush.msra.mxu0 0.0
        %4450 = vmatpush.msra.mxu0 0.0
        %4451 = vmatpush.msra.mxu0 0.0
        %4452 = vmatpush.msra.mxu0 0.0
        %4453 = vmatpush.msra.mxu0 0.0
        %4454 = vmatpush.msra.mxu0 0.0
        %4455 = vmatpush.msra.mxu0 0.0
        %4456 = vmatpush.msra.mxu0 0.0
        %4457 = vmatpush.msra.mxu0 0.0
        %4458 = vmatpush.msra.mxu0 0.0
        %4459 = vmatpush.msra.mxu0 0.0
        %4460 = vmatpush.msra.mxu0 0.0
        %4461 = vmatpush.msra.mxu0 %v4441
        %4462 = vmatmul.f32.gmra.mxu0 %v388
        %v4463 = vpop.f32.mrf.mxu0
        %v4464 = vadd.f32 0.0, %v4463
        %4465 = vdwg.mxu0
        %4466 = vmatpush.msra.mxu0 0.0
        %4467 = vmatpush.msra.mxu0 0.0
        %4468 = vmatpush.msra.mxu0 0.0
        %4469 = vmatpush.msra.mxu0 0.0
        %4470 = vmatpush.msra.mxu0 0.0
        %4471 = vmatpush.msra.mxu0 0.0
        %4472 = vmatpush.msra.mxu0 0.0
        %4473 = vmatpush.msra.mxu0 0.0
        %4474 = vmatpush.msra.mxu0 0.0
        %4475 = vmatpush.msra.mxu0 0.0
        %4476 = vmatpush.msra.mxu0 0.0
        %4477 = vmatpush.msra.mxu0 0.0
        %4478 = vmatpush.msra.mxu0 0.0
        %4479 = vmatpush.msra.mxu0 0.0
        %4480 = vmatpush.msra.mxu0 0.0
        %4481 = vmatpush.msra.mxu0 %v4444
        %4482 = vmatmul.f32.gmra.mxu0 %v388
        %v4483 = vpop.f32.mrf.mxu0
        %v4484 = vadd.f32 0.0, %v4483
        %4485 = vdwg.mxu0
        %v4486 = vpack.c.bf16 %v4432, %v4432
        %v4487 = vpack.c.bf16 %v4433, %v4433
        %v4488 = vpack.c.bf16 %v4434, %v4434
        %v4489 = vpack.c.bf16 %v4435, %v4435
        %v4490 = vpack.c.bf16 %v4436, %v4436
        %v4491 = vpack.c.bf16 %v4437, %v4437
        %v4492 = vpack.c.bf16 %v4438, %v4438
        %v4493 = vpack.c.bf16 %v4439, %v4439
        %v4494 = vpack.c.bf16 %v4464, %v4464
        %v4495 = vpack.c.bf16 %v4484, %v4484
        %v4496 = vld [vmem:[#allocation9] sm:$0xff]
        %v4497 = vld [vmem:[#allocation9 + $0x8] sm:$0xff]
        %v4498 = vld [vmem:[#allocation9 + $0x10] sm:$0xff]
        %v4499 = vld [vmem:[#allocation9 + $0x18] sm:$0xff]
        %v4500 = vld [vmem:[#allocation9 + $0x20] sm:$0xff]
        %v4501 = vld [vmem:[#allocation9 + $0x28] sm:$0xff]
        %v4502 = vld [vmem:[#allocation9 + $0x30] sm:$0xff]
        %v4503 = vld [vmem:[#allocation9 + $0x38] sm:$0xff]
        %v4504 = vld [vmem:[#allocation9 + $0x40] sm:$0xff]
        %v4505 = vld [vmem:[#allocation9 + $0x48] sm:$0xff]
        %v4506 = vld [vmem:[#allocation9 + $0x50] sm:$0xff]
        %v4507 = vld [vmem:[#allocation9 + $0x58] sm:$0xff]
        %v4508 = vld [vmem:[#allocation9 + $0x60] sm:$0xff]
        %v4509 = vld [vmem:[#allocation9 + $0x68] sm:$0xff]
        %v4510 = vld [vmem:[#allocation9 + $0x70] sm:$0xff]
        %v4511 = vld [vmem:[#allocation9 + $0x78] sm:$0xff]
        %v4512 = vld [vmem:[#allocation9 + $0x80] sm:$0xff]
        %v4513 = vld [vmem:[#allocation9 + $0x88] sm:$0xff]
        %v4514 = vld [vmem:[#allocation9 + $0x90] sm:$0xff]
        %v4515 = vld [vmem:[#allocation9 + $0x98] sm:$0xff]
        %v4516 = vld [vmem:[#allocation9 + $0xa0] sm:$0xff]
        %v4517 = vld [vmem:[#allocation9 + $0xa8] sm:$0xff]
        %v4518 = vld [vmem:[#allocation9 + $0xb0] sm:$0xff]
        %v4519 = vld [vmem:[#allocation9 + $0xb8] sm:$0xff]
        %v4520 = vld [vmem:[#allocation9 + $0xc0] sm:$0xff]
        %v4521 = vld [vmem:[#allocation9 + $0xc8] sm:$0xff]
        %v4522 = vld [vmem:[#allocation9 + $0xd0] sm:$0xff]
        %v4523 = vld [vmem:[#allocation9 + $0xd8] sm:$0xff]
        %v4524 = vld [vmem:[#allocation9 + $0xe0] sm:$0xff]
        %v4525 = vld [vmem:[#allocation9 + $0xe8] sm:$0xff]
        %v4526 = vld [vmem:[#allocation9 + $0xf0] sm:$0xff]
        %v4527 = vld [vmem:[#allocation9 + $0xf8] sm:$0xff]
        %v4528 = vld [vmem:[#allocation9 + $0x100] sm:$0xff]
        %v4529 = vld [vmem:[#allocation9 + $0x108] sm:$0xff]
        %v4530 = vld [vmem:[#allocation9 + $0x110] sm:$0xff]
        %v4531 = vld [vmem:[#allocation9 + $0x118] sm:$0xff]
        %v4532 = vld [vmem:[#allocation9 + $0x120] sm:$0xff]
        %v4533 = vld [vmem:[#allocation9 + $0x128] sm:$0xff]
        %v4534 = vld [vmem:[#allocation9 + $0x130] sm:$0xff]
        %v4535 = vld [vmem:[#allocation9 + $0x138] sm:$0xff]
        %v4536 = vld [vmem:[#allocation9 + $0x140] sm:$0xff]
        %v4537 = vld [vmem:[#allocation9 + $0x148] sm:$0xff]
        %v4538 = vld [vmem:[#allocation9 + $0x150] sm:$0xff]
        %v4539 = vld [vmem:[#allocation9 + $0x158] sm:$0xff]
        %v4540 = vld [vmem:[#allocation9 + $0x160] sm:$0xff]
        %v4541 = vld [vmem:[#allocation9 + $0x168] sm:$0xff]
        %v4542 = vld [vmem:[#allocation9 + $0x170] sm:$0xff]
        %v4543 = vld [vmem:[#allocation9 + $0x178] sm:$0xff]
        %v4544 = vld [vmem:[#allocation9 + $0x180] sm:$0xff]
        %v4545 = vld [vmem:[#allocation9 + $0x188] sm:$0xff]
        %v4546 = vld [vmem:[#allocation9 + $0x190] sm:$0xff]
        %v4547 = vld [vmem:[#allocation9 + $0x198] sm:$0xff]
        %v4548 = vld [vmem:[#allocation9 + $0x1a0] sm:$0xff]
        %v4549 = vld [vmem:[#allocation9 + $0x1a8] sm:$0xff]
        %v4550 = vld [vmem:[#allocation9 + $0x1b0] sm:$0xff]
        %v4551 = vld [vmem:[#allocation9 + $0x1b8] sm:$0xff]
        %v4552 = vld [vmem:[#allocation9 + $0x1c0] sm:$0xff]
        %v4553 = vld [vmem:[#allocation9 + $0x1c8] sm:$0xff]
        %v4554 = vld [vmem:[#allocation9 + $0x1d0] sm:$0xff]
        %v4555 = vld [vmem:[#allocation9 + $0x1d8] sm:$0xff]
        %v4556 = vld [vmem:[#allocation9 + $0x1e0] sm:$0xff]
        %v4557 = vld [vmem:[#allocation9 + $0x1e8] sm:$0xff]
        %v4558 = vld [vmem:[#allocation9 + $0x1f0] sm:$0xff]
        %v4559 = vld [vmem:[#allocation9 + $0x1f8] sm:$0xff]
        %v4560 = vld [vmem:[#allocation9 + $0x200] sm:$0xff]
        %v4561 = vld [vmem:[#allocation9 + $0x208] sm:$0xff]
        %v4562 = vld [vmem:[#allocation9 + $0x210] sm:$0xff]
        %v4563 = vld [vmem:[#allocation9 + $0x218] sm:$0xff]
        %v4564 = vld [vmem:[#allocation9 + $0x220] sm:$0xff]
        %v4565 = vld [vmem:[#allocation9 + $0x228] sm:$0xff]
        %v4566 = vld [vmem:[#allocation9 + $0x230] sm:$0xff]
        %v4567 = vld [vmem:[#allocation9 + $0x238] sm:$0xff]
        %v4568 = vld [vmem:[#allocation9 + $0x240] sm:$0xff]
        %v4569 = vld [vmem:[#allocation9 + $0x248] sm:$0xff]
        %v4570 = vld [vmem:[#allocation9 + $0x250] sm:$0xff]
        %v4571 = vld [vmem:[#allocation9 + $0x258] sm:$0xff]
        %v4572 = vld [vmem:[#allocation9 + $0x260] sm:$0xff]
        %v4573 = vld [vmem:[#allocation9 + $0x268] sm:$0xff]
        %v4574 = vld [vmem:[#allocation9 + $0x270] sm:$0xff]
        %v4575 = vld [vmem:[#allocation9 + $0x278] sm:$0xff]
        %v4576 = vld [vmem:[#allocation9 + $0x280] sm:$0xff]
        %v4577 = vld [vmem:[#allocation9 + $0x288] sm:$0xff]
        %v4578 = vld [vmem:[#allocation9 + $0x290] sm:$0xff]
        %v4579 = vld [vmem:[#allocation9 + $0x298] sm:$0xff]
        %v4580 = vld [vmem:[#allocation9 + $0x2a0] sm:$0xff]
        %v4581 = vld [vmem:[#allocation9 + $0x2a8] sm:$0xff]
        %v4582 = vld [vmem:[#allocation9 + $0x2b0] sm:$0xff]
        %v4583 = vld [vmem:[#allocation9 + $0x2b8] sm:$0xff]
        %v4584 = vld [vmem:[#allocation9 + $0x2c0] sm:$0xff]
        %v4585 = vld [vmem:[#allocation9 + $0x2c8] sm:$0xff]
        %v4586 = vld [vmem:[#allocation9 + $0x2d0] sm:$0xff]
        %v4587 = vld [vmem:[#allocation9 + $0x2d8] sm:$0xff]
        %v4588 = vld [vmem:[#allocation9 + $0x2e0] sm:$0xff]
        %v4589 = vld [vmem:[#allocation9 + $0x2e8] sm:$0xff]
        %v4590 = vld [vmem:[#allocation9 + $0x2f0] sm:$0xff]
        %v4591 = vld [vmem:[#allocation9 + $0x2f8] sm:$0xff]
        %v4592 = vld [vmem:[#allocation9 + $0x300] sm:$0xff]
        %v4593 = vld [vmem:[#allocation9 + $0x308] sm:$0xff]
        %v4594 = vld [vmem:[#allocation9 + $0x310] sm:$0xff]
        %v4595 = vld [vmem:[#allocation9 + $0x318] sm:$0xff]
        %v4596 = vld [vmem:[#allocation9 + $0x320] sm:$0xff]
        %v4597 = vld [vmem:[#allocation9 + $0x328] sm:$0xff]
        %v4598 = vld [vmem:[#allocation9 + $0x330] sm:$0xff]
        %v4599 = vld [vmem:[#allocation9 + $0x338] sm:$0xff]
        %v4600 = vld [vmem:[#allocation9 + $0x340] sm:$0xff]
        %v4601 = vld [vmem:[#allocation9 + $0x348] sm:$0xff]
        %v4602 = vld [vmem:[#allocation9 + $0x350] sm:$0xff]
        %v4603 = vld [vmem:[#allocation9 + $0x358] sm:$0xff]
        %v4604 = vld [vmem:[#allocation9 + $0x360] sm:$0xff]
        %v4605 = vld [vmem:[#allocation9 + $0x368] sm:$0xff]
        %v4606 = vld [vmem:[#allocation9 + $0x370] sm:$0xff]
        %v4607 = vld [vmem:[#allocation9 + $0x378] sm:$0xff]
        %v4608 = vld [vmem:[#allocation9 + $0x380] sm:$0xff]
        %v4609 = vld [vmem:[#allocation9 + $0x388] sm:$0xff]
        %v4610 = vld [vmem:[#allocation9 + $0x390] sm:$0xff]
        %v4611 = vld [vmem:[#allocation9 + $0x398] sm:$0xff]
        %v4612 = vld [vmem:[#allocation9 + $0x3a0] sm:$0xff]
        %v4613 = vld [vmem:[#allocation9 + $0x3a8] sm:$0xff]
        %v4614 = vld [vmem:[#allocation9 + $0x3b0] sm:$0xff]
        %v4615 = vld [vmem:[#allocation9 + $0x3b8] sm:$0xff]
        %v4616 = vld [vmem:[#allocation9 + $0x3c0] sm:$0xff]
        %v4617 = vld [vmem:[#allocation9 + $0x3c8] sm:$0xff]
        %v4618 = vld [vmem:[#allocation9 + $0x3d0] sm:$0xff]
        %v4619 = vld [vmem:[#allocation9 + $0x3d8] sm:$0xff]
        %v4620 = vld [vmem:[#allocation9 + $0x3e0] sm:$0xff]
        %v4621 = vld [vmem:[#allocation9 + $0x3e8] sm:$0xff]
        %v4622 = vld [vmem:[#allocation9 + $0x3f0] sm:$0xff]
        %v4623 = vld [vmem:[#allocation9 + $0x3f8] sm:$0xff]
        %v4624 = vld [vmem:[#allocation9 + $0x400] sm:$0xff]
        %v4625 = vld [vmem:[#allocation9 + $0x408] sm:$0xff]
        %v4626 = vld [vmem:[#allocation9 + $0x410] sm:$0xff]
        %v4627 = vld [vmem:[#allocation9 + $0x418] sm:$0xff]
        %v4628 = vld [vmem:[#allocation9 + $0x420] sm:$0xff]
        %v4629 = vld [vmem:[#allocation9 + $0x428] sm:$0xff]
        %v4630 = vld [vmem:[#allocation9 + $0x430] sm:$0xff]
        %v4631 = vld [vmem:[#allocation9 + $0x438] sm:$0xff]
        %v4632 = vld [vmem:[#allocation9 + $0x440] sm:$0xff]
        %v4633 = vld [vmem:[#allocation9 + $0x448] sm:$0xff]
        %v4634 = vld [vmem:[#allocation9 + $0x450] sm:$0xff]
        %v4635 = vld [vmem:[#allocation9 + $0x458] sm:$0xff]
        %v4636 = vld [vmem:[#allocation9 + $0x460] sm:$0xff]
        %v4637 = vld [vmem:[#allocation9 + $0x468] sm:$0xff]
        %v4638 = vld [vmem:[#allocation9 + $0x470] sm:$0xff]
        %v4639 = vld [vmem:[#allocation9 + $0x478] sm:$0xff]
        %v4640 = vld [vmem:[#allocation9 + $0x480] sm:$0xff]
        %v4641 = vld [vmem:[#allocation9 + $0x488] sm:$0xff]
        %v4642 = vld [vmem:[#allocation9 + $0x490] sm:$0xff]
        %v4643 = vld [vmem:[#allocation9 + $0x498] sm:$0xff]
        %v4644 = vld [vmem:[#allocation9 + $0x4a0] sm:$0xff]
        %v4645 = vld [vmem:[#allocation9 + $0x4a8] sm:$0xff]
        %v4646 = vld [vmem:[#allocation9 + $0x4b0] sm:$0xff]
        %v4647 = vld [vmem:[#allocation9 + $0x4b8] sm:$0xff]
        %v4648 = vld [vmem:[#allocation9 + $0x4c0] sm:$0xff]
        %v4649 = vld [vmem:[#allocation9 + $0x4c8] sm:$0xff]
        %v4650 = vld [vmem:[#allocation9 + $0x4d0] sm:$0xff]
        %v4651 = vld [vmem:[#allocation9 + $0x4d8] sm:$0xff]
        %v4652 = vld [vmem:[#allocation9 + $0x4e0] sm:$0xff]
        %v4653 = vld [vmem:[#allocation9 + $0x4e8] sm:$0xff]
        %v4654 = vld [vmem:[#allocation9 + $0x4f0] sm:$0xff]
        %v4655 = vld [vmem:[#allocation9 + $0x4f8] sm:$0xff]
        %v4656 = vld [vmem:[#allocation9 + $0x500] sm:$0xff]
        %v4657 = vld [vmem:[#allocation9 + $0x508] sm:$0xff]
        %v4658 = vld [vmem:[#allocation9 + $0x510] sm:$0xff]
        %v4659 = vld [vmem:[#allocation9 + $0x518] sm:$0xff]
        %v4660 = vld [vmem:[#allocation9 + $0x520] sm:$0xff]
        %v4661 = vld [vmem:[#allocation9 + $0x528] sm:$0xff]
        %v4662 = vld [vmem:[#allocation9 + $0x530] sm:$0xff]
        %v4663 = vld [vmem:[#allocation9 + $0x538] sm:$0xff]
        %v4664 = vld [vmem:[#allocation9 + $0x540] sm:$0xff]
        %v4665 = vld [vmem:[#allocation9 + $0x548] sm:$0xff]
        %v4666 = vld [vmem:[#allocation9 + $0x550] sm:$0xff]
        %v4667 = vld [vmem:[#allocation9 + $0x558] sm:$0xff]
        %v4668 = vld [vmem:[#allocation9 + $0x560] sm:$0xff]
        %v4669 = vld [vmem:[#allocation9 + $0x568] sm:$0xff]
        %v4670 = vld [vmem:[#allocation9 + $0x570] sm:$0xff]
        %v4671 = vld [vmem:[#allocation9 + $0x578] sm:$0xff]
        %v4672 = vld [vmem:[#allocation9 + $0x580] sm:$0xff]
        %v4673 = vld [vmem:[#allocation9 + $0x588] sm:$0xff]
        %v4674 = vld [vmem:[#allocation9 + $0x590] sm:$0xff]
        %v4675 = vld [vmem:[#allocation9 + $0x598] sm:$0xff]
        %v4676 = vld [vmem:[#allocation9 + $0x5a0] sm:$0xff]
        %v4677 = vld [vmem:[#allocation9 + $0x5a8] sm:$0xff]
        %v4678 = vld [vmem:[#allocation9 + $0x5b0] sm:$0xff]
        %v4679 = vld [vmem:[#allocation9 + $0x5b8] sm:$0xff]
        %v4680 = vld [vmem:[#allocation9 + $0x5c0] sm:$0xff]
        %v4681 = vld [vmem:[#allocation9 + $0x5c8] sm:$0xff]
        %v4682 = vld [vmem:[#allocation9 + $0x5d0] sm:$0xff]
        %v4683 = vld [vmem:[#allocation9 + $0x5d8] sm:$0xff]
        %v4684 = vld [vmem:[#allocation9 + $0x5e0] sm:$0xff]
        %v4685 = vld [vmem:[#allocation9 + $0x5e8] sm:$0xff]
        %v4686 = vld [vmem:[#allocation9 + $0x5f0] sm:$0xff]
        %v4687 = vld [vmem:[#allocation9 + $0x5f8] sm:$0xff]
        %v4688 = vld [vmem:[#allocation9 + $0x600] sm:$0xff]
        %v4689 = vld [vmem:[#allocation9 + $0x608] sm:$0xff]
        %v4690 = vld [vmem:[#allocation9 + $0x610] sm:$0xff]
        %v4691 = vld [vmem:[#allocation9 + $0x618] sm:$0xff]
        %v4692 = vld [vmem:[#allocation9 + $0x620] sm:$0xff]
        %v4693 = vld [vmem:[#allocation9 + $0x628] sm:$0xff]
        %v4694 = vld [vmem:[#allocation9 + $0x630] sm:$0xff]
        %v4695 = vld [vmem:[#allocation9 + $0x638] sm:$0xff]
        %v4696 = vld [vmem:[#allocation9 + $0x640] sm:$0xff]
        %v4697 = vld [vmem:[#allocation9 + $0x648] sm:$0xff]
        %v4698 = vld [vmem:[#allocation9 + $0x650] sm:$0xff]
        %v4699 = vld [vmem:[#allocation9 + $0x658] sm:$0xff]
        %v4700 = vld [vmem:[#allocation9 + $0x660] sm:$0xff]
        %v4701 = vld [vmem:[#allocation9 + $0x668] sm:$0xff]
        %v4702 = vld [vmem:[#allocation9 + $0x670] sm:$0xff]
        %v4703 = vld [vmem:[#allocation9 + $0x678] sm:$0xff]
        %v4704 = vld [vmem:[#allocation9 + $0x680] sm:$0xff]
        %v4705 = vld [vmem:[#allocation9 + $0x688] sm:$0xff]
        %v4706 = vld [vmem:[#allocation9 + $0x690] sm:$0xff]
        %v4707 = vld [vmem:[#allocation9 + $0x698] sm:$0xff]
        %v4708 = vld [vmem:[#allocation9 + $0x6a0] sm:$0xff]
        %v4709 = vld [vmem:[#allocation9 + $0x6a8] sm:$0xff]
        %v4710 = vld [vmem:[#allocation9 + $0x6b0] sm:$0xff]
        %v4711 = vld [vmem:[#allocation9 + $0x6b8] sm:$0xff]
        %v4712 = vld [vmem:[#allocation9 + $0x6c0] sm:$0xff]
        %v4713 = vld [vmem:[#allocation9 + $0x6c8] sm:$0xff]
        %v4714 = vld [vmem:[#allocation9 + $0x6d0] sm:$0xff]
        %v4715 = vld [vmem:[#allocation9 + $0x6d8] sm:$0xff]
        %v4716 = vld [vmem:[#allocation9 + $0x6e0] sm:$0xff]
        %v4717 = vld [vmem:[#allocation9 + $0x6e8] sm:$0xff]
        %v4718 = vld [vmem:[#allocation9 + $0x6f0] sm:$0xff]
        %v4719 = vld [vmem:[#allocation9 + $0x6f8] sm:$0xff]
        %v4720 = vld [vmem:[#allocation9 + $0x700] sm:$0xff]
        %v4721 = vld [vmem:[#allocation9 + $0x708] sm:$0xff]
        %v4722 = vld [vmem:[#allocation9 + $0x710] sm:$0xff]
        %v4723 = vld [vmem:[#allocation9 + $0x718] sm:$0xff]
        %v4724 = vld [vmem:[#allocation9 + $0x720] sm:$0xff]
        %v4725 = vld [vmem:[#allocation9 + $0x728] sm:$0xff]
        %v4726 = vld [vmem:[#allocation9 + $0x730] sm:$0xff]
        %v4727 = vld [vmem:[#allocation9 + $0x738] sm:$0xff]
        %v4728 = vld [vmem:[#allocation9 + $0x740] sm:$0xff]
        %v4729 = vld [vmem:[#allocation9 + $0x748] sm:$0xff]
        %v4730 = vld [vmem:[#allocation9 + $0x750] sm:$0xff]
        %v4731 = vld [vmem:[#allocation9 + $0x758] sm:$0xff]
        %v4732 = vld [vmem:[#allocation9 + $0x760] sm:$0xff]
        %v4733 = vld [vmem:[#allocation9 + $0x768] sm:$0xff]
        %v4734 = vld [vmem:[#allocation9 + $0x770] sm:$0xff]
        %v4735 = vld [vmem:[#allocation9 + $0x778] sm:$0xff]
        %v4736 = vld [vmem:[#allocation9 + $0x780] sm:$0xff]
        %v4737 = vld [vmem:[#allocation9 + $0x788] sm:$0xff]
        %v4738 = vld [vmem:[#allocation9 + $0x790] sm:$0xff]
        %v4739 = vld [vmem:[#allocation9 + $0x798] sm:$0xff]
        %v4740 = vld [vmem:[#allocation9 + $0x7a0] sm:$0xff]
        %v4741 = vld [vmem:[#allocation9 + $0x7a8] sm:$0xff]
        %v4742 = vld [vmem:[#allocation9 + $0x7b0] sm:$0xff]
        %v4743 = vld [vmem:[#allocation9 + $0x7b8] sm:$0xff]
        %v4744 = vld [vmem:[#allocation9 + $0x7c0] sm:$0xff]
        %v4745 = vld [vmem:[#allocation9 + $0x7c8] sm:$0xff]
        %v4746 = vld [vmem:[#allocation9 + $0x7d0] sm:$0xff]
        %v4747 = vld [vmem:[#allocation9 + $0x7d8] sm:$0xff]
        %v4748 = vld [vmem:[#allocation9 + $0x7e0] sm:$0xff]
        %v4749 = vld [vmem:[#allocation9 + $0x7e8] sm:$0xff]
        %v4750 = vld [vmem:[#allocation9 + $0x7f0] sm:$0xff]
        %v4751 = vld [vmem:[#allocation9 + $0x7f8] sm:$0xff]
        %v4752 = vld [vmem:[#allocation9 + $0x800] sm:$0xff]
        %v4753 = vld [vmem:[#allocation9 + $0x808] sm:$0xff]
        %v4754 = vld [vmem:[#allocation9 + $0x810] sm:$0xff]
        %v4755 = vld [vmem:[#allocation9 + $0x818] sm:$0xff]
        %v4756 = vld [vmem:[#allocation9 + $0x820] sm:$0xff]
        %v4757 = vld [vmem:[#allocation9 + $0x828] sm:$0xff]
        %v4758 = vld [vmem:[#allocation9 + $0x830] sm:$0xff]
        %v4759 = vld [vmem:[#allocation9 + $0x838] sm:$0xff]
        %v4760 = vld [vmem:[#allocation9 + $0x840] sm:$0xff]
        %v4761 = vld [vmem:[#allocation9 + $0x848] sm:$0xff]
        %v4762 = vld [vmem:[#allocation9 + $0x850] sm:$0xff]
        %v4763 = vld [vmem:[#allocation9 + $0x858] sm:$0xff]
        %v4764 = vld [vmem:[#allocation9 + $0x860] sm:$0xff]
        %v4765 = vld [vmem:[#allocation9 + $0x868] sm:$0xff]
        %v4766 = vld [vmem:[#allocation9 + $0x870] sm:$0xff]
        %v4767 = vld [vmem:[#allocation9 + $0x878] sm:$0xff]
        %v4768 = vld [vmem:[#allocation9 + $0x880] sm:$0xff]
        %v4769 = vld [vmem:[#allocation9 + $0x888] sm:$0xff]
        %v4770 = vld [vmem:[#allocation9 + $0x890] sm:$0xff]
        %v4771 = vld [vmem:[#allocation9 + $0x898] sm:$0xff]
        %v4772 = vld [vmem:[#allocation9 + $0x8a0] sm:$0xff]
        %v4773 = vld [vmem:[#allocation9 + $0x8a8] sm:$0xff]
        %v4774 = vld [vmem:[#allocation9 + $0x8b0] sm:$0xff]
        %v4775 = vld [vmem:[#allocation9 + $0x8b8] sm:$0xff]
        %v4776 = vld [vmem:[#allocation9 + $0x8c0] sm:$0xff]
        %v4777 = vld [vmem:[#allocation9 + $0x8c8] sm:$0xff]
        %v4778 = vld [vmem:[#allocation9 + $0x8d0] sm:$0xff]
        %v4779 = vld [vmem:[#allocation9 + $0x8d8] sm:$0xff]
        %v4780 = vld [vmem:[#allocation9 + $0x8e0] sm:$0xff]
        %v4781 = vld [vmem:[#allocation9 + $0x8e8] sm:$0xff]
        %v4782 = vld [vmem:[#allocation9 + $0x8f0] sm:$0xff]
        %v4783 = vld [vmem:[#allocation9 + $0x8f8] sm:$0xff]
        %v4784 = vld [vmem:[#allocation9 + $0x900] sm:$0xff]
        %v4785 = vld [vmem:[#allocation9 + $0x908] sm:$0xff]
        %v4786 = vld [vmem:[#allocation9 + $0x910] sm:$0xff]
        %v4787 = vld [vmem:[#allocation9 + $0x918] sm:$0xff]
        %v4788 = vld [vmem:[#allocation9 + $0x920] sm:$0xff]
        %v4789 = vld [vmem:[#allocation9 + $0x928] sm:$0xff]
        %v4790 = vld [vmem:[#allocation9 + $0x930] sm:$0xff]
        %v4791 = vld [vmem:[#allocation9 + $0x938] sm:$0xff]
        %v4792 = vld [vmem:[#allocation9 + $0x940] sm:$0xff]
        %v4793 = vld [vmem:[#allocation9 + $0x948] sm:$0xff]
        %v4794 = vld [vmem:[#allocation9 + $0x950] sm:$0xff]
        %v4795 = vld [vmem:[#allocation9 + $0x958] sm:$0xff]
        %v4796 = vld [vmem:[#allocation9 + $0x960] sm:$0xff]
        %v4797 = vld [vmem:[#allocation9 + $0x968] sm:$0xff]
        %v4798 = vld [vmem:[#allocation9 + $0x970] sm:$0xff]
        %v4799 = vld [vmem:[#allocation9 + $0x978] sm:$0xff]
        %v4800 = vld [vmem:[#allocation9 + $0x980] sm:$0xff]
        %v4801 = vld [vmem:[#allocation9 + $0x988] sm:$0xff]
        %v4802 = vld [vmem:[#allocation9 + $0x990] sm:$0xff]
        %v4803 = vld [vmem:[#allocation9 + $0x998] sm:$0xff]
        %v4804 = vld [vmem:[#allocation9 + $0x9a0] sm:$0xff]
        %v4805 = vld [vmem:[#allocation9 + $0x9a8] sm:$0xff]
        %v4806 = vld [vmem:[#allocation9 + $0x9b0] sm:$0xff]
        %v4807 = vld [vmem:[#allocation9 + $0x9b8] sm:$0xff]
        %v4808 = vld [vmem:[#allocation9 + $0x9c0] sm:$0xff]
        %v4809 = vld [vmem:[#allocation9 + $0x9c8] sm:$0xff]
        %v4810 = vld [vmem:[#allocation9 + $0x9d0] sm:$0xff]
        %v4811 = vld [vmem:[#allocation9 + $0x9d8] sm:$0xff]
        %v4812 = vld [vmem:[#allocation9 + $0x9e0] sm:$0xff]
        %v4813 = vld [vmem:[#allocation9 + $0x9e8] sm:$0xff]
        %v4814 = vld [vmem:[#allocation9 + $0x9f0] sm:$0xff]
        %v4815 = vld [vmem:[#allocation9 + $0x9f8] sm:$0xff]
        %v4816 = vld [vmem:[#allocation9 + $0xa00] sm:$0xff]
        %v4817 = vld [vmem:[#allocation9 + $0xa08] sm:$0xff]
        %v4818 = vld [vmem:[#allocation9 + $0xa10] sm:$0xff]
        %v4819 = vld [vmem:[#allocation9 + $0xa18] sm:$0xff]
        %v4820 = vld [vmem:[#allocation9 + $0xa20] sm:$0xff]
        %v4821 = vld [vmem:[#allocation9 + $0xa28] sm:$0xff]
        %v4822 = vld [vmem:[#allocation9 + $0xa30] sm:$0xff]
        %v4823 = vld [vmem:[#allocation9 + $0xa38] sm:$0xff]
        %v4824 = vld [vmem:[#allocation9 + $0xa40] sm:$0xff]
        %v4825 = vld [vmem:[#allocation9 + $0xa48] sm:$0xff]
        %v4826 = vld [vmem:[#allocation9 + $0xa50] sm:$0xff]
        %v4827 = vld [vmem:[#allocation9 + $0xa58] sm:$0xff]
        %v4828 = vld [vmem:[#allocation9 + $0xa60] sm:$0xff]
        %v4829 = vld [vmem:[#allocation9 + $0xa68] sm:$0xff]
        %v4830 = vld [vmem:[#allocation9 + $0xa70] sm:$0xff]
        %v4831 = vld [vmem:[#allocation9 + $0xa78] sm:$0xff]
        %v4832 = vld [vmem:[#allocation9 + $0xa80] sm:$0xff]
        %v4833 = vld [vmem:[#allocation9 + $0xa88] sm:$0xff]
        %v4834 = vld [vmem:[#allocation9 + $0xa90] sm:$0xff]
        %v4835 = vld [vmem:[#allocation9 + $0xa98] sm:$0xff]
        %v4836 = vld [vmem:[#allocation9 + $0xaa0] sm:$0xff]
        %v4837 = vld [vmem:[#allocation9 + $0xaa8] sm:$0xff]
        %v4838 = vld [vmem:[#allocation9 + $0xab0] sm:$0xff]
        %v4839 = vld [vmem:[#allocation9 + $0xab8] sm:$0xff]
        %v4840 = vld [vmem:[#allocation9 + $0xac0] sm:$0xff]
        %v4841 = vld [vmem:[#allocation9 + $0xac8] sm:$0xff]
        %v4842 = vld [vmem:[#allocation9 + $0xad0] sm:$0xff]
        %v4843 = vld [vmem:[#allocation9 + $0xad8] sm:$0xff]
        %v4844 = vld [vmem:[#allocation9 + $0xae0] sm:$0xff]
        %v4845 = vld [vmem:[#allocation9 + $0xae8] sm:$0xff]
        %v4846 = vld [vmem:[#allocation9 + $0xaf0] sm:$0xff]
        %v4847 = vld [vmem:[#allocation9 + $0xaf8] sm:$0xff]
        %v4848 = vld [vmem:[#allocation9 + $0xb00] sm:$0xff]
        %v4849 = vld [vmem:[#allocation9 + $0xb08] sm:$0xff]
        %v4850 = vld [vmem:[#allocation9 + $0xb10] sm:$0xff]
        %v4851 = vld [vmem:[#allocation9 + $0xb18] sm:$0xff]
        %v4852 = vld [vmem:[#allocation9 + $0xb20] sm:$0xff]
        %v4853 = vld [vmem:[#allocation9 + $0xb28] sm:$0xff]
        %v4854 = vld [vmem:[#allocation9 + $0xb30] sm:$0xff]
        %v4855 = vld [vmem:[#allocation9 + $0xb38] sm:$0xff]
        %v4856 = vld [vmem:[#allocation9 + $0xb40] sm:$0xff]
        %v4857 = vld [vmem:[#allocation9 + $0xb48] sm:$0xff]
        %v4858 = vld [vmem:[#allocation9 + $0xb50] sm:$0xff]
        %v4859 = vld [vmem:[#allocation9 + $0xb58] sm:$0xff]
        %v4860 = vld [vmem:[#allocation9 + $0xb60] sm:$0xff]
        %v4861 = vld [vmem:[#allocation9 + $0xb68] sm:$0xff]
        %v4862 = vld [vmem:[#allocation9 + $0xb70] sm:$0xff]
        %v4863 = vld [vmem:[#allocation9 + $0xb78] sm:$0xff]
        %v4864 = vld [vmem:[#allocation9 + $0xb80] sm:$0xff]
        %v4865 = vld [vmem:[#allocation9 + $0xb88] sm:$0xff]
        %v4866 = vld [vmem:[#allocation9 + $0xb90] sm:$0xff]
        %v4867 = vld [vmem:[#allocation9 + $0xb98] sm:$0xff]
        %v4868 = vld [vmem:[#allocation9 + $0xba0] sm:$0xff]
        %v4869 = vld [vmem:[#allocation9 + $0xba8] sm:$0xff]
        %v4870 = vld [vmem:[#allocation9 + $0xbb0] sm:$0xff]
        %v4871 = vld [vmem:[#allocation9 + $0xbb8] sm:$0xff]
        %v4872 = vld [vmem:[#allocation9 + $0xbc0] sm:$0xff]
        %v4873 = vld [vmem:[#allocation9 + $0xbc8] sm:$0xff]
        %v4874 = vld [vmem:[#allocation9 + $0xbd0] sm:$0xff]
        %v4875 = vld [vmem:[#allocation9 + $0xbd8] sm:$0xff]
        %v4876 = vld [vmem:[#allocation9 + $0xbe0] sm:$0xff]
        %v4877 = vld [vmem:[#allocation9 + $0xbe8] sm:$0xff]
        %v4878 = vld [vmem:[#allocation9 + $0xbf0] sm:$0xff]
        %v4879 = vld [vmem:[#allocation9 + $0xbf8] sm:$0xff]
        %v4880 = vld [vmem:[#allocation9 + $0xc00] sm:$0xff]
        %v4881 = vld [vmem:[#allocation9 + $0xc08] sm:$0xff]
        %v4882 = vld [vmem:[#allocation9 + $0xc10] sm:$0xff]
        %v4883 = vld [vmem:[#allocation9 + $0xc18] sm:$0xff]
        %v4884 = vld [vmem:[#allocation9 + $0xc20] sm:$0xff]
        %v4885 = vld [vmem:[#allocation9 + $0xc28] sm:$0xff]
        %v4886 = vld [vmem:[#allocation9 + $0xc30] sm:$0xff]
        %v4887 = vld [vmem:[#allocation9 + $0xc38] sm:$0xff]
        %v4888 = vld [vmem:[#allocation9 + $0xc40] sm:$0xff]
        %v4889 = vld [vmem:[#allocation9 + $0xc48] sm:$0xff]
        %v4890 = vld [vmem:[#allocation9 + $0xc50] sm:$0xff]
        %v4891 = vld [vmem:[#allocation9 + $0xc58] sm:$0xff]
        %v4892 = vld [vmem:[#allocation9 + $0xc60] sm:$0xff]
        %v4893 = vld [vmem:[#allocation9 + $0xc68] sm:$0xff]
        %v4894 = vld [vmem:[#allocation9 + $0xc70] sm:$0xff]
        %v4895 = vld [vmem:[#allocation9 + $0xc78] sm:$0xff]
        %v4896 = vld [vmem:[#allocation9 + $0xc80] sm:$0xff]
        %v4897 = vld [vmem:[#allocation9 + $0xc88] sm:$0xff]
        %v4898 = vld [vmem:[#allocation9 + $0xc90] sm:$0xff]
        %v4899 = vld [vmem:[#allocation9 + $0xc98] sm:$0xff]
        %v4900 = vld [vmem:[#allocation9 + $0xca0] sm:$0xff]
        %v4901 = vld [vmem:[#allocation9 + $0xca8] sm:$0xff]
        %v4902 = vld [vmem:[#allocation9 + $0xcb0] sm:$0xff]
        %v4903 = vld [vmem:[#allocation9 + $0xcb8] sm:$0xff]
        %v4904 = vld [vmem:[#allocation9 + $0xcc0] sm:$0xff]
        %v4905 = vld [vmem:[#allocation9 + $0xcc8] sm:$0xff]
        %v4906 = vld [vmem:[#allocation9 + $0xcd0] sm:$0xff]
        %v4907 = vld [vmem:[#allocation9 + $0xcd8] sm:$0xff]
        %v4908 = vld [vmem:[#allocation9 + $0xce0] sm:$0xff]
        %v4909 = vld [vmem:[#allocation9 + $0xce8] sm:$0xff]
        %v4910 = vld [vmem:[#allocation9 + $0xcf0] sm:$0xff]
        %v4911 = vld [vmem:[#allocation9 + $0xcf8] sm:$0xff]
        %v4912 = vld [vmem:[#allocation9 + $0xd00] sm:$0xff]
        %v4913 = vld [vmem:[#allocation9 + $0xd08] sm:$0xff]
        %v4914 = vld [vmem:[#allocation9 + $0xd10] sm:$0xff]
        %v4915 = vld [vmem:[#allocation9 + $0xd18] sm:$0xff]
        %v4916 = vld [vmem:[#allocation9 + $0xd20] sm:$0xff]
        %v4917 = vld [vmem:[#allocation9 + $0xd28] sm:$0xff]
        %v4918 = vld [vmem:[#allocation9 + $0xd30] sm:$0xff]
        %v4919 = vld [vmem:[#allocation9 + $0xd38] sm:$0xff]
        %v4920 = vld [vmem:[#allocation9 + $0xd40] sm:$0xff]
        %v4921 = vld [vmem:[#allocation9 + $0xd48] sm:$0xff]
        %v4922 = vld [vmem:[#allocation9 + $0xd50] sm:$0xff]
        %v4923 = vld [vmem:[#allocation9 + $0xd58] sm:$0xff]
        %v4924 = vld [vmem:[#allocation9 + $0xd60] sm:$0xff]
        %v4925 = vld [vmem:[#allocation9 + $0xd68] sm:$0xff]
        %v4926 = vld [vmem:[#allocation9 + $0xd70] sm:$0xff]
        %v4927 = vld [vmem:[#allocation9 + $0xd78] sm:$0xff]
        %v4928 = vld [vmem:[#allocation9 + $0xd80] sm:$0xff]
        %v4929 = vld [vmem:[#allocation9 + $0xd88] sm:$0xff]
        %v4930 = vld [vmem:[#allocation9 + $0xd90] sm:$0xff]
        %v4931 = vld [vmem:[#allocation9 + $0xd98] sm:$0xff]
        %v4932 = vld [vmem:[#allocation9 + $0xda0] sm:$0xff]
        %v4933 = vld [vmem:[#allocation9 + $0xda8] sm:$0xff]
        %v4934 = vld [vmem:[#allocation9 + $0xdb0] sm:$0xff]
        %v4935 = vld [vmem:[#allocation9 + $0xdb8] sm:$0xff]
        %v4936 = vld [vmem:[#allocation9 + $0xdc0] sm:$0xff]
        %v4937 = vld [vmem:[#allocation9 + $0xdc8] sm:$0xff]
        %v4938 = vld [vmem:[#allocation9 + $0xdd0] sm:$0xff]
        %v4939 = vld [vmem:[#allocation9 + $0xdd8] sm:$0xff]
        %v4940 = vld [vmem:[#allocation9 + $0xde0] sm:$0xff]
        %v4941 = vld [vmem:[#allocation9 + $0xde8] sm:$0xff]
        %v4942 = vld [vmem:[#allocation9 + $0xdf0] sm:$0xff]
        %v4943 = vld [vmem:[#allocation9 + $0xdf8] sm:$0xff]
        %v4944 = vld [vmem:[#allocation9 + $0xe00] sm:$0xff]
        %v4945 = vld [vmem:[#allocation9 + $0xe08] sm:$0xff]
        %v4946 = vld [vmem:[#allocation9 + $0xe10] sm:$0xff]
        %v4947 = vld [vmem:[#allocation9 + $0xe18] sm:$0xff]
        %v4948 = vld [vmem:[#allocation9 + $0xe20] sm:$0xff]
        %v4949 = vld [vmem:[#allocation9 + $0xe28] sm:$0xff]
        %v4950 = vld [vmem:[#allocation9 + $0xe30] sm:$0xff]
        %v4951 = vld [vmem:[#allocation9 + $0xe38] sm:$0xff]
        %v4952 = vld [vmem:[#allocation9 + $0xe40] sm:$0xff]
        %v4953 = vld [vmem:[#allocation9 + $0xe48] sm:$0xff]
        %v4954 = vld [vmem:[#allocation9 + $0xe50] sm:$0xff]
        %v4955 = vld [vmem:[#allocation9 + $0xe58] sm:$0xff]
        %v4956 = vld [vmem:[#allocation9 + $0xe60] sm:$0xff]
        %v4957 = vld [vmem:[#allocation9 + $0xe68] sm:$0xff]
        %v4958 = vld [vmem:[#allocation9 + $0xe70] sm:$0xff]
        %v4959 = vld [vmem:[#allocation9 + $0xe78] sm:$0xff]
        %v4960 = vld [vmem:[#allocation9 + $0xe80] sm:$0xff]
        %v4961 = vld [vmem:[#allocation9 + $0xe88] sm:$0xff]
        %v4962 = vld [vmem:[#allocation9 + $0xe90] sm:$0xff]
        %v4963 = vld [vmem:[#allocation9 + $0xe98] sm:$0xff]
        %v4964 = vld [vmem:[#allocation9 + $0xea0] sm:$0xff]
        %v4965 = vld [vmem:[#allocation9 + $0xea8] sm:$0xff]
        %v4966 = vld [vmem:[#allocation9 + $0xeb0] sm:$0xff]
        %v4967 = vld [vmem:[#allocation9 + $0xeb8] sm:$0xff]
        %v4968 = vld [vmem:[#allocation9 + $0xec0] sm:$0xff]
        %v4969 = vld [vmem:[#allocation9 + $0xec8] sm:$0xff]
        %v4970 = vld [vmem:[#allocation9 + $0xed0] sm:$0xff]
        %v4971 = vld [vmem:[#allocation9 + $0xed8] sm:$0xff]
        %v4972 = vld [vmem:[#allocation9 + $0xee0] sm:$0xff]
        %v4973 = vld [vmem:[#allocation9 + $0xee8] sm:$0xff]
        %v4974 = vld [vmem:[#allocation9 + $0xef0] sm:$0xff]
        %v4975 = vld [vmem:[#allocation9 + $0xef8] sm:$0xff]
        %v4976 = vld [vmem:[#allocation10] sm:$0x3f]
        %v4978 = vperm.slane %v4976, 0
        %v4979 = vperm.slane %v4976, 1
        %v4980 = vperm.slane %v4976, 2
        %v4981 = vperm.slane %v4976, 3
        %v4982 = vperm.slane %v4976, 4
        %v4983 = vperm.slane %v4976, 5
        %v5470 = vunpack.c.l.b16 %v4496
        %v5471 = vunpack.c.h.b16 %v4496
        %v5472 = vunpack.c.l.b16 %v4497
        %v5473 = vunpack.c.h.b16 %v4497
        %v5474 = vunpack.c.l.b16 %v4498
        %v5475 = vunpack.c.h.b16 %v4498
        %v5476 = vunpack.c.l.b16 %v4499
        %v5477 = vunpack.c.h.b16 %v4499
        %v5478 = vunpack.c.l.b16 %v4500
        %v5479 = vunpack.c.h.b16 %v4500
        %v5480 = vunpack.c.l.b16 %v4501
        %v5481 = vunpack.c.h.b16 %v4501
        %v5482 = vunpack.c.l.b16 %v4502
        %v5483 = vunpack.c.h.b16 %v4502
        %v5484 = vunpack.c.l.b16 %v4503
        %v5485 = vunpack.c.h.b16 %v4503
        %v5486 = vunpack.c.l.b16 %v4504
        %v5487 = vunpack.c.h.b16 %v4504
        %v5488 = vunpack.c.l.b16 %v4505
        %v5489 = vunpack.c.h.b16 %v4505
        %v5490 = vunpack.c.l.b16 %v4506
        %v5491 = vunpack.c.h.b16 %v4506
        %v5492 = vunpack.c.l.b16 %v4507
        %v5493 = vunpack.c.h.b16 %v4507
        %v5494 = vunpack.c.l.b16 %v4508
        %v5495 = vunpack.c.h.b16 %v4508
        %v5496 = vunpack.c.l.b16 %v4509
        %v5497 = vunpack.c.h.b16 %v4509
        %v5498 = vunpack.c.l.b16 %v4510
        %v5499 = vunpack.c.h.b16 %v4510
        %v5500 = vunpack.c.l.b16 %v4511
        %v5501 = vunpack.c.h.b16 %v4511
        %v5502 = vunpack.c.l.b16 %v4512
        %v5503 = vunpack.c.h.b16 %v4512
        %v5504 = vunpack.c.l.b16 %v4513
        %v5505 = vunpack.c.h.b16 %v4513
        %v5506 = vunpack.c.l.b16 %v4514
        %v5507 = vunpack.c.h.b16 %v4514
        %v5508 = vunpack.c.l.b16 %v4515
        %v5509 = vunpack.c.h.b16 %v4515
        %v5510 = vunpack.c.l.b16 %v4516
        %v5511 = vunpack.c.h.b16 %v4516
        %v5512 = vunpack.c.l.b16 %v4517
        %v5513 = vunpack.c.h.b16 %v4517
        %v5514 = vunpack.c.l.b16 %v4518
        %v5515 = vunpack.c.h.b16 %v4518
        %v5516 = vunpack.c.l.b16 %v4519
        %v5517 = vunpack.c.h.b16 %v4519
        %v5518 = vunpack.c.l.b16 %v4520
        %v5519 = vunpack.c.h.b16 %v4520
        %v5520 = vunpack.c.l.b16 %v4521
        %v5521 = vunpack.c.h.b16 %v4521
        %v5522 = vunpack.c.l.b16 %v4522
        %v5523 = vunpack.c.h.b16 %v4522
        %v5524 = vunpack.c.l.b16 %v4523
        %v5525 = vunpack.c.h.b16 %v4523
        %v5526 = vunpack.c.l.b16 %v4524
        %v5527 = vunpack.c.h.b16 %v4524
        %v5528 = vunpack.c.l.b16 %v4525
        %v5529 = vunpack.c.h.b16 %v4525
        %v5530 = vunpack.c.l.b16 %v4526
        %v5531 = vunpack.c.h.b16 %v4526
        %v5532 = vunpack.c.l.b16 %v4527
        %v5533 = vunpack.c.h.b16 %v4527
        %v5534 = vunpack.c.l.b16 %v4528
        %v5535 = vunpack.c.h.b16 %v4528
        %v5536 = vunpack.c.l.b16 %v4529
        %v5537 = vunpack.c.h.b16 %v4529
        %v5538 = vunpack.c.l.b16 %v4530
        %v5539 = vunpack.c.h.b16 %v4530
        %v5540 = vunpack.c.l.b16 %v4531
        %v5541 = vunpack.c.h.b16 %v4531
        %v5542 = vunpack.c.l.b16 %v4532
        %v5543 = vunpack.c.h.b16 %v4532
        %v5544 = vunpack.c.l.b16 %v4533
        %v5545 = vunpack.c.h.b16 %v4533
        %v5546 = vunpack.c.l.b16 %v4534
        %v5547 = vunpack.c.h.b16 %v4534
        %v5548 = vunpack.c.l.b16 %v4535
        %v5549 = vunpack.c.h.b16 %v4535
        %v5550 = vunpack.c.l.b16 %v4536
        %v5551 = vunpack.c.h.b16 %v4536
        %v5552 = vunpack.c.l.b16 %v4537
        %v5553 = vunpack.c.h.b16 %v4537
        %v5554 = vunpack.c.l.b16 %v4538
        %v5555 = vunpack.c.h.b16 %v4538
        %v5556 = vunpack.c.l.b16 %v4539
        %v5557 = vunpack.c.h.b16 %v4539
        %v5558 = vunpack.c.l.b16 %v4540
        %v5559 = vunpack.c.h.b16 %v4540
        %v5560 = vunpack.c.l.b16 %v4541
        %v5561 = vunpack.c.h.b16 %v4541
        %v5562 = vunpack.c.l.b16 %v4542
        %v5563 = vunpack.c.h.b16 %v4542
        %v5564 = vunpack.c.l.b16 %v4543
        %v5565 = vunpack.c.h.b16 %v4543
        %v5566 = vunpack.c.l.b16 %v4544
        %v5567 = vunpack.c.h.b16 %v4544
        %v5568 = vunpack.c.l.b16 %v4545
        %v5569 = vunpack.c.h.b16 %v4545
        %v5570 = vunpack.c.l.b16 %v4546
        %v5571 = vunpack.c.h.b16 %v4546
        %v5572 = vunpack.c.l.b16 %v4547
        %v5573 = vunpack.c.h.b16 %v4547
        %v5574 = vunpack.c.l.b16 %v4548
        %v5575 = vunpack.c.h.b16 %v4548
        %v5576 = vunpack.c.l.b16 %v4549
        %v5577 = vunpack.c.h.b16 %v4549
        %v5578 = vunpack.c.l.b16 %v4550
        %v5579 = vunpack.c.h.b16 %v4550
        %v5580 = vunpack.c.l.b16 %v4551
        %v5581 = vunpack.c.h.b16 %v4551
        %v5582 = vunpack.c.l.b16 %v4552
        %v5583 = vunpack.c.h.b16 %v4552
        %v5584 = vunpack.c.l.b16 %v4553
        %v5585 = vunpack.c.h.b16 %v4553
        %v5586 = vunpack.c.l.b16 %v4554
        %v5587 = vunpack.c.h.b16 %v4554
        %v5588 = vunpack.c.l.b16 %v4555
        %v5589 = vunpack.c.h.b16 %v4555
        %v5590 = vunpack.c.l.b16 %v4556
        %v5591 = vunpack.c.h.b16 %v4556
        %v5592 = vunpack.c.l.b16 %v4557
        %v5593 = vunpack.c.h.b16 %v4557
        %v5594 = vunpack.c.l.b16 %v4558
        %v5595 = vunpack.c.h.b16 %v4558
        %v5596 = vunpack.c.l.b16 %v4559
        %v5597 = vunpack.c.h.b16 %v4559
        %v5598 = vunpack.c.l.b16 %v4560
        %v5599 = vunpack.c.h.b16 %v4560
        %v5600 = vunpack.c.l.b16 %v4561
        %v5601 = vunpack.c.h.b16 %v4561
        %v5602 = vunpack.c.l.b16 %v4562
        %v5603 = vunpack.c.h.b16 %v4562
        %v5604 = vunpack.c.l.b16 %v4563
        %v5605 = vunpack.c.h.b16 %v4563
        %v5606 = vunpack.c.l.b16 %v4564
        %v5607 = vunpack.c.h.b16 %v4564
        %v5608 = vunpack.c.l.b16 %v4565
        %v5609 = vunpack.c.h.b16 %v4565
        %v5610 = vunpack.c.l.b16 %v4566
        %v5611 = vunpack.c.h.b16 %v4566
        %v5612 = vunpack.c.l.b16 %v4567
        %v5613 = vunpack.c.h.b16 %v4567
        %v5614 = vunpack.c.l.b16 %v4568
        %v5615 = vunpack.c.h.b16 %v4568
        %v5616 = vunpack.c.l.b16 %v4569
        %v5617 = vunpack.c.h.b16 %v4569
        %v5618 = vunpack.c.l.b16 %v4570
        %v5619 = vunpack.c.h.b16 %v4570
        %v5620 = vunpack.c.l.b16 %v4571
        %v5621 = vunpack.c.h.b16 %v4571
        %v5622 = vunpack.c.l.b16 %v4572
        %v5623 = vunpack.c.h.b16 %v4572
        %v5624 = vunpack.c.l.b16 %v4573
        %v5625 = vunpack.c.h.b16 %v4573
        %v5626 = vunpack.c.l.b16 %v4574
        %v5627 = vunpack.c.h.b16 %v4574
        %v5628 = vunpack.c.l.b16 %v4575
        %v5629 = vunpack.c.h.b16 %v4575
        %v5630 = vunpack.c.l.b16 %v4576
        %v5631 = vunpack.c.h.b16 %v4576
        %v5632 = vunpack.c.l.b16 %v4577
        %v5633 = vunpack.c.h.b16 %v4577
        %v5634 = vunpack.c.l.b16 %v4578
        %v5635 = vunpack.c.h.b16 %v4578
        %v5636 = vunpack.c.l.b16 %v4579
        %v5637 = vunpack.c.h.b16 %v4579
        %v5638 = vunpack.c.l.b16 %v4580
        %v5639 = vunpack.c.h.b16 %v4580
        %v5640 = vunpack.c.l.b16 %v4581
        %v5641 = vunpack.c.h.b16 %v4581
        %v5642 = vunpack.c.l.b16 %v4582
        %v5643 = vunpack.c.h.b16 %v4582
        %v5644 = vunpack.c.l.b16 %v4583
        %v5645 = vunpack.c.h.b16 %v4583
        %v5646 = vunpack.c.l.b16 %v4584
        %v5647 = vunpack.c.h.b16 %v4584
        %v5648 = vunpack.c.l.b16 %v4585
        %v5649 = vunpack.c.h.b16 %v4585
        %v5650 = vunpack.c.l.b16 %v4586
        %v5651 = vunpack.c.h.b16 %v4586
        %v5652 = vunpack.c.l.b16 %v4587
        %v5653 = vunpack.c.h.b16 %v4587
        %v5654 = vunpack.c.l.b16 %v4588
        %v5655 = vunpack.c.h.b16 %v4588
        %v5656 = vunpack.c.l.b16 %v4589
        %v5657 = vunpack.c.h.b16 %v4589
        %v5658 = vunpack.c.l.b16 %v4590
        %v5659 = vunpack.c.h.b16 %v4590
        %v5660 = vunpack.c.l.b16 %v4591
        %v5661 = vunpack.c.h.b16 %v4591
        %v5662 = vunpack.c.l.b16 %v4592
        %v5663 = vunpack.c.h.b16 %v4592
        %v5664 = vunpack.c.l.b16 %v4593
        %v5665 = vunpack.c.h.b16 %v4593
        %v5666 = vunpack.c.l.b16 %v4594
        %v5667 = vunpack.c.h.b16 %v4594
        %v5668 = vunpack.c.l.b16 %v4595
        %v5669 = vunpack.c.h.b16 %v4595
        %v5670 = vunpack.c.l.b16 %v4596
        %v5671 = vunpack.c.h.b16 %v4596
        %v5672 = vunpack.c.l.b16 %v4597
        %v5673 = vunpack.c.h.b16 %v4597
        %v5674 = vunpack.c.l.b16 %v4598
        %v5675 = vunpack.c.h.b16 %v4598
        %v5676 = vunpack.c.l.b16 %v4599
        %v5677 = vunpack.c.h.b16 %v4599
        %v5678 = vunpack.c.l.b16 %v4600
        %v5679 = vunpack.c.h.b16 %v4600
        %v5680 = vunpack.c.l.b16 %v4601
        %v5681 = vunpack.c.h.b16 %v4601
        %v5682 = vunpack.c.l.b16 %v4602
        %v5683 = vunpack.c.h.b16 %v4602
        %v5684 = vunpack.c.l.b16 %v4603
        %v5685 = vunpack.c.h.b16 %v4603
        %v5686 = vunpack.c.l.b16 %v4604
        %v5687 = vunpack.c.h.b16 %v4604
        %v5688 = vunpack.c.l.b16 %v4605
        %v5689 = vunpack.c.h.b16 %v4605
        %v5690 = vunpack.c.l.b16 %v4606
        %v5691 = vunpack.c.h.b16 %v4606
        %v5692 = vunpack.c.l.b16 %v4607
        %v5693 = vunpack.c.h.b16 %v4607
        %v5694 = vunpack.c.l.b16 %v4608
        %v5695 = vunpack.c.h.b16 %v4608
        %v5696 = vunpack.c.l.b16 %v4609
        %v5697 = vunpack.c.h.b16 %v4609
        %v5698 = vunpack.c.l.b16 %v4610
        %v5699 = vunpack.c.h.b16 %v4610
        %v5700 = vunpack.c.l.b16 %v4611
        %v5701 = vunpack.c.h.b16 %v4611
        %v5702 = vunpack.c.l.b16 %v4612
        %v5703 = vunpack.c.h.b16 %v4612
        %v5704 = vunpack.c.l.b16 %v4613
        %v5705 = vunpack.c.h.b16 %v4613
        %v5706 = vunpack.c.l.b16 %v4614
        %v5707 = vunpack.c.h.b16 %v4614
        %v5708 = vunpack.c.l.b16 %v4615
        %v5709 = vunpack.c.h.b16 %v4615
        %v5710 = vunpack.c.l.b16 %v4616
        %v5711 = vunpack.c.h.b16 %v4616
        %v5712 = vunpack.c.l.b16 %v4617
        %v5713 = vunpack.c.h.b16 %v4617
        %v5714 = vunpack.c.l.b16 %v4618
        %v5715 = vunpack.c.h.b16 %v4618
        %v5716 = vunpack.c.l.b16 %v4619
        %v5717 = vunpack.c.h.b16 %v4619
        %v5718 = vunpack.c.l.b16 %v4620
        %v5719 = vunpack.c.h.b16 %v4620
        %v5720 = vunpack.c.l.b16 %v4621
        %v5721 = vunpack.c.h.b16 %v4621
        %v5722 = vunpack.c.l.b16 %v4622
        %v5723 = vunpack.c.h.b16 %v4622
        %v5724 = vunpack.c.l.b16 %v4623
        %v5725 = vunpack.c.h.b16 %v4623
        %v5726 = vunpack.c.l.b16 %v4624
        %v5727 = vunpack.c.h.b16 %v4624
        %v5728 = vunpack.c.l.b16 %v4625
        %v5729 = vunpack.c.h.b16 %v4625
        %v5730 = vunpack.c.l.b16 %v4626
        %v5731 = vunpack.c.h.b16 %v4626
        %v5732 = vunpack.c.l.b16 %v4627
        %v5733 = vunpack.c.h.b16 %v4627
        %v5734 = vunpack.c.l.b16 %v4628
        %v5735 = vunpack.c.h.b16 %v4628
        %v5736 = vunpack.c.l.b16 %v4629
        %v5737 = vunpack.c.h.b16 %v4629
        %v5738 = vunpack.c.l.b16 %v4630
        %v5739 = vunpack.c.h.b16 %v4630
        %v5740 = vunpack.c.l.b16 %v4631
        %v5741 = vunpack.c.h.b16 %v4631
        %v5742 = vunpack.c.l.b16 %v4632
        %v5743 = vunpack.c.h.b16 %v4632
        %v5744 = vunpack.c.l.b16 %v4633
        %v5745 = vunpack.c.h.b16 %v4633
        %v5746 = vunpack.c.l.b16 %v4634
        %v5747 = vunpack.c.h.b16 %v4634
        %v5748 = vunpack.c.l.b16 %v4635
        %v5749 = vunpack.c.h.b16 %v4635
        %v5750 = vunpack.c.l.b16 %v4636
        %v5751 = vunpack.c.h.b16 %v4636
        %v5752 = vunpack.c.l.b16 %v4637
        %v5753 = vunpack.c.h.b16 %v4637
        %v5754 = vunpack.c.l.b16 %v4638
        %v5755 = vunpack.c.h.b16 %v4638
        %v5756 = vunpack.c.l.b16 %v4639
        %v5757 = vunpack.c.h.b16 %v4639
        %v5758 = vunpack.c.l.b16 %v4640
        %v5759 = vunpack.c.h.b16 %v4640
        %v5760 = vunpack.c.l.b16 %v4641
        %v5761 = vunpack.c.h.b16 %v4641
        %v5762 = vunpack.c.l.b16 %v4642
        %v5763 = vunpack.c.h.b16 %v4642
        %v5764 = vunpack.c.l.b16 %v4643
        %v5765 = vunpack.c.h.b16 %v4643
        %v5766 = vunpack.c.l.b16 %v4644
        %v5767 = vunpack.c.h.b16 %v4644
        %v5768 = vunpack.c.l.b16 %v4645
        %v5769 = vunpack.c.h.b16 %v4645
        %v5770 = vunpack.c.l.b16 %v4646
        %v5771 = vunpack.c.h.b16 %v4646
        %v5772 = vunpack.c.l.b16 %v4647
        %v5773 = vunpack.c.h.b16 %v4647
        %v5774 = vunpack.c.l.b16 %v4648
        %v5775 = vunpack.c.h.b16 %v4648
        %v5776 = vunpack.c.l.b16 %v4649
        %v5777 = vunpack.c.h.b16 %v4649
        %v5778 = vunpack.c.l.b16 %v4650
        %v5779 = vunpack.c.h.b16 %v4650
        %v5780 = vunpack.c.l.b16 %v4651
        %v5781 = vunpack.c.h.b16 %v4651
        %v5782 = vunpack.c.l.b16 %v4652
        %v5783 = vunpack.c.h.b16 %v4652
        %v5784 = vunpack.c.l.b16 %v4653
        %v5785 = vunpack.c.h.b16 %v4653
        %v5786 = vunpack.c.l.b16 %v4654
        %v5787 = vunpack.c.h.b16 %v4654
        %v5788 = vunpack.c.l.b16 %v4655
        %v5789 = vunpack.c.h.b16 %v4655
        %v5790 = vunpack.c.l.b16 %v4656
        %v5791 = vunpack.c.h.b16 %v4656
        %v5792 = vunpack.c.l.b16 %v4657
        %v5793 = vunpack.c.h.b16 %v4657
        %v5794 = vunpack.c.l.b16 %v4658
        %v5795 = vunpack.c.h.b16 %v4658
        %v5796 = vunpack.c.l.b16 %v4659
        %v5797 = vunpack.c.h.b16 %v4659
        %v5798 = vunpack.c.l.b16 %v4660
        %v5799 = vunpack.c.h.b16 %v4660
        %v5800 = vunpack.c.l.b16 %v4661
        %v5801 = vunpack.c.h.b16 %v4661
        %v5802 = vunpack.c.l.b16 %v4662
        %v5803 = vunpack.c.h.b16 %v4662
        %v5804 = vunpack.c.l.b16 %v4663
        %v5805 = vunpack.c.h.b16 %v4663
        %v5806 = vunpack.c.l.b16 %v4664
        %v5807 = vunpack.c.h.b16 %v4664
        %v5808 = vunpack.c.l.b16 %v4665
        %v5809 = vunpack.c.h.b16 %v4665
        %v5810 = vunpack.c.l.b16 %v4666
        %v5811 = vunpack.c.h.b16 %v4666
        %v5812 = vunpack.c.l.b16 %v4667
        %v5813 = vunpack.c.h.b16 %v4667
        %v5814 = vunpack.c.l.b16 %v4668
        %v5815 = vunpack.c.h.b16 %v4668
        %v5816 = vunpack.c.l.b16 %v4669
        %v5817 = vunpack.c.h.b16 %v4669
        %v5818 = vunpack.c.l.b16 %v4670
        %v5819 = vunpack.c.h.b16 %v4670
        %v5820 = vunpack.c.l.b16 %v4671
        %v5821 = vunpack.c.h.b16 %v4671
        %v5822 = vunpack.c.l.b16 %v4672
        %v5823 = vunpack.c.h.b16 %v4672
        %v5824 = vunpack.c.l.b16 %v4673
        %v5825 = vunpack.c.h.b16 %v4673
        %v5826 = vunpack.c.l.b16 %v4674
        %v5827 = vunpack.c.h.b16 %v4674
        %v5828 = vunpack.c.l.b16 %v4675
        %v5829 = vunpack.c.h.b16 %v4675
        %v5830 = vunpack.c.l.b16 %v4676
        %v5831 = vunpack.c.h.b16 %v4676
        %v5832 = vunpack.c.l.b16 %v4677
        %v5833 = vunpack.c.h.b16 %v4677
        %v5834 = vunpack.c.l.b16 %v4678
        %v5835 = vunpack.c.h.b16 %v4678
        %v5836 = vunpack.c.l.b16 %v4679
        %v5837 = vunpack.c.h.b16 %v4679
        %v5838 = vunpack.c.l.b16 %v4680
        %v5839 = vunpack.c.h.b16 %v4680
        %v5840 = vunpack.c.l.b16 %v4681
        %v5841 = vunpack.c.h.b16 %v4681
        %v5842 = vunpack.c.l.b16 %v4682
        %v5843 = vunpack.c.h.b16 %v4682
        %v5844 = vunpack.c.l.b16 %v4683
        %v5845 = vunpack.c.h.b16 %v4683
        %v5846 = vunpack.c.l.b16 %v4684
        %v5847 = vunpack.c.h.b16 %v4684
        %v5848 = vunpack.c.l.b16 %v4685
        %v5849 = vunpack.c.h.b16 %v4685
        %v5850 = vunpack.c.l.b16 %v4686
        %v5851 = vunpack.c.h.b16 %v4686
        %v5852 = vunpack.c.l.b16 %v4687
        %v5853 = vunpack.c.h.b16 %v4687
        %v5854 = vunpack.c.l.b16 %v4688
        %v5855 = vunpack.c.h.b16 %v4688
        %v5856 = vunpack.c.l.b16 %v4689
        %v5857 = vunpack.c.h.b16 %v4689
        %v5858 = vunpack.c.l.b16 %v4690
        %v5859 = vunpack.c.h.b16 %v4690
        %v5860 = vunpack.c.l.b16 %v4691
        %v5861 = vunpack.c.h.b16 %v4691
        %v5862 = vunpack.c.l.b16 %v4692
        %v5863 = vunpack.c.h.b16 %v4692
        %v5864 = vunpack.c.l.b16 %v4693
        %v5865 = vunpack.c.h.b16 %v4693
        %v5866 = vunpack.c.l.b16 %v4694
        %v5867 = vunpack.c.h.b16 %v4694
        %v5868 = vunpack.c.l.b16 %v4695
        %v5869 = vunpack.c.h.b16 %v4695
        %v5870 = vunpack.c.l.b16 %v4696
        %v5871 = vunpack.c.h.b16 %v4696
        %v5872 = vunpack.c.l.b16 %v4697
        %v5873 = vunpack.c.h.b16 %v4697
        %v5874 = vunpack.c.l.b16 %v4698
        %v5875 = vunpack.c.h.b16 %v4698
        %v5876 = vunpack.c.l.b16 %v4699
        %v5877 = vunpack.c.h.b16 %v4699
        %v5878 = vunpack.c.l.b16 %v4700
        %v5879 = vunpack.c.h.b16 %v4700
        %v5880 = vunpack.c.l.b16 %v4701
        %v5881 = vunpack.c.h.b16 %v4701
        %v5882 = vunpack.c.l.b16 %v4702
        %v5883 = vunpack.c.h.b16 %v4702
        %v5884 = vunpack.c.l.b16 %v4703
        %v5885 = vunpack.c.h.b16 %v4703
        %v5886 = vunpack.c.l.b16 %v4704
        %v5887 = vunpack.c.h.b16 %v4704
        %v5888 = vunpack.c.l.b16 %v4705
        %v5889 = vunpack.c.h.b16 %v4705
        %v5890 = vunpack.c.l.b16 %v4706
        %v5891 = vunpack.c.h.b16 %v4706
        %v5892 = vunpack.c.l.b16 %v4707
        %v5893 = vunpack.c.h.b16 %v4707
        %v5894 = vunpack.c.l.b16 %v4708
        %v5895 = vunpack.c.h.b16 %v4708
        %v5896 = vunpack.c.l.b16 %v4709
        %v5897 = vunpack.c.h.b16 %v4709
        %v5898 = vunpack.c.l.b16 %v4710
        %v5899 = vunpack.c.h.b16 %v4710
        %v5900 = vunpack.c.l.b16 %v4711
        %v5901 = vunpack.c.h.b16 %v4711
        %v5902 = vunpack.c.l.b16 %v4712
        %v5903 = vunpack.c.h.b16 %v4712
        %v5904 = vunpack.c.l.b16 %v4713
        %v5905 = vunpack.c.h.b16 %v4713
        %v5906 = vunpack.c.l.b16 %v4714
        %v5907 = vunpack.c.h.b16 %v4714
        %v5908 = vunpack.c.l.b16 %v4715
        %v5909 = vunpack.c.h.b16 %v4715
        %v5910 = vunpack.c.l.b16 %v4716
        %v5911 = vunpack.c.h.b16 %v4716
        %v5912 = vunpack.c.l.b16 %v4717
        %v5913 = vunpack.c.h.b16 %v4717
        %v5914 = vunpack.c.l.b16 %v4718
        %v5915 = vunpack.c.h.b16 %v4718
        %v5916 = vunpack.c.l.b16 %v4719
        %v5917 = vunpack.c.h.b16 %v4719
        %v5918 = vunpack.c.l.b16 %v4720
        %v5919 = vunpack.c.h.b16 %v4720
        %v5920 = vunpack.c.l.b16 %v4721
        %v5921 = vunpack.c.h.b16 %v4721
        %v5922 = vunpack.c.l.b16 %v4722
        %v5923 = vunpack.c.h.b16 %v4722
        %v5924 = vunpack.c.l.b16 %v4723
        %v5925 = vunpack.c.h.b16 %v4723
        %v5926 = vunpack.c.l.b16 %v4724
        %v5927 = vunpack.c.h.b16 %v4724
        %v5928 = vunpack.c.l.b16 %v4725
        %v5929 = vunpack.c.h.b16 %v4725
        %v5930 = vunpack.c.l.b16 %v4726
        %v5931 = vunpack.c.h.b16 %v4726
        %v5932 = vunpack.c.l.b16 %v4727
        %v5933 = vunpack.c.h.b16 %v4727
        %v5934 = vunpack.c.l.b16 %v4728
        %v5935 = vunpack.c.h.b16 %v4728
        %v5936 = vunpack.c.l.b16 %v4729
        %v5937 = vunpack.c.h.b16 %v4729
        %v5938 = vunpack.c.l.b16 %v4730
        %v5939 = vunpack.c.h.b16 %v4730
        %v5940 = vunpack.c.l.b16 %v4731
        %v5941 = vunpack.c.h.b16 %v4731
        %v5942 = vunpack.c.l.b16 %v4732
        %v5943 = vunpack.c.h.b16 %v4732
        %v5944 = vunpack.c.l.b16 %v4733
        %v5945 = vunpack.c.h.b16 %v4733
        %v5946 = vunpack.c.l.b16 %v4734
        %v5947 = vunpack.c.h.b16 %v4734
        %v5948 = vunpack.c.l.b16 %v4735
        %v5949 = vunpack.c.h.b16 %v4735
        %v5950 = vunpack.c.l.b16 %v4736
        %v5951 = vunpack.c.h.b16 %v4736
        %v5952 = vunpack.c.l.b16 %v4737
        %v5953 = vunpack.c.h.b16 %v4737
        %v5954 = vunpack.c.l.b16 %v4738
        %v5955 = vunpack.c.h.b16 %v4738
        %v5956 = vunpack.c.l.b16 %v4739
        %v5957 = vunpack.c.h.b16 %v4739
        %v5958 = vunpack.c.l.b16 %v4740
        %v5959 = vunpack.c.h.b16 %v4740
        %v5960 = vunpack.c.l.b16 %v4741
        %v5961 = vunpack.c.h.b16 %v4741
        %v5962 = vunpack.c.l.b16 %v4742
        %v5963 = vunpack.c.h.b16 %v4742
        %v5964 = vunpack.c.l.b16 %v4743
        %v5965 = vunpack.c.h.b16 %v4743
        %v5966 = vunpack.c.l.b16 %v4744
        %v5967 = vunpack.c.h.b16 %v4744
        %v5968 = vunpack.c.l.b16 %v4745
        %v5969 = vunpack.c.h.b16 %v4745
        %v5970 = vunpack.c.l.b16 %v4746
        %v5971 = vunpack.c.h.b16 %v4746
        %v5972 = vunpack.c.l.b16 %v4747
        %v5973 = vunpack.c.h.b16 %v4747
        %v5974 = vunpack.c.l.b16 %v4748
        %v5975 = vunpack.c.h.b16 %v4748
        %v5976 = vunpack.c.l.b16 %v4749
        %v5977 = vunpack.c.h.b16 %v4749
        %v5978 = vunpack.c.l.b16 %v4750
        %v5979 = vunpack.c.h.b16 %v4750
        %v5980 = vunpack.c.l.b16 %v4751
        %v5981 = vunpack.c.h.b16 %v4751
        %v5982 = vunpack.c.l.b16 %v4752
        %v5983 = vunpack.c.h.b16 %v4752
        %v5984 = vunpack.c.l.b16 %v4753
        %v5985 = vunpack.c.h.b16 %v4753
        %v5986 = vunpack.c.l.b16 %v4754
        %v5987 = vunpack.c.h.b16 %v4754
        %v5988 = vunpack.c.l.b16 %v4755
        %v5989 = vunpack.c.h.b16 %v4755
        %v5990 = vunpack.c.l.b16 %v4756
        %v5991 = vunpack.c.h.b16 %v4756
        %v5992 = vunpack.c.l.b16 %v4757
        %v5993 = vunpack.c.h.b16 %v4757
        %v5994 = vunpack.c.l.b16 %v4758
        %v5995 = vunpack.c.h.b16 %v4758
        %v5996 = vunpack.c.l.b16 %v4759
        %v5997 = vunpack.c.h.b16 %v4759
        %v5998 = vunpack.c.l.b16 %v4760
        %v5999 = vunpack.c.h.b16 %v4760
        %v6000 = vunpack.c.l.b16 %v4761
        %v6001 = vunpack.c.h.b16 %v4761
        %v6002 = vunpack.c.l.b16 %v4762
        %v6003 = vunpack.c.h.b16 %v4762
        %v6004 = vunpack.c.l.b16 %v4763
        %v6005 = vunpack.c.h.b16 %v4763
        %v6006 = vunpack.c.l.b16 %v4764
        %v6007 = vunpack.c.h.b16 %v4764
        %v6008 = vunpack.c.l.b16 %v4765
        %v6009 = vunpack.c.h.b16 %v4765
        %v6010 = vunpack.c.l.b16 %v4766
        %v6011 = vunpack.c.h.b16 %v4766
        %v6012 = vunpack.c.l.b16 %v4767
        %v6013 = vunpack.c.h.b16 %v4767
        %v6014 = vunpack.c.l.b16 %v4768
        %v6015 = vunpack.c.h.b16 %v4768
        %v6016 = vunpack.c.l.b16 %v4769
        %v6017 = vunpack.c.h.b16 %v4769
        %v6018 = vunpack.c.l.b16 %v4770
        %v6019 = vunpack.c.h.b16 %v4770
        %v6020 = vunpack.c.l.b16 %v4771
        %v6021 = vunpack.c.h.b16 %v4771
        %v6022 = vunpack.c.l.b16 %v4772
        %v6023 = vunpack.c.h.b16 %v4772
        %v6024 = vunpack.c.l.b16 %v4773
        %v6025 = vunpack.c.h.b16 %v4773
        %v6026 = vunpack.c.l.b16 %v4774
        %v6027 = vunpack.c.h.b16 %v4774
        %v6028 = vunpack.c.l.b16 %v4775
        %v6029 = vunpack.c.h.b16 %v4775
        %v6030 = vunpack.c.l.b16 %v4776
        %v6031 = vunpack.c.h.b16 %v4776
        %v6032 = vunpack.c.l.b16 %v4777
        %v6033 = vunpack.c.h.b16 %v4777
        %v6034 = vunpack.c.l.b16 %v4778
        %v6035 = vunpack.c.h.b16 %v4778
        %v6036 = vunpack.c.l.b16 %v4779
        %v6037 = vunpack.c.h.b16 %v4779
        %v6038 = vunpack.c.l.b16 %v4780
        %v6039 = vunpack.c.h.b16 %v4780
        %v6040 = vunpack.c.l.b16 %v4781
        %v6041 = vunpack.c.h.b16 %v4781
        %v6042 = vunpack.c.l.b16 %v4782
        %v6043 = vunpack.c.h.b16 %v4782
        %v6044 = vunpack.c.l.b16 %v4783
        %v6045 = vunpack.c.h.b16 %v4783
        %v6046 = vunpack.c.l.b16 %v4784
        %v6047 = vunpack.c.h.b16 %v4784
        %v6048 = vunpack.c.l.b16 %v4785
        %v6049 = vunpack.c.h.b16 %v4785
        %v6050 = vunpack.c.l.b16 %v4786
        %v6051 = vunpack.c.h.b16 %v4786
        %v6052 = vunpack.c.l.b16 %v4787
        %v6053 = vunpack.c.h.b16 %v4787
        %v6054 = vunpack.c.l.b16 %v4788
        %v6055 = vunpack.c.h.b16 %v4788
        %v6056 = vunpack.c.l.b16 %v4789
        %v6057 = vunpack.c.h.b16 %v4789
        %v6058 = vunpack.c.l.b16 %v4790
        %v6059 = vunpack.c.h.b16 %v4790
        %v6060 = vunpack.c.l.b16 %v4791
        %v6061 = vunpack.c.h.b16 %v4791
        %v6062 = vunpack.c.l.b16 %v4792
        %v6063 = vunpack.c.h.b16 %v4792
        %v6064 = vunpack.c.l.b16 %v4793
        %v6065 = vunpack.c.h.b16 %v4793
        %v6066 = vunpack.c.l.b16 %v4794
        %v6067 = vunpack.c.h.b16 %v4794
        %v6068 = vunpack.c.l.b16 %v4795
        %v6069 = vunpack.c.h.b16 %v4795
        %v6070 = vunpack.c.l.b16 %v4796
        %v6071 = vunpack.c.h.b16 %v4796
        %v6072 = vunpack.c.l.b16 %v4797
        %v6073 = vunpack.c.h.b16 %v4797
        %v6074 = vunpack.c.l.b16 %v4798
        %v6075 = vunpack.c.h.b16 %v4798
        %v6076 = vunpack.c.l.b16 %v4799
        %v6077 = vunpack.c.h.b16 %v4799
        %v6078 = vunpack.c.l.b16 %v4800
        %v6079 = vunpack.c.h.b16 %v4800
        %v6080 = vunpack.c.l.b16 %v4801
        %v6081 = vunpack.c.h.b16 %v4801
        %v6082 = vunpack.c.l.b16 %v4802
        %v6083 = vunpack.c.h.b16 %v4802
        %v6084 = vunpack.c.l.b16 %v4803
        %v6085 = vunpack.c.h.b16 %v4803
        %v6086 = vunpack.c.l.b16 %v4804
        %v6087 = vunpack.c.h.b16 %v4804
        %v6088 = vunpack.c.l.b16 %v4805
        %v6089 = vunpack.c.h.b16 %v4805
        %v6090 = vunpack.c.l.b16 %v4806
        %v6091 = vunpack.c.h.b16 %v4806
        %v6092 = vunpack.c.l.b16 %v4807
        %v6093 = vunpack.c.h.b16 %v4807
        %v6094 = vunpack.c.l.b16 %v4808
        %v6095 = vunpack.c.h.b16 %v4808
        %v6096 = vunpack.c.l.b16 %v4809
        %v6097 = vunpack.c.h.b16 %v4809
        %v6098 = vunpack.c.l.b16 %v4810
        %v6099 = vunpack.c.h.b16 %v4810
        %v6100 = vunpack.c.l.b16 %v4811
        %v6101 = vunpack.c.h.b16 %v4811
        %v6102 = vunpack.c.l.b16 %v4812
        %v6103 = vunpack.c.h.b16 %v4812
        %v6104 = vunpack.c.l.b16 %v4813
        %v6105 = vunpack.c.h.b16 %v4813
        %v6106 = vunpack.c.l.b16 %v4814
        %v6107 = vunpack.c.h.b16 %v4814
        %v6108 = vunpack.c.l.b16 %v4815
        %v6109 = vunpack.c.h.b16 %v4815
        %v6110 = vunpack.c.l.b16 %v4816
        %v6111 = vunpack.c.h.b16 %v4816
        %v6112 = vunpack.c.l.b16 %v4817
        %v6113 = vunpack.c.h.b16 %v4817
        %v6114 = vunpack.c.l.b16 %v4818
        %v6115 = vunpack.c.h.b16 %v4818
        %v6116 = vunpack.c.l.b16 %v4819
        %v6117 = vunpack.c.h.b16 %v4819
        %v6118 = vunpack.c.l.b16 %v4820
        %v6119 = vunpack.c.h.b16 %v4820
        %v6120 = vunpack.c.l.b16 %v4821
        %v6121 = vunpack.c.h.b16 %v4821
        %v6122 = vunpack.c.l.b16 %v4822
        %v6123 = vunpack.c.h.b16 %v4822
        %v6124 = vunpack.c.l.b16 %v4823
        %v6125 = vunpack.c.h.b16 %v4823
        %v6126 = vunpack.c.l.b16 %v4824
        %v6127 = vunpack.c.h.b16 %v4824
        %v6128 = vunpack.c.l.b16 %v4825
        %v6129 = vunpack.c.h.b16 %v4825
        %v6130 = vunpack.c.l.b16 %v4826
        %v6131 = vunpack.c.h.b16 %v4826
        %v6132 = vunpack.c.l.b16 %v4827
        %v6133 = vunpack.c.h.b16 %v4827
        %v6134 = vunpack.c.l.b16 %v4828
        %v6135 = vunpack.c.h.b16 %v4828
        %v6136 = vunpack.c.l.b16 %v4829
        %v6137 = vunpack.c.h.b16 %v4829
        %v6138 = vunpack.c.l.b16 %v4830
        %v6139 = vunpack.c.h.b16 %v4830
        %v6140 = vunpack.c.l.b16 %v4831
        %v6141 = vunpack.c.h.b16 %v4831
        %v6142 = vunpack.c.l.b16 %v4832
        %v6143 = vunpack.c.h.b16 %v4832
        %v6144 = vunpack.c.l.b16 %v4833
        %v6145 = vunpack.c.h.b16 %v4833
        %v6146 = vunpack.c.l.b16 %v4834
        %v6147 = vunpack.c.h.b16 %v4834
        %v6148 = vunpack.c.l.b16 %v4835
        %v6149 = vunpack.c.h.b16 %v4835
        %v6150 = vunpack.c.l.b16 %v4836
        %v6151 = vunpack.c.h.b16 %v4836
        %v6152 = vunpack.c.l.b16 %v4837
        %v6153 = vunpack.c.h.b16 %v4837
        %v6154 = vunpack.c.l.b16 %v4838
        %v6155 = vunpack.c.h.b16 %v4838
        %v6156 = vunpack.c.l.b16 %v4839
        %v6157 = vunpack.c.h.b16 %v4839
        %v6158 = vunpack.c.l.b16 %v4840
        %v6159 = vunpack.c.h.b16 %v4840
        %v6160 = vunpack.c.l.b16 %v4841
        %v6161 = vunpack.c.h.b16 %v4841
        %v6162 = vunpack.c.l.b16 %v4842
        %v6163 = vunpack.c.h.b16 %v4842
        %v6164 = vunpack.c.l.b16 %v4843
        %v6165 = vunpack.c.h.b16 %v4843
        %v6166 = vunpack.c.l.b16 %v4844
        %v6167 = vunpack.c.h.b16 %v4844
        %v6168 = vunpack.c.l.b16 %v4845
        %v6169 = vunpack.c.h.b16 %v4845
        %v6170 = vunpack.c.l.b16 %v4846
        %v6171 = vunpack.c.h.b16 %v4846
        %v6172 = vunpack.c.l.b16 %v4847
        %v6173 = vunpack.c.h.b16 %v4847
        %v6174 = vunpack.c.l.b16 %v4848
        %v6175 = vunpack.c.h.b16 %v4848
        %v6176 = vunpack.c.l.b16 %v4849
        %v6177 = vunpack.c.h.b16 %v4849
        %v6178 = vunpack.c.l.b16 %v4850
        %v6179 = vunpack.c.h.b16 %v4850
        %v6180 = vunpack.c.l.b16 %v4851
        %v6181 = vunpack.c.h.b16 %v4851
        %v6182 = vunpack.c.l.b16 %v4852
        %v6183 = vunpack.c.h.b16 %v4852
        %v6184 = vunpack.c.l.b16 %v4853
        %v6185 = vunpack.c.h.b16 %v4853
        %v6186 = vunpack.c.l.b16 %v4854
        %v6187 = vunpack.c.h.b16 %v4854
        %v6188 = vunpack.c.l.b16 %v4855
        %v6189 = vunpack.c.h.b16 %v4855
        %v6190 = vunpack.c.l.b16 %v4856
        %v6191 = vunpack.c.h.b16 %v4856
        %v6192 = vunpack.c.l.b16 %v4857
        %v6193 = vunpack.c.h.b16 %v4857
        %v6194 = vunpack.c.l.b16 %v4858
        %v6195 = vunpack.c.h.b16 %v4858
        %v6196 = vunpack.c.l.b16 %v4859
        %v6197 = vunpack.c.h.b16 %v4859
        %v6198 = vunpack.c.l.b16 %v4860
        %v6199 = vunpack.c.h.b16 %v4860
        %v6200 = vunpack.c.l.b16 %v4861
        %v6201 = vunpack.c.h.b16 %v4861
        %v6202 = vunpack.c.l.b16 %v4862
        %v6203 = vunpack.c.h.b16 %v4862
        %v6204 = vunpack.c.l.b16 %v4863
        %v6205 = vunpack.c.h.b16 %v4863
        %v6206 = vunpack.c.l.b16 %v4864
        %v6207 = vunpack.c.h.b16 %v4864
        %v6208 = vunpack.c.l.b16 %v4865
        %v6209 = vunpack.c.h.b16 %v4865
        %v6210 = vunpack.c.l.b16 %v4866
        %v6211 = vunpack.c.h.b16 %v4866
        %v6212 = vunpack.c.l.b16 %v4867
        %v6213 = vunpack.c.h.b16 %v4867
        %v6214 = vunpack.c.l.b16 %v4868
        %v6215 = vunpack.c.h.b16 %v4868
        %v6216 = vunpack.c.l.b16 %v4869
        %v6217 = vunpack.c.h.b16 %v4869
        %v6218 = vunpack.c.l.b16 %v4870
        %v6219 = vunpack.c.h.b16 %v4870
        %v6220 = vunpack.c.l.b16 %v4871
        %v6221 = vunpack.c.h.b16 %v4871
        %v6222 = vunpack.c.l.b16 %v4872
        %v6223 = vunpack.c.h.b16 %v4872
        %v6224 = vunpack.c.l.b16 %v4873
        %v6225 = vunpack.c.h.b16 %v4873
        %v6226 = vunpack.c.l.b16 %v4874
        %v6227 = vunpack.c.h.b16 %v4874
        %v6228 = vunpack.c.l.b16 %v4875
        %v6229 = vunpack.c.h.b16 %v4875
        %v6230 = vunpack.c.l.b16 %v4876
        %v6231 = vunpack.c.h.b16 %v4876
        %v6232 = vunpack.c.l.b16 %v4877
        %v6233 = vunpack.c.h.b16 %v4877
        %v6234 = vunpack.c.l.b16 %v4878
        %v6235 = vunpack.c.h.b16 %v4878
        %v6236 = vunpack.c.l.b16 %v4879
        %v6237 = vunpack.c.h.b16 %v4879
        %v6238 = vunpack.c.l.b16 %v4880
        %v6239 = vunpack.c.h.b16 %v4880
        %v6240 = vunpack.c.l.b16 %v4881
        %v6241 = vunpack.c.h.b16 %v4881
        %v6242 = vunpack.c.l.b16 %v4882
        %v6243 = vunpack.c.h.b16 %v4882
        %v6244 = vunpack.c.l.b16 %v4883
        %v6245 = vunpack.c.h.b16 %v4883
        %v6246 = vunpack.c.l.b16 %v4884
        %v6247 = vunpack.c.h.b16 %v4884
        %v6248 = vunpack.c.l.b16 %v4885
        %v6249 = vunpack.c.h.b16 %v4885
        %v6250 = vunpack.c.l.b16 %v4886
        %v6251 = vunpack.c.h.b16 %v4886
        %v6252 = vunpack.c.l.b16 %v4887
        %v6253 = vunpack.c.h.b16 %v4887
        %v6254 = vunpack.c.l.b16 %v4888
        %v6255 = vunpack.c.h.b16 %v4888
        %v6256 = vunpack.c.l.b16 %v4889
        %v6257 = vunpack.c.h.b16 %v4889
        %v6258 = vunpack.c.l.b16 %v4890
        %v6259 = vunpack.c.h.b16 %v4890
        %v6260 = vunpack.c.l.b16 %v4891
        %v6261 = vunpack.c.h.b16 %v4891
        %v6262 = vunpack.c.l.b16 %v4892
        %v6263 = vunpack.c.h.b16 %v4892
        %v6264 = vunpack.c.l.b16 %v4893
        %v6265 = vunpack.c.h.b16 %v4893
        %v6266 = vunpack.c.l.b16 %v4894
        %v6267 = vunpack.c.h.b16 %v4894
        %v6268 = vunpack.c.l.b16 %v4895
        %v6269 = vunpack.c.h.b16 %v4895
        %v6270 = vunpack.c.l.b16 %v4896
        %v6271 = vunpack.c.h.b16 %v4896
        %v6272 = vunpack.c.l.b16 %v4897
        %v6273 = vunpack.c.h.b16 %v4897
        %v6274 = vunpack.c.l.b16 %v4898
        %v6275 = vunpack.c.h.b16 %v4898
        %v6276 = vunpack.c.l.b16 %v4899
        %v6277 = vunpack.c.h.b16 %v4899
        %v6278 = vunpack.c.l.b16 %v4900
        %v6279 = vunpack.c.h.b16 %v4900
        %v6280 = vunpack.c.l.b16 %v4901
        %v6281 = vunpack.c.h.b16 %v4901
        %v6282 = vunpack.c.l.b16 %v4902
        %v6283 = vunpack.c.h.b16 %v4902
        %v6284 = vunpack.c.l.b16 %v4903
        %v6285 = vunpack.c.h.b16 %v4903
        %v6286 = vunpack.c.l.b16 %v4904
        %v6287 = vunpack.c.h.b16 %v4904
        %v6288 = vunpack.c.l.b16 %v4905
        %v6289 = vunpack.c.h.b16 %v4905
        %v6290 = vunpack.c.l.b16 %v4906
        %v6291 = vunpack.c.h.b16 %v4906
        %v6292 = vunpack.c.l.b16 %v4907
        %v6293 = vunpack.c.h.b16 %v4907
        %v6294 = vunpack.c.l.b16 %v4908
        %v6295 = vunpack.c.h.b16 %v4908
        %v6296 = vunpack.c.l.b16 %v4909
        %v6297 = vunpack.c.h.b16 %v4909
        %v6298 = vunpack.c.l.b16 %v4910
        %v6299 = vunpack.c.h.b16 %v4910
        %v6300 = vunpack.c.l.b16 %v4911
        %v6301 = vunpack.c.h.b16 %v4911
        %v6302 = vunpack.c.l.b16 %v4912
        %v6303 = vunpack.c.h.b16 %v4912
        %v6304 = vunpack.c.l.b16 %v4913
        %v6305 = vunpack.c.h.b16 %v4913
        %v6306 = vunpack.c.l.b16 %v4914
        %v6307 = vunpack.c.h.b16 %v4914
        %v6308 = vunpack.c.l.b16 %v4915
        %v6309 = vunpack.c.h.b16 %v4915
        %v6310 = vunpack.c.l.b16 %v4916
        %v6311 = vunpack.c.h.b16 %v4916
        %v6312 = vunpack.c.l.b16 %v4917
        %v6313 = vunpack.c.h.b16 %v4917
        %v6314 = vunpack.c.l.b16 %v4918
        %v6315 = vunpack.c.h.b16 %v4918
        %v6316 = vunpack.c.l.b16 %v4919
        %v6317 = vunpack.c.h.b16 %v4919
        %v6318 = vunpack.c.l.b16 %v4920
        %v6319 = vunpack.c.h.b16 %v4920
        %v6320 = vunpack.c.l.b16 %v4921
        %v6321 = vunpack.c.h.b16 %v4921
        %v6322 = vunpack.c.l.b16 %v4922
        %v6323 = vunpack.c.h.b16 %v4922
        %v6324 = vunpack.c.l.b16 %v4923
        %v6325 = vunpack.c.h.b16 %v4923
        %v6326 = vunpack.c.l.b16 %v4924
        %v6327 = vunpack.c.h.b16 %v4924
        %v6328 = vunpack.c.l.b16 %v4925
        %v6329 = vunpack.c.h.b16 %v4925
        %v6330 = vunpack.c.l.b16 %v4926
        %v6331 = vunpack.c.h.b16 %v4926
        %v6332 = vunpack.c.l.b16 %v4927
        %v6333 = vunpack.c.h.b16 %v4927
        %v6334 = vunpack.c.l.b16 %v4928
        %v6335 = vunpack.c.h.b16 %v4928
        %v6336 = vunpack.c.l.b16 %v4929
        %v6337 = vunpack.c.h.b16 %v4929
        %v6338 = vunpack.c.l.b16 %v4930
        %v6339 = vunpack.c.h.b16 %v4930
        %v6340 = vunpack.c.l.b16 %v4931
        %v6341 = vunpack.c.h.b16 %v4931
        %v6342 = vunpack.c.l.b16 %v4932
        %v6343 = vunpack.c.h.b16 %v4932
        %v6344 = vunpack.c.l.b16 %v4933
        %v6345 = vunpack.c.h.b16 %v4933
        %v6346 = vunpack.c.l.b16 %v4934
        %v6347 = vunpack.c.h.b16 %v4934
        %v6348 = vunpack.c.l.b16 %v4935
        %v6349 = vunpack.c.h.b16 %v4935
        %v6350 = vunpack.c.l.b16 %v4936
        %v6351 = vunpack.c.h.b16 %v4936
        %v6352 = vunpack.c.l.b16 %v4937
        %v6353 = vunpack.c.h.b16 %v4937
        %v6354 = vunpack.c.l.b16 %v4938
        %v6355 = vunpack.c.h.b16 %v4938
        %v6356 = vunpack.c.l.b16 %v4939
        %v6357 = vunpack.c.h.b16 %v4939
        %v6358 = vunpack.c.l.b16 %v4940
        %v6359 = vunpack.c.h.b16 %v4940
        %v6360 = vunpack.c.l.b16 %v4941
        %v6361 = vunpack.c.h.b16 %v4941
        %v6362 = vunpack.c.l.b16 %v4942
        %v6363 = vunpack.c.h.b16 %v4942
        %v6364 = vunpack.c.l.b16 %v4943
        %v6365 = vunpack.c.h.b16 %v4943
        %v6366 = vunpack.c.l.b16 %v4944
        %v6367 = vunpack.c.h.b16 %v4944
        %v6368 = vunpack.c.l.b16 %v4945
        %v6369 = vunpack.c.h.b16 %v4945
        %v6370 = vunpack.c.l.b16 %v4946
        %v6371 = vunpack.c.h.b16 %v4946
        %v6372 = vunpack.c.l.b16 %v4947
        %v6373 = vunpack.c.h.b16 %v4947
        %v6374 = vunpack.c.l.b16 %v4948
        %v6375 = vunpack.c.h.b16 %v4948
        %v6376 = vunpack.c.l.b16 %v4949
        %v6377 = vunpack.c.h.b16 %v4949
        %v6378 = vunpack.c.l.b16 %v4950
        %v6379 = vunpack.c.h.b16 %v4950
        %v6380 = vunpack.c.l.b16 %v4951
        %v6381 = vunpack.c.h.b16 %v4951
        %v6382 = vunpack.c.l.b16 %v4952
        %v6383 = vunpack.c.h.b16 %v4952
        %v6384 = vunpack.c.l.b16 %v4953
        %v6385 = vunpack.c.h.b16 %v4953
        %v6386 = vunpack.c.l.b16 %v4954
        %v6387 = vunpack.c.h.b16 %v4954
        %v6388 = vunpack.c.l.b16 %v4955
        %v6389 = vunpack.c.h.b16 %v4955
        %v6390 = vunpack.c.l.b16 %v4956
        %v6391 = vunpack.c.h.b16 %v4956
        %v6392 = vunpack.c.l.b16 %v4957
        %v6393 = vunpack.c.h.b16 %v4957
        %v6394 = vunpack.c.l.b16 %v4958
        %v6395 = vunpack.c.h.b16 %v4958
        %v6396 = vunpack.c.l.b16 %v4959
        %v6397 = vunpack.c.h.b16 %v4959
        %v6398 = vunpack.c.l.b16 %v4960
        %v6399 = vunpack.c.h.b16 %v4960
        %v6400 = vunpack.c.l.b16 %v4961
        %v6401 = vunpack.c.h.b16 %v4961
        %v6402 = vunpack.c.l.b16 %v4962
        %v6403 = vunpack.c.h.b16 %v4962
        %v6404 = vunpack.c.l.b16 %v4963
        %v6405 = vunpack.c.h.b16 %v4963
        %v6406 = vunpack.c.l.b16 %v4964
        %v6407 = vunpack.c.h.b16 %v4964
        %v6408 = vunpack.c.l.b16 %v4965
        %v6409 = vunpack.c.h.b16 %v4965
        %v6410 = vunpack.c.l.b16 %v4966
        %v6411 = vunpack.c.h.b16 %v4966
        %v6412 = vunpack.c.l.b16 %v4967
        %v6413 = vunpack.c.h.b16 %v4967
        %v6414 = vunpack.c.l.b16 %v4968
        %v6415 = vunpack.c.h.b16 %v4968
        %v6416 = vunpack.c.l.b16 %v4969
        %v6417 = vunpack.c.h.b16 %v4969
        %v6418 = vunpack.c.l.b16 %v4970
        %v6419 = vunpack.c.h.b16 %v4970
        %v6420 = vunpack.c.l.b16 %v4971
        %v6421 = vunpack.c.h.b16 %v4971
        %v6422 = vunpack.c.l.b16 %v4972
        %v6423 = vunpack.c.h.b16 %v4972
        %v6424 = vunpack.c.l.b16 %v4973
        %v6425 = vunpack.c.h.b16 %v4973
        %v6426 = vunpack.c.l.b16 %v4974
        %v6427 = vunpack.c.h.b16 %v4974
        %v6428 = vunpack.c.l.b16 %v4975
        %v6429 = vunpack.c.h.b16 %v4975
        %v6430 = vpack.c.b16 %v5476, %v5470
        %v6431 = vpack.c.b16 %v5477, %v5471
        %v6432 = vpack.c.b16 %v5478, %v5472
        %v6433 = vpack.c.b16 %v5479, %v5473
        %v6434 = vpack.c.b16 %v5480, %v5474
        %v6435 = vpack.c.b16 %v5481, %v5475
        %v6436 = vpack.c.b16 %v5488, %v5482
        %v6437 = vpack.c.b16 %v5489, %v5483
        %v6438 = vpack.c.b16 %v5490, %v5484
        %v6439 = vpack.c.b16 %v5491, %v5485
        %v6440 = vpack.c.b16 %v5492, %v5486
        %v6441 = vpack.c.b16 %v5493, %v5487
        %v6442 = vpack.c.b16 %v5500, %v5494
        %v6443 = vpack.c.b16 %v5501, %v5495
        %v6444 = vpack.c.b16 %v5502, %v5496
        %v6445 = vpack.c.b16 %v5503, %v5497
        %v6446 = vpack.c.b16 %v5504, %v5498
        %v6447 = vpack.c.b16 %v5505, %v5499
        %v6448 = vpack.c.b16 %v5512, %v5506
        %v6449 = vpack.c.b16 %v5513, %v5507
        %v6450 = vpack.c.b16 %v5514, %v5508
        %v6451 = vpack.c.b16 %v5515, %v5509
        %v6452 = vpack.c.b16 %v5516, %v5510
        %v6453 = vpack.c.b16 %v5517, %v5511
        %v6454 = vpack.c.b16 %v5524, %v5518
        %v6455 = vpack.c.b16 %v5525, %v5519
        %v6456 = vpack.c.b16 %v5526, %v5520
        %v6457 = vpack.c.b16 %v5527, %v5521
        %v6458 = vpack.c.b16 %v5528, %v5522
        %v6459 = vpack.c.b16 %v5529, %v5523
        %v6460 = vpack.c.b16 %v5536, %v5530
        %v6461 = vpack.c.b16 %v5537, %v5531
        %v6462 = vpack.c.b16 %v5538, %v5532
        %v6463 = vpack.c.b16 %v5539, %v5533
        %v6464 = vpack.c.b16 %v5540, %v5534
        %v6465 = vpack.c.b16 %v5541, %v5535
        %v6466 = vpack.c.b16 %v5548, %v5542
        %v6467 = vpack.c.b16 %v5549, %v5543
        %v6468 = vpack.c.b16 %v5550, %v5544
        %v6469 = vpack.c.b16 %v5551, %v5545
        %v6470 = vpack.c.b16 %v5552, %v5546
        %v6471 = vpack.c.b16 %v5553, %v5547
        %v6472 = vpack.c.b16 %v5560, %v5554
        %v6473 = vpack.c.b16 %v5561, %v5555
        %v6474 = vpack.c.b16 %v5562, %v5556
        %v6475 = vpack.c.b16 %v5563, %v5557
        %v6476 = vpack.c.b16 %v5564, %v5558
        %v6477 = vpack.c.b16 %v5565, %v5559
        %v6478 = vpack.c.b16 %v5572, %v5566
        %v6479 = vpack.c.b16 %v5573, %v5567
        %v6480 = vpack.c.b16 %v5574, %v5568
        %v6481 = vpack.c.b16 %v5575, %v5569
        %v6482 = vpack.c.b16 %v5576, %v5570
        %v6483 = vpack.c.b16 %v5577, %v5571
        %v6484 = vpack.c.b16 %v5584, %v5578
        %v6485 = vpack.c.b16 %v5585, %v5579
        %v6486 = vpack.c.b16 %v5586, %v5580
        %v6487 = vpack.c.b16 %v5587, %v5581
        %v6488 = vpack.c.b16 %v5588, %v5582
        %v6489 = vpack.c.b16 %v5589, %v5583
        %v6490 = vpack.c.b16 %v5596, %v5590
        %v6491 = vpack.c.b16 %v5597, %v5591
        %v6492 = vpack.c.b16 %v5598, %v5592
        %v6493 = vpack.c.b16 %v5599, %v5593
        %v6494 = vpack.c.b16 %v5600, %v5594
        %v6495 = vpack.c.b16 %v5601, %v5595
        %v6496 = vpack.c.b16 %v5608, %v5602
        %v6497 = vpack.c.b16 %v5609, %v5603
        %v6498 = vpack.c.b16 %v5610, %v5604
        %v6499 = vpack.c.b16 %v5611, %v5605
        %v6500 = vpack.c.b16 %v5612, %v5606
        %v6501 = vpack.c.b16 %v5613, %v5607
        %v6502 = vpack.c.b16 %v5620, %v5614
        %v6503 = vpack.c.b16 %v5621, %v5615
        %v6504 = vpack.c.b16 %v5622, %v5616
        %v6505 = vpack.c.b16 %v5623, %v5617
        %v6506 = vpack.c.b16 %v5624, %v5618
        %v6507 = vpack.c.b16 %v5625, %v5619
        %v6508 = vpack.c.b16 %v5632, %v5626
        %v6509 = vpack.c.b16 %v5633, %v5627
        %v6510 = vpack.c.b16 %v5634, %v5628
        %v6511 = vpack.c.b16 %v5635, %v5629
        %v6512 = vpack.c.b16 %v5636, %v5630
        %v6513 = vpack.c.b16 %v5637, %v5631
        %v6514 = vpack.c.b16 %v5644, %v5638
        %v6515 = vpack.c.b16 %v5645, %v5639
        %v6516 = vpack.c.b16 %v5646, %v5640
        %v6517 = vpack.c.b16 %v5647, %v5641
        %v6518 = vpack.c.b16 %v5648, %v5642
        %v6519 = vpack.c.b16 %v5649, %v5643
        %v6520 = vpack.c.b16 %v5656, %v5650
        %v6521 = vpack.c.b16 %v5657, %v5651
        %v6522 = vpack.c.b16 %v5658, %v5652
        %v6523 = vpack.c.b16 %v5659, %v5653
        %v6524 = vpack.c.b16 %v5660, %v5654
        %v6525 = vpack.c.b16 %v5661, %v5655
        %v6526 = vpack.c.b16 %v5668, %v5662
        %v6527 = vpack.c.b16 %v5669, %v5663
        %v6528 = vpack.c.b16 %v5670, %v5664
        %v6529 = vpack.c.b16 %v5671, %v5665
        %v6530 = vpack.c.b16 %v5672, %v5666
        %v6531 = vpack.c.b16 %v5673, %v5667
        %v6532 = vpack.c.b16 %v5680, %v5674
        %v6533 = vpack.c.b16 %v5681, %v5675
        %v6534 = vpack.c.b16 %v5682, %v5676
        %v6535 = vpack.c.b16 %v5683, %v5677
        %v6536 = vpack.c.b16 %v5684, %v5678
        %v6537 = vpack.c.b16 %v5685, %v5679
        %v6538 = vpack.c.b16 %v5692, %v5686
        %v6539 = vpack.c.b16 %v5693, %v5687
        %v6540 = vpack.c.b16 %v5694, %v5688
        %v6541 = vpack.c.b16 %v5695, %v5689
        %v6542 = vpack.c.b16 %v5696, %v5690
        %v6543 = vpack.c.b16 %v5697, %v5691
        %v6544 = vpack.c.b16 %v5704, %v5698
        %v6545 = vpack.c.b16 %v5705, %v5699
        %v6546 = vpack.c.b16 %v5706, %v5700
        %v6547 = vpack.c.b16 %v5707, %v5701
        %v6548 = vpack.c.b16 %v5708, %v5702
        %v6549 = vpack.c.b16 %v5709, %v5703
        %v6550 = vpack.c.b16 %v5716, %v5710
        %v6551 = vpack.c.b16 %v5717, %v5711
        %v6552 = vpack.c.b16 %v5718, %v5712
        %v6553 = vpack.c.b16 %v5719, %v5713
        %v6554 = vpack.c.b16 %v5720, %v5714
        %v6555 = vpack.c.b16 %v5721, %v5715
        %v6556 = vpack.c.b16 %v5728, %v5722
        %v6557 = vpack.c.b16 %v5729, %v5723
        %v6558 = vpack.c.b16 %v5730, %v5724
        %v6559 = vpack.c.b16 %v5731, %v5725
        %v6560 = vpack.c.b16 %v5732, %v5726
        %v6561 = vpack.c.b16 %v5733, %v5727
        %v6562 = vpack.c.b16 %v5740, %v5734
        %v6563 = vpack.c.b16 %v5741, %v5735
        %v6564 = vpack.c.b16 %v5742, %v5736
        %v6565 = vpack.c.b16 %v5743, %v5737
        %v6566 = vpack.c.b16 %v5744, %v5738
        %v6567 = vpack.c.b16 %v5745, %v5739
        %v6568 = vpack.c.b16 %v5752, %v5746
        %v6569 = vpack.c.b16 %v5753, %v5747
        %v6570 = vpack.c.b16 %v5754, %v5748
        %v6571 = vpack.c.b16 %v5755, %v5749
        %v6572 = vpack.c.b16 %v5756, %v5750
        %v6573 = vpack.c.b16 %v5757, %v5751
        %v6574 = vpack.c.b16 %v5764, %v5758
        %v6575 = vpack.c.b16 %v5765, %v5759
        %v6576 = vpack.c.b16 %v5766, %v5760
        %v6577 = vpack.c.b16 %v5767, %v5761
        %v6578 = vpack.c.b16 %v5768, %v5762
        %v6579 = vpack.c.b16 %v5769, %v5763
        %v6580 = vpack.c.b16 %v5776, %v5770
        %v6581 = vpack.c.b16 %v5777, %v5771
        %v6582 = vpack.c.b16 %v5778, %v5772
        %v6583 = vpack.c.b16 %v5779, %v5773
        %v6584 = vpack.c.b16 %v5780, %v5774
        %v6585 = vpack.c.b16 %v5781, %v5775
        %v6586 = vpack.c.b16 %v5788, %v5782
        %v6587 = vpack.c.b16 %v5789, %v5783
        %v6588 = vpack.c.b16 %v5790, %v5784
        %v6589 = vpack.c.b16 %v5791, %v5785
        %v6590 = vpack.c.b16 %v5792, %v5786
        %v6591 = vpack.c.b16 %v5793, %v5787
        %v6592 = vpack.c.b16 %v5800, %v5794
        %v6593 = vpack.c.b16 %v5801, %v5795
        %v6594 = vpack.c.b16 %v5802, %v5796
        %v6595 = vpack.c.b16 %v5803, %v5797
        %v6596 = vpack.c.b16 %v5804, %v5798
        %v6597 = vpack.c.b16 %v5805, %v5799
        %v6598 = vpack.c.b16 %v5812, %v5806
        %v6599 = vpack.c.b16 %v5813, %v5807
        %v6600 = vpack.c.b16 %v5814, %v5808
        %v6601 = vpack.c.b16 %v5815, %v5809
        %v6602 = vpack.c.b16 %v5816, %v5810
        %v6603 = vpack.c.b16 %v5817, %v5811
        %v6604 = vpack.c.b16 %v5824, %v5818
        %v6605 = vpack.c.b16 %v5825, %v5819
        %v6606 = vpack.c.b16 %v5826, %v5820
        %v6607 = vpack.c.b16 %v5827, %v5821
        %v6608 = vpack.c.b16 %v5828, %v5822
        %v6609 = vpack.c.b16 %v5829, %v5823
        %v6610 = vpack.c.b16 %v5836, %v5830
        %v6611 = vpack.c.b16 %v5837, %v5831
        %v6612 = vpack.c.b16 %v5838, %v5832
        %v6613 = vpack.c.b16 %v5839, %v5833
        %v6614 = vpack.c.b16 %v5840, %v5834
        %v6615 = vpack.c.b16 %v5841, %v5835
        %v6616 = vpack.c.b16 %v5848, %v5842
        %v6617 = vpack.c.b16 %v5849, %v5843
        %v6618 = vpack.c.b16 %v5850, %v5844
        %v6619 = vpack.c.b16 %v5851, %v5845
        %v6620 = vpack.c.b16 %v5852, %v5846
        %v6621 = vpack.c.b16 %v5853, %v5847
        %v6622 = vpack.c.b16 %v5860, %v5854
        %v6623 = vpack.c.b16 %v5861, %v5855
        %v6624 = vpack.c.b16 %v5862, %v5856
        %v6625 = vpack.c.b16 %v5863, %v5857
        %v6626 = vpack.c.b16 %v5864, %v5858
        %v6627 = vpack.c.b16 %v5865, %v5859
        %v6628 = vpack.c.b16 %v5872, %v5866
        %v6629 = vpack.c.b16 %v5873, %v5867
        %v6630 = vpack.c.b16 %v5874, %v5868
        %v6631 = vpack.c.b16 %v5875, %v5869
        %v6632 = vpack.c.b16 %v5876, %v5870
        %v6633 = vpack.c.b16 %v5877, %v5871
        %v6634 = vpack.c.b16 %v5884, %v5878
        %v6635 = vpack.c.b16 %v5885, %v5879
        %v6636 = vpack.c.b16 %v5886, %v5880
        %v6637 = vpack.c.b16 %v5887, %v5881
        %v6638 = vpack.c.b16 %v5888, %v5882
        %v6639 = vpack.c.b16 %v5889, %v5883
        %v6640 = vpack.c.b16 %v5896, %v5890
        %v6641 = vpack.c.b16 %v5897, %v5891
        %v6642 = vpack.c.b16 %v5898, %v5892
        %v6643 = vpack.c.b16 %v5899, %v5893
        %v6644 = vpack.c.b16 %v5900, %v5894
        %v6645 = vpack.c.b16 %v5901, %v5895
        %v6646 = vpack.c.b16 %v5908, %v5902
        %v6647 = vpack.c.b16 %v5909, %v5903
        %v6648 = vpack.c.b16 %v5910, %v5904
        %v6649 = vpack.c.b16 %v5911, %v5905
        %v6650 = vpack.c.b16 %v5912, %v5906
        %v6651 = vpack.c.b16 %v5913, %v5907
        %v6652 = vpack.c.b16 %v5920, %v5914
        %v6653 = vpack.c.b16 %v5921, %v5915
        %v6654 = vpack.c.b16 %v5922, %v5916
        %v6655 = vpack.c.b16 %v5923, %v5917
        %v6656 = vpack.c.b16 %v5924, %v5918
        %v6657 = vpack.c.b16 %v5925, %v5919
        %v6658 = vpack.c.b16 %v5932, %v5926
        %v6659 = vpack.c.b16 %v5933, %v5927
        %v6660 = vpack.c.b16 %v5934, %v5928
        %v6661 = vpack.c.b16 %v5935, %v5929
        %v6662 = vpack.c.b16 %v5936, %v5930
        %v6663 = vpack.c.b16 %v5937, %v5931
        %v6664 = vpack.c.b16 %v5944, %v5938
        %v6665 = vpack.c.b16 %v5945, %v5939
        %v6666 = vpack.c.b16 %v5946, %v5940
        %v6667 = vpack.c.b16 %v5947, %v5941
        %v6668 = vpack.c.b16 %v5948, %v5942
        %v6669 = vpack.c.b16 %v5949, %v5943
        %v6670 = vpack.c.b16 %v5956, %v5950
        %v6671 = vpack.c.b16 %v5957, %v5951
        %v6672 = vpack.c.b16 %v5958, %v5952
        %v6673 = vpack.c.b16 %v5959, %v5953
        %v6674 = vpack.c.b16 %v5960, %v5954
        %v6675 = vpack.c.b16 %v5961, %v5955
        %v6676 = vpack.c.b16 %v5968, %v5962
        %v6677 = vpack.c.b16 %v5969, %v5963
        %v6678 = vpack.c.b16 %v5970, %v5964
        %v6679 = vpack.c.b16 %v5971, %v5965
        %v6680 = vpack.c.b16 %v5972, %v5966
        %v6681 = vpack.c.b16 %v5973, %v5967
        %v6682 = vpack.c.b16 %v5980, %v5974
        %v6683 = vpack.c.b16 %v5981, %v5975
        %v6684 = vpack.c.b16 %v5982, %v5976
        %v6685 = vpack.c.b16 %v5983, %v5977
        %v6686 = vpack.c.b16 %v5984, %v5978
        %v6687 = vpack.c.b16 %v5985, %v5979
        %v6688 = vpack.c.b16 %v5992, %v5986
        %v6689 = vpack.c.b16 %v5993, %v5987
        %v6690 = vpack.c.b16 %v5994, %v5988
        %v6691 = vpack.c.b16 %v5995, %v5989
        %v6692 = vpack.c.b16 %v5996, %v5990
        %v6693 = vpack.c.b16 %v5997, %v5991
        %v6694 = vpack.c.b16 %v6004, %v5998
        %v6695 = vpack.c.b16 %v6005, %v5999
        %v6696 = vpack.c.b16 %v6006, %v6000
        %v6697 = vpack.c.b16 %v6007, %v6001
        %v6698 = vpack.c.b16 %v6008, %v6002
        %v6699 = vpack.c.b16 %v6009, %v6003
        %v6700 = vpack.c.b16 %v6016, %v6010
        %v6701 = vpack.c.b16 %v6017, %v6011
        %v6702 = vpack.c.b16 %v6018, %v6012
        %v6703 = vpack.c.b16 %v6019, %v6013
        %v6704 = vpack.c.b16 %v6020, %v6014
        %v6705 = vpack.c.b16 %v6021, %v6015
        %v6706 = vpack.c.b16 %v6028, %v6022
        %v6707 = vpack.c.b16 %v6029, %v6023
        %v6708 = vpack.c.b16 %v6030, %v6024
        %v6709 = vpack.c.b16 %v6031, %v6025
        %v6710 = vpack.c.b16 %v6032, %v6026
        %v6711 = vpack.c.b16 %v6033, %v6027
        %v6712 = vpack.c.b16 %v6040, %v6034
        %v6713 = vpack.c.b16 %v6041, %v6035
        %v6714 = vpack.c.b16 %v6042, %v6036
        %v6715 = vpack.c.b16 %v6043, %v6037
        %v6716 = vpack.c.b16 %v6044, %v6038
        %v6717 = vpack.c.b16 %v6045, %v6039
        %v6718 = vpack.c.b16 %v6052, %v6046
        %v6719 = vpack.c.b16 %v6053, %v6047
        %v6720 = vpack.c.b16 %v6054, %v6048
        %v6721 = vpack.c.b16 %v6055, %v6049
        %v6722 = vpack.c.b16 %v6056, %v6050
        %v6723 = vpack.c.b16 %v6057, %v6051
        %v6724 = vpack.c.b16 %v6064, %v6058
        %v6725 = vpack.c.b16 %v6065, %v6059
        %v6726 = vpack.c.b16 %v6066, %v6060
        %v6727 = vpack.c.b16 %v6067, %v6061
        %v6728 = vpack.c.b16 %v6068, %v6062
        %v6729 = vpack.c.b16 %v6069, %v6063
        %v6730 = vpack.c.b16 %v6076, %v6070
        %v6731 = vpack.c.b16 %v6077, %v6071
        %v6732 = vpack.c.b16 %v6078, %v6072
        %v6733 = vpack.c.b16 %v6079, %v6073
        %v6734 = vpack.c.b16 %v6080, %v6074
        %v6735 = vpack.c.b16 %v6081, %v6075
        %v6736 = vpack.c.b16 %v6088, %v6082
        %v6737 = vpack.c.b16 %v6089, %v6083
        %v6738 = vpack.c.b16 %v6090, %v6084
        %v6739 = vpack.c.b16 %v6091, %v6085
        %v6740 = vpack.c.b16 %v6092, %v6086
        %v6741 = vpack.c.b16 %v6093, %v6087
        %v6742 = vpack.c.b16 %v6100, %v6094
        %v6743 = vpack.c.b16 %v6101, %v6095
        %v6744 = vpack.c.b16 %v6102, %v6096
        %v6745 = vpack.c.b16 %v6103, %v6097
        %v6746 = vpack.c.b16 %v6104, %v6098
        %v6747 = vpack.c.b16 %v6105, %v6099
        %v6748 = vpack.c.b16 %v6112, %v6106
        %v6749 = vpack.c.b16 %v6113, %v6107
        %v6750 = vpack.c.b16 %v6114, %v6108
        %v6751 = vpack.c.b16 %v6115, %v6109
        %v6752 = vpack.c.b16 %v6116, %v6110
        %v6753 = vpack.c.b16 %v6117, %v6111
        %v6754 = vpack.c.b16 %v6124, %v6118
        %v6755 = vpack.c.b16 %v6125, %v6119
        %v6756 = vpack.c.b16 %v6126, %v6120
        %v6757 = vpack.c.b16 %v6127, %v6121
        %v6758 = vpack.c.b16 %v6128, %v6122
        %v6759 = vpack.c.b16 %v6129, %v6123
        %v6760 = vpack.c.b16 %v6136, %v6130
        %v6761 = vpack.c.b16 %v6137, %v6131
        %v6762 = vpack.c.b16 %v6138, %v6132
        %v6763 = vpack.c.b16 %v6139, %v6133
        %v6764 = vpack.c.b16 %v6140, %v6134
        %v6765 = vpack.c.b16 %v6141, %v6135
        %v6766 = vpack.c.b16 %v6148, %v6142
        %v6767 = vpack.c.b16 %v6149, %v6143
        %v6768 = vpack.c.b16 %v6150, %v6144
        %v6769 = vpack.c.b16 %v6151, %v6145
        %v6770 = vpack.c.b16 %v6152, %v6146
        %v6771 = vpack.c.b16 %v6153, %v6147
        %v6772 = vpack.c.b16 %v6160, %v6154
        %v6773 = vpack.c.b16 %v6161, %v6155
        %v6774 = vpack.c.b16 %v6162, %v6156
        %v6775 = vpack.c.b16 %v6163, %v6157
        %v6776 = vpack.c.b16 %v6164, %v6158
        %v6777 = vpack.c.b16 %v6165, %v6159
        %v6778 = vpack.c.b16 %v6172, %v6166
        %v6779 = vpack.c.b16 %v6173, %v6167
        %v6780 = vpack.c.b16 %v6174, %v6168
        %v6781 = vpack.c.b16 %v6175, %v6169
        %v6782 = vpack.c.b16 %v6176, %v6170
        %v6783 = vpack.c.b16 %v6177, %v6171
        %v6784 = vpack.c.b16 %v6184, %v6178
        %v6785 = vpack.c.b16 %v6185, %v6179
        %v6786 = vpack.c.b16 %v6186, %v6180
        %v6787 = vpack.c.b16 %v6187, %v6181
        %v6788 = vpack.c.b16 %v6188, %v6182
        %v6789 = vpack.c.b16 %v6189, %v6183
        %v6790 = vpack.c.b16 %v6196, %v6190
        %v6791 = vpack.c.b16 %v6197, %v6191
        %v6792 = vpack.c.b16 %v6198, %v6192
        %v6793 = vpack.c.b16 %v6199, %v6193
        %v6794 = vpack.c.b16 %v6200, %v6194
        %v6795 = vpack.c.b16 %v6201, %v6195
        %v6796 = vpack.c.b16 %v6208, %v6202
        %v6797 = vpack.c.b16 %v6209, %v6203
        %v6798 = vpack.c.b16 %v6210, %v6204
        %v6799 = vpack.c.b16 %v6211, %v6205
        %v6800 = vpack.c.b16 %v6212, %v6206
        %v6801 = vpack.c.b16 %v6213, %v6207
        %v6802 = vpack.c.b16 %v6220, %v6214
        %v6803 = vpack.c.b16 %v6221, %v6215
        %v6804 = vpack.c.b16 %v6222, %v6216
        %v6805 = vpack.c.b16 %v6223, %v6217
        %v6806 = vpack.c.b16 %v6224, %v6218
        %v6807 = vpack.c.b16 %v6225, %v6219
        %v6808 = vpack.c.b16 %v6232, %v6226
        %v6809 = vpack.c.b16 %v6233, %v6227
        %v6810 = vpack.c.b16 %v6234, %v6228
        %v6811 = vpack.c.b16 %v6235, %v6229
        %v6812 = vpack.c.b16 %v6236, %v6230
        %v6813 = vpack.c.b16 %v6237, %v6231
        %v6814 = vpack.c.b16 %v6244, %v6238
        %v6815 = vpack.c.b16 %v6245, %v6239
        %v6816 = vpack.c.b16 %v6246, %v6240
        %v6817 = vpack.c.b16 %v6247, %v6241
        %v6818 = vpack.c.b16 %v6248, %v6242
        %v6819 = vpack.c.b16 %v6249, %v6243
        %v6820 = vpack.c.b16 %v6256, %v6250
        %v6821 = vpack.c.b16 %v6257, %v6251
        %v6822 = vpack.c.b16 %v6258, %v6252
        %v6823 = vpack.c.b16 %v6259, %v6253
        %v6824 = vpack.c.b16 %v6260, %v6254
        %v6825 = vpack.c.b16 %v6261, %v6255
        %v6826 = vpack.c.b16 %v6268, %v6262
        %v6827 = vpack.c.b16 %v6269, %v6263
        %v6828 = vpack.c.b16 %v6270, %v6264
        %v6829 = vpack.c.b16 %v6271, %v6265
        %v6830 = vpack.c.b16 %v6272, %v6266
        %v6831 = vpack.c.b16 %v6273, %v6267
        %v6832 = vpack.c.b16 %v6280, %v6274
        %v6833 = vpack.c.b16 %v6281, %v6275
        %v6834 = vpack.c.b16 %v6282, %v6276
        %v6835 = vpack.c.b16 %v6283, %v6277
        %v6836 = vpack.c.b16 %v6284, %v6278
        %v6837 = vpack.c.b16 %v6285, %v6279
        %v6838 = vpack.c.b16 %v6292, %v6286
        %v6839 = vpack.c.b16 %v6293, %v6287
        %v6840 = vpack.c.b16 %v6294, %v6288
        %v6841 = vpack.c.b16 %v6295, %v6289
        %v6842 = vpack.c.b16 %v6296, %v6290
        %v6843 = vpack.c.b16 %v6297, %v6291
        %v6844 = vpack.c.b16 %v6304, %v6298
        %v6845 = vpack.c.b16 %v6305, %v6299
        %v6846 = vpack.c.b16 %v6306, %v6300
        %v6847 = vpack.c.b16 %v6307, %v6301
        %v6848 = vpack.c.b16 %v6308, %v6302
        %v6849 = vpack.c.b16 %v6309, %v6303
        %v6850 = vpack.c.b16 %v6316, %v6310
        %v6851 = vpack.c.b16 %v6317, %v6311
        %v6852 = vpack.c.b16 %v6318, %v6312
        %v6853 = vpack.c.b16 %v6319, %v6313
        %v6854 = vpack.c.b16 %v6320, %v6314
        %v6855 = vpack.c.b16 %v6321, %v6315
        %v6856 = vpack.c.b16 %v6328, %v6322
        %v6857 = vpack.c.b16 %v6329, %v6323
        %v6858 = vpack.c.b16 %v6330, %v6324
        %v6859 = vpack.c.b16 %v6331, %v6325
        %v6860 = vpack.c.b16 %v6332, %v6326
        %v6861 = vpack.c.b16 %v6333, %v6327
        %v6862 = vpack.c.b16 %v6340, %v6334
        %v6863 = vpack.c.b16 %v6341, %v6335
        %v6864 = vpack.c.b16 %v6342, %v6336
        %v6865 = vpack.c.b16 %v6343, %v6337
        %v6866 = vpack.c.b16 %v6344, %v6338
        %v6867 = vpack.c.b16 %v6345, %v6339
        %v6868 = vpack.c.b16 %v6352, %v6346
        %v6869 = vpack.c.b16 %v6353, %v6347
        %v6870 = vpack.c.b16 %v6354, %v6348
        %v6871 = vpack.c.b16 %v6355, %v6349
        %v6872 = vpack.c.b16 %v6356, %v6350
        %v6873 = vpack.c.b16 %v6357, %v6351
        %v6874 = vpack.c.b16 %v6364, %v6358
        %v6875 = vpack.c.b16 %v6365, %v6359
        %v6876 = vpack.c.b16 %v6366, %v6360
        %v6877 = vpack.c.b16 %v6367, %v6361
        %v6878 = vpack.c.b16 %v6368, %v6362
        %v6879 = vpack.c.b16 %v6369, %v6363
        %v6880 = vpack.c.b16 %v6376, %v6370
        %v6881 = vpack.c.b16 %v6377, %v6371
        %v6882 = vpack.c.b16 %v6378, %v6372
        %v6883 = vpack.c.b16 %v6379, %v6373
        %v6884 = vpack.c.b16 %v6380, %v6374
        %v6885 = vpack.c.b16 %v6381, %v6375
        %v6886 = vpack.c.b16 %v6388, %v6382
        %v6887 = vpack.c.b16 %v6389, %v6383
        %v6888 = vpack.c.b16 %v6390, %v6384
        %v6889 = vpack.c.b16 %v6391, %v6385
        %v6890 = vpack.c.b16 %v6392, %v6386
        %v6891 = vpack.c.b16 %v6393, %v6387
        %v6892 = vpack.c.b16 %v6400, %v6394
        %v6893 = vpack.c.b16 %v6401, %v6395
        %v6894 = vpack.c.b16 %v6402, %v6396
        %v6895 = vpack.c.b16 %v6403, %v6397
        %v6896 = vpack.c.b16 %v6404, %v6398
        %v6897 = vpack.c.b16 %v6405, %v6399
        %v6898 = vpack.c.b16 %v6412, %v6406
        %v6899 = vpack.c.b16 %v6413, %v6407
        %v6900 = vpack.c.b16 %v6414, %v6408
        %v6901 = vpack.c.b16 %v6415, %v6409
        %v6902 = vpack.c.b16 %v6416, %v6410
        %v6903 = vpack.c.b16 %v6417, %v6411
        %v6904 = vpack.c.b16 %v6424, %v6418
        %v6905 = vpack.c.b16 %v6425, %v6419
        %v6906 = vpack.c.b16 %v6426, %v6420
        %v6907 = vpack.c.b16 %v6427, %v6421
        %v6908 = vpack.c.b16 %v6428, %v6422
        %v6909 = vpack.c.b16 %v6429, %v6423
        %7390 = vmatpush.bf16.msra.mxu0 %v6472
        %7391 = vmatpush.bf16.msra.mxu0 %v6466
        %7392 = vmatpush.bf16.msra.mxu0 %v6460
        %7393 = vmatpush.bf16.msra.mxu0 %v6454
        %7394 = vmatpush.bf16.msra.mxu0 %v6448
        %7395 = vmatpush.bf16.msra.mxu0 %v6442
        %7396 = vmatpush.bf16.msra.mxu0 %v6436
        %7397 = vmatpush.bf16.msra.mxu0 %v6430
        %7398 = vmatmul.bf16.gmra.mxu0 %v4486
        %v7399 = vpop.f32.mrf.mxu0
        %v7400 = vadd.f32 %v4978, %v7399
        %v7401 = vpop.f32.mrf.mxu0
        %7402 = vdwg.mxu0
        %7403 = vmatpush.bf16.msra.mxu0 %v6520
        %7404 = vmatpush.bf16.msra.mxu0 %v6514
        %7405 = vmatpush.bf16.msra.mxu0 %v6508
        %7406 = vmatpush.bf16.msra.mxu0 %v6502
        %7407 = vmatpush.bf16.msra.mxu0 %v6496
        %7408 = vmatpush.bf16.msra.mxu0 %v6490
        %7409 = vmatpush.bf16.msra.mxu0 %v6484
        %7410 = vmatpush.bf16.msra.mxu0 %v6478
        %7411 = vmatmul.bf16.gmra.mxu0 %v4487
        %v7412 = vpop.f32.mrf.mxu0
        %v7413 = vadd.f32 %v7400, %v7412
        %v7414 = vpop.f32.mrf.mxu0
        %7415 = vdwg.mxu0
        %7416 = vmatpush.bf16.msra.mxu0 %v6568
        %7417 = vmatpush.bf16.msra.mxu0 %v6562
        %7418 = vmatpush.bf16.msra.mxu0 %v6556
        %7419 = vmatpush.bf16.msra.mxu0 %v6550
        %7420 = vmatpush.bf16.msra.mxu0 %v6544
        %7421 = vmatpush.bf16.msra.mxu0 %v6538
        %7422 = vmatpush.bf16.msra.mxu0 %v6532
        %7423 = vmatpush.bf16.msra.mxu0 %v6526
        %7424 = vmatmul.bf16.gmra.mxu0 %v4488
        %v7425 = vpop.f32.mrf.mxu0
        %v7426 = vadd.f32 %v7413, %v7425
        %v7427 = vpop.f32.mrf.mxu0
        %7428 = vdwg.mxu0
        %7429 = vmatpush.bf16.msra.mxu0 %v6616
        %7430 = vmatpush.bf16.msra.mxu0 %v6610
        %7431 = vmatpush.bf16.msra.mxu0 %v6604
        %7432 = vmatpush.bf16.msra.mxu0 %v6598
        %7433 = vmatpush.bf16.msra.mxu0 %v6592
        %7434 = vmatpush.bf16.msra.mxu0 %v6586
        %7435 = vmatpush.bf16.msra.mxu0 %v6580
        %7436 = vmatpush.bf16.msra.mxu0 %v6574
        %7437 = vmatmul.bf16.gmra.mxu0 %v4489
        %v7438 = vpop.f32.mrf.mxu0
        %v7439 = vadd.f32 %v7426, %v7438
        %v7440 = vpop.f32.mrf.mxu0
        %7441 = vdwg.mxu0
        %7442 = vmatpush.bf16.msra.mxu0 %v6664
        %7443 = vmatpush.bf16.msra.mxu0 %v6658
        %7444 = vmatpush.bf16.msra.mxu0 %v6652
        %7445 = vmatpush.bf16.msra.mxu0 %v6646
        %7446 = vmatpush.bf16.msra.mxu0 %v6640
        %7447 = vmatpush.bf16.msra.mxu0 %v6634
        %7448 = vmatpush.bf16.msra.mxu0 %v6628
        %7449 = vmatpush.bf16.msra.mxu0 %v6622
        %7450 = vmatmul.bf16.gmra.mxu0 %v4490
        %v7451 = vpop.f32.mrf.mxu0
        %v7452 = vadd.f32 %v7439, %v7451
        %v7453 = vpop.f32.mrf.mxu0
        %7454 = vdwg.mxu0
        %7455 = vmatpush.bf16.msra.mxu0 %v6712
        %7456 = vmatpush.bf16.msra.mxu0 %v6706
        %7457 = vmatpush.bf16.msra.mxu0 %v6700
        %7458 = vmatpush.bf16.msra.mxu0 %v6694
        %7459 = vmatpush.bf16.msra.mxu0 %v6688
        %7460 = vmatpush.bf16.msra.mxu0 %v6682
        %7461 = vmatpush.bf16.msra.mxu0 %v6676
        %7462 = vmatpush.bf16.msra.mxu0 %v6670
        %7463 = vmatmul.bf16.gmra.mxu0 %v4491
        %v7464 = vpop.f32.mrf.mxu0
        %v7465 = vadd.f32 %v7452, %v7464
        %v7466 = vpop.f32.mrf.mxu0
        %7467 = vdwg.mxu0
        %7468 = vmatpush.bf16.msra.mxu0 %v6760
        %7469 = vmatpush.bf16.msra.mxu0 %v6754
        %7470 = vmatpush.bf16.msra.mxu0 %v6748
        %7471 = vmatpush.bf16.msra.mxu0 %v6742
        %7472 = vmatpush.bf16.msra.mxu0 %v6736
        %7473 = vmatpush.bf16.msra.mxu0 %v6730
        %7474 = vmatpush.bf16.msra.mxu0 %v6724
        %7475 = vmatpush.bf16.msra.mxu0 %v6718
        %7476 = vmatmul.bf16.gmra.mxu0 %v4492
        %v7477 = vpop.f32.mrf.mxu0
        %v7478 = vadd.f32 %v7465, %v7477
        %v7479 = vpop.f32.mrf.mxu0
        %7480 = vdwg.mxu0
        %7481 = vmatpush.bf16.msra.mxu0 %v6808
        %7482 = vmatpush.bf16.msra.mxu0 %v6802
        %7483 = vmatpush.bf16.msra.mxu0 %v6796
        %7484 = vmatpush.bf16.msra.mxu0 %v6790
        %7485 = vmatpush.bf16.msra.mxu0 %v6784
        %7486 = vmatpush.bf16.msra.mxu0 %v6778
        %7487 = vmatpush.bf16.msra.mxu0 %v6772
        %7488 = vmatpush.bf16.msra.mxu0 %v6766
        %7489 = vmatmul.bf16.gmra.mxu0 %v4493
        %v7490 = vpop.f32.mrf.mxu0
        %v7491 = vadd.f32 %v7478, %v7490
        %v7492 = vpop.f32.mrf.mxu0
        %7493 = vdwg.mxu0
        %7494 = vmatpush.bf16.msra.mxu0 %v6856
        %7495 = vmatpush.bf16.msra.mxu0 %v6850
        %7496 = vmatpush.bf16.msra.mxu0 %v6844
        %7497 = vmatpush.bf16.msra.mxu0 %v6838
        %7498 = vmatpush.bf16.msra.mxu0 %v6832
        %7499 = vmatpush.bf16.msra.mxu0 %v6826
        %7500 = vmatpush.bf16.msra.mxu0 %v6820
        %7501 = vmatpush.bf16.msra.mxu0 %v6814
        %7502 = vmatmul.bf16.gmra.mxu0 %v4494
        %v7503 = vpop.f32.mrf.mxu0
        %v7504 = vadd.f32 %v7491, %v7503
        %v7505 = vpop.f32.mrf.mxu0
        %7506 = vdwg.mxu0
        %7507 = vmatpush.bf16.msra.mxu0 %v6904
        %7508 = vmatpush.bf16.msra.mxu0 %v6898
        %7509 = vmatpush.bf16.msra.mxu0 %v6892
        %7510 = vmatpush.bf16.msra.mxu0 %v6886
        %7511 = vmatpush.bf16.msra.mxu0 %v6880
        %7512 = vmatpush.bf16.msra.mxu0 %v6874
        %7513 = vmatpush.bf16.msra.mxu0 %v6868
        %7514 = vmatpush.bf16.msra.mxu0 %v6862
        %7515 = vmatmul.bf16.gmra.mxu0 %v4495
        %v7516 = vpop.f32.mrf.mxu0
        %v7517 = vadd.f32 %v7504, %v7516
        %v7518 = vpop.f32.mrf.mxu0
        %7519 = vdwg.mxu0
        %7520 = vmatpush.bf16.msra.mxu0 %v6473
        %7521 = vmatpush.bf16.msra.mxu0 %v6467
        %7522 = vmatpush.bf16.msra.mxu0 %v6461
        %7523 = vmatpush.bf16.msra.mxu0 %v6455
        %7524 = vmatpush.bf16.msra.mxu0 %v6449
        %7525 = vmatpush.bf16.msra.mxu0 %v6443
        %7526 = vmatpush.bf16.msra.mxu0 %v6437
        %7527 = vmatpush.bf16.msra.mxu0 %v6431
        %7528 = vmatmul.bf16.gmra.mxu0 %v4486
        %v7529 = vpop.f32.mrf.mxu0
        %v7530 = vadd.f32 %v4979, %v7529
        %v7531 = vpop.f32.mrf.mxu0
        %7532 = vdwg.mxu0
        %7533 = vmatpush.bf16.msra.mxu0 %v6521
        %7534 = vmatpush.bf16.msra.mxu0 %v6515
        %7535 = vmatpush.bf16.msra.mxu0 %v6509
        %7536 = vmatpush.bf16.msra.mxu0 %v6503
        %7537 = vmatpush.bf16.msra.mxu0 %v6497
        %7538 = vmatpush.bf16.msra.mxu0 %v6491
        %7539 = vmatpush.bf16.msra.mxu0 %v6485
        %7540 = vmatpush.bf16.msra.mxu0 %v6479
        %7541 = vmatmul.bf16.gmra.mxu0 %v4487
        %v7542 = vpop.f32.mrf.mxu0
        %v7543 = vadd.f32 %v7530, %v7542
        %v7544 = vpop.f32.mrf.mxu0
        %7545 = vdwg.mxu0
        %7546 = vmatpush.bf16.msra.mxu0 %v6569
        %7547 = vmatpush.bf16.msra.mxu0 %v6563
        %7548 = vmatpush.bf16.msra.mxu0 %v6557
        %7549 = vmatpush.bf16.msra.mxu0 %v6551
        %7550 = vmatpush.bf16.msra.mxu0 %v6545
        %7551 = vmatpush.bf16.msra.mxu0 %v6539
        %7552 = vmatpush.bf16.msra.mxu0 %v6533
        %7553 = vmatpush.bf16.msra.mxu0 %v6527
        %7554 = vmatmul.bf16.gmra.mxu0 %v4488
        %v7555 = vpop.f32.mrf.mxu0
        %v7556 = vadd.f32 %v7543, %v7555
        %v7557 = vpop.f32.mrf.mxu0
        %7558 = vdwg.mxu0
        %7559 = vmatpush.bf16.msra.mxu0 %v6617
        %7560 = vmatpush.bf16.msra.mxu0 %v6611
        %7561 = vmatpush.bf16.msra.mxu0 %v6605
        %7562 = vmatpush.bf16.msra.mxu0 %v6599
        %7563 = vmatpush.bf16.msra.mxu0 %v6593
        %7564 = vmatpush.bf16.msra.mxu0 %v6587
        %7565 = vmatpush.bf16.msra.mxu0 %v6581
        %7566 = vmatpush.bf16.msra.mxu0 %v6575
        %7567 = vmatmul.bf16.gmra.mxu0 %v4489
        %v7568 = vpop.f32.mrf.mxu0
        %v7569 = vadd.f32 %v7556, %v7568
        %v7570 = vpop.f32.mrf.mxu0
        %7571 = vdwg.mxu0
        %7572 = vmatpush.bf16.msra.mxu0 %v6665
        %7573 = vmatpush.bf16.msra.mxu0 %v6659
        %7574 = vmatpush.bf16.msra.mxu0 %v6653
        %7575 = vmatpush.bf16.msra.mxu0 %v6647
        %7576 = vmatpush.bf16.msra.mxu0 %v6641
        %7577 = vmatpush.bf16.msra.mxu0 %v6635
        %7578 = vmatpush.bf16.msra.mxu0 %v6629
        %7579 = vmatpush.bf16.msra.mxu0 %v6623
        %7580 = vmatmul.bf16.gmra.mxu0 %v4490
        %v7581 = vpop.f32.mrf.mxu0
        %v7582 = vadd.f32 %v7569, %v7581
        %v7583 = vpop.f32.mrf.mxu0
        %7584 = vdwg.mxu0
        %7585 = vmatpush.bf16.msra.mxu0 %v6713
        %7586 = vmatpush.bf16.msra.mxu0 %v6707
        %7587 = vmatpush.bf16.msra.mxu0 %v6701
        %7588 = vmatpush.bf16.msra.mxu0 %v6695
        %7589 = vmatpush.bf16.msra.mxu0 %v6689
        %7590 = vmatpush.bf16.msra.mxu0 %v6683
        %7591 = vmatpush.bf16.msra.mxu0 %v6677
        %7592 = vmatpush.bf16.msra.mxu0 %v6671
        %7593 = vmatmul.bf16.gmra.mxu0 %v4491
        %v7594 = vpop.f32.mrf.mxu0
        %v7595 = vadd.f32 %v7582, %v7594
        %v7596 = vpop.f32.mrf.mxu0
        %7597 = vdwg.mxu0
        %7598 = vmatpush.bf16.msra.mxu0 %v6761
        %7599 = vmatpush.bf16.msra.mxu0 %v6755
        %7600 = vmatpush.bf16.msra.mxu0 %v6749
        %7601 = vmatpush.bf16.msra.mxu0 %v6743
        %7602 = vmatpush.bf16.msra.mxu0 %v6737
        %7603 = vmatpush.bf16.msra.mxu0 %v6731
        %7604 = vmatpush.bf16.msra.mxu0 %v6725
        %7605 = vmatpush.bf16.msra.mxu0 %v6719
        %7606 = vmatmul.bf16.gmra.mxu0 %v4492
        %v7607 = vpop.f32.mrf.mxu0
        %v7608 = vadd.f32 %v7595, %v7607
        %v7609 = vpop.f32.mrf.mxu0
        %7610 = vdwg.mxu0
        %7611 = vmatpush.bf16.msra.mxu0 %v6809
        %7612 = vmatpush.bf16.msra.mxu0 %v6803
        %7613 = vmatpush.bf16.msra.mxu0 %v6797
        %7614 = vmatpush.bf16.msra.mxu0 %v6791
        %7615 = vmatpush.bf16.msra.mxu0 %v6785
        %7616 = vmatpush.bf16.msra.mxu0 %v6779
        %7617 = vmatpush.bf16.msra.mxu0 %v6773
        %7618 = vmatpush.bf16.msra.mxu0 %v6767
        %7619 = vmatmul.bf16.gmra.mxu0 %v4493
        %v7620 = vpop.f32.mrf.mxu0
        %v7621 = vadd.f32 %v7608, %v7620
        %v7622 = vpop.f32.mrf.mxu0
        %7623 = vdwg.mxu0
        %7624 = vmatpush.bf16.msra.mxu0 %v6857
        %7625 = vmatpush.bf16.msra.mxu0 %v6851
        %7626 = vmatpush.bf16.msra.mxu0 %v6845
        %7627 = vmatpush.bf16.msra.mxu0 %v6839
        %7628 = vmatpush.bf16.msra.mxu0 %v6833
        %7629 = vmatpush.bf16.msra.mxu0 %v6827
        %7630 = vmatpush.bf16.msra.mxu0 %v6821
        %7631 = vmatpush.bf16.msra.mxu0 %v6815
        %7632 = vmatmul.bf16.gmra.mxu0 %v4494
        %v7633 = vpop.f32.mrf.mxu0
        %v7634 = vadd.f32 %v7621, %v7633
        %v7635 = vpop.f32.mrf.mxu0
        %7636 = vdwg.mxu0
        %7637 = vmatpush.bf16.msra.mxu0 %v6905
        %7638 = vmatpush.bf16.msra.mxu0 %v6899
        %7639 = vmatpush.bf16.msra.mxu0 %v6893
        %7640 = vmatpush.bf16.msra.mxu0 %v6887
        %7641 = vmatpush.bf16.msra.mxu0 %v6881
        %7642 = vmatpush.bf16.msra.mxu0 %v6875
        %7643 = vmatpush.bf16.msra.mxu0 %v6869
        %7644 = vmatpush.bf16.msra.mxu0 %v6863
        %7645 = vmatmul.bf16.gmra.mxu0 %v4495
        %v7646 = vpop.f32.mrf.mxu0
        %v7647 = vadd.f32 %v7634, %v7646
        %v7648 = vpop.f32.mrf.mxu0
        %7649 = vdwg.mxu0
        %7650 = vmatpush.bf16.msra.mxu0 %v6474
        %7651 = vmatpush.bf16.msra.mxu0 %v6468
        %7652 = vmatpush.bf16.msra.mxu0 %v6462
        %7653 = vmatpush.bf16.msra.mxu0 %v6456
        %7654 = vmatpush.bf16.msra.mxu0 %v6450
        %7655 = vmatpush.bf16.msra.mxu0 %v6444
        %7656 = vmatpush.bf16.msra.mxu0 %v6438
        %7657 = vmatpush.bf16.msra.mxu0 %v6432
        %7658 = vmatmul.bf16.gmra.mxu0 %v4486
        %v7659 = vpop.f32.mrf.mxu0
        %v7660 = vadd.f32 %v4980, %v7659
        %v7661 = vpop.f32.mrf.mxu0
        %7662 = vdwg.mxu0
        %7663 = vmatpush.bf16.msra.mxu0 %v6522
        %7664 = vmatpush.bf16.msra.mxu0 %v6516
        %7665 = vmatpush.bf16.msra.mxu0 %v6510
        %7666 = vmatpush.bf16.msra.mxu0 %v6504
        %7667 = vmatpush.bf16.msra.mxu0 %v6498
        %7668 = vmatpush.bf16.msra.mxu0 %v6492
        %7669 = vmatpush.bf16.msra.mxu0 %v6486
        %7670 = vmatpush.bf16.msra.mxu0 %v6480
        %7671 = vmatmul.bf16.gmra.mxu0 %v4487
        %v7672 = vpop.f32.mrf.mxu0
        %v7673 = vadd.f32 %v7660, %v7672
        %v7674 = vpop.f32.mrf.mxu0
        %7675 = vdwg.mxu0
        %7676 = vmatpush.bf16.msra.mxu0 %v6570
        %7677 = vmatpush.bf16.msra.mxu0 %v6564
        %7678 = vmatpush.bf16.msra.mxu0 %v6558
        %7679 = vmatpush.bf16.msra.mxu0 %v6552
        %7680 = vmatpush.bf16.msra.mxu0 %v6546
        %7681 = vmatpush.bf16.msra.mxu0 %v6540
        %7682 = vmatpush.bf16.msra.mxu0 %v6534
        %7683 = vmatpush.bf16.msra.mxu0 %v6528
        %7684 = vmatmul.bf16.gmra.mxu0 %v4488
        %v7685 = vpop.f32.mrf.mxu0
        %v7686 = vadd.f32 %v7673, %v7685
        %v7687 = vpop.f32.mrf.mxu0
        %7688 = vdwg.mxu0
        %7689 = vmatpush.bf16.msra.mxu0 %v6618
        %7690 = vmatpush.bf16.msra.mxu0 %v6612
        %7691 = vmatpush.bf16.msra.mxu0 %v6606
        %7692 = vmatpush.bf16.msra.mxu0 %v6600
        %7693 = vmatpush.bf16.msra.mxu0 %v6594
        %7694 = vmatpush.bf16.msra.mxu0 %v6588
        %7695 = vmatpush.bf16.msra.mxu0 %v6582
        %7696 = vmatpush.bf16.msra.mxu0 %v6576
        %7697 = vmatmul.bf16.gmra.mxu0 %v4489
        %v7698 = vpop.f32.mrf.mxu0
        %v7699 = vadd.f32 %v7686, %v7698
        %v7700 = vpop.f32.mrf.mxu0
        %7701 = vdwg.mxu0
        %7702 = vmatpush.bf16.msra.mxu0 %v6666
        %7703 = vmatpush.bf16.msra.mxu0 %v6660
        %7704 = vmatpush.bf16.msra.mxu0 %v6654
        %7705 = vmatpush.bf16.msra.mxu0 %v6648
        %7706 = vmatpush.bf16.msra.mxu0 %v6642
        %7707 = vmatpush.bf16.msra.mxu0 %v6636
        %7708 = vmatpush.bf16.msra.mxu0 %v6630
        %7709 = vmatpush.bf16.msra.mxu0 %v6624
        %7710 = vmatmul.bf16.gmra.mxu0 %v4490
        %v7711 = vpop.f32.mrf.mxu0
        %v7712 = vadd.f32 %v7699, %v7711
        %v7713 = vpop.f32.mrf.mxu0
        %7714 = vdwg.mxu0
        %7715 = vmatpush.bf16.msra.mxu0 %v6714
        %7716 = vmatpush.bf16.msra.mxu0 %v6708
        %7717 = vmatpush.bf16.msra.mxu0 %v6702
        %7718 = vmatpush.bf16.msra.mxu0 %v6696
        %7719 = vmatpush.bf16.msra.mxu0 %v6690
        %7720 = vmatpush.bf16.msra.mxu0 %v6684
        %7721 = vmatpush.bf16.msra.mxu0 %v6678
        %7722 = vmatpush.bf16.msra.mxu0 %v6672
        %7723 = vmatmul.bf16.gmra.mxu0 %v4491
        %v7724 = vpop.f32.mrf.mxu0
        %v7725 = vadd.f32 %v7712, %v7724
        %v7726 = vpop.f32.mrf.mxu0
        %7727 = vdwg.mxu0
        %7728 = vmatpush.bf16.msra.mxu0 %v6762
        %7729 = vmatpush.bf16.msra.mxu0 %v6756
        %7730 = vmatpush.bf16.msra.mxu0 %v6750
        %7731 = vmatpush.bf16.msra.mxu0 %v6744
        %7732 = vmatpush.bf16.msra.mxu0 %v6738
        %7733 = vmatpush.bf16.msra.mxu0 %v6732
        %7734 = vmatpush.bf16.msra.mxu0 %v6726
        %7735 = vmatpush.bf16.msra.mxu0 %v6720
        %7736 = vmatmul.bf16.gmra.mxu0 %v4492
        %v7737 = vpop.f32.mrf.mxu0
        %v7738 = vadd.f32 %v7725, %v7737
        %v7739 = vpop.f32.mrf.mxu0
        %7740 = vdwg.mxu0
        %7741 = vmatpush.bf16.msra.mxu0 %v6810
        %7742 = vmatpush.bf16.msra.mxu0 %v6804
        %7743 = vmatpush.bf16.msra.mxu0 %v6798
        %7744 = vmatpush.bf16.msra.mxu0 %v6792
        %7745 = vmatpush.bf16.msra.mxu0 %v6786
        %7746 = vmatpush.bf16.msra.mxu0 %v6780
        %7747 = vmatpush.bf16.msra.mxu0 %v6774
        %7748 = vmatpush.bf16.msra.mxu0 %v6768
        %7749 = vmatmul.bf16.gmra.mxu0 %v4493
        %v7750 = vpop.f32.mrf.mxu0
        %v7751 = vadd.f32 %v7738, %v7750
        %v7752 = vpop.f32.mrf.mxu0
        %7753 = vdwg.mxu0
        %7754 = vmatpush.bf16.msra.mxu0 %v6858
        %7755 = vmatpush.bf16.msra.mxu0 %v6852
        %7756 = vmatpush.bf16.msra.mxu0 %v6846
        %7757 = vmatpush.bf16.msra.mxu0 %v6840
        %7758 = vmatpush.bf16.msra.mxu0 %v6834
        %7759 = vmatpush.bf16.msra.mxu0 %v6828
        %7760 = vmatpush.bf16.msra.mxu0 %v6822
        %7761 = vmatpush.bf16.msra.mxu0 %v6816
        %7762 = vmatmul.bf16.gmra.mxu0 %v4494
        %v7763 = vpop.f32.mrf.mxu0
        %v7764 = vadd.f32 %v7751, %v7763
        %v7765 = vpop.f32.mrf.mxu0
        %7766 = vdwg.mxu0
        %7767 = vmatpush.bf16.msra.mxu0 %v6906
        %7768 = vmatpush.bf16.msra.mxu0 %v6900
        %7769 = vmatpush.bf16.msra.mxu0 %v6894
        %7770 = vmatpush.bf16.msra.mxu0 %v6888
        %7771 = vmatpush.bf16.msra.mxu0 %v6882
        %7772 = vmatpush.bf16.msra.mxu0 %v6876
        %7773 = vmatpush.bf16.msra.mxu0 %v6870
        %7774 = vmatpush.bf16.msra.mxu0 %v6864
        %7775 = vmatmul.bf16.gmra.mxu0 %v4495
        %v7776 = vpop.f32.mrf.mxu0
        %v7777 = vadd.f32 %v7764, %v7776
        %v7778 = vpop.f32.mrf.mxu0
        %7779 = vdwg.mxu0
        %7780 = vmatpush.bf16.msra.mxu0 %v6475
        %7781 = vmatpush.bf16.msra.mxu0 %v6469
        %7782 = vmatpush.bf16.msra.mxu0 %v6463
        %7783 = vmatpush.bf16.msra.mxu0 %v6457
        %7784 = vmatpush.bf16.msra.mxu0 %v6451
        %7785 = vmatpush.bf16.msra.mxu0 %v6445
        %7786 = vmatpush.bf16.msra.mxu0 %v6439
        %7787 = vmatpush.bf16.msra.mxu0 %v6433
        %7788 = vmatmul.bf16.gmra.mxu0 %v4486
        %v7789 = vpop.f32.mrf.mxu0
        %v7790 = vadd.f32 %v4981, %v7789
        %v7791 = vpop.f32.mrf.mxu0
        %7792 = vdwg.mxu0
        %7793 = vmatpush.bf16.msra.mxu0 %v6523
        %7794 = vmatpush.bf16.msra.mxu0 %v6517
        %7795 = vmatpush.bf16.msra.mxu0 %v6511
        %7796 = vmatpush.bf16.msra.mxu0 %v6505
        %7797 = vmatpush.bf16.msra.mxu0 %v6499
        %7798 = vmatpush.bf16.msra.mxu0 %v6493
        %7799 = vmatpush.bf16.msra.mxu0 %v6487
        %7800 = vmatpush.bf16.msra.mxu0 %v6481
        %7801 = vmatmul.bf16.gmra.mxu0 %v4487
        %v7802 = vpop.f32.mrf.mxu0
        %v7803 = vadd.f32 %v7790, %v7802
        %v7804 = vpop.f32.mrf.mxu0
        %7805 = vdwg.mxu0
        %7806 = vmatpush.bf16.msra.mxu0 %v6571
        %7807 = vmatpush.bf16.msra.mxu0 %v6565
        %7808 = vmatpush.bf16.msra.mxu0 %v6559
        %7809 = vmatpush.bf16.msra.mxu0 %v6553
        %7810 = vmatpush.bf16.msra.mxu0 %v6547
        %7811 = vmatpush.bf16.msra.mxu0 %v6541
        %7812 = vmatpush.bf16.msra.mxu0 %v6535
        %7813 = vmatpush.bf16.msra.mxu0 %v6529
        %7814 = vmatmul.bf16.gmra.mxu0 %v4488
        %v7815 = vpop.f32.mrf.mxu0
        %v7816 = vadd.f32 %v7803, %v7815
        %v7817 = vpop.f32.mrf.mxu0
        %7818 = vdwg.mxu0
        %7819 = vmatpush.bf16.msra.mxu0 %v6619
        %7820 = vmatpush.bf16.msra.mxu0 %v6613
        %7821 = vmatpush.bf16.msra.mxu0 %v6607
        %7822 = vmatpush.bf16.msra.mxu0 %v6601
        %7823 = vmatpush.bf16.msra.mxu0 %v6595
        %7824 = vmatpush.bf16.msra.mxu0 %v6589
        %7825 = vmatpush.bf16.msra.mxu0 %v6583
        %7826 = vmatpush.bf16.msra.mxu0 %v6577
        %7827 = vmatmul.bf16.gmra.mxu0 %v4489
        %v7828 = vpop.f32.mrf.mxu0
        %v7829 = vadd.f32 %v7816, %v7828
        %v7830 = vpop.f32.mrf.mxu0
        %7831 = vdwg.mxu0
        %7832 = vmatpush.bf16.msra.mxu0 %v6667
        %7833 = vmatpush.bf16.msra.mxu0 %v6661
        %7834 = vmatpush.bf16.msra.mxu0 %v6655
        %7835 = vmatpush.bf16.msra.mxu0 %v6649
        %7836 = vmatpush.bf16.msra.mxu0 %v6643
        %7837 = vmatpush.bf16.msra.mxu0 %v6637
        %7838 = vmatpush.bf16.msra.mxu0 %v6631
        %7839 = vmatpush.bf16.msra.mxu0 %v6625
        %7840 = vmatmul.bf16.gmra.mxu0 %v4490
        %v7841 = vpop.f32.mrf.mxu0
        %v7842 = vadd.f32 %v7829, %v7841
        %v7843 = vpop.f32.mrf.mxu0
        %7844 = vdwg.mxu0
        %7845 = vmatpush.bf16.msra.mxu0 %v6715
        %7846 = vmatpush.bf16.msra.mxu0 %v6709
        %7847 = vmatpush.bf16.msra.mxu0 %v6703
        %7848 = vmatpush.bf16.msra.mxu0 %v6697
        %7849 = vmatpush.bf16.msra.mxu0 %v6691
        %7850 = vmatpush.bf16.msra.mxu0 %v6685
        %7851 = vmatpush.bf16.msra.mxu0 %v6679
        %7852 = vmatpush.bf16.msra.mxu0 %v6673
        %7853 = vmatmul.bf16.gmra.mxu0 %v4491
        %v7854 = vpop.f32.mrf.mxu0
        %v7855 = vadd.f32 %v7842, %v7854
        %v7856 = vpop.f32.mrf.mxu0
        %7857 = vdwg.mxu0
        %7858 = vmatpush.bf16.msra.mxu0 %v6763
        %7859 = vmatpush.bf16.msra.mxu0 %v6757
        %7860 = vmatpush.bf16.msra.mxu0 %v6751
        %7861 = vmatpush.bf16.msra.mxu0 %v6745
        %7862 = vmatpush.bf16.msra.mxu0 %v6739
        %7863 = vmatpush.bf16.msra.mxu0 %v6733
        %7864 = vmatpush.bf16.msra.mxu0 %v6727
        %7865 = vmatpush.bf16.msra.mxu0 %v6721
        %7866 = vmatmul.bf16.gmra.mxu0 %v4492
        %v7867 = vpop.f32.mrf.mxu0
        %v7868 = vadd.f32 %v7855, %v7867
        %v7869 = vpop.f32.mrf.mxu0
        %7870 = vdwg.mxu0
        %7871 = vmatpush.bf16.msra.mxu0 %v6811
        %7872 = vmatpush.bf16.msra.mxu0 %v6805
        %7873 = vmatpush.bf16.msra.mxu0 %v6799
        %7874 = vmatpush.bf16.msra.mxu0 %v6793
        %7875 = vmatpush.bf16.msra.mxu0 %v6787
        %7876 = vmatpush.bf16.msra.mxu0 %v6781
        %7877 = vmatpush.bf16.msra.mxu0 %v6775
        %7878 = vmatpush.bf16.msra.mxu0 %v6769
        %7879 = vmatmul.bf16.gmra.mxu0 %v4493
        %v7880 = vpop.f32.mrf.mxu0
        %v7881 = vadd.f32 %v7868, %v7880
        %v7882 = vpop.f32.mrf.mxu0
        %7883 = vdwg.mxu0
        %7884 = vmatpush.bf16.msra.mxu0 %v6859
        %7885 = vmatpush.bf16.msra.mxu0 %v6853
        %7886 = vmatpush.bf16.msra.mxu0 %v6847
        %7887 = vmatpush.bf16.msra.mxu0 %v6841
        %7888 = vmatpush.bf16.msra.mxu0 %v6835
        %7889 = vmatpush.bf16.msra.mxu0 %v6829
        %7890 = vmatpush.bf16.msra.mxu0 %v6823
        %7891 = vmatpush.bf16.msra.mxu0 %v6817
        %7892 = vmatmul.bf16.gmra.mxu0 %v4494
        %v7893 = vpop.f32.mrf.mxu0
        %v7894 = vadd.f32 %v7881, %v7893
        %v7895 = vpop.f32.mrf.mxu0
        %7896 = vdwg.mxu0
        %7897 = vmatpush.bf16.msra.mxu0 %v6907
        %7898 = vmatpush.bf16.msra.mxu0 %v6901
        %7899 = vmatpush.bf16.msra.mxu0 %v6895
        %7900 = vmatpush.bf16.msra.mxu0 %v6889
        %7901 = vmatpush.bf16.msra.mxu0 %v6883
        %7902 = vmatpush.bf16.msra.mxu0 %v6877
        %7903 = vmatpush.bf16.msra.mxu0 %v6871
        %7904 = vmatpush.bf16.msra.mxu0 %v6865
        %7905 = vmatmul.bf16.gmra.mxu0 %v4495
        %v7906 = vpop.f32.mrf.mxu0
        %v7907 = vadd.f32 %v7894, %v7906
        %v7908 = vpop.f32.mrf.mxu0
        %7909 = vdwg.mxu0
        %7910 = vmatpush.bf16.msra.mxu0 %v6476
        %7911 = vmatpush.bf16.msra.mxu0 %v6470
        %7912 = vmatpush.bf16.msra.mxu0 %v6464
        %7913 = vmatpush.bf16.msra.mxu0 %v6458
        %7914 = vmatpush.bf16.msra.mxu0 %v6452
        %7915 = vmatpush.bf16.msra.mxu0 %v6446
        %7916 = vmatpush.bf16.msra.mxu0 %v6440
        %7917 = vmatpush.bf16.msra.mxu0 %v6434
        %7918 = vmatmul.bf16.gmra.mxu0 %v4486
        %v7919 = vpop.f32.mrf.mxu0
        %v7920 = vadd.f32 %v4982, %v7919
        %v7921 = vpop.f32.mrf.mxu0
        %7922 = vdwg.mxu0
        %7923 = vmatpush.bf16.msra.mxu0 %v6524
        %7924 = vmatpush.bf16.msra.mxu0 %v6518
        %7925 = vmatpush.bf16.msra.mxu0 %v6512
        %7926 = vmatpush.bf16.msra.mxu0 %v6506
        %7927 = vmatpush.bf16.msra.mxu0 %v6500
        %7928 = vmatpush.bf16.msra.mxu0 %v6494
        %7929 = vmatpush.bf16.msra.mxu0 %v6488
        %7930 = vmatpush.bf16.msra.mxu0 %v6482
        %7931 = vmatmul.bf16.gmra.mxu0 %v4487
        %v7932 = vpop.f32.mrf.mxu0
        %v7933 = vadd.f32 %v7920, %v7932
        %v7934 = vpop.f32.mrf.mxu0
        %7935 = vdwg.mxu0
        %7936 = vmatpush.bf16.msra.mxu0 %v6572
        %7937 = vmatpush.bf16.msra.mxu0 %v6566
        %7938 = vmatpush.bf16.msra.mxu0 %v6560
        %7939 = vmatpush.bf16.msra.mxu0 %v6554
        %7940 = vmatpush.bf16.msra.mxu0 %v6548
        %7941 = vmatpush.bf16.msra.mxu0 %v6542
        %7942 = vmatpush.bf16.msra.mxu0 %v6536
        %7943 = vmatpush.bf16.msra.mxu0 %v6530
        %7944 = vmatmul.bf16.gmra.mxu0 %v4488
        %v7945 = vpop.f32.mrf.mxu0
        %v7946 = vadd.f32 %v7933, %v7945
        %v7947 = vpop.f32.mrf.mxu0
        %7948 = vdwg.mxu0
        %7949 = vmatpush.bf16.msra.mxu0 %v6620
        %7950 = vmatpush.bf16.msra.mxu0 %v6614
        %7951 = vmatpush.bf16.msra.mxu0 %v6608
        %7952 = vmatpush.bf16.msra.mxu0 %v6602
        %7953 = vmatpush.bf16.msra.mxu0 %v6596
        %7954 = vmatpush.bf16.msra.mxu0 %v6590
        %7955 = vmatpush.bf16.msra.mxu0 %v6584
        %7956 = vmatpush.bf16.msra.mxu0 %v6578
        %7957 = vmatmul.bf16.gmra.mxu0 %v4489
        %v7958 = vpop.f32.mrf.mxu0
        %v7959 = vadd.f32 %v7946, %v7958
        %v7960 = vpop.f32.mrf.mxu0
        %7961 = vdwg.mxu0
        %7962 = vmatpush.bf16.msra.mxu0 %v6668
        %7963 = vmatpush.bf16.msra.mxu0 %v6662
        %7964 = vmatpush.bf16.msra.mxu0 %v6656
        %7965 = vmatpush.bf16.msra.mxu0 %v6650
        %7966 = vmatpush.bf16.msra.mxu0 %v6644
        %7967 = vmatpush.bf16.msra.mxu0 %v6638
        %7968 = vmatpush.bf16.msra.mxu0 %v6632
        %7969 = vmatpush.bf16.msra.mxu0 %v6626
        %7970 = vmatmul.bf16.gmra.mxu0 %v4490
        %v7971 = vpop.f32.mrf.mxu0
        %v7972 = vadd.f32 %v7959, %v7971
        %v7973 = vpop.f32.mrf.mxu0
        %7974 = vdwg.mxu0
        %7975 = vmatpush.bf16.msra.mxu0 %v6716
        %7976 = vmatpush.bf16.msra.mxu0 %v6710
        %7977 = vmatpush.bf16.msra.mxu0 %v6704
        %7978 = vmatpush.bf16.msra.mxu0 %v6698
        %7979 = vmatpush.bf16.msra.mxu0 %v6692
        %7980 = vmatpush.bf16.msra.mxu0 %v6686
        %7981 = vmatpush.bf16.msra.mxu0 %v6680
        %7982 = vmatpush.bf16.msra.mxu0 %v6674
        %7983 = vmatmul.bf16.gmra.mxu0 %v4491
        %v7984 = vpop.f32.mrf.mxu0
        %v7985 = vadd.f32 %v7972, %v7984
        %v7986 = vpop.f32.mrf.mxu0
        %7987 = vdwg.mxu0
        %7988 = vmatpush.bf16.msra.mxu0 %v6764
        %7989 = vmatpush.bf16.msra.mxu0 %v6758
        %7990 = vmatpush.bf16.msra.mxu0 %v6752
        %7991 = vmatpush.bf16.msra.mxu0 %v6746
        %7992 = vmatpush.bf16.msra.mxu0 %v6740
        %7993 = vmatpush.bf16.msra.mxu0 %v6734
        %7994 = vmatpush.bf16.msra.mxu0 %v6728
        %7995 = vmatpush.bf16.msra.mxu0 %v6722
        %7996 = vmatmul.bf16.gmra.mxu0 %v4492
        %v7997 = vpop.f32.mrf.mxu0
        %v7998 = vadd.f32 %v7985, %v7997
        %v7999 = vpop.f32.mrf.mxu0
        %8000 = vdwg.mxu0
        %8001 = vmatpush.bf16.msra.mxu0 %v6812
        %8002 = vmatpush.bf16.msra.mxu0 %v6806
        %8003 = vmatpush.bf16.msra.mxu0 %v6800
        %8004 = vmatpush.bf16.msra.mxu0 %v6794
        %8005 = vmatpush.bf16.msra.mxu0 %v6788
        %8006 = vmatpush.bf16.msra.mxu0 %v6782
        %8007 = vmatpush.bf16.msra.mxu0 %v6776
        %8008 = vmatpush.bf16.msra.mxu0 %v6770
        %8009 = vmatmul.bf16.gmra.mxu0 %v4493
        %v8010 = vpop.f32.mrf.mxu0
        %v8011 = vadd.f32 %v7998, %v8010
        %v8012 = vpop.f32.mrf.mxu0
        %8013 = vdwg.mxu0
        %8014 = vmatpush.bf16.msra.mxu0 %v6860
        %8015 = vmatpush.bf16.msra.mxu0 %v6854
        %8016 = vmatpush.bf16.msra.mxu0 %v6848
        %8017 = vmatpush.bf16.msra.mxu0 %v6842
        %8018 = vmatpush.bf16.msra.mxu0 %v6836
        %8019 = vmatpush.bf16.msra.mxu0 %v6830
        %8020 = vmatpush.bf16.msra.mxu0 %v6824
        %8021 = vmatpush.bf16.msra.mxu0 %v6818
        %8022 = vmatmul.bf16.gmra.mxu0 %v4494
        %v8023 = vpop.f32.mrf.mxu0
        %v8024 = vadd.f32 %v8011, %v8023
        %v8025 = vpop.f32.mrf.mxu0
        %8026 = vdwg.mxu0
        %8027 = vmatpush.bf16.msra.mxu0 %v6908
        %8028 = vmatpush.bf16.msra.mxu0 %v6902
        %8029 = vmatpush.bf16.msra.mxu0 %v6896
        %8030 = vmatpush.bf16.msra.mxu0 %v6890
        %8031 = vmatpush.bf16.msra.mxu0 %v6884
        %8032 = vmatpush.bf16.msra.mxu0 %v6878
        %8033 = vmatpush.bf16.msra.mxu0 %v6872
        %8034 = vmatpush.bf16.msra.mxu0 %v6866
        %8035 = vmatmul.bf16.gmra.mxu0 %v4495
        %v8036 = vpop.f32.mrf.mxu0
        %v8037 = vadd.f32 %v8024, %v8036
        %v8038 = vpop.f32.mrf.mxu0
        %8039 = vdwg.mxu0
        %8040 = vmatpush.bf16.msra.mxu0 %v6477
        %8041 = vmatpush.bf16.msra.mxu0 %v6471
        %8042 = vmatpush.bf16.msra.mxu0 %v6465
        %8043 = vmatpush.bf16.msra.mxu0 %v6459
        %8044 = vmatpush.bf16.msra.mxu0 %v6453
        %8045 = vmatpush.bf16.msra.mxu0 %v6447
        %8046 = vmatpush.bf16.msra.mxu0 %v6441
        %8047 = vmatpush.bf16.msra.mxu0 %v6435
        %8048 = vmatmul.bf16.gmra.mxu0 %v4486
        %v8049 = vpop.f32.mrf.mxu0
        %v8050 = vadd.f32 %v4983, %v8049
        %v8051 = vpop.f32.mrf.mxu0
        %8052 = vdwg.mxu0
        %8053 = vmatpush.bf16.msra.mxu0 %v6525
        %8054 = vmatpush.bf16.msra.mxu0 %v6519
        %8055 = vmatpush.bf16.msra.mxu0 %v6513
        %8056 = vmatpush.bf16.msra.mxu0 %v6507
        %8057 = vmatpush.bf16.msra.mxu0 %v6501
        %8058 = vmatpush.bf16.msra.mxu0 %v6495
        %8059 = vmatpush.bf16.msra.mxu0 %v6489
        %8060 = vmatpush.bf16.msra.mxu0 %v6483
        %8061 = vmatmul.bf16.gmra.mxu0 %v4487
        %v8062 = vpop.f32.mrf.mxu0
        %v8063 = vadd.f32 %v8050, %v8062
        %v8064 = vpop.f32.mrf.mxu0
        %8065 = vdwg.mxu0
        %8066 = vmatpush.bf16.msra.mxu0 %v6573
        %8067 = vmatpush.bf16.msra.mxu0 %v6567
        %8068 = vmatpush.bf16.msra.mxu0 %v6561
        %8069 = vmatpush.bf16.msra.mxu0 %v6555
        %8070 = vmatpush.bf16.msra.mxu0 %v6549
        %8071 = vmatpush.bf16.msra.mxu0 %v6543
        %8072 = vmatpush.bf16.msra.mxu0 %v6537
        %8073 = vmatpush.bf16.msra.mxu0 %v6531
        %8074 = vmatmul.bf16.gmra.mxu0 %v4488
        %v8075 = vpop.f32.mrf.mxu0
        %v8076 = vadd.f32 %v8063, %v8075
        %v8077 = vpop.f32.mrf.mxu0
        %8078 = vdwg.mxu0
        %8079 = vmatpush.bf16.msra.mxu0 %v6621
        %8080 = vmatpush.bf16.msra.mxu0 %v6615
        %8081 = vmatpush.bf16.msra.mxu0 %v6609
        %8082 = vmatpush.bf16.msra.mxu0 %v6603
        %8083 = vmatpush.bf16.msra.mxu0 %v6597
        %8084 = vmatpush.bf16.msra.mxu0 %v6591
        %8085 = vmatpush.bf16.msra.mxu0 %v6585
        %8086 = vmatpush.bf16.msra.mxu0 %v6579
        %8087 = vmatmul.bf16.gmra.mxu0 %v4489
        %v8088 = vpop.f32.mrf.mxu0
        %v8089 = vadd.f32 %v8076, %v8088
        %v8090 = vpop.f32.mrf.mxu0
        %8091 = vdwg.mxu0
        %8092 = vmatpush.bf16.msra.mxu0 %v6669
        %8093 = vmatpush.bf16.msra.mxu0 %v6663
        %8094 = vmatpush.bf16.msra.mxu0 %v6657
        %8095 = vmatpush.bf16.msra.mxu0 %v6651
        %8096 = vmatpush.bf16.msra.mxu0 %v6645
        %8097 = vmatpush.bf16.msra.mxu0 %v6639
        %8098 = vmatpush.bf16.msra.mxu0 %v6633
        %8099 = vmatpush.bf16.msra.mxu0 %v6627
        %8100 = vmatmul.bf16.gmra.mxu0 %v4490
        %v8101 = vpop.f32.mrf.mxu0
        %v8102 = vadd.f32 %v8089, %v8101
        %v8103 = vpop.f32.mrf.mxu0
        %8104 = vdwg.mxu0
        %8105 = vmatpush.bf16.msra.mxu0 %v6717
        %8106 = vmatpush.bf16.msra.mxu0 %v6711
        %8107 = vmatpush.bf16.msra.mxu0 %v6705
        %8108 = vmatpush.bf16.msra.mxu0 %v6699
        %8109 = vmatpush.bf16.msra.mxu0 %v6693
        %8110 = vmatpush.bf16.msra.mxu0 %v6687
        %8111 = vmatpush.bf16.msra.mxu0 %v6681
        %8112 = vmatpush.bf16.msra.mxu0 %v6675
        %8113 = vmatmul.bf16.gmra.mxu0 %v4491
        %v8114 = vpop.f32.mrf.mxu0
        %v8115 = vadd.f32 %v8102, %v8114
        %v8116 = vpop.f32.mrf.mxu0
        %8117 = vdwg.mxu0
        %8118 = vmatpush.bf16.msra.mxu0 %v6765
        %8119 = vmatpush.bf16.msra.mxu0 %v6759
        %8120 = vmatpush.bf16.msra.mxu0 %v6753
        %8121 = vmatpush.bf16.msra.mxu0 %v6747
        %8122 = vmatpush.bf16.msra.mxu0 %v6741
        %8123 = vmatpush.bf16.msra.mxu0 %v6735
        %8124 = vmatpush.bf16.msra.mxu0 %v6729
        %8125 = vmatpush.bf16.msra.mxu0 %v6723
        %8126 = vmatmul.bf16.gmra.mxu0 %v4492
        %v8127 = vpop.f32.mrf.mxu0
        %v8128 = vadd.f32 %v8115, %v8127
        %v8129 = vpop.f32.mrf.mxu0
        %8130 = vdwg.mxu0
        %8131 = vmatpush.bf16.msra.mxu0 %v6813
        %8132 = vmatpush.bf16.msra.mxu0 %v6807
        %8133 = vmatpush.bf16.msra.mxu0 %v6801
        %8134 = vmatpush.bf16.msra.mxu0 %v6795
        %8135 = vmatpush.bf16.msra.mxu0 %v6789
        %8136 = vmatpush.bf16.msra.mxu0 %v6783
        %8137 = vmatpush.bf16.msra.mxu0 %v6777
        %8138 = vmatpush.bf16.msra.mxu0 %v6771
        %8139 = vmatmul.bf16.gmra.mxu0 %v4493
        %v8140 = vpop.f32.mrf.mxu0
        %v8141 = vadd.f32 %v8128, %v8140
        %v8142 = vpop.f32.mrf.mxu0
        %8143 = vdwg.mxu0
        %8144 = vmatpush.bf16.msra.mxu0 %v6861
        %8145 = vmatpush.bf16.msra.mxu0 %v6855
        %8146 = vmatpush.bf16.msra.mxu0 %v6849
        %8147 = vmatpush.bf16.msra.mxu0 %v6843
        %8148 = vmatpush.bf16.msra.mxu0 %v6837
        %8149 = vmatpush.bf16.msra.mxu0 %v6831
        %8150 = vmatpush.bf16.msra.mxu0 %v6825
        %8151 = vmatpush.bf16.msra.mxu0 %v6819
        %8152 = vmatmul.bf16.gmra.mxu0 %v4494
        %v8153 = vpop.f32.mrf.mxu0
        %v8154 = vadd.f32 %v8141, %v8153
        %v8155 = vpop.f32.mrf.mxu0
        %8156 = vdwg.mxu0
        %8157 = vmatpush.bf16.msra.mxu0 %v6909
        %8158 = vmatpush.bf16.msra.mxu0 %v6903
        %8159 = vmatpush.bf16.msra.mxu0 %v6897
        %8160 = vmatpush.bf16.msra.mxu0 %v6891
        %8161 = vmatpush.bf16.msra.mxu0 %v6885
        %8162 = vmatpush.bf16.msra.mxu0 %v6879
        %8163 = vmatpush.bf16.msra.mxu0 %v6873
        %8164 = vmatpush.bf16.msra.mxu0 %v6867
        %8165 = vmatmul.bf16.gmra.mxu0 %v4495
        %v8166 = vpop.f32.mrf.mxu0
        %v8167 = vadd.f32 %v8154, %v8166
        %v8168 = vpop.f32.mrf.mxu0
        %8169 = vdwg.mxu0
        %v8170 = vxor.u32 %v7517, 2147483648
        %v8171 = vxor.u32 %v7647, 2147483648
        %v8172 = vxor.u32 %v7777, 2147483648
        %v8173 = vxor.u32 %v7907, 2147483648
        %v8174 = vxor.u32 %v8037, 2147483648
        %v8175 = vxor.u32 %v8167, 2147483648
        %v8176 = vmul.f32 %v8170, 1.442695
        %v8177 = vpow.pop %v8176
        %v8178 = vmul.f32 %v8171, 1.442695
        %v8179 = vpow.pop %v8178
        %v8180 = vmul.f32 %v8172, 1.442695
        %v8181 = vpow.pop %v8180
        %v8182 = vmul.f32 %v8173, 1.442695
        %v8183 = vpow.pop %v8182
        %v8184 = vmul.f32 %v8174, 1.442695
        %v8185 = vpow.pop %v8184
        %v8186 = vmul.f32 %v8175, 1.442695
        %v8187 = vpow.pop %v8186
        %v8188 = vadd.f32 %v8177, 1.0
        %v8189 = vadd.f32 %v8179, 1.0
        %v8190 = vadd.f32 %v8181, 1.0
        %v8191 = vadd.f32 %v8183, 1.0
        %v8192 = vadd.f32 %v8185, 1.0
        %v8193 = vadd.f32 %v8187, 1.0
        %v8194 = vrcp.pop %v8188
        %v8195 = vmul.f32 %v8188, %v8194
        %v8196 = vsub.f32 1.0, %v8195
        %v8197 = vmul.f32 %v8194, %v8196
        %v8198 = vadd.f32 %v8194, %v8197
        %vm8199 = vweird.f32 %v8188
        %vm8200 = vweird.f32 %v8194
        %vm8201 = vmor %vm8199, %vm8200
        %v8202 = vsel %vm8201, %v8194, %v8198
        %v8203 = vand.u32 2147483647, %v8188
        %vm8204 = vcmp.eq.f32.partialorder %v8203, 8.507059e+37
        %v8205 = vand.u32 %v8188, 2147483648
        %v8206 = vor.u32 1.1754944e-38, %v8205
        %v8207 = vsel %vm8204, %v8206, %v8202
        %v8208 = vmul.f32 1.0, %v8207
        %v8209 = vrcp.pop %v8189
        %v8210 = vmul.f32 %v8189, %v8209
        %v8211 = vsub.f32 1.0, %v8210
        %v8212 = vmul.f32 %v8209, %v8211
        %v8213 = vadd.f32 %v8209, %v8212
        %vm8214 = vweird.f32 %v8189
        %vm8215 = vweird.f32 %v8209
        %vm8216 = vmor %vm8214, %vm8215
        %v8217 = vsel %vm8216, %v8209, %v8213
        %v8218 = vand.u32 2147483647, %v8189
        %vm8219 = vcmp.eq.f32.partialorder %v8218, 8.507059e+37
        %v8220 = vand.u32 %v8189, 2147483648
        %v8221 = vor.u32 1.1754944e-38, %v8220
        %v8222 = vsel %vm8219, %v8221, %v8217
        %v8223 = vmul.f32 1.0, %v8222
        %v8224 = vrcp.pop %v8190
        %v8225 = vmul.f32 %v8190, %v8224
        %v8226 = vsub.f32 1.0, %v8225
        %v8227 = vmul.f32 %v8224, %v8226
        %v8228 = vadd.f32 %v8224, %v8227
        %vm8229 = vweird.f32 %v8190
        %vm8230 = vweird.f32 %v8224
        %vm8231 = vmor %vm8229, %vm8230
        %v8232 = vsel %vm8231, %v8224, %v8228
        %v8233 = vand.u32 2147483647, %v8190
        %vm8234 = vcmp.eq.f32.partialorder %v8233, 8.507059e+37
        %v8235 = vand.u32 %v8190, 2147483648
        %v8236 = vor.u32 1.1754944e-38, %v8235
        %v8237 = vsel %vm8234, %v8236, %v8232
        %v8238 = vmul.f32 1.0, %v8237
        %v8239 = vrcp.pop %v8191
        %v8240 = vmul.f32 %v8191, %v8239
        %v8241 = vsub.f32 1.0, %v8240
        %v8242 = vmul.f32 %v8239, %v8241
        %v8243 = vadd.f32 %v8239, %v8242
        %vm8244 = vweird.f32 %v8191
        %vm8245 = vweird.f32 %v8239
        %vm8246 = vmor %vm8244, %vm8245
        %v8247 = vsel %vm8246, %v8239, %v8243
        %v8248 = vand.u32 2147483647, %v8191
        %vm8249 = vcmp.eq.f32.partialorder %v8248, 8.507059e+37
        %v8250 = vand.u32 %v8191, 2147483648
        %v8251 = vor.u32 1.1754944e-38, %v8250
        %v8252 = vsel %vm8249, %v8251, %v8247
        %v8253 = vmul.f32 1.0, %v8252
        %v8254 = vrcp.pop %v8192
        %v8255 = vmul.f32 %v8192, %v8254
        %v8256 = vsub.f32 1.0, %v8255
        %v8257 = vmul.f32 %v8254, %v8256
        %v8258 = vadd.f32 %v8254, %v8257
        %vm8259 = vweird.f32 %v8192
        %vm8260 = vweird.f32 %v8254
        %vm8261 = vmor %vm8259, %vm8260
        %v8262 = vsel %vm8261, %v8254, %v8258
        %v8263 = vand.u32 2147483647, %v8192
        %vm8264 = vcmp.eq.f32.partialorder %v8263, 8.507059e+37
        %v8265 = vand.u32 %v8192, 2147483648
        %v8266 = vor.u32 1.1754944e-38, %v8265
        %v8267 = vsel %vm8264, %v8266, %v8262
        %v8268 = vmul.f32 1.0, %v8267
        %v8269 = vrcp.pop %v8193
        %v8270 = vmul.f32 %v8193, %v8269
        %v8271 = vsub.f32 1.0, %v8270
        %v8272 = vmul.f32 %v8269, %v8271
        %v8273 = vadd.f32 %v8269, %v8272
        %vm8274 = vweird.f32 %v8193
        %vm8275 = vweird.f32 %v8269
        %vm8276 = vmor %vm8274, %vm8275
        %v8277 = vsel %vm8276, %v8269, %v8273
        %v8278 = vand.u32 2147483647, %v8193
        %vm8279 = vcmp.eq.f32.partialorder %v8278, 8.507059e+37
        %v8280 = vand.u32 %v8193, 2147483648
        %v8281 = vor.u32 1.1754944e-38, %v8280
        %v8282 = vsel %vm8279, %v8281, %v8277
        %v8283 = vmul.f32 1.0, %v8282
        %v8290 = vrot.slane %v8223, 4
        %v8291 = vrot.slane %v8253, 4
        %v8292 = vrot.slane %v8283, 4
        %v8293 = vsel %vm390, %v8208, %v8290
        %v8294 = vsel %vm390, %v8238, %v8291
        %v8295 = vsel %vm390, %v8268, %v8292
        %8299 = vst [vmem:[%s372] sm:$0xff] %v8293
        %8300 = vst [vmem:[%s372 + $0x8] sm:$0xff] %v8294
        %8301 = vst [vmem:[%s372 + $0x10] sm:$0xff] %v8295
        %p8302 = scmp.lt.s32.totalorder %s22, 1
        %s8303 = scalar_select %p8302, %s22, 1
        %s8304 = smul.addr %s8303, 6
        %s8305 = smul.addr %s8304, 4
        %s8306 = scalar_lea.vmem %s7, %s8305
        // Predicated region
        $region73: #{decoder_forward.1} parent=47 // pred_check
          %p8307 = pneg %p192
        $region74: #{decoder_forward.1} parent=47 // pred_check_branch
          %8309 = sbr.rel (%p8307) target = $region76
        $region75: #{decoder_forward.1} parent=47 // pred_region
          _
        $region76: #{decoder_forward.1} parent=47 // pred_fallthru
          _
      $region48: #{decoder_forward.1} parent=5 // pred_fallthru
        _
      %p8310 = scmp.le.s32.totalorder 2, %s17
      // Predicated region
      $region77: #{decoder_forward.1} parent=5 // pred_check
        %p8311 = pneg %p8310
      $region78: #{decoder_forward.1} parent=5 // pred_check_branch
        %8313 = sbr.rel (%p8311) target = $region80
      $region79: #{decoder_forward.1} parent=5 // pred_region
        %s8314 = ssub.s32 %s17, 2
        // Predicated region
        $region81: #{decoder_forward.1} parent=79 // pred_check
          %p8315 = pneg %p198
        $region82: #{decoder_forward.1} parent=79 // pred_check_branch
          %8317 = sbr.rel (%p8315) target = $region84
        $region83: #{decoder_forward.1} parent=79 // pred_region
          %p8318 = scmp.lt.s32.totalorder %s23, 1
          %s8319 = scalar_select %p8318, %s23, 1
          %s8320 = smul.addr %s8319, 6
          %s8321 = smul.addr %s8320, 4
          %s8322 = scalar_lea.vmem %s7, %s8321
        $region84: #{decoder_forward.1} parent=79 // pred_fallthru
          _
      $region80: #{decoder_forward.1} parent=5 // pred_fallthru
        _
    $region6: #{decoder_forward.1} parent=1 // loop_footer
      %s21 = sadd.s32 1, %s17
    $region7: #{decoder_forward.1} parent=1 // loop_footer_branch
      %16 = sbr.rel target = $region3
    $region8: #{decoder_forward.1} parent=1 // loop_exit
      _
    %8323 = vsyncpa [#allocation3], 1
    %s8324 = scalar_lea.sflag [#allocation3], 1
    %8325 = vsyncpa %s8324, 1
    %8326 = vsyncpa [#allocation5], 1
    %8327 = vsyncpa [#allocation8], 1
    %8328 = vsyncpa [#allocation11], 1

</llo_original>
